<compile_context>
chip_gen: v6e
topology: v6e:2x2x1
jax: 0.10.0
libtpu: 0.0.40
codegen_flags: <defaults>
</compile_context>

<pallas_src>
import functools

import jax
import jax.numpy as jnp
from jax.experimental import pallas as pl
from jax.experimental.pallas import tpu as pltpu

# ----------------------- small BART-like config -----------------------------
VOCAB = 128
D_MODEL = 64
N_HEADS = 4
HEAD_DIM = D_MODEL // N_HEADS
FFN_DIM = 128
ENC_LAYERS = 2
DEC_LAYERS = 2
MAX_POS = 32
POS_OFFSET = 2            # BART learned-positional-embedding offset
PAD_ID = 1
DECODER_START_ID = 2      # eos token id, as in BART
LN_EPS = 1e-5
NEG_INF = -1e9


# --------------------------- weight slab packing -----------------------------
class _Packer:
    """Packs 2-D arrays of a fixed lane width into one contiguous slab."""

    def __init__(self, dtype):
        self.dtype = dtype
        self.chunks = []
        self.offset = 0

    def add(self, arr2d):
        off = self.offset
        self.chunks.append(jnp.asarray(arr2d, self.dtype))
        self.offset += int(arr2d.shape[0])
        return off

    def finalize(self):
        return jnp.concatenate(self.chunks, axis=0)


def pack_params(params):
    """Pack every weight into 4 contiguous slabs + a static Python offset table."""
    w64 = _Packer(jnp.bfloat16)    # matmul weights with 64 output lanes
    w128 = _Packer(jnp.bfloat16)   # matmul weights with 128 output lanes
    v64 = _Packer(jnp.float32)     # 64-wide vectors (biases, LN params)
    v128 = _Packer(jnp.float32)    # 128-wide vectors

    def vec64(v):
        return v64.add(v.reshape(1, -1))

    def vec128(v):
        return v128.add(v.reshape(1, -1))

    def pack_attn(p):
        # weight chunks are 64 rows each -> every w64 offset stays 64-aligned
        return {"wq": w64.add(p["wq"]), "bq": vec64(p["bq"]),
                "wk": w64.add(p["wk"]), "bk": vec64(p["bk"]),
                "wv": w64.add(p["wv"]), "bv": vec64(p["bv"]),
                "wo": w64.add(p["wo"]), "bo": vec64(p["bo"])}

    def pack_enc_layer(p):
        return {"attn": pack_attn(p["self_attn"]),
                "ln1_g": vec64(p["ln1_g"]), "ln1_b": vec64(p["ln1_b"]),
                "fc1_w": w128.add(p["fc1_w"]), "fc1_b": vec128(p["fc1_b"]),
                "fc2_w": w64.add(p["fc2_w"]), "fc2_b": vec64(p["fc2_b"]),
                "ln2_g": vec64(p["ln2_g"]), "ln2_b": vec64(p["ln2_b"])}

    def pack_dec_layer(p):
        return {"self_attn": pack_attn(p["self_attn"]),
                "cross_attn": pack_attn(p["cross_attn"]),
                "ln1_g": vec64(p["ln1_g"]), "ln1_b": vec64(p["ln1_b"]),
                "ln2_g": vec64(p["ln2_g"]), "ln2_b": vec64(p["ln2_b"]),
                "fc1_w": w128.add(p["fc1_w"]), "fc1_b": vec128(p["fc1_b"]),
                "fc2_w": w64.add(p["fc2_w"]), "fc2_b": vec64(p["fc2_b"]),
                "ln3_g": vec64(p["ln3_g"]), "ln3_b": vec64(p["ln3_b"])}

    offsets = {
        # LM head: tied embedding, pre-transposed on host -> lane-dense [64,128]
        "embed_T": w128.add(params["embed_tokens"].T),
        "logits_b": vec128(params["final_logits_bias"]),
        "enc_ln_emb_g": vec64(params["enc_ln_emb_g"]),
        "enc_ln_emb_b": vec64(params["enc_ln_emb_b"]),
        "dec_ln_emb_g": vec64(params["dec_ln_emb_g"]),
        "dec_ln_emb_b": vec64(params["dec_ln_emb_b"]),
        "enc_layers": [pack_enc_layer(p) for p in params["enc_layers"]],
        "dec_layers": [pack_dec_layer(p) for p in params["dec_layers"]],
    }
    slabs = (w64.finalize(), w128.finalize(), v64.finalize(), v128.finalize())
    return slabs, offsets


# ------------------------- fused whole-model kernel --------------------------
def _forward_kernel(w64_ref, w128_ref, v64_ref, v128_ref,
                    enc_emb_ref, dec_emb_ref, am_ref, lbl_ref,
                    logits_ref, stats_ref, *, off, s_enc, s_dec):
    f32, bf16 = jnp.float32, jnp.bfloat16

    def vrow64(i):
        return v64_ref[i:i + 1, :]

    def vrow128(i):
        return v128_ref[i:i + 1, :]

    def lin64(x, w_off, k, b_off):
        return jnp.dot(x.astype(bf16), w64_ref[w_off:w_off + k, :],
                       preferred_element_type=f32) + vrow64(b_off)

    def lin128(x, w_off, k, b_off):
        return jnp.dot(x.astype(bf16), w128_ref[w_off:w_off + k, :],
                       preferred_element_type=f32) + vrow128(b_off)

    def layer_norm(x, g_off, b_off):
        mu = jnp.mean(x, axis=-1, keepdims=True)
        xc = x - mu
        var = jnp.mean(xc * xc, axis=-1, keepdims=True)
        return xc * jax.lax.rsqrt(var + LN_EPS) * vrow64(g_off) + vrow64(b_off)

    def gelu(x):
        # tanh-approx GELU (BART uses exact erf GELU; negligible drift here).
        c = 0.7978845608028654
        return 0.5 * x * (1.0 + jnp.tanh(c * (x + 0.044715 * x * x * x)))

    def attention(x_q, x_kv, ap, mask, sq, sk):
        scale = HEAD_DIM ** -0.5
        q = lin64(x_q, ap["wq"], D_MODEL, ap["bq"]) * scale   # scale hoisted
        k = lin64(x_kv, ap["wk"], D_MODEL, ap["bk"])
        v = lin64(x_kv, ap["wv"], D_MODEL, ap["bv"])
        # Per-head q @ k^T tiles stacked along sublanes -> ONE softmax pass.
        scores = [jax.lax.dot_general(
            q[:, h * HEAD_DIM:(h + 1) * HEAD_DIM],
            k[:, h * HEAD_DIM:(h + 1) * HEAD_DIM],
            (((1,), (1,)), ((), ())), preferred_element_type=f32)
            for h in range(N_HEADS)]
        s = jnp.concatenate(scores, axis=0) + mask            # [H*sq, sk]
        s = s - jnp.max(s, axis=-1, keepdims=True)
        p = jnp.exp(s)
        p = p * pl.reciprocal(jnp.sum(p, axis=-1, keepdims=True), approx=True)
        # PV + per-head folded output projection:
        #   concat_h(o_h) @ Wo == sum_h o_h @ Wo[h*Dh:(h+1)*Dh, :]
        out = jnp.zeros((sq, D_MODEL), f32)
        for h in range(N_HEADS):
            ph = p[h * sq:(h + 1) * sq, :]                    # sublane slice
            oh = jnp.dot(ph, v[:, h * HEAD_DIM:(h + 1) * HEAD_DIM],
                         preferred_element_type=f32)          # [sq, Dh]
            wo_h = w64_ref[ap["wo"] + h * HEAD_DIM:
                           ap["wo"] + (h + 1) * HEAD_DIM, :]
            out = out + jnp.dot(oh.astype(bf16), wo_h,
                                preferred_element_type=f32)
        return out + vrow64(ap["bo"])

    def ffn(x, lp):
        return lin64(gelu(lin128(x, lp["fc1_w"], D_MODEL, lp["fc1_b"])),
                     lp["fc2_w"], FFN_DIM, lp["fc2_b"])

    # ----- masks, built in-kernel for this batch element -----
    pad_mask = (1.0 - am_ref[0]) * NEG_INF                    # [1, s_enc]
    row = jax.lax.broadcasted_iota(jnp.int32, (s_dec, s_dec), 0)
    col = jax.lax.broadcasted_iota(jnp.int32, (s_dec, s_dec), 1)
    causal = jnp.where(col > row, NEG_INF, 0.0).astype(f32)
    causal_hd = jnp.concatenate([causal] * N_HEADS, axis=0)   # [H*s_dec, s_dec]

    # ----- encoder -----
    h = layer_norm(enc_emb_ref[0], off["enc_ln_emb_g"], off["enc_ln_emb_b"])
    for lp in off["enc_layers"]:
        a = attention(h, h, lp["attn"], pad_mask, s_enc, s_enc)
        h = layer_norm(h + a, lp["ln1_g"], lp["ln1_b"])
        h = layer_norm(h + ffn(h, lp), lp["ln2_g"], lp["ln2_b"])
    enc_out = h                                               # [s_enc, D]

    # ----- decoder -----
    d = layer_norm(dec_emb_ref[0], off["dec_ln_emb_g"], off["dec_ln_emb_b"])
    for lp in off["dec_layers"]:
        a = attention(d, d, lp["self_attn"], causal_hd, s_dec, s_dec)
        d = layer_norm(d + a, lp["ln1_g"], lp["ln1_b"])
        c = attention(d, enc_out, lp["cross_attn"], pad_mask, s_dec, s_enc)
        d = layer_norm(d + c, lp["ln2_g"], lp["ln2_b"])
        d = layer_norm(d + ffn(d, lp), lp["ln3_g"], lp["ln3_b"])

    # ----- LM head: pre-transposed tied embedding, lane-dense logits -----
    logits = lin128(d, off["embed_T"], D_MODEL, off["logits_b"])  # [s_dec, V]
    logits_ref[0] = logits

    # ----- fused cross-entropy; one-hot built in-kernel from int labels -----
    lbl = lbl_ref[0]                                          # [s_dec, 1] i32
    lane = jax.lax.broadcasted_iota(jnp.int32, (s_dec, VOCAB), 1)
    m = jnp.max(logits, axis=-1, keepdims=True)
    lse = jnp.log(jnp.sum(jnp.exp(logits - m), axis=-1, keepdims=True)) + m
    tgt = jnp.sum(jnp.where(lane == lbl, logits, 0.0), axis=-1, keepdims=True)
    valid = jnp.logical_and(lbl >= 0, lbl < VOCAB).astype(f32)  # 0 for -100
    tot = jnp.sum((lse - tgt) * valid, keepdims=True)         # (1, 1)
    cnt = jnp.sum(valid, keepdims=True)                       # (1, 1)
    r = jax.lax.broadcasted_iota(jnp.int32, (8, 128), 0)
    stats_ref[0] = jnp.where(r == 0, tot, jnp.where(r == 1, cnt, 0.0))


# ------------------------------ model wrapper ---------------------------------
def shift_tokens_right(ids):
    shifted = jnp.roll(ids, 1, axis=-1)
    shifted = shifted.at[:, 0].set(DECODER_START_ID)
    return jnp.where(shifted == -100, PAD_ID, shifted)


def bart_forward(slabs, tables, input_ids, attention_mask, labels=None, *,
                 offsets):
    B, S_enc = input_ids.shape
    if labels is not None:
        dec_ids = shift_tokens_right(labels)
        lbl = labels
    else:
        dec_ids = shift_tokens_right(input_ids)
        lbl = jnp.full_like(input_ids, -100)
    S_dec = dec_ids.shape[1]

    # TODO(synk): embedding gathers + decoder-input shifting stay in plain JAX
    # (no clean Pallas gather at this size); everything else is one kernel.
    pos = jnp.arange(S_enc) + POS_OFFSET
    dpos = jnp.arange(S_dec) + POS_OFFSET
    enc_emb = tables["embed_tokens"][input_ids] + tables["enc_pos"][pos][None]
    dec_emb = tables["embed_tokens"][dec_ids] + tables["dec_pos"][dpos][None]
    am = attention_mask.astype(jnp.float32).reshape(B, 1, S_enc)
    lbl_col = lbl.astype(jnp.int32).reshape(B, S_dec, 1)

    w64s, w128s, v64s, v128s = slabs
    kernel = functools.partial(_forward_kernel, off=offsets,
                               s_enc=S_enc, s_dec=S_dec)

    def resident(a):  # full-array block, constant index map -> stays in VMEM
        return pl.BlockSpec(a.shape, lambda b: (0,) * a.ndim)

    logits, stats = pl.pallas_call(
        kernel,
        grid=(B,),
        out_shape=(jax.ShapeDtypeStruct((B, S_dec, VOCAB), jnp.float32),
                   jax.ShapeDtypeStruct((B, 8, 128), jnp.float32)),
        in_specs=[resident(w64s), resident(w128s), resident(v64s),
                  resident(v128s),
                  pl.BlockSpec((1, S_enc, D_MODEL), lambda b: (b, 0, 0)),
                  pl.BlockSpec((1, S_dec, D_MODEL), lambda b: (b, 0, 0)),
                  pl.BlockSpec((1, 1, S_enc), lambda b: (b, 0, 0)),
                  pl.BlockSpec((1, S_dec, 1), lambda b: (b, 0, 0))],
        out_specs=(pl.BlockSpec((1, S_dec, VOCAB), lambda b: (b, 0, 0)),
                   pl.BlockSpec((1, 8, 128), lambda b: (b, 0, 0))),
        compiler_params=pltpu.CompilerParams(
            dimension_semantics=("parallel",)),
    )(w64s, w128s, v64s, v128s, enc_emb, dec_emb, am, lbl_col)

    if labels is not None:
        total = jnp.sum(stats[:, 0, 0])
        count = jnp.sum(stats[:, 1, 0])
        loss = total / jnp.maximum(count, 1.0)
    else:
        loss = None
    return {"loss": loss, "logits": logits}


# --------------------------- parameter init ----------------------------------
def init_params(key):
    keys = iter(jax.random.split(key, 256))

    def nrm(shape, std=0.02):
        return (std * jax.random.normal(next(keys), shape)).astype(jnp.float32)

    def zeros(shape):
        return jnp.zeros(shape, jnp.float32)

    def ones(shape):
        return jnp.ones(shape, jnp.float32)

    def attn_p():
        return {"wq": nrm((D_MODEL, D_MODEL)), "bq": zeros((D_MODEL,)),
                "wk": nrm((D_MODEL, D_MODEL)), "bk": zeros((D_MODEL,)),
                "wv": nrm((D_MODEL, D_MODEL)), "bv": zeros((D_MODEL,)),
                "wo": nrm((D_MODEL, D_MODEL)), "bo": zeros((D_MODEL,))}

    def enc_layer_p():
        return {"self_attn": attn_p(),
                "ln1_g": ones((D_MODEL,)), "ln1_b": zeros((D_MODEL,)),
                "fc1_w": nrm((D_MODEL, FFN_DIM)), "fc1_b": zeros((FFN_DIM,)),
                "fc2_w": nrm((FFN_DIM, D_MODEL)), "fc2_b": zeros((D_MODEL,)),
                "ln2_g": ones((D_MODEL,)), "ln2_b": zeros((D_MODEL,))}

    def dec_layer_p():
        return {"self_attn": attn_p(), "cross_attn": attn_p(),
                "ln1_g": ones((D_MODEL,)), "ln1_b": zeros((D_MODEL,)),
                "ln2_g": ones((D_MODEL,)), "ln2_b": zeros((D_MODEL,)),
                "fc1_w": nrm((D_MODEL, FFN_DIM)), "fc1_b": zeros((FFN_DIM,)),
                "fc2_w": nrm((FFN_DIM, D_MODEL)), "fc2_b": zeros((D_MODEL,)),
                "ln3_g": ones((D_MODEL,)), "ln3_b": zeros((D_MODEL,))}

    return {
        "embed_tokens": nrm((VOCAB, D_MODEL)),
        "enc_pos": nrm((MAX_POS + POS_OFFSET, D_MODEL)),
        "dec_pos": nrm((MAX_POS + POS_OFFSET, D_MODEL)),
        "enc_ln_emb_g": ones((D_MODEL,)), "enc_ln_emb_b": zeros((D_MODEL,)),
        "dec_ln_emb_g": ones((D_MODEL,)), "dec_ln_emb_b": zeros((D_MODEL,)),
        "enc_layers": [enc_layer_p() for _ in range(ENC_LAYERS)],
        "dec_layers": [dec_layer_p() for _ in range(DEC_LAYERS)],
        "final_logits_bias": zeros((VOCAB,)),
    }


# --------------------------------- main ---------------------------------------
if __name__ == "__main__":
    key = jax.random.PRNGKey(0)
    pkey, k_ids, k_lab = jax.random.split(key, 3)
    params = init_params(pkey)
    slabs, offsets = pack_params(params)            # host-side, once
    tables = {"embed_tokens": params["embed_tokens"],
              "enc_pos": params["enc_pos"], "dec_pos": params["dec_pos"]}

    B, S = 2, 8
    input_ids = jax.random.randint(k_ids, (B, S), 3, VOCAB, dtype=jnp.int32)
    input_ids = input_ids.at[1, 6:].set(PAD_ID)     # some padding
    attention_mask = (input_ids != PAD_ID).astype(jnp.int32)
    labels = jax.random.randint(k_lab, (B, S), 3, VOCAB, dtype=jnp.int32)

    fwd = jax.jit(functools.partial(bart_forward, offsets=offsets))
    out = fwd(slabs, tables, input_ids, attention_mask, labels)
    jax.block_until_ready(out["logits"])
    jax.block_until_ready(out["loss"])

    assert out["logits"].shape == (B, S, VOCAB)
    assert bool(jnp.isfinite(out["loss"])) and bool(
        jnp.all(jnp.isfinite(out["logits"])))
    print("KERNEL_OK")
</pallas_src>

<mosaic_0001>
module attributes {stable_mosaic.version = 11 : i64} {
  func.func @_forward_kernel(%arg0: i32, %arg1: memref<2048x64xbf16, #tpu.memory_space<vmem>>, %arg2: memref<320x128xbf16, #tpu.memory_space<vmem>>, %arg3: memref<52x64xf32, #tpu.memory_space<vmem>>, %arg4: memref<5x128xf32, #tpu.memory_space<vmem>>, %arg5: memref<1x8x64xf32, #tpu.memory_space<vmem>>, %arg6: memref<1x8x64xf32, #tpu.memory_space<vmem>>, %arg7: memref<1x1x8xf32, #tpu.memory_space<vmem>>, %arg8: memref<1x8x1xi32, #tpu.memory_space<vmem>>, %arg9: memref<1x8x128xf32, #tpu.memory_space<vmem>>, %arg10: memref<1x8x128xf32, #tpu.memory_space<vmem>>) attributes {dimension_semantics = [#tpu.dimension_semantics<parallel>], iteration_bounds = array<i64: 2>, scalar_prefetch = 0 : i64, scratch_operands = 0 : i64, tpu.core_type = #tpu.core_type<tc>, window_params = [{pipeline_mode = #tpu.pipeline_mode<synchronous>, transform_indices = @transform_0, window_bounds = array<i64: 2048, 64>}, {pipeline_mode = #tpu.pipeline_mode<synchronous>, transform_indices = @transform_1, window_bounds = array<i64: 320, 128>}, {pipeline_mode = #tpu.pipeline_mode<synchronous>, transform_indices = @transform_2, window_bounds = array<i64: 52, 64>}, {pipeline_mode = #tpu.pipeline_mode<synchronous>, transform_indices = @transform_3, window_bounds = array<i64: 5, 128>}, {transform_indices = @transform_4, window_bounds = array<i64: 1, 8, 64>}, {transform_indices = @transform_5, window_bounds = array<i64: 1, 8, 64>}, {transform_indices = @transform_6, window_bounds = array<i64: 1, 1, 8>}, {transform_indices = @transform_7, window_bounds = array<i64: 1, 8, 1>}, {transform_indices = @transform_8, window_bounds = array<i64: 1, 8, 128>}, {transform_indices = @transform_9, window_bounds = array<i64: 1, 8, 128>}]} {
    %c0 = arith.constant 0 : index
    %c0_0 = arith.constant 0 : index
    %c0_1 = arith.constant 0 : index
    %0 = vector.load %arg7[%c0, %c0_0, %c0_1] : memref<1x1x8xf32, #tpu.memory_space<vmem>>, vector<1x1x8xf32>
    %1 = vector.shape_cast %0 : vector<1x1x8xf32> to vector<1x8xf32>
    %cst = arith.constant 1.000000e+00 : f32
    %2 = vector.broadcast %cst : f32 to vector<1x8xf32>
    %3 = arith.subf %2, %1 : vector<1x8xf32>
    %cst_2 = arith.constant -1.000000e+09 : f32
    %4 = vector.broadcast %cst_2 : f32 to vector<1x8xf32>
    %5 = arith.mulf %3, %4 : vector<1x8xf32>
    %6 = tpu.iota {dimensions = array<i32: 0>} : vector<8x8xi32>
    %7 = tpu.iota {dimensions = array<i32: 1>} : vector<8x8xi32>
    %8 = arith.cmpi sgt, %7, %6 : vector<8x8xi32>
    %cst_3 = arith.constant -1.000000e+09 : f32
    %cst_4 = arith.constant 0.000000e+00 : f32
    %9 = vector.broadcast %cst_3 : f32 to vector<8x8xf32>
    %10 = vector.broadcast %cst_4 : f32 to vector<8x8xf32>
    %11 = arith.select %8, %9, %10 : vector<8x8xi1>, vector<8x8xf32>
    %12 = tpu.concatenate %11, %11, %11, %11 in 0 : vector<8x8xf32>, vector<8x8xf32>, vector<8x8xf32>, vector<8x8xf32> -> vector<32x8xf32>
    %c0_5 = arith.constant 0 : index
    %c0_6 = arith.constant 0 : index
    %c0_7 = arith.constant 0 : index
    %13 = vector.load %arg5[%c0_5, %c0_6, %c0_7] : memref<1x8x64xf32, #tpu.memory_space<vmem>>, vector<1x8x64xf32>
    %14 = vector.shape_cast %13 : vector<1x8x64xf32> to vector<8x64xf32>
    %cst_8 = arith.constant dense<0.000000e+00> : vector<8xf32>
    %15 = vector.multi_reduction <add>, %14, %cst_8 [1] : vector<8x64xf32> to vector<8xf32>
    %16 = vector.shape_cast %15 : vector<8xf32> to vector<8x1xf32>
    %cst_9 = arith.constant 6.400000e+01 : f32
    %17 = vector.broadcast %cst_9 : f32 to vector<8x1xf32>
    %18 = arith.divf %16, %17 : vector<8x1xf32>
    %19 = vector.broadcast %18 : vector<8x1xf32> to vector<8x64xf32>
    %20 = arith.subf %14, %19 : vector<8x64xf32>
    %21 = arith.mulf %20, %20 : vector<8x64xf32>
    %cst_10 = arith.constant dense<0.000000e+00> : vector<8xf32>
    %22 = vector.multi_reduction <add>, %21, %cst_10 [1] : vector<8x64xf32> to vector<8xf32>
    %23 = vector.shape_cast %22 : vector<8xf32> to vector<8x1xf32>
    %cst_11 = arith.constant 6.400000e+01 : f32
    %24 = vector.broadcast %cst_11 : f32 to vector<8x1xf32>
    %25 = arith.divf %23, %24 : vector<8x1xf32>
    %cst_12 = arith.constant 9.99999974E-6 : f32
    %26 = vector.broadcast %cst_12 : f32 to vector<8x1xf32>
    %27 = arith.addf %25, %26 : vector<8x1xf32>
    %28 = math.rsqrt %27 : vector<8x1xf32>
    %29 = vector.broadcast %28 : vector<8x1xf32> to vector<8x64xf32>
    %30 = arith.mulf %20, %29 : vector<8x64xf32>
    %c0_13 = arith.constant 0 : index
    %c0_14 = arith.constant 0 : index
    %31 = vector.load %arg3[%c0_13, %c0_14] : memref<52x64xf32, #tpu.memory_space<vmem>>, vector<1x64xf32>
    %32 = vector.broadcast %31 : vector<1x64xf32> to vector<8x64xf32>
    %33 = arith.mulf %30, %32 : vector<8x64xf32>
    %c1 = arith.constant 1 : index
    %c0_15 = arith.constant 0 : index
    %34 = vector.load %arg3[%c1, %c0_15] : memref<52x64xf32, #tpu.memory_space<vmem>>, vector<1x64xf32>
    %35 = vector.broadcast %34 : vector<1x64xf32> to vector<8x64xf32>
    %36 = arith.addf %33, %35 : vector<8x64xf32>
    %37 = arith.truncf %36 : vector<8x64xf32> to vector<8x64xbf16>
    %c0_16 = arith.constant 0 : index
    %c0_17 = arith.constant 0 : index
    %38 = vector.load %arg1[%c0_16, %c0_17] : memref<2048x64xbf16, #tpu.memory_space<vmem>>, vector<64x64xbf16>
    %cst_18 = arith.constant dense<0.000000e+00> : vector<8x64xf32>
    %39 = tpu.matmul %37, %38, %cst_18 {dimension_numbers = #tpu.dot_dimension_numbers<[1], [0], [0], [1], [0, 0, 1, 1], [], []>} : vector<8x64xbf16>, vector<64x64xbf16>, vector<8x64xf32> -> vector<8x64xf32>
    %c4 = arith.constant 4 : index
    %c0_19 = arith.constant 0 : index
    %40 = vector.load %arg3[%c4, %c0_19] : memref<52x64xf32, #tpu.memory_space<vmem>>, vector<1x64xf32>
    %41 = vector.broadcast %40 : vector<1x64xf32> to vector<8x64xf32>
    %42 = arith.addf %39, %41 : vector<8x64xf32>
    %cst_20 = arith.constant 2.500000e-01 : f32
    %43 = vector.broadcast %cst_20 : f32 to vector<8x64xf32>
    %44 = arith.mulf %42, %43 : vector<8x64xf32>
    %45 = arith.truncf %36 : vector<8x64xf32> to vector<8x64xbf16>
    %c64 = arith.constant 64 : index
    %c0_21 = arith.constant 0 : index
    %46 = vector.load %arg1[%c64, %c0_21] : memref<2048x64xbf16, #tpu.memory_space<vmem>>, vector<64x64xbf16>
    %cst_22 = arith.constant dense<0.000000e+00> : vector<8x64xf32>
    %47 = tpu.matmul %45, %46, %cst_22 {dimension_numbers = #tpu.dot_dimension_numbers<[1], [0], [0], [1], [0, 0, 1, 1], [], []>} : vector<8x64xbf16>, vector<64x64xbf16>, vector<8x64xf32> -> vector<8x64xf32>
    %c5 = arith.constant 5 : index
    %c0_23 = arith.constant 0 : index
    %48 = vector.load %arg3[%c5, %c0_23] : memref<52x64xf32, #tpu.memory_space<vmem>>, vector<1x64xf32>
    %49 = vector.broadcast %48 : vector<1x64xf32> to vector<8x64xf32>
    %50 = arith.addf %47, %49 : vector<8x64xf32>
    %51 = arith.truncf %36 : vector<8x64xf32> to vector<8x64xbf16>
    %c128 = arith.constant 128 : index
    %c0_24 = arith.constant 0 : index
    %52 = vector.load %arg1[%c128, %c0_24] : memref<2048x64xbf16, #tpu.memory_space<vmem>>, vector<64x64xbf16>
    %cst_25 = arith.constant dense<0.000000e+00> : vector<8x64xf32>
    %53 = tpu.matmul %51, %52, %cst_25 {dimension_numbers = #tpu.dot_dimension_numbers<[1], [0], [0], [1], [0, 0, 1, 1], [], []>} : vector<8x64xbf16>, vector<64x64xbf16>, vector<8x64xf32> -> vector<8x64xf32>
    %c6 = arith.constant 6 : index
    %c0_26 = arith.constant 0 : index
    %54 = vector.load %arg3[%c6, %c0_26] : memref<52x64xf32, #tpu.memory_space<vmem>>, vector<1x64xf32>
    %55 = vector.broadcast %54 : vector<1x64xf32> to vector<8x64xf32>
    %56 = arith.addf %53, %55 : vector<8x64xf32>
    %57 = vector.extract_strided_slice %44 {offsets = [0, 0], sizes = [8, 16], strides = [1, 1]} : vector<8x64xf32> to vector<8x16xf32>
    %58 = vector.extract_strided_slice %50 {offsets = [0, 0], sizes = [8, 16], strides = [1, 1]} : vector<8x64xf32> to vector<8x16xf32>
    %cst_27 = arith.constant dense<0.000000e+00> : vector<8x8xf32>
    %59 = tpu.matmul %57, %58, %cst_27 {dimension_numbers = #tpu.dot_dimension_numbers<[1], [1], [0], [0], [0, 0, 1, 0], [], []>} : vector<8x16xf32>, vector<8x16xf32>, vector<8x8xf32> -> vector<8x8xf32>
    %60 = vector.extract_strided_slice %44 {offsets = [0, 16], sizes = [8, 16], strides = [1, 1]} : vector<8x64xf32> to vector<8x16xf32>
    %61 = vector.extract_strided_slice %50 {offsets = [0, 16], sizes = [8, 16], strides = [1, 1]} : vector<8x64xf32> to vector<8x16xf32>
    %cst_28 = arith.constant dense<0.000000e+00> : vector<8x8xf32>
    %62 = tpu.matmul %60, %61, %cst_28 {dimension_numbers = #tpu.dot_dimension_numbers<[1], [1], [0], [0], [0, 0, 1, 0], [], []>} : vector<8x16xf32>, vector<8x16xf32>, vector<8x8xf32> -> vector<8x8xf32>
    %63 = vector.extract_strided_slice %44 {offsets = [0, 32], sizes = [8, 16], strides = [1, 1]} : vector<8x64xf32> to vector<8x16xf32>
    %64 = vector.extract_strided_slice %50 {offsets = [0, 32], sizes = [8, 16], strides = [1, 1]} : vector<8x64xf32> to vector<8x16xf32>
    %cst_29 = arith.constant dense<0.000000e+00> : vector<8x8xf32>
    %65 = tpu.matmul %63, %64, %cst_29 {dimension_numbers = #tpu.dot_dimension_numbers<[1], [1], [0], [0], [0, 0, 1, 0], [], []>} : vector<8x16xf32>, vector<8x16xf32>, vector<8x8xf32> -> vector<8x8xf32>
    %66 = vector.extract_strided_slice %44 {offsets = [0, 48], sizes = [8, 16], strides = [1, 1]} : vector<8x64xf32> to vector<8x16xf32>
    %67 = vector.extract_strided_slice %50 {offsets = [0, 48], sizes = [8, 16], strides = [1, 1]} : vector<8x64xf32> to vector<8x16xf32>
    %cst_30 = arith.constant dense<0.000000e+00> : vector<8x8xf32>
    %68 = tpu.matmul %66, %67, %cst_30 {dimension_numbers = #tpu.dot_dimension_numbers<[1], [1], [0], [0], [0, 0, 1, 0], [], []>} : vector<8x16xf32>, vector<8x16xf32>, vector<8x8xf32> -> vector<8x8xf32>
    %69 = tpu.concatenate %59, %62, %65, %68 in 0 : vector<8x8xf32>, vector<8x8xf32>, vector<8x8xf32>, vector<8x8xf32> -> vector<32x8xf32>
    %70 = vector.broadcast %5 : vector<1x8xf32> to vector<32x8xf32>
    %71 = arith.addf %69, %70 : vector<32x8xf32>
    %cst_31 = arith.constant dense<0xFF800000> : vector<32xf32>
    %72 = vector.multi_reduction <maximumf>, %71, %cst_31 [1] : vector<32x8xf32> to vector<32xf32>
    %73 = vector.shape_cast %72 : vector<32xf32> to vector<32x1xf32>
    %74 = vector.broadcast %73 : vector<32x1xf32> to vector<32x8xf32>
    %75 = arith.subf %71, %74 : vector<32x8xf32>
    %76 = math.exp %75 : vector<32x8xf32>
    %cst_32 = arith.constant dense<0.000000e+00> : vector<32xf32>
    %77 = vector.multi_reduction <add>, %76, %cst_32 [1] : vector<32x8xf32> to vector<32xf32>
    %78 = vector.shape_cast %77 : vector<32xf32> to vector<32x1xf32>
    %79 = tpu.reciprocal %78 {approx = true} : vector<32x1xf32> -> vector<32x1xf32>
    %80 = vector.broadcast %79 : vector<32x1xf32> to vector<32x8xf32>
    %81 = arith.mulf %76, %80 : vector<32x8xf32>
    %cst_33 = arith.constant 0.000000e+00 : f32
    %82 = vector.broadcast %cst_33 : f32 to vector<8x64xf32>
    %83 = vector.extract_strided_slice %81 {offsets = [0, 0], sizes = [8, 8], strides = [1, 1]} : vector<32x8xf32> to vector<8x8xf32>
    %84 = vector.extract_strided_slice %56 {offsets = [0, 0], sizes = [8, 16], strides = [1, 1]} : vector<8x64xf32> to vector<8x16xf32>
    %cst_34 = arith.constant dense<0.000000e+00> : vector<8x16xf32>
    %85 = tpu.matmul %83, %84, %cst_34 {dimension_numbers = #tpu.dot_dimension_numbers<[1], [0], [0], [1], [0, 0, 1, 1], [], []>} : vector<8x8xf32>, vector<8x16xf32>, vector<8x16xf32> -> vector<8x16xf32>
    %c192 = arith.constant 192 : index
    %c0_35 = arith.constant 0 : index
    %86 = vector.load %arg1[%c192, %c0_35] : memref<2048x64xbf16, #tpu.memory_space<vmem>>, vector<16x64xbf16>
    %87 = arith.truncf %85 : vector<8x16xf32> to vector<8x16xbf16>
    %cst_36 = arith.constant dense<0.000000e+00> : vector<8x64xf32>
    %88 = tpu.matmul %87, %86, %cst_36 {dimension_numbers = #tpu.dot_dimension_numbers<[1], [0], [0], [1], [0, 0, 1, 1], [], []>} : vector<8x16xbf16>, vector<16x64xbf16>, vector<8x64xf32> -> vector<8x64xf32>
    %89 = arith.addf %82, %88 : vector<8x64xf32>
    %90 = vector.extract_strided_slice %81 {offsets = [8, 0], sizes = [8, 8], strides = [1, 1]} : vector<32x8xf32> to vector<8x8xf32>
    %91 = vector.extract_strided_slice %56 {offsets = [0, 16], sizes = [8, 16], strides = [1, 1]} : vector<8x64xf32> to vector<8x16xf32>
    %cst_37 = arith.constant dense<0.000000e+00> : vector<8x16xf32>
    %92 = tpu.matmul %90, %91, %cst_37 {dimension_numbers = #tpu.dot_dimension_numbers<[1], [0], [0], [1], [0, 0, 1, 1], [], []>} : vector<8x8xf32>, vector<8x16xf32>, vector<8x16xf32> -> vector<8x16xf32>
    %c208 = arith.constant 208 : index
    %c0_38 = arith.constant 0 : index
    %93 = vector.load %arg1[%c208, %c0_38] : memref<2048x64xbf16, #tpu.memory_space<vmem>>, vector<16x64xbf16>
    %94 = arith.truncf %92 : vector<8x16xf32> to vector<8x16xbf16>
    %cst_39 = arith.constant dense<0.000000e+00> : vector<8x64xf32>
    %95 = tpu.matmul %94, %93, %cst_39 {dimension_numbers = #tpu.dot_dimension_numbers<[1], [0], [0], [1], [0, 0, 1, 1], [], []>} : vector<8x16xbf16>, vector<16x64xbf16>, vector<8x64xf32> -> vector<8x64xf32>
    %96 = arith.addf %89, %95 : vector<8x64xf32>
    %97 = vector.extract_strided_slice %81 {offsets = [16, 0], sizes = [8, 8], strides = [1, 1]} : vector<32x8xf32> to vector<8x8xf32>
    %98 = vector.extract_strided_slice %56 {offsets = [0, 32], sizes = [8, 16], strides = [1, 1]} : vector<8x64xf32> to vector<8x16xf32>
    %cst_40 = arith.constant dense<0.000000e+00> : vector<8x16xf32>
    %99 = tpu.matmul %97, %98, %cst_40 {dimension_numbers = #tpu.dot_dimension_numbers<[1], [0], [0], [1], [0, 0, 1, 1], [], []>} : vector<8x8xf32>, vector<8x16xf32>, vector<8x16xf32> -> vector<8x16xf32>
    %c224 = arith.constant 224 : index
    %c0_41 = arith.constant 0 : index
    %100 = vector.load %arg1[%c224, %c0_41] : memref<2048x64xbf16, #tpu.memory_space<vmem>>, vector<16x64xbf16>
    %101 = arith.truncf %99 : vector<8x16xf32> to vector<8x16xbf16>
    %cst_42 = arith.constant dense<0.000000e+00> : vector<8x64xf32>
    %102 = tpu.matmul %101, %100, %cst_42 {dimension_numbers = #tpu.dot_dimension_numbers<[1], [0], [0], [1], [0, 0, 1, 1], [], []>} : vector<8x16xbf16>, vector<16x64xbf16>, vector<8x64xf32> -> vector<8x64xf32>
    %103 = arith.addf %96, %102 : vector<8x64xf32>
    %104 = vector.extract_strided_slice %81 {offsets = [24, 0], sizes = [8, 8], strides = [1, 1]} : vector<32x8xf32> to vector<8x8xf32>
    %105 = vector.extract_strided_slice %56 {offsets = [0, 48], sizes = [8, 16], strides = [1, 1]} : vector<8x64xf32> to vector<8x16xf32>
    %cst_43 = arith.constant dense<0.000000e+00> : vector<8x16xf32>
    %106 = tpu.matmul %104, %105, %cst_43 {dimension_numbers = #tpu.dot_dimension_numbers<[1], [0], [0], [1], [0, 0, 1, 1], [], []>} : vector<8x8xf32>, vector<8x16xf32>, vector<8x16xf32> -> vector<8x16xf32>
    %c240 = arith.constant 240 : index
    %c0_44 = arith.constant 0 : index
    %107 = vector.load %arg1[%c240, %c0_44] : memref<2048x64xbf16, #tpu.memory_space<vmem>>, vector<16x64xbf16>
    %108 = arith.truncf %106 : vector<8x16xf32> to vector<8x16xbf16>
    %cst_45 = arith.constant dense<0.000000e+00> : vector<8x64xf32>
    %109 = tpu.matmul %108, %107, %cst_45 {dimension_numbers = #tpu.dot_dimension_numbers<[1], [0], [0], [1], [0, 0, 1, 1], [], []>} : vector<8x16xbf16>, vector<16x64xbf16>, vector<8x64xf32> -> vector<8x64xf32>
    %110 = arith.addf %103, %109 : vector<8x64xf32>
    %c7 = arith.constant 7 : index
    %c0_46 = arith.constant 0 : index
    %111 = vector.load %arg3[%c7, %c0_46] : memref<52x64xf32, #tpu.memory_space<vmem>>, vector<1x64xf32>
    %112 = vector.broadcast %111 : vector<1x64xf32> to vector<8x64xf32>
    %113 = arith.addf %110, %112 : vector<8x64xf32>
    %114 = arith.addf %36, %113 : vector<8x64xf32>
    %cst_47 = arith.constant dense<0.000000e+00> : vector<8xf32>
    %115 = vector.multi_reduction <add>, %114, %cst_47 [1] : vector<8x64xf32> to vector<8xf32>
    %116 = vector.shape_cast %115 : vector<8xf32> to vector<8x1xf32>
    %cst_48 = arith.constant 6.400000e+01 : f32
    %117 = vector.broadcast %cst_48 : f32 to vector<8x1xf32>
    %118 = arith.divf %116, %117 : vector<8x1xf32>
    %119 = vector.broadcast %118 : vector<8x1xf32> to vector<8x64xf32>
    %120 = arith.subf %114, %119 : vector<8x64xf32>
    %121 = arith.mulf %120, %120 : vector<8x64xf32>
    %cst_49 = arith.constant dense<0.000000e+00> : vector<8xf32>
    %122 = vector.multi_reduction <add>, %121, %cst_49 [1] : vector<8x64xf32> to vector<8xf32>
    %123 = vector.shape_cast %122 : vector<8xf32> to vector<8x1xf32>
    %cst_50 = arith.constant 6.400000e+01 : f32
    %124 = vector.broadcast %cst_50 : f32 to vector<8x1xf32>
    %125 = arith.divf %123, %124 : vector<8x1xf32>
    %cst_51 = arith.constant 9.99999974E-6 : f32
    %126 = vector.broadcast %cst_51 : f32 to vector<8x1xf32>
    %127 = arith.addf %125, %126 : vector<8x1xf32>
    %128 = math.rsqrt %127 : vector<8x1xf32>
    %129 = vector.broadcast %128 : vector<8x1xf32> to vector<8x64xf32>
    %130 = arith.mulf %120, %129 : vector<8x64xf32>
    %c8 = arith.constant 8 : index
    %c0_52 = arith.constant 0 : index
    %131 = vector.load %arg3[%c8, %c0_52] : memref<52x64xf32, #tpu.memory_space<vmem>>, vector<1x64xf32>
    %132 = vector.broadcast %131 : vector<1x64xf32> to vector<8x64xf32>
    %133 = arith.mulf %130, %132 : vector<8x64xf32>
    %c9 = arith.constant 9 : index
    %c0_53 = arith.constant 0 : index
    %134 = vector.load %arg3[%c9, %c0_53] : memref<52x64xf32, #tpu.memory_space<vmem>>, vector<1x64xf32>
    %135 = vector.broadcast %134 : vector<1x64xf32> to vector<8x64xf32>
    %136 = arith.addf %133, %135 : vector<8x64xf32>
    %137 = arith.truncf %136 : vector<8x64xf32> to vector<8x64xbf16>
    %c64_54 = arith.constant 64 : index
    %c0_55 = arith.constant 0 : index
    %138 = vector.load %arg2[%c64_54, %c0_55] : memref<320x128xbf16, #tpu.memory_space<vmem>>, vector<64x128xbf16>
    %cst_56 = arith.constant dense<0.000000e+00> : vector<8x128xf32>
    %139 = tpu.matmul %137, %138, %cst_56 {dimension_numbers = #tpu.dot_dimension_numbers<[1], [0], [0], [1], [0, 0, 1, 1], [], []>} : vector<8x64xbf16>, vector<64x128xbf16>, vector<8x128xf32> -> vector<8x128xf32>
    %c1_57 = arith.constant 1 : index
    %c0_58 = arith.constant 0 : index
    %140 = vector.load %arg4[%c1_57, %c0_58] : memref<5x128xf32, #tpu.memory_space<vmem>>, vector<1x128xf32>
    %141 = vector.broadcast %140 : vector<1x128xf32> to vector<8x128xf32>
    %142 = arith.addf %139, %141 : vector<8x128xf32>
    %cst_59 = arith.constant 5.000000e-01 : f32
    %143 = vector.broadcast %cst_59 : f32 to vector<8x128xf32>
    %144 = arith.mulf %143, %142 : vector<8x128xf32>
    %cst_60 = arith.constant 4.471500e-02 : f32
    %145 = vector.broadcast %cst_60 : f32 to vector<8x128xf32>
    %146 = arith.mulf %145, %142 : vector<8x128xf32>
    %147 = arith.mulf %146, %142 : vector<8x128xf32>
    %148 = arith.mulf %147, %142 : vector<8x128xf32>
    %149 = arith.addf %142, %148 : vector<8x128xf32>
    %cst_61 = arith.constant 0.797884583 : f32
    %150 = vector.broadcast %cst_61 : f32 to vector<8x128xf32>
    %151 = arith.mulf %150, %149 : vector<8x128xf32>
    %152 = math.tanh %151 : vector<8x128xf32>
    %cst_62 = arith.constant 1.000000e+00 : f32
    %153 = vector.broadcast %cst_62 : f32 to vector<8x128xf32>
    %154 = arith.addf %153, %152 : vector<8x128xf32>
    %155 = arith.mulf %144, %154 : vector<8x128xf32>
    %156 = arith.truncf %155 : vector<8x128xf32> to vector<8x128xbf16>
    %c256 = arith.constant 256 : index
    %c0_63 = arith.constant 0 : index
    %157 = vector.load %arg1[%c256, %c0_63] : memref<2048x64xbf16, #tpu.memory_space<vmem>>, vector<128x64xbf16>
    %cst_64 = arith.constant dense<0.000000e+00> : vector<8x64xf32>
    %158 = tpu.matmul %156, %157, %cst_64 {dimension_numbers = #tpu.dot_dimension_numbers<[1], [0], [0], [1], [0, 0, 1, 1], [], []>} : vector<8x128xbf16>, vector<128x64xbf16>, vector<8x64xf32> -> vector<8x64xf32>
    %c10 = arith.constant 10 : index
    %c0_65 = arith.constant 0 : index
    %159 = vector.load %arg3[%c10, %c0_65] : memref<52x64xf32, #tpu.memory_space<vmem>>, vector<1x64xf32>
    %160 = vector.broadcast %159 : vector<1x64xf32> to vector<8x64xf32>
    %161 = arith.addf %158, %160 : vector<8x64xf32>
    %162 = arith.addf %136, %161 : vector<8x64xf32>
    %cst_66 = arith.constant dense<0.000000e+00> : vector<8xf32>
    %163 = vector.multi_reduction <add>, %162, %cst_66 [1] : vector<8x64xf32> to vector<8xf32>
    %164 = vector.shape_cast %163 : vector<8xf32> to vector<8x1xf32>
    %cst_67 = arith.constant 6.400000e+01 : f32
    %165 = vector.broadcast %cst_67 : f32 to vector<8x1xf32>
    %166 = arith.divf %164, %165 : vector<8x1xf32>
    %167 = vector.broadcast %166 : vector<8x1xf32> to vector<8x64xf32>
    %168 = arith.subf %162, %167 : vector<8x64xf32>
    %169 = arith.mulf %168, %168 : vector<8x64xf32>
    %cst_68 = arith.constant dense<0.000000e+00> : vector<8xf32>
    %170 = vector.multi_reduction <add>, %169, %cst_68 [1] : vector<8x64xf32> to vector<8xf32>
    %171 = vector.shape_cast %170 : vector<8xf32> to vector<8x1xf32>
    %cst_69 = arith.constant 6.400000e+01 : f32
    %172 = vector.broadcast %cst_69 : f32 to vector<8x1xf32>
    %173 = arith.divf %171, %172 : vector<8x1xf32>
    %cst_70 = arith.constant 9.99999974E-6 : f32
    %174 = vector.broadcast %cst_70 : f32 to vector<8x1xf32>
    %175 = arith.addf %173, %174 : vector<8x1xf32>
    %176 = math.rsqrt %175 : vector<8x1xf32>
    %177 = vector.broadcast %176 : vector<8x1xf32> to vector<8x64xf32>
    %178 = arith.mulf %168, %177 : vector<8x64xf32>
    %c11 = arith.constant 11 : index
    %c0_71 = arith.constant 0 : index
    %179 = vector.load %arg3[%c11, %c0_71] : memref<52x64xf32, #tpu.memory_space<vmem>>, vector<1x64xf32>
    %180 = vector.broadcast %179 : vector<1x64xf32> to vector<8x64xf32>
    %181 = arith.mulf %178, %180 : vector<8x64xf32>
    %c12 = arith.constant 12 : index
    %c0_72 = arith.constant 0 : index
    %182 = vector.load %arg3[%c12, %c0_72] : memref<52x64xf32, #tpu.memory_space<vmem>>, vector<1x64xf32>
    %183 = vector.broadcast %182 : vector<1x64xf32> to vector<8x64xf32>
    %184 = arith.addf %181, %183 : vector<8x64xf32>
    %185 = arith.truncf %184 : vector<8x64xf32> to vector<8x64xbf16>
    %c384 = arith.constant 384 : index
    %c0_73 = arith.constant 0 : index
    %186 = vector.load %arg1[%c384, %c0_73] : memref<2048x64xbf16, #tpu.memory_space<vmem>>, vector<64x64xbf16>
    %cst_74 = arith.constant dense<0.000000e+00> : vector<8x64xf32>
    %187 = tpu.matmul %185, %186, %cst_74 {dimension_numbers = #tpu.dot_dimension_numbers<[1], [0], [0], [1], [0, 0, 1, 1], [], []>} : vector<8x64xbf16>, vector<64x64xbf16>, vector<8x64xf32> -> vector<8x64xf32>
    %c13 = arith.constant 13 : index
    %c0_75 = arith.constant 0 : index
    %188 = vector.load %arg3[%c13, %c0_75] : memref<52x64xf32, #tpu.memory_space<vmem>>, vector<1x64xf32>
    %189 = vector.broadcast %188 : vector<1x64xf32> to vector<8x64xf32>
    %190 = arith.addf %187, %189 : vector<8x64xf32>
    %cst_76 = arith.constant 2.500000e-01 : f32
    %191 = vector.broadcast %cst_76 : f32 to vector<8x64xf32>
    %192 = arith.mulf %190, %191 : vector<8x64xf32>
    %193 = arith.truncf %184 : vector<8x64xf32> to vector<8x64xbf16>
    %c448 = arith.constant 448 : index
    %c0_77 = arith.constant 0 : index
    %194 = vector.load %arg1[%c448, %c0_77] : memref<2048x64xbf16, #tpu.memory_space<vmem>>, vector<64x64xbf16>
    %cst_78 = arith.constant dense<0.000000e+00> : vector<8x64xf32>
    %195 = tpu.matmul %193, %194, %cst_78 {dimension_numbers = #tpu.dot_dimension_numbers<[1], [0], [0], [1], [0, 0, 1, 1], [], []>} : vector<8x64xbf16>, vector<64x64xbf16>, vector<8x64xf32> -> vector<8x64xf32>
    %c14 = arith.constant 14 : index
    %c0_79 = arith.constant 0 : index
    %196 = vector.load %arg3[%c14, %c0_79] : memref<52x64xf32, #tpu.memory_space<vmem>>, vector<1x64xf32>
    %197 = vector.broadcast %196 : vector<1x64xf32> to vector<8x64xf32>
    %198 = arith.addf %195, %197 : vector<8x64xf32>
    %199 = arith.truncf %184 : vector<8x64xf32> to vector<8x64xbf16>
    %c512 = arith.constant 512 : index
    %c0_80 = arith.constant 0 : index
    %200 = vector.load %arg1[%c512, %c0_80] : memref<2048x64xbf16, #tpu.memory_space<vmem>>, vector<64x64xbf16>
    %cst_81 = arith.constant dense<0.000000e+00> : vector<8x64xf32>
    %201 = tpu.matmul %199, %200, %cst_81 {dimension_numbers = #tpu.dot_dimension_numbers<[1], [0], [0], [1], [0, 0, 1, 1], [], []>} : vector<8x64xbf16>, vector<64x64xbf16>, vector<8x64xf32> -> vector<8x64xf32>
    %c15 = arith.constant 15 : index
    %c0_82 = arith.constant 0 : index
    %202 = vector.load %arg3[%c15, %c0_82] : memref<52x64xf32, #tpu.memory_space<vmem>>, vector<1x64xf32>
    %203 = vector.broadcast %202 : vector<1x64xf32> to vector<8x64xf32>
    %204 = arith.addf %201, %203 : vector<8x64xf32>
    %205 = vector.extract_strided_slice %192 {offsets = [0, 0], sizes = [8, 16], strides = [1, 1]} : vector<8x64xf32> to vector<8x16xf32>
    %206 = vector.extract_strided_slice %198 {offsets = [0, 0], sizes = [8, 16], strides = [1, 1]} : vector<8x64xf32> to vector<8x16xf32>
    %cst_83 = arith.constant dense<0.000000e+00> : vector<8x8xf32>
    %207 = tpu.matmul %205, %206, %cst_83 {dimension_numbers = #tpu.dot_dimension_numbers<[1], [1], [0], [0], [0, 0, 1, 0], [], []>} : vector<8x16xf32>, vector<8x16xf32>, vector<8x8xf32> -> vector<8x8xf32>
    %208 = vector.extract_strided_slice %192 {offsets = [0, 16], sizes = [8, 16], strides = [1, 1]} : vector<8x64xf32> to vector<8x16xf32>
    %209 = vector.extract_strided_slice %198 {offsets = [0, 16], sizes = [8, 16], strides = [1, 1]} : vector<8x64xf32> to vector<8x16xf32>
    %cst_84 = arith.constant dense<0.000000e+00> : vector<8x8xf32>
    %210 = tpu.matmul %208, %209, %cst_84 {dimension_numbers = #tpu.dot_dimension_numbers<[1], [1], [0], [0], [0, 0, 1, 0], [], []>} : vector<8x16xf32>, vector<8x16xf32>, vector<8x8xf32> -> vector<8x8xf32>
    %211 = vector.extract_strided_slice %192 {offsets = [0, 32], sizes = [8, 16], strides = [1, 1]} : vector<8x64xf32> to vector<8x16xf32>
    %212 = vector.extract_strided_slice %198 {offsets = [0, 32], sizes = [8, 16], strides = [1, 1]} : vector<8x64xf32> to vector<8x16xf32>
    %cst_85 = arith.constant dense<0.000000e+00> : vector<8x8xf32>
    %213 = tpu.matmul %211, %212, %cst_85 {dimension_numbers = #tpu.dot_dimension_numbers<[1], [1], [0], [0], [0, 0, 1, 0], [], []>} : vector<8x16xf32>, vector<8x16xf32>, vector<8x8xf32> -> vector<8x8xf32>
    %214 = vector.extract_strided_slice %192 {offsets = [0, 48], sizes = [8, 16], strides = [1, 1]} : vector<8x64xf32> to vector<8x16xf32>
    %215 = vector.extract_strided_slice %198 {offsets = [0, 48], sizes = [8, 16], strides = [1, 1]} : vector<8x64xf32> to vector<8x16xf32>
    %cst_86 = arith.constant dense<0.000000e+00> : vector<8x8xf32>
    %216 = tpu.matmul %214, %215, %cst_86 {dimension_numbers = #tpu.dot_dimension_numbers<[1], [1], [0], [0], [0, 0, 1, 0], [], []>} : vector<8x16xf32>, vector<8x16xf32>, vector<8x8xf32> -> vector<8x8xf32>
    %217 = tpu.concatenate %207, %210, %213, %216 in 0 : vector<8x8xf32>, vector<8x8xf32>, vector<8x8xf32>, vector<8x8xf32> -> vector<32x8xf32>
    %218 = vector.broadcast %5 : vector<1x8xf32> to vector<32x8xf32>
    %219 = arith.addf %217, %218 : vector<32x8xf32>
    %cst_87 = arith.constant dense<0xFF800000> : vector<32xf32>
    %220 = vector.multi_reduction <maximumf>, %219, %cst_87 [1] : vector<32x8xf32> to vector<32xf32>
    %221 = vector.shape_cast %220 : vector<32xf32> to vector<32x1xf32>
    %222 = vector.broadcast %221 : vector<32x1xf32> to vector<32x8xf32>
    %223 = arith.subf %219, %222 : vector<32x8xf32>
    %224 = math.exp %223 : vector<32x8xf32>
    %cst_88 = arith.constant dense<0.000000e+00> : vector<32xf32>
    %225 = vector.multi_reduction <add>, %224, %cst_88 [1] : vector<32x8xf32> to vector<32xf32>
    %226 = vector.shape_cast %225 : vector<32xf32> to vector<32x1xf32>
    %227 = tpu.reciprocal %226 {approx = true} : vector<32x1xf32> -> vector<32x1xf32>
    %228 = vector.broadcast %227 : vector<32x1xf32> to vector<32x8xf32>
    %229 = arith.mulf %224, %228 : vector<32x8xf32>
    %cst_89 = arith.constant 0.000000e+00 : f32
    %230 = vector.broadcast %cst_89 : f32 to vector<8x64xf32>
    %231 = vector.extract_strided_slice %229 {offsets = [0, 0], sizes = [8, 8], strides = [1, 1]} : vector<32x8xf32> to vector<8x8xf32>
    %232 = vector.extract_strided_slice %204 {offsets = [0, 0], sizes = [8, 16], strides = [1, 1]} : vector<8x64xf32> to vector<8x16xf32>
    %cst_90 = arith.constant dense<0.000000e+00> : vector<8x16xf32>
    %233 = tpu.matmul %231, %232, %cst_90 {dimension_numbers = #tpu.dot_dimension_numbers<[1], [0], [0], [1], [0, 0, 1, 1], [], []>} : vector<8x8xf32>, vector<8x16xf32>, vector<8x16xf32> -> vector<8x16xf32>
    %c576 = arith.constant 576 : index
    %c0_91 = arith.constant 0 : index
    %234 = vector.load %arg1[%c576, %c0_91] : memref<2048x64xbf16, #tpu.memory_space<vmem>>, vector<16x64xbf16>
    %235 = arith.truncf %233 : vector<8x16xf32> to vector<8x16xbf16>
    %cst_92 = arith.constant dense<0.000000e+00> : vector<8x64xf32>
    %236 = tpu.matmul %235, %234, %cst_92 {dimension_numbers = #tpu.dot_dimension_numbers<[1], [0], [0], [1], [0, 0, 1, 1], [], []>} : vector<8x16xbf16>, vector<16x64xbf16>, vector<8x64xf32> -> vector<8x64xf32>
    %237 = arith.addf %230, %236 : vector<8x64xf32>
    %238 = vector.extract_strided_slice %229 {offsets = [8, 0], sizes = [8, 8], strides = [1, 1]} : vector<32x8xf32> to vector<8x8xf32>
    %239 = vector.extract_strided_slice %204 {offsets = [0, 16], sizes = [8, 16], strides = [1, 1]} : vector<8x64xf32> to vector<8x16xf32>
    %cst_93 = arith.constant dense<0.000000e+00> : vector<8x16xf32>
    %240 = tpu.matmul %238, %239, %cst_93 {dimension_numbers = #tpu.dot_dimension_numbers<[1], [0], [0], [1], [0, 0, 1, 1], [], []>} : vector<8x8xf32>, vector<8x16xf32>, vector<8x16xf32> -> vector<8x16xf32>
    %c592 = arith.constant 592 : index
    %c0_94 = arith.constant 0 : index
    %241 = vector.load %arg1[%c592, %c0_94] : memref<2048x64xbf16, #tpu.memory_space<vmem>>, vector<16x64xbf16>
    %242 = arith.truncf %240 : vector<8x16xf32> to vector<8x16xbf16>
    %cst_95 = arith.constant dense<0.000000e+00> : vector<8x64xf32>
    %243 = tpu.matmul %242, %241, %cst_95 {dimension_numbers = #tpu.dot_dimension_numbers<[1], [0], [0], [1], [0, 0, 1, 1], [], []>} : vector<8x16xbf16>, vector<16x64xbf16>, vector<8x64xf32> -> vector<8x64xf32>
    %244 = arith.addf %237, %243 : vector<8x64xf32>
    %245 = vector.extract_strided_slice %229 {offsets = [16, 0], sizes = [8, 8], strides = [1, 1]} : vector<32x8xf32> to vector<8x8xf32>
    %246 = vector.extract_strided_slice %204 {offsets = [0, 32], sizes = [8, 16], strides = [1, 1]} : vector<8x64xf32> to vector<8x16xf32>
    %cst_96 = arith.constant dense<0.000000e+00> : vector<8x16xf32>
    %247 = tpu.matmul %245, %246, %cst_96 {dimension_numbers = #tpu.dot_dimension_numbers<[1], [0], [0], [1], [0, 0, 1, 1], [], []>} : vector<8x8xf32>, vector<8x16xf32>, vector<8x16xf32> -> vector<8x16xf32>
    %c608 = arith.constant 608 : index
    %c0_97 = arith.constant 0 : index
    %248 = vector.load %arg1[%c608, %c0_97] : memref<2048x64xbf16, #tpu.memory_space<vmem>>, vector<16x64xbf16>
    %249 = arith.truncf %247 : vector<8x16xf32> to vector<8x16xbf16>
    %cst_98 = arith.constant dense<0.000000e+00> : vector<8x64xf32>
    %250 = tpu.matmul %249, %248, %cst_98 {dimension_numbers = #tpu.dot_dimension_numbers<[1], [0], [0], [1], [0, 0, 1, 1], [], []>} : vector<8x16xbf16>, vector<16x64xbf16>, vector<8x64xf32> -> vector<8x64xf32>
    %251 = arith.addf %244, %250 : vector<8x64xf32>
    %252 = vector.extract_strided_slice %229 {offsets = [24, 0], sizes = [8, 8], strides = [1, 1]} : vector<32x8xf32> to vector<8x8xf32>
    %253 = vector.extract_strided_slice %204 {offsets = [0, 48], sizes = [8, 16], strides = [1, 1]} : vector<8x64xf32> to vector<8x16xf32>
    %cst_99 = arith.constant dense<0.000000e+00> : vector<8x16xf32>
    %254 = tpu.matmul %252, %253, %cst_99 {dimension_numbers = #tpu.dot_dimension_numbers<[1], [0], [0], [1], [0, 0, 1, 1], [], []>} : vector<8x8xf32>, vector<8x16xf32>, vector<8x16xf32> -> vector<8x16xf32>
    %c624 = arith.constant 624 : index
    %c0_100 = arith.constant 0 : index
    %255 = vector.load %arg1[%c624, %c0_100] : memref<2048x64xbf16, #tpu.memory_space<vmem>>, vector<16x64xbf16>
    %256 = arith.truncf %254 : vector<8x16xf32> to vector<8x16xbf16>
    %cst_101 = arith.constant dense<0.000000e+00> : vector<8x64xf32>
    %257 = tpu.matmul %256, %255, %cst_101 {dimension_numbers = #tpu.dot_dimension_numbers<[1], [0], [0], [1], [0, 0, 1, 1], [], []>} : vector<8x16xbf16>, vector<16x64xbf16>, vector<8x64xf32> -> vector<8x64xf32>
    %258 = arith.addf %251, %257 : vector<8x64xf32>
    %c16 = arith.constant 16 : index
    %c0_102 = arith.constant 0 : index
    %259 = vector.load %arg3[%c16, %c0_102] : memref<52x64xf32, #tpu.memory_space<vmem>>, vector<1x64xf32>
    %260 = vector.broadcast %259 : vector<1x64xf32> to vector<8x64xf32>
    %261 = arith.addf %258, %260 : vector<8x64xf32>
    %262 = arith.addf %184, %261 : vector<8x64xf32>
    %cst_103 = arith.constant dense<0.000000e+00> : vector<8xf32>
    %263 = vector.multi_reduction <add>, %262, %cst_103 [1] : vector<8x64xf32> to vector<8xf32>
    %264 = vector.shape_cast %263 : vector<8xf32> to vector<8x1xf32>
    %cst_104 = arith.constant 6.400000e+01 : f32
    %265 = vector.broadcast %cst_104 : f32 to vector<8x1xf32>
    %266 = arith.divf %264, %265 : vector<8x1xf32>
    %267 = vector.broadcast %266 : vector<8x1xf32> to vector<8x64xf32>
    %268 = arith.subf %262, %267 : vector<8x64xf32>
    %269 = arith.mulf %268, %268 : vector<8x64xf32>
    %cst_105 = arith.constant dense<0.000000e+00> : vector<8xf32>
    %270 = vector.multi_reduction <add>, %269, %cst_105 [1] : vector<8x64xf32> to vector<8xf32>
    %271 = vector.shape_cast %270 : vector<8xf32> to vector<8x1xf32>
    %cst_106 = arith.constant 6.400000e+01 : f32
    %272 = vector.broadcast %cst_106 : f32 to vector<8x1xf32>
    %273 = arith.divf %271, %272 : vector<8x1xf32>
    %cst_107 = arith.constant 9.99999974E-6 : f32
    %274 = vector.broadcast %cst_107 : f32 to vector<8x1xf32>
    %275 = arith.addf %273, %274 : vector<8x1xf32>
    %276 = math.rsqrt %275 : vector<8x1xf32>
    %277 = vector.broadcast %276 : vector<8x1xf32> to vector<8x64xf32>
    %278 = arith.mulf %268, %277 : vector<8x64xf32>
    %c17 = arith.constant 17 : index
    %c0_108 = arith.constant 0 : index
    %279 = vector.load %arg3[%c17, %c0_108] : memref<52x64xf32, #tpu.memory_space<vmem>>, vector<1x64xf32>
    %280 = vector.broadcast %279 : vector<1x64xf32> to vector<8x64xf32>
    %281 = arith.mulf %278, %280 : vector<8x64xf32>
    %c18 = arith.constant 18 : index
    %c0_109 = arith.constant 0 : index
    %282 = vector.load %arg3[%c18, %c0_109] : memref<52x64xf32, #tpu.memory_space<vmem>>, vector<1x64xf32>
    %283 = vector.broadcast %282 : vector<1x64xf32> to vector<8x64xf32>
    %284 = arith.addf %281, %283 : vector<8x64xf32>
    %285 = arith.truncf %284 : vector<8x64xf32> to vector<8x64xbf16>
    %c128_110 = arith.constant 128 : index
    %c0_111 = arith.constant 0 : index
    %286 = vector.load %arg2[%c128_110, %c0_111] : memref<320x128xbf16, #tpu.memory_space<vmem>>, vector<64x128xbf16>
    %cst_112 = arith.constant dense<0.000000e+00> : vector<8x128xf32>
    %287 = tpu.matmul %285, %286, %cst_112 {dimension_numbers = #tpu.dot_dimension_numbers<[1], [0], [0], [1], [0, 0, 1, 1], [], []>} : vector<8x64xbf16>, vector<64x128xbf16>, vector<8x128xf32> -> vector<8x128xf32>
    %c2 = arith.constant 2 : index
    %c0_113 = arith.constant 0 : index
    %288 = vector.load %arg4[%c2, %c0_113] : memref<5x128xf32, #tpu.memory_space<vmem>>, vector<1x128xf32>
    %289 = vector.broadcast %288 : vector<1x128xf32> to vector<8x128xf32>
    %290 = arith.addf %287, %289 : vector<8x128xf32>
    %cst_114 = arith.constant 5.000000e-01 : f32
    %291 = vector.broadcast %cst_114 : f32 to vector<8x128xf32>
    %292 = arith.mulf %291, %290 : vector<8x128xf32>
    %cst_115 = arith.constant 4.471500e-02 : f32
    %293 = vector.broadcast %cst_115 : f32 to vector<8x128xf32>
    %294 = arith.mulf %293, %290 : vector<8x128xf32>
    %295 = arith.mulf %294, %290 : vector<8x128xf32>
    %296 = arith.mulf %295, %290 : vector<8x128xf32>
    %297 = arith.addf %290, %296 : vector<8x128xf32>
    %cst_116 = arith.constant 0.797884583 : f32
    %298 = vector.broadcast %cst_116 : f32 to vector<8x128xf32>
    %299 = arith.mulf %298, %297 : vector<8x128xf32>
    %300 = math.tanh %299 : vector<8x128xf32>
    %cst_117 = arith.constant 1.000000e+00 : f32
    %301 = vector.broadcast %cst_117 : f32 to vector<8x128xf32>
    %302 = arith.addf %301, %300 : vector<8x128xf32>
    %303 = arith.mulf %292, %302 : vector<8x128xf32>
    %304 = arith.truncf %303 : vector<8x128xf32> to vector<8x128xbf16>
    %c640 = arith.constant 640 : index
    %c0_118 = arith.constant 0 : index
    %305 = vector.load %arg1[%c640, %c0_118] : memref<2048x64xbf16, #tpu.memory_space<vmem>>, vector<128x64xbf16>
    %cst_119 = arith.constant dense<0.000000e+00> : vector<8x64xf32>
    %306 = tpu.matmul %304, %305, %cst_119 {dimension_numbers = #tpu.dot_dimension_numbers<[1], [0], [0], [1], [0, 0, 1, 1], [], []>} : vector<8x128xbf16>, vector<128x64xbf16>, vector<8x64xf32> -> vector<8x64xf32>
    %c19 = arith.constant 19 : index
    %c0_120 = arith.constant 0 : index
    %307 = vector.load %arg3[%c19, %c0_120] : memref<52x64xf32, #tpu.memory_space<vmem>>, vector<1x64xf32>
    %308 = vector.broadcast %307 : vector<1x64xf32> to vector<8x64xf32>
    %309 = arith.addf %306, %308 : vector<8x64xf32>
    %310 = arith.addf %284, %309 : vector<8x64xf32>
    %cst_121 = arith.constant dense<0.000000e+00> : vector<8xf32>
    %311 = vector.multi_reduction <add>, %310, %cst_121 [1] : vector<8x64xf32> to vector<8xf32>
    %312 = vector.shape_cast %311 : vector<8xf32> to vector<8x1xf32>
    %cst_122 = arith.constant 6.400000e+01 : f32
    %313 = vector.broadcast %cst_122 : f32 to vector<8x1xf32>
    %314 = arith.divf %312, %313 : vector<8x1xf32>
    %315 = vector.broadcast %314 : vector<8x1xf32> to vector<8x64xf32>
    %316 = arith.subf %310, %315 : vector<8x64xf32>
    %317 = arith.mulf %316, %316 : vector<8x64xf32>
    %cst_123 = arith.constant dense<0.000000e+00> : vector<8xf32>
    %318 = vector.multi_reduction <add>, %317, %cst_123 [1] : vector<8x64xf32> to vector<8xf32>
    %319 = vector.shape_cast %318 : vector<8xf32> to vector<8x1xf32>
    %cst_124 = arith.constant 6.400000e+01 : f32
    %320 = vector.broadcast %cst_124 : f32 to vector<8x1xf32>
    %321 = arith.divf %319, %320 : vector<8x1xf32>
    %cst_125 = arith.constant 9.99999974E-6 : f32
    %322 = vector.broadcast %cst_125 : f32 to vector<8x1xf32>
    %323 = arith.addf %321, %322 : vector<8x1xf32>
    %324 = math.rsqrt %323 : vector<8x1xf32>
    %325 = vector.broadcast %324 : vector<8x1xf32> to vector<8x64xf32>
    %326 = arith.mulf %316, %325 : vector<8x64xf32>
    %c20 = arith.constant 20 : index
    %c0_126 = arith.constant 0 : index
    %327 = vector.load %arg3[%c20, %c0_126] : memref<52x64xf32, #tpu.memory_space<vmem>>, vector<1x64xf32>
    %328 = vector.broadcast %327 : vector<1x64xf32> to vector<8x64xf32>
    %329 = arith.mulf %326, %328 : vector<8x64xf32>
    %c21 = arith.constant 21 : index
    %c0_127 = arith.constant 0 : index
    %330 = vector.load %arg3[%c21, %c0_127] : memref<52x64xf32, #tpu.memory_space<vmem>>, vector<1x64xf32>
    %331 = vector.broadcast %330 : vector<1x64xf32> to vector<8x64xf32>
    %332 = arith.addf %329, %331 : vector<8x64xf32>
    %c0_128 = arith.constant 0 : index
    %c0_129 = arith.constant 0 : index
    %c0_130 = arith.constant 0 : index
    %333 = vector.load %arg6[%c0_128, %c0_129, %c0_130] : memref<1x8x64xf32, #tpu.memory_space<vmem>>, vector<1x8x64xf32>
    %334 = vector.shape_cast %333 : vector<1x8x64xf32> to vector<8x64xf32>
    %cst_131 = arith.constant dense<0.000000e+00> : vector<8xf32>
    %335 = vector.multi_reduction <add>, %334, %cst_131 [1] : vector<8x64xf32> to vector<8xf32>
    %336 = vector.shape_cast %335 : vector<8xf32> to vector<8x1xf32>
    %cst_132 = arith.constant 6.400000e+01 : f32
    %337 = vector.broadcast %cst_132 : f32 to vector<8x1xf32>
    %338 = arith.divf %336, %337 : vector<8x1xf32>
    %339 = vector.broadcast %338 : vector<8x1xf32> to vector<8x64xf32>
    %340 = arith.subf %334, %339 : vector<8x64xf32>
    %341 = arith.mulf %340, %340 : vector<8x64xf32>
    %cst_133 = arith.constant dense<0.000000e+00> : vector<8xf32>
    %342 = vector.multi_reduction <add>, %341, %cst_133 [1] : vector<8x64xf32> to vector<8xf32>
    %343 = vector.shape_cast %342 : vector<8xf32> to vector<8x1xf32>
    %cst_134 = arith.constant 6.400000e+01 : f32
    %344 = vector.broadcast %cst_134 : f32 to vector<8x1xf32>
    %345 = arith.divf %343, %344 : vector<8x1xf32>
    %cst_135 = arith.constant 9.99999974E-6 : f32
    %346 = vector.broadcast %cst_135 : f32 to vector<8x1xf32>
    %347 = arith.addf %345, %346 : vector<8x1xf32>
    %348 = math.rsqrt %347 : vector<8x1xf32>
    %349 = vector.broadcast %348 : vector<8x1xf32> to vector<8x64xf32>
    %350 = arith.mulf %340, %349 : vector<8x64xf32>
    %c2_136 = arith.constant 2 : index
    %c0_137 = arith.constant 0 : index
    %351 = vector.load %arg3[%c2_136, %c0_137] : memref<52x64xf32, #tpu.memory_space<vmem>>, vector<1x64xf32>
    %352 = vector.broadcast %351 : vector<1x64xf32> to vector<8x64xf32>
    %353 = arith.mulf %350, %352 : vector<8x64xf32>
    %c3 = arith.constant 3 : index
    %c0_138 = arith.constant 0 : index
    %354 = vector.load %arg3[%c3, %c0_138] : memref<52x64xf32, #tpu.memory_space<vmem>>, vector<1x64xf32>
    %355 = vector.broadcast %354 : vector<1x64xf32> to vector<8x64xf32>
    %356 = arith.addf %353, %355 : vector<8x64xf32>
    %357 = arith.truncf %356 : vector<8x64xf32> to vector<8x64xbf16>
    %c768 = arith.constant 768 : index
    %c0_139 = arith.constant 0 : index
    %358 = vector.load %arg1[%c768, %c0_139] : memref<2048x64xbf16, #tpu.memory_space<vmem>>, vector<64x64xbf16>
    %cst_140 = arith.constant dense<0.000000e+00> : vector<8x64xf32>
    %359 = tpu.matmul %357, %358, %cst_140 {dimension_numbers = #tpu.dot_dimension_numbers<[1], [0], [0], [1], [0, 0, 1, 1], [], []>} : vector<8x64xbf16>, vector<64x64xbf16>, vector<8x64xf32> -> vector<8x64xf32>
    %c22 = arith.constant 22 : index
    %c0_141 = arith.constant 0 : index
    %360 = vector.load %arg3[%c22, %c0_141] : memref<52x64xf32, #tpu.memory_space<vmem>>, vector<1x64xf32>
    %361 = vector.broadcast %360 : vector<1x64xf32> to vector<8x64xf32>
    %362 = arith.addf %359, %361 : vector<8x64xf32>
    %cst_142 = arith.constant 2.500000e-01 : f32
    %363 = vector.broadcast %cst_142 : f32 to vector<8x64xf32>
    %364 = arith.mulf %362, %363 : vector<8x64xf32>
    %365 = arith.truncf %356 : vector<8x64xf32> to vector<8x64xbf16>
    %c832 = arith.constant 832 : index
    %c0_143 = arith.constant 0 : index
    %366 = vector.load %arg1[%c832, %c0_143] : memref<2048x64xbf16, #tpu.memory_space<vmem>>, vector<64x64xbf16>
    %cst_144 = arith.constant dense<0.000000e+00> : vector<8x64xf32>
    %367 = tpu.matmul %365, %366, %cst_144 {dimension_numbers = #tpu.dot_dimension_numbers<[1], [0], [0], [1], [0, 0, 1, 1], [], []>} : vector<8x64xbf16>, vector<64x64xbf16>, vector<8x64xf32> -> vector<8x64xf32>
    %c23 = arith.constant 23 : index
    %c0_145 = arith.constant 0 : index
    %368 = vector.load %arg3[%c23, %c0_145] : memref<52x64xf32, #tpu.memory_space<vmem>>, vector<1x64xf32>
    %369 = vector.broadcast %368 : vector<1x64xf32> to vector<8x64xf32>
    %370 = arith.addf %367, %369 : vector<8x64xf32>
    %371 = arith.truncf %356 : vector<8x64xf32> to vector<8x64xbf16>
    %c896 = arith.constant 896 : index
    %c0_146 = arith.constant 0 : index
    %372 = vector.load %arg1[%c896, %c0_146] : memref<2048x64xbf16, #tpu.memory_space<vmem>>, vector<64x64xbf16>
    %cst_147 = arith.constant dense<0.000000e+00> : vector<8x64xf32>
    %373 = tpu.matmul %371, %372, %cst_147 {dimension_numbers = #tpu.dot_dimension_numbers<[1], [0], [0], [1], [0, 0, 1, 1], [], []>} : vector<8x64xbf16>, vector<64x64xbf16>, vector<8x64xf32> -> vector<8x64xf32>
    %c24 = arith.constant 24 : index
    %c0_148 = arith.constant 0 : index
    %374 = vector.load %arg3[%c24, %c0_148] : memref<52x64xf32, #tpu.memory_space<vmem>>, vector<1x64xf32>
    %375 = vector.broadcast %374 : vector<1x64xf32> to vector<8x64xf32>
    %376 = arith.addf %373, %375 : vector<8x64xf32>
    %377 = vector.extract_strided_slice %364 {offsets = [0, 0], sizes = [8, 16], strides = [1, 1]} : vector<8x64xf32> to vector<8x16xf32>
    %378 = vector.extract_strided_slice %370 {offsets = [0, 0], sizes = [8, 16], strides = [1, 1]} : vector<8x64xf32> to vector<8x16xf32>
    %cst_149 = arith.constant dense<0.000000e+00> : vector<8x8xf32>
    %379 = tpu.matmul %377, %378, %cst_149 {dimension_numbers = #tpu.dot_dimension_numbers<[1], [1], [0], [0], [0, 0, 1, 0], [], []>} : vector<8x16xf32>, vector<8x16xf32>, vector<8x8xf32> -> vector<8x8xf32>
    %380 = vector.extract_strided_slice %364 {offsets = [0, 16], sizes = [8, 16], strides = [1, 1]} : vector<8x64xf32> to vector<8x16xf32>
    %381 = vector.extract_strided_slice %370 {offsets = [0, 16], sizes = [8, 16], strides = [1, 1]} : vector<8x64xf32> to vector<8x16xf32>
    %cst_150 = arith.constant dense<0.000000e+00> : vector<8x8xf32>
    %382 = tpu.matmul %380, %381, %cst_150 {dimension_numbers = #tpu.dot_dimension_numbers<[1], [1], [0], [0], [0, 0, 1, 0], [], []>} : vector<8x16xf32>, vector<8x16xf32>, vector<8x8xf32> -> vector<8x8xf32>
    %383 = vector.extract_strided_slice %364 {offsets = [0, 32], sizes = [8, 16], strides = [1, 1]} : vector<8x64xf32> to vector<8x16xf32>
    %384 = vector.extract_strided_slice %370 {offsets = [0, 32], sizes = [8, 16], strides = [1, 1]} : vector<8x64xf32> to vector<8x16xf32>
    %cst_151 = arith.constant dense<0.000000e+00> : vector<8x8xf32>
    %385 = tpu.matmul %383, %384, %cst_151 {dimension_numbers = #tpu.dot_dimension_numbers<[1], [1], [0], [0], [0, 0, 1, 0], [], []>} : vector<8x16xf32>, vector<8x16xf32>, vector<8x8xf32> -> vector<8x8xf32>
    %386 = vector.extract_strided_slice %364 {offsets = [0, 48], sizes = [8, 16], strides = [1, 1]} : vector<8x64xf32> to vector<8x16xf32>
    %387 = vector.extract_strided_slice %370 {offsets = [0, 48], sizes = [8, 16], strides = [1, 1]} : vector<8x64xf32> to vector<8x16xf32>
    %cst_152 = arith.constant dense<0.000000e+00> : vector<8x8xf32>
    %388 = tpu.matmul %386, %387, %cst_152 {dimension_numbers = #tpu.dot_dimension_numbers<[1], [1], [0], [0], [0, 0, 1, 0], [], []>} : vector<8x16xf32>, vector<8x16xf32>, vector<8x8xf32> -> vector<8x8xf32>
    %389 = tpu.concatenate %379, %382, %385, %388 in 0 : vector<8x8xf32>, vector<8x8xf32>, vector<8x8xf32>, vector<8x8xf32> -> vector<32x8xf32>
    %390 = arith.addf %389, %12 : vector<32x8xf32>
    %cst_153 = arith.constant dense<0xFF800000> : vector<32xf32>
    %391 = vector.multi_reduction <maximumf>, %390, %cst_153 [1] : vector<32x8xf32> to vector<32xf32>
    %392 = vector.shape_cast %391 : vector<32xf32> to vector<32x1xf32>
    %393 = vector.broadcast %392 : vector<32x1xf32> to vector<32x8xf32>
    %394 = arith.subf %390, %393 : vector<32x8xf32>
    %395 = math.exp %394 : vector<32x8xf32>
    %cst_154 = arith.constant dense<0.000000e+00> : vector<32xf32>
    %396 = vector.multi_reduction <add>, %395, %cst_154 [1] : vector<32x8xf32> to vector<32xf32>
    %397 = vector.shape_cast %396 : vector<32xf32> to vector<32x1xf32>
    %398 = tpu.reciprocal %397 {approx = true} : vector<32x1xf32> -> vector<32x1xf32>
    %399 = vector.broadcast %398 : vector<32x1xf32> to vector<32x8xf32>
    %400 = arith.mulf %395, %399 : vector<32x8xf32>
    %cst_155 = arith.constant 0.000000e+00 : f32
    %401 = vector.broadcast %cst_155 : f32 to vector<8x64xf32>
    %402 = vector.extract_strided_slice %400 {offsets = [0, 0], sizes = [8, 8], strides = [1, 1]} : vector<32x8xf32> to vector<8x8xf32>
    %403 = vector.extract_strided_slice %376 {offsets = [0, 0], sizes = [8, 16], strides = [1, 1]} : vector<8x64xf32> to vector<8x16xf32>
    %cst_156 = arith.constant dense<0.000000e+00> : vector<8x16xf32>
    %404 = tpu.matmul %402, %403, %cst_156 {dimension_numbers = #tpu.dot_dimension_numbers<[1], [0], [0], [1], [0, 0, 1, 1], [], []>} : vector<8x8xf32>, vector<8x16xf32>, vector<8x16xf32> -> vector<8x16xf32>
    %c960 = arith.constant 960 : index
    %c0_157 = arith.constant 0 : index
    %405 = vector.load %arg1[%c960, %c0_157] : memref<2048x64xbf16, #tpu.memory_space<vmem>>, vector<16x64xbf16>
    %406 = arith.truncf %404 : vector<8x16xf32> to vector<8x16xbf16>
    %cst_158 = arith.constant dense<0.000000e+00> : vector<8x64xf32>
    %407 = tpu.matmul %406, %405, %cst_158 {dimension_numbers = #tpu.dot_dimension_numbers<[1], [0], [0], [1], [0, 0, 1, 1], [], []>} : vector<8x16xbf16>, vector<16x64xbf16>, vector<8x64xf32> -> vector<8x64xf32>
    %408 = arith.addf %401, %407 : vector<8x64xf32>
    %409 = vector.extract_strided_slice %400 {offsets = [8, 0], sizes = [8, 8], strides = [1, 1]} : vector<32x8xf32> to vector<8x8xf32>
    %410 = vector.extract_strided_slice %376 {offsets = [0, 16], sizes = [8, 16], strides = [1, 1]} : vector<8x64xf32> to vector<8x16xf32>
    %cst_159 = arith.constant dense<0.000000e+00> : vector<8x16xf32>
    %411 = tpu.matmul %409, %410, %cst_159 {dimension_numbers = #tpu.dot_dimension_numbers<[1], [0], [0], [1], [0, 0, 1, 1], [], []>} : vector<8x8xf32>, vector<8x16xf32>, vector<8x16xf32> -> vector<8x16xf32>
    %c976 = arith.constant 976 : index
    %c0_160 = arith.constant 0 : index
    %412 = vector.load %arg1[%c976, %c0_160] : memref<2048x64xbf16, #tpu.memory_space<vmem>>, vector<16x64xbf16>
    %413 = arith.truncf %411 : vector<8x16xf32> to vector<8x16xbf16>
    %cst_161 = arith.constant dense<0.000000e+00> : vector<8x64xf32>
    %414 = tpu.matmul %413, %412, %cst_161 {dimension_numbers = #tpu.dot_dimension_numbers<[1], [0], [0], [1], [0, 0, 1, 1], [], []>} : vector<8x16xbf16>, vector<16x64xbf16>, vector<8x64xf32> -> vector<8x64xf32>
    %415 = arith.addf %408, %414 : vector<8x64xf32>
    %416 = vector.extract_strided_slice %400 {offsets = [16, 0], sizes = [8, 8], strides = [1, 1]} : vector<32x8xf32> to vector<8x8xf32>
    %417 = vector.extract_strided_slice %376 {offsets = [0, 32], sizes = [8, 16], strides = [1, 1]} : vector<8x64xf32> to vector<8x16xf32>
    %cst_162 = arith.constant dense<0.000000e+00> : vector<8x16xf32>
    %418 = tpu.matmul %416, %417, %cst_162 {dimension_numbers = #tpu.dot_dimension_numbers<[1], [0], [0], [1], [0, 0, 1, 1], [], []>} : vector<8x8xf32>, vector<8x16xf32>, vector<8x16xf32> -> vector<8x16xf32>
    %c992 = arith.constant 992 : index
    %c0_163 = arith.constant 0 : index
    %419 = vector.load %arg1[%c992, %c0_163] : memref<2048x64xbf16, #tpu.memory_space<vmem>>, vector<16x64xbf16>
    %420 = arith.truncf %418 : vector<8x16xf32> to vector<8x16xbf16>
    %cst_164 = arith.constant dense<0.000000e+00> : vector<8x64xf32>
    %421 = tpu.matmul %420, %419, %cst_164 {dimension_numbers = #tpu.dot_dimension_numbers<[1], [0], [0], [1], [0, 0, 1, 1], [], []>} : vector<8x16xbf16>, vector<16x64xbf16>, vector<8x64xf32> -> vector<8x64xf32>
    %422 = arith.addf %415, %421 : vector<8x64xf32>
    %423 = vector.extract_strided_slice %400 {offsets = [24, 0], sizes = [8, 8], strides = [1, 1]} : vector<32x8xf32> to vector<8x8xf32>
    %424 = vector.extract_strided_slice %376 {offsets = [0, 48], sizes = [8, 16], strides = [1, 1]} : vector<8x64xf32> to vector<8x16xf32>
    %cst_165 = arith.constant dense<0.000000e+00> : vector<8x16xf32>
    %425 = tpu.matmul %423, %424, %cst_165 {dimension_numbers = #tpu.dot_dimension_numbers<[1], [0], [0], [1], [0, 0, 1, 1], [], []>} : vector<8x8xf32>, vector<8x16xf32>, vector<8x16xf32> -> vector<8x16xf32>
    %c1008 = arith.constant 1008 : index
    %c0_166 = arith.constant 0 : index
    %426 = vector.load %arg1[%c1008, %c0_166] : memref<2048x64xbf16, #tpu.memory_space<vmem>>, vector<16x64xbf16>
    %427 = arith.truncf %425 : vector<8x16xf32> to vector<8x16xbf16>
    %cst_167 = arith.constant dense<0.000000e+00> : vector<8x64xf32>
    %428 = tpu.matmul %427, %426, %cst_167 {dimension_numbers = #tpu.dot_dimension_numbers<[1], [0], [0], [1], [0, 0, 1, 1], [], []>} : vector<8x16xbf16>, vector<16x64xbf16>, vector<8x64xf32> -> vector<8x64xf32>
    %429 = arith.addf %422, %428 : vector<8x64xf32>
    %c25 = arith.constant 25 : index
    %c0_168 = arith.constant 0 : index
    %430 = vector.load %arg3[%c25, %c0_168] : memref<52x64xf32, #tpu.memory_space<vmem>>, vector<1x64xf32>
    %431 = vector.broadcast %430 : vector<1x64xf32> to vector<8x64xf32>
    %432 = arith.addf %429, %431 : vector<8x64xf32>
    %433 = arith.addf %356, %432 : vector<8x64xf32>
    %cst_169 = arith.constant dense<0.000000e+00> : vector<8xf32>
    %434 = vector.multi_reduction <add>, %433, %cst_169 [1] : vector<8x64xf32> to vector<8xf32>
    %435 = vector.shape_cast %434 : vector<8xf32> to vector<8x1xf32>
    %cst_170 = arith.constant 6.400000e+01 : f32
    %436 = vector.broadcast %cst_170 : f32 to vector<8x1xf32>
    %437 = arith.divf %435, %436 : vector<8x1xf32>
    %438 = vector.broadcast %437 : vector<8x1xf32> to vector<8x64xf32>
    %439 = arith.subf %433, %438 : vector<8x64xf32>
    %440 = arith.mulf %439, %439 : vector<8x64xf32>
    %cst_171 = arith.constant dense<0.000000e+00> : vector<8xf32>
    %441 = vector.multi_reduction <add>, %440, %cst_171 [1] : vector<8x64xf32> to vector<8xf32>
    %442 = vector.shape_cast %441 : vector<8xf32> to vector<8x1xf32>
    %cst_172 = arith.constant 6.400000e+01 : f32
    %443 = vector.broadcast %cst_172 : f32 to vector<8x1xf32>
    %444 = arith.divf %442, %443 : vector<8x1xf32>
    %cst_173 = arith.constant 9.99999974E-6 : f32
    %445 = vector.broadcast %cst_173 : f32 to vector<8x1xf32>
    %446 = arith.addf %444, %445 : vector<8x1xf32>
    %447 = math.rsqrt %446 : vector<8x1xf32>
    %448 = vector.broadcast %447 : vector<8x1xf32> to vector<8x64xf32>
    %449 = arith.mulf %439, %448 : vector<8x64xf32>
    %c30 = arith.constant 30 : index
    %c0_174 = arith.constant 0 : index
    %450 = vector.load %arg3[%c30, %c0_174] : memref<52x64xf32, #tpu.memory_space<vmem>>, vector<1x64xf32>
    %451 = vector.broadcast %450 : vector<1x64xf32> to vector<8x64xf32>
    %452 = arith.mulf %449, %451 : vector<8x64xf32>
    %c31 = arith.constant 31 : index
    %c0_175 = arith.constant 0 : index
    %453 = vector.load %arg3[%c31, %c0_175] : memref<52x64xf32, #tpu.memory_space<vmem>>, vector<1x64xf32>
    %454 = vector.broadcast %453 : vector<1x64xf32> to vector<8x64xf32>
    %455 = arith.addf %452, %454 : vector<8x64xf32>
    %456 = arith.truncf %455 : vector<8x64xf32> to vector<8x64xbf16>
    %c1024 = arith.constant 1024 : index
    %c0_176 = arith.constant 0 : index
    %457 = vector.load %arg1[%c1024, %c0_176] : memref<2048x64xbf16, #tpu.memory_space<vmem>>, vector<64x64xbf16>
    %cst_177 = arith.constant dense<0.000000e+00> : vector<8x64xf32>
    %458 = tpu.matmul %456, %457, %cst_177 {dimension_numbers = #tpu.dot_dimension_numbers<[1], [0], [0], [1], [0, 0, 1, 1], [], []>} : vector<8x64xbf16>, vector<64x64xbf16>, vector<8x64xf32> -> vector<8x64xf32>
    %c26 = arith.constant 26 : index
    %c0_178 = arith.constant 0 : index
    %459 = vector.load %arg3[%c26, %c0_178] : memref<52x64xf32, #tpu.memory_space<vmem>>, vector<1x64xf32>
    %460 = vector.broadcast %459 : vector<1x64xf32> to vector<8x64xf32>
    %461 = arith.addf %458, %460 : vector<8x64xf32>
    %cst_179 = arith.constant 2.500000e-01 : f32
    %462 = vector.broadcast %cst_179 : f32 to vector<8x64xf32>
    %463 = arith.mulf %461, %462 : vector<8x64xf32>
    %464 = arith.truncf %332 : vector<8x64xf32> to vector<8x64xbf16>
    %c1088 = arith.constant 1088 : index
    %c0_180 = arith.constant 0 : index
    %465 = vector.load %arg1[%c1088, %c0_180] : memref<2048x64xbf16, #tpu.memory_space<vmem>>, vector<64x64xbf16>
    %cst_181 = arith.constant dense<0.000000e+00> : vector<8x64xf32>
    %466 = tpu.matmul %464, %465, %cst_181 {dimension_numbers = #tpu.dot_dimension_numbers<[1], [0], [0], [1], [0, 0, 1, 1], [], []>} : vector<8x64xbf16>, vector<64x64xbf16>, vector<8x64xf32> -> vector<8x64xf32>
    %c27 = arith.constant 27 : index
    %c0_182 = arith.constant 0 : index
    %467 = vector.load %arg3[%c27, %c0_182] : memref<52x64xf32, #tpu.memory_space<vmem>>, vector<1x64xf32>
    %468 = vector.broadcast %467 : vector<1x64xf32> to vector<8x64xf32>
    %469 = arith.addf %466, %468 : vector<8x64xf32>
    %470 = arith.truncf %332 : vector<8x64xf32> to vector<8x64xbf16>
    %c1152 = arith.constant 1152 : index
    %c0_183 = arith.constant 0 : index
    %471 = vector.load %arg1[%c1152, %c0_183] : memref<2048x64xbf16, #tpu.memory_space<vmem>>, vector<64x64xbf16>
    %cst_184 = arith.constant dense<0.000000e+00> : vector<8x64xf32>
    %472 = tpu.matmul %470, %471, %cst_184 {dimension_numbers = #tpu.dot_dimension_numbers<[1], [0], [0], [1], [0, 0, 1, 1], [], []>} : vector<8x64xbf16>, vector<64x64xbf16>, vector<8x64xf32> -> vector<8x64xf32>
    %c28 = arith.constant 28 : index
    %c0_185 = arith.constant 0 : index
    %473 = vector.load %arg3[%c28, %c0_185] : memref<52x64xf32, #tpu.memory_space<vmem>>, vector<1x64xf32>
    %474 = vector.broadcast %473 : vector<1x64xf32> to vector<8x64xf32>
    %475 = arith.addf %472, %474 : vector<8x64xf32>
    %476 = vector.extract_strided_slice %463 {offsets = [0, 0], sizes = [8, 16], strides = [1, 1]} : vector<8x64xf32> to vector<8x16xf32>
    %477 = vector.extract_strided_slice %469 {offsets = [0, 0], sizes = [8, 16], strides = [1, 1]} : vector<8x64xf32> to vector<8x16xf32>
    %cst_186 = arith.constant dense<0.000000e+00> : vector<8x8xf32>
    %478 = tpu.matmul %476, %477, %cst_186 {dimension_numbers = #tpu.dot_dimension_numbers<[1], [1], [0], [0], [0, 0, 1, 0], [], []>} : vector<8x16xf32>, vector<8x16xf32>, vector<8x8xf32> -> vector<8x8xf32>
    %479 = vector.extract_strided_slice %463 {offsets = [0, 16], sizes = [8, 16], strides = [1, 1]} : vector<8x64xf32> to vector<8x16xf32>
    %480 = vector.extract_strided_slice %469 {offsets = [0, 16], sizes = [8, 16], strides = [1, 1]} : vector<8x64xf32> to vector<8x16xf32>
    %cst_187 = arith.constant dense<0.000000e+00> : vector<8x8xf32>
    %481 = tpu.matmul %479, %480, %cst_187 {dimension_numbers = #tpu.dot_dimension_numbers<[1], [1], [0], [0], [0, 0, 1, 0], [], []>} : vector<8x16xf32>, vector<8x16xf32>, vector<8x8xf32> -> vector<8x8xf32>
    %482 = vector.extract_strided_slice %463 {offsets = [0, 32], sizes = [8, 16], strides = [1, 1]} : vector<8x64xf32> to vector<8x16xf32>
    %483 = vector.extract_strided_slice %469 {offsets = [0, 32], sizes = [8, 16], strides = [1, 1]} : vector<8x64xf32> to vector<8x16xf32>
    %cst_188 = arith.constant dense<0.000000e+00> : vector<8x8xf32>
    %484 = tpu.matmul %482, %483, %cst_188 {dimension_numbers = #tpu.dot_dimension_numbers<[1], [1], [0], [0], [0, 0, 1, 0], [], []>} : vector<8x16xf32>, vector<8x16xf32>, vector<8x8xf32> -> vector<8x8xf32>
    %485 = vector.extract_strided_slice %463 {offsets = [0, 48], sizes = [8, 16], strides = [1, 1]} : vector<8x64xf32> to vector<8x16xf32>
    %486 = vector.extract_strided_slice %469 {offsets = [0, 48], sizes = [8, 16], strides = [1, 1]} : vector<8x64xf32> to vector<8x16xf32>
    %cst_189 = arith.constant dense<0.000000e+00> : vector<8x8xf32>
    %487 = tpu.matmul %485, %486, %cst_189 {dimension_numbers = #tpu.dot_dimension_numbers<[1], [1], [0], [0], [0, 0, 1, 0], [], []>} : vector<8x16xf32>, vector<8x16xf32>, vector<8x8xf32> -> vector<8x8xf32>
    %488 = tpu.concatenate %478, %481, %484, %487 in 0 : vector<8x8xf32>, vector<8x8xf32>, vector<8x8xf32>, vector<8x8xf32> -> vector<32x8xf32>
    %489 = vector.broadcast %5 : vector<1x8xf32> to vector<32x8xf32>
    %490 = arith.addf %488, %489 : vector<32x8xf32>
    %cst_190 = arith.constant dense<0xFF800000> : vector<32xf32>
    %491 = vector.multi_reduction <maximumf>, %490, %cst_190 [1] : vector<32x8xf32> to vector<32xf32>
    %492 = vector.shape_cast %491 : vector<32xf32> to vector<32x1xf32>
    %493 = vector.broadcast %492 : vector<32x1xf32> to vector<32x8xf32>
    %494 = arith.subf %490, %493 : vector<32x8xf32>
    %495 = math.exp %494 : vector<32x8xf32>
    %cst_191 = arith.constant dense<0.000000e+00> : vector<32xf32>
    %496 = vector.multi_reduction <add>, %495, %cst_191 [1] : vector<32x8xf32> to vector<32xf32>
    %497 = vector.shape_cast %496 : vector<32xf32> to vector<32x1xf32>
    %498 = tpu.reciprocal %497 {approx = true} : vector<32x1xf32> -> vector<32x1xf32>
    %499 = vector.broadcast %498 : vector<32x1xf32> to vector<32x8xf32>
    %500 = arith.mulf %495, %499 : vector<32x8xf32>
    %cst_192 = arith.constant 0.000000e+00 : f32
    %501 = vector.broadcast %cst_192 : f32 to vector<8x64xf32>
    %502 = vector.extract_strided_slice %500 {offsets = [0, 0], sizes = [8, 8], strides = [1, 1]} : vector<32x8xf32> to vector<8x8xf32>
    %503 = vector.extract_strided_slice %475 {offsets = [0, 0], sizes = [8, 16], strides = [1, 1]} : vector<8x64xf32> to vector<8x16xf32>
    %cst_193 = arith.constant dense<0.000000e+00> : vector<8x16xf32>
    %504 = tpu.matmul %502, %503, %cst_193 {dimension_numbers = #tpu.dot_dimension_numbers<[1], [0], [0], [1], [0, 0, 1, 1], [], []>} : vector<8x8xf32>, vector<8x16xf32>, vector<8x16xf32> -> vector<8x16xf32>
    %c1216 = arith.constant 1216 : index
    %c0_194 = arith.constant 0 : index
    %505 = vector.load %arg1[%c1216, %c0_194] : memref<2048x64xbf16, #tpu.memory_space<vmem>>, vector<16x64xbf16>
    %506 = arith.truncf %504 : vector<8x16xf32> to vector<8x16xbf16>
    %cst_195 = arith.constant dense<0.000000e+00> : vector<8x64xf32>
    %507 = tpu.matmul %506, %505, %cst_195 {dimension_numbers = #tpu.dot_dimension_numbers<[1], [0], [0], [1], [0, 0, 1, 1], [], []>} : vector<8x16xbf16>, vector<16x64xbf16>, vector<8x64xf32> -> vector<8x64xf32>
    %508 = arith.addf %501, %507 : vector<8x64xf32>
    %509 = vector.extract_strided_slice %500 {offsets = [8, 0], sizes = [8, 8], strides = [1, 1]} : vector<32x8xf32> to vector<8x8xf32>
    %510 = vector.extract_strided_slice %475 {offsets = [0, 16], sizes = [8, 16], strides = [1, 1]} : vector<8x64xf32> to vector<8x16xf32>
    %cst_196 = arith.constant dense<0.000000e+00> : vector<8x16xf32>
    %511 = tpu.matmul %509, %510, %cst_196 {dimension_numbers = #tpu.dot_dimension_numbers<[1], [0], [0], [1], [0, 0, 1, 1], [], []>} : vector<8x8xf32>, vector<8x16xf32>, vector<8x16xf32> -> vector<8x16xf32>
    %c1232 = arith.constant 1232 : index
    %c0_197 = arith.constant 0 : index
    %512 = vector.load %arg1[%c1232, %c0_197] : memref<2048x64xbf16, #tpu.memory_space<vmem>>, vector<16x64xbf16>
    %513 = arith.truncf %511 : vector<8x16xf32> to vector<8x16xbf16>
    %cst_198 = arith.constant dense<0.000000e+00> : vector<8x64xf32>
    %514 = tpu.matmul %513, %512, %cst_198 {dimension_numbers = #tpu.dot_dimension_numbers<[1], [0], [0], [1], [0, 0, 1, 1], [], []>} : vector<8x16xbf16>, vector<16x64xbf16>, vector<8x64xf32> -> vector<8x64xf32>
    %515 = arith.addf %508, %514 : vector<8x64xf32>
    %516 = vector.extract_strided_slice %500 {offsets = [16, 0], sizes = [8, 8], strides = [1, 1]} : vector<32x8xf32> to vector<8x8xf32>
    %517 = vector.extract_strided_slice %475 {offsets = [0, 32], sizes = [8, 16], strides = [1, 1]} : vector<8x64xf32> to vector<8x16xf32>
    %cst_199 = arith.constant dense<0.000000e+00> : vector<8x16xf32>
    %518 = tpu.matmul %516, %517, %cst_199 {dimension_numbers = #tpu.dot_dimension_numbers<[1], [0], [0], [1], [0, 0, 1, 1], [], []>} : vector<8x8xf32>, vector<8x16xf32>, vector<8x16xf32> -> vector<8x16xf32>
    %c1248 = arith.constant 1248 : index
    %c0_200 = arith.constant 0 : index
    %519 = vector.load %arg1[%c1248, %c0_200] : memref<2048x64xbf16, #tpu.memory_space<vmem>>, vector<16x64xbf16>
    %520 = arith.truncf %518 : vector<8x16xf32> to vector<8x16xbf16>
    %cst_201 = arith.constant dense<0.000000e+00> : vector<8x64xf32>
    %521 = tpu.matmul %520, %519, %cst_201 {dimension_numbers = #tpu.dot_dimension_numbers<[1], [0], [0], [1], [0, 0, 1, 1], [], []>} : vector<8x16xbf16>, vector<16x64xbf16>, vector<8x64xf32> -> vector<8x64xf32>
    %522 = arith.addf %515, %521 : vector<8x64xf32>
    %523 = vector.extract_strided_slice %500 {offsets = [24, 0], sizes = [8, 8], strides = [1, 1]} : vector<32x8xf32> to vector<8x8xf32>
    %524 = vector.extract_strided_slice %475 {offsets = [0, 48], sizes = [8, 16], strides = [1, 1]} : vector<8x64xf32> to vector<8x16xf32>
    %cst_202 = arith.constant dense<0.000000e+00> : vector<8x16xf32>
    %525 = tpu.matmul %523, %524, %cst_202 {dimension_numbers = #tpu.dot_dimension_numbers<[1], [0], [0], [1], [0, 0, 1, 1], [], []>} : vector<8x8xf32>, vector<8x16xf32>, vector<8x16xf32> -> vector<8x16xf32>
    %c1264 = arith.constant 1264 : index
    %c0_203 = arith.constant 0 : index
    %526 = vector.load %arg1[%c1264, %c0_203] : memref<2048x64xbf16, #tpu.memory_space<vmem>>, vector<16x64xbf16>
    %527 = arith.truncf %525 : vector<8x16xf32> to vector<8x16xbf16>
    %cst_204 = arith.constant dense<0.000000e+00> : vector<8x64xf32>
    %528 = tpu.matmul %527, %526, %cst_204 {dimension_numbers = #tpu.dot_dimension_numbers<[1], [0], [0], [1], [0, 0, 1, 1], [], []>} : vector<8x16xbf16>, vector<16x64xbf16>, vector<8x64xf32> -> vector<8x64xf32>
    %529 = arith.addf %522, %528 : vector<8x64xf32>
    %c29 = arith.constant 29 : index
    %c0_205 = arith.constant 0 : index
    %530 = vector.load %arg3[%c29, %c0_205] : memref<52x64xf32, #tpu.memory_space<vmem>>, vector<1x64xf32>
    %531 = vector.broadcast %530 : vector<1x64xf32> to vector<8x64xf32>
    %532 = arith.addf %529, %531 : vector<8x64xf32>
    %533 = arith.addf %455, %532 : vector<8x64xf32>
    %cst_206 = arith.constant dense<0.000000e+00> : vector<8xf32>
    %534 = vector.multi_reduction <add>, %533, %cst_206 [1] : vector<8x64xf32> to vector<8xf32>
    %535 = vector.shape_cast %534 : vector<8xf32> to vector<8x1xf32>
    %cst_207 = arith.constant 6.400000e+01 : f32
    %536 = vector.broadcast %cst_207 : f32 to vector<8x1xf32>
    %537 = arith.divf %535, %536 : vector<8x1xf32>
    %538 = vector.broadcast %537 : vector<8x1xf32> to vector<8x64xf32>
    %539 = arith.subf %533, %538 : vector<8x64xf32>
    %540 = arith.mulf %539, %539 : vector<8x64xf32>
    %cst_208 = arith.constant dense<0.000000e+00> : vector<8xf32>
    %541 = vector.multi_reduction <add>, %540, %cst_208 [1] : vector<8x64xf32> to vector<8xf32>
    %542 = vector.shape_cast %541 : vector<8xf32> to vector<8x1xf32>
    %cst_209 = arith.constant 6.400000e+01 : f32
    %543 = vector.broadcast %cst_209 : f32 to vector<8x1xf32>
    %544 = arith.divf %542, %543 : vector<8x1xf32>
    %cst_210 = arith.constant 9.99999974E-6 : f32
    %545 = vector.broadcast %cst_210 : f32 to vector<8x1xf32>
    %546 = arith.addf %544, %545 : vector<8x1xf32>
    %547 = math.rsqrt %546 : vector<8x1xf32>
    %548 = vector.broadcast %547 : vector<8x1xf32> to vector<8x64xf32>
    %549 = arith.mulf %539, %548 : vector<8x64xf32>
    %c32 = arith.constant 32 : index
    %c0_211 = arith.constant 0 : index
    %550 = vector.load %arg3[%c32, %c0_211] : memref<52x64xf32, #tpu.memory_space<vmem>>, vector<1x64xf32>
    %551 = vector.broadcast %550 : vector<1x64xf32> to vector<8x64xf32>
    %552 = arith.mulf %549, %551 : vector<8x64xf32>
    %c33 = arith.constant 33 : index
    %c0_212 = arith.constant 0 : index
    %553 = vector.load %arg3[%c33, %c0_212] : memref<52x64xf32, #tpu.memory_space<vmem>>, vector<1x64xf32>
    %554 = vector.broadcast %553 : vector<1x64xf32> to vector<8x64xf32>
    %555 = arith.addf %552, %554 : vector<8x64xf32>
    %556 = arith.truncf %555 : vector<8x64xf32> to vector<8x64xbf16>
    %c192_213 = arith.constant 192 : index
    %c0_214 = arith.constant 0 : index
    %557 = vector.load %arg2[%c192_213, %c0_214] : memref<320x128xbf16, #tpu.memory_space<vmem>>, vector<64x128xbf16>
    %cst_215 = arith.constant dense<0.000000e+00> : vector<8x128xf32>
    %558 = tpu.matmul %556, %557, %cst_215 {dimension_numbers = #tpu.dot_dimension_numbers<[1], [0], [0], [1], [0, 0, 1, 1], [], []>} : vector<8x64xbf16>, vector<64x128xbf16>, vector<8x128xf32> -> vector<8x128xf32>
    %c3_216 = arith.constant 3 : index
    %c0_217 = arith.constant 0 : index
    %559 = vector.load %arg4[%c3_216, %c0_217] : memref<5x128xf32, #tpu.memory_space<vmem>>, vector<1x128xf32>
    %560 = vector.broadcast %559 : vector<1x128xf32> to vector<8x128xf32>
    %561 = arith.addf %558, %560 : vector<8x128xf32>
    %cst_218 = arith.constant 5.000000e-01 : f32
    %562 = vector.broadcast %cst_218 : f32 to vector<8x128xf32>
    %563 = arith.mulf %562, %561 : vector<8x128xf32>
    %cst_219 = arith.constant 4.471500e-02 : f32
    %564 = vector.broadcast %cst_219 : f32 to vector<8x128xf32>
    %565 = arith.mulf %564, %561 : vector<8x128xf32>
    %566 = arith.mulf %565, %561 : vector<8x128xf32>
    %567 = arith.mulf %566, %561 : vector<8x128xf32>
    %568 = arith.addf %561, %567 : vector<8x128xf32>
    %cst_220 = arith.constant 0.797884583 : f32
    %569 = vector.broadcast %cst_220 : f32 to vector<8x128xf32>
    %570 = arith.mulf %569, %568 : vector<8x128xf32>
    %571 = math.tanh %570 : vector<8x128xf32>
    %cst_221 = arith.constant 1.000000e+00 : f32
    %572 = vector.broadcast %cst_221 : f32 to vector<8x128xf32>
    %573 = arith.addf %572, %571 : vector<8x128xf32>
    %574 = arith.mulf %563, %573 : vector<8x128xf32>
    %575 = arith.truncf %574 : vector<8x128xf32> to vector<8x128xbf16>
    %c1280 = arith.constant 1280 : index
    %c0_222 = arith.constant 0 : index
    %576 = vector.load %arg1[%c1280, %c0_222] : memref<2048x64xbf16, #tpu.memory_space<vmem>>, vector<128x64xbf16>
    %cst_223 = arith.constant dense<0.000000e+00> : vector<8x64xf32>
    %577 = tpu.matmul %575, %576, %cst_223 {dimension_numbers = #tpu.dot_dimension_numbers<[1], [0], [0], [1], [0, 0, 1, 1], [], []>} : vector<8x128xbf16>, vector<128x64xbf16>, vector<8x64xf32> -> vector<8x64xf32>
    %c34 = arith.constant 34 : index
    %c0_224 = arith.constant 0 : index
    %578 = vector.load %arg3[%c34, %c0_224] : memref<52x64xf32, #tpu.memory_space<vmem>>, vector<1x64xf32>
    %579 = vector.broadcast %578 : vector<1x64xf32> to vector<8x64xf32>
    %580 = arith.addf %577, %579 : vector<8x64xf32>
    %581 = arith.addf %555, %580 : vector<8x64xf32>
    %cst_225 = arith.constant dense<0.000000e+00> : vector<8xf32>
    %582 = vector.multi_reduction <add>, %581, %cst_225 [1] : vector<8x64xf32> to vector<8xf32>
    %583 = vector.shape_cast %582 : vector<8xf32> to vector<8x1xf32>
    %cst_226 = arith.constant 6.400000e+01 : f32
    %584 = vector.broadcast %cst_226 : f32 to vector<8x1xf32>
    %585 = arith.divf %583, %584 : vector<8x1xf32>
    %586 = vector.broadcast %585 : vector<8x1xf32> to vector<8x64xf32>
    %587 = arith.subf %581, %586 : vector<8x64xf32>
    %588 = arith.mulf %587, %587 : vector<8x64xf32>
    %cst_227 = arith.constant dense<0.000000e+00> : vector<8xf32>
    %589 = vector.multi_reduction <add>, %588, %cst_227 [1] : vector<8x64xf32> to vector<8xf32>
    %590 = vector.shape_cast %589 : vector<8xf32> to vector<8x1xf32>
    %cst_228 = arith.constant 6.400000e+01 : f32
    %591 = vector.broadcast %cst_228 : f32 to vector<8x1xf32>
    %592 = arith.divf %590, %591 : vector<8x1xf32>
    %cst_229 = arith.constant 9.99999974E-6 : f32
    %593 = vector.broadcast %cst_229 : f32 to vector<8x1xf32>
    %594 = arith.addf %592, %593 : vector<8x1xf32>
    %595 = math.rsqrt %594 : vector<8x1xf32>
    %596 = vector.broadcast %595 : vector<8x1xf32> to vector<8x64xf32>
    %597 = arith.mulf %587, %596 : vector<8x64xf32>
    %c35 = arith.constant 35 : index
    %c0_230 = arith.constant 0 : index
    %598 = vector.load %arg3[%c35, %c0_230] : memref<52x64xf32, #tpu.memory_space<vmem>>, vector<1x64xf32>
    %599 = vector.broadcast %598 : vector<1x64xf32> to vector<8x64xf32>
    %600 = arith.mulf %597, %599 : vector<8x64xf32>
    %c36 = arith.constant 36 : index
    %c0_231 = arith.constant 0 : index
    %601 = vector.load %arg3[%c36, %c0_231] : memref<52x64xf32, #tpu.memory_space<vmem>>, vector<1x64xf32>
    %602 = vector.broadcast %601 : vector<1x64xf32> to vector<8x64xf32>
    %603 = arith.addf %600, %602 : vector<8x64xf32>
    %604 = arith.truncf %603 : vector<8x64xf32> to vector<8x64xbf16>
    %c1408 = arith.constant 1408 : index
    %c0_232 = arith.constant 0 : index
    %605 = vector.load %arg1[%c1408, %c0_232] : memref<2048x64xbf16, #tpu.memory_space<vmem>>, vector<64x64xbf16>
    %cst_233 = arith.constant dense<0.000000e+00> : vector<8x64xf32>
    %606 = tpu.matmul %604, %605, %cst_233 {dimension_numbers = #tpu.dot_dimension_numbers<[1], [0], [0], [1], [0, 0, 1, 1], [], []>} : vector<8x64xbf16>, vector<64x64xbf16>, vector<8x64xf32> -> vector<8x64xf32>
    %c37 = arith.constant 37 : index
    %c0_234 = arith.constant 0 : index
    %607 = vector.load %arg3[%c37, %c0_234] : memref<52x64xf32, #tpu.memory_space<vmem>>, vector<1x64xf32>
    %608 = vector.broadcast %607 : vector<1x64xf32> to vector<8x64xf32>
    %609 = arith.addf %606, %608 : vector<8x64xf32>
    %cst_235 = arith.constant 2.500000e-01 : f32
    %610 = vector.broadcast %cst_235 : f32 to vector<8x64xf32>
    %611 = arith.mulf %609, %610 : vector<8x64xf32>
    %612 = arith.truncf %603 : vector<8x64xf32> to vector<8x64xbf16>
    %c1472 = arith.constant 1472 : index
    %c0_236 = arith.constant 0 : index
    %613 = vector.load %arg1[%c1472, %c0_236] : memref<2048x64xbf16, #tpu.memory_space<vmem>>, vector<64x64xbf16>
    %cst_237 = arith.constant dense<0.000000e+00> : vector<8x64xf32>
    %614 = tpu.matmul %612, %613, %cst_237 {dimension_numbers = #tpu.dot_dimension_numbers<[1], [0], [0], [1], [0, 0, 1, 1], [], []>} : vector<8x64xbf16>, vector<64x64xbf16>, vector<8x64xf32> -> vector<8x64xf32>
    %c38 = arith.constant 38 : index
    %c0_238 = arith.constant 0 : index
    %615 = vector.load %arg3[%c38, %c0_238] : memref<52x64xf32, #tpu.memory_space<vmem>>, vector<1x64xf32>
    %616 = vector.broadcast %615 : vector<1x64xf32> to vector<8x64xf32>
    %617 = arith.addf %614, %616 : vector<8x64xf32>
    %618 = arith.truncf %603 : vector<8x64xf32> to vector<8x64xbf16>
    %c1536 = arith.constant 1536 : index
    %c0_239 = arith.constant 0 : index
    %619 = vector.load %arg1[%c1536, %c0_239] : memref<2048x64xbf16, #tpu.memory_space<vmem>>, vector<64x64xbf16>
    %cst_240 = arith.constant dense<0.000000e+00> : vector<8x64xf32>
    %620 = tpu.matmul %618, %619, %cst_240 {dimension_numbers = #tpu.dot_dimension_numbers<[1], [0], [0], [1], [0, 0, 1, 1], [], []>} : vector<8x64xbf16>, vector<64x64xbf16>, vector<8x64xf32> -> vector<8x64xf32>
    %c39 = arith.constant 39 : index
    %c0_241 = arith.constant 0 : index
    %621 = vector.load %arg3[%c39, %c0_241] : memref<52x64xf32, #tpu.memory_space<vmem>>, vector<1x64xf32>
    %622 = vector.broadcast %621 : vector<1x64xf32> to vector<8x64xf32>
    %623 = arith.addf %620, %622 : vector<8x64xf32>
    %624 = vector.extract_strided_slice %611 {offsets = [0, 0], sizes = [8, 16], strides = [1, 1]} : vector<8x64xf32> to vector<8x16xf32>
    %625 = vector.extract_strided_slice %617 {offsets = [0, 0], sizes = [8, 16], strides = [1, 1]} : vector<8x64xf32> to vector<8x16xf32>
    %cst_242 = arith.constant dense<0.000000e+00> : vector<8x8xf32>
    %626 = tpu.matmul %624, %625, %cst_242 {dimension_numbers = #tpu.dot_dimension_numbers<[1], [1], [0], [0], [0, 0, 1, 0], [], []>} : vector<8x16xf32>, vector<8x16xf32>, vector<8x8xf32> -> vector<8x8xf32>
    %627 = vector.extract_strided_slice %611 {offsets = [0, 16], sizes = [8, 16], strides = [1, 1]} : vector<8x64xf32> to vector<8x16xf32>
    %628 = vector.extract_strided_slice %617 {offsets = [0, 16], sizes = [8, 16], strides = [1, 1]} : vector<8x64xf32> to vector<8x16xf32>
    %cst_243 = arith.constant dense<0.000000e+00> : vector<8x8xf32>
    %629 = tpu.matmul %627, %628, %cst_243 {dimension_numbers = #tpu.dot_dimension_numbers<[1], [1], [0], [0], [0, 0, 1, 0], [], []>} : vector<8x16xf32>, vector<8x16xf32>, vector<8x8xf32> -> vector<8x8xf32>
    %630 = vector.extract_strided_slice %611 {offsets = [0, 32], sizes = [8, 16], strides = [1, 1]} : vector<8x64xf32> to vector<8x16xf32>
    %631 = vector.extract_strided_slice %617 {offsets = [0, 32], sizes = [8, 16], strides = [1, 1]} : vector<8x64xf32> to vector<8x16xf32>
    %cst_244 = arith.constant dense<0.000000e+00> : vector<8x8xf32>
    %632 = tpu.matmul %630, %631, %cst_244 {dimension_numbers = #tpu.dot_dimension_numbers<[1], [1], [0], [0], [0, 0, 1, 0], [], []>} : vector<8x16xf32>, vector<8x16xf32>, vector<8x8xf32> -> vector<8x8xf32>
    %633 = vector.extract_strided_slice %611 {offsets = [0, 48], sizes = [8, 16], strides = [1, 1]} : vector<8x64xf32> to vector<8x16xf32>
    %634 = vector.extract_strided_slice %617 {offsets = [0, 48], sizes = [8, 16], strides = [1, 1]} : vector<8x64xf32> to vector<8x16xf32>
    %cst_245 = arith.constant dense<0.000000e+00> : vector<8x8xf32>
    %635 = tpu.matmul %633, %634, %cst_245 {dimension_numbers = #tpu.dot_dimension_numbers<[1], [1], [0], [0], [0, 0, 1, 0], [], []>} : vector<8x16xf32>, vector<8x16xf32>, vector<8x8xf32> -> vector<8x8xf32>
    %636 = tpu.concatenate %626, %629, %632, %635 in 0 : vector<8x8xf32>, vector<8x8xf32>, vector<8x8xf32>, vector<8x8xf32> -> vector<32x8xf32>
    %637 = arith.addf %636, %12 : vector<32x8xf32>
    %cst_246 = arith.constant dense<0xFF800000> : vector<32xf32>
    %638 = vector.multi_reduction <maximumf>, %637, %cst_246 [1] : vector<32x8xf32> to vector<32xf32>
    %639 = vector.shape_cast %638 : vector<32xf32> to vector<32x1xf32>
    %640 = vector.broadcast %639 : vector<32x1xf32> to vector<32x8xf32>
    %641 = arith.subf %637, %640 : vector<32x8xf32>
    %642 = math.exp %641 : vector<32x8xf32>
    %cst_247 = arith.constant dense<0.000000e+00> : vector<32xf32>
    %643 = vector.multi_reduction <add>, %642, %cst_247 [1] : vector<32x8xf32> to vector<32xf32>
    %644 = vector.shape_cast %643 : vector<32xf32> to vector<32x1xf32>
    %645 = tpu.reciprocal %644 {approx = true} : vector<32x1xf32> -> vector<32x1xf32>
    %646 = vector.broadcast %645 : vector<32x1xf32> to vector<32x8xf32>
    %647 = arith.mulf %642, %646 : vector<32x8xf32>
    %cst_248 = arith.constant 0.000000e+00 : f32
    %648 = vector.broadcast %cst_248 : f32 to vector<8x64xf32>
    %649 = vector.extract_strided_slice %647 {offsets = [0, 0], sizes = [8, 8], strides = [1, 1]} : vector<32x8xf32> to vector<8x8xf32>
    %650 = vector.extract_strided_slice %623 {offsets = [0, 0], sizes = [8, 16], strides = [1, 1]} : vector<8x64xf32> to vector<8x16xf32>
    %cst_249 = arith.constant dense<0.000000e+00> : vector<8x16xf32>
    %651 = tpu.matmul %649, %650, %cst_249 {dimension_numbers = #tpu.dot_dimension_numbers<[1], [0], [0], [1], [0, 0, 1, 1], [], []>} : vector<8x8xf32>, vector<8x16xf32>, vector<8x16xf32> -> vector<8x16xf32>
    %c1600 = arith.constant 1600 : index
    %c0_250 = arith.constant 0 : index
    %652 = vector.load %arg1[%c1600, %c0_250] : memref<2048x64xbf16, #tpu.memory_space<vmem>>, vector<16x64xbf16>
    %653 = arith.truncf %651 : vector<8x16xf32> to vector<8x16xbf16>
    %cst_251 = arith.constant dense<0.000000e+00> : vector<8x64xf32>
    %654 = tpu.matmul %653, %652, %cst_251 {dimension_numbers = #tpu.dot_dimension_numbers<[1], [0], [0], [1], [0, 0, 1, 1], [], []>} : vector<8x16xbf16>, vector<16x64xbf16>, vector<8x64xf32> -> vector<8x64xf32>
    %655 = arith.addf %648, %654 : vector<8x64xf32>
    %656 = vector.extract_strided_slice %647 {offsets = [8, 0], sizes = [8, 8], strides = [1, 1]} : vector<32x8xf32> to vector<8x8xf32>
    %657 = vector.extract_strided_slice %623 {offsets = [0, 16], sizes = [8, 16], strides = [1, 1]} : vector<8x64xf32> to vector<8x16xf32>
    %cst_252 = arith.constant dense<0.000000e+00> : vector<8x16xf32>
    %658 = tpu.matmul %656, %657, %cst_252 {dimension_numbers = #tpu.dot_dimension_numbers<[1], [0], [0], [1], [0, 0, 1, 1], [], []>} : vector<8x8xf32>, vector<8x16xf32>, vector<8x16xf32> -> vector<8x16xf32>
    %c1616 = arith.constant 1616 : index
    %c0_253 = arith.constant 0 : index
    %659 = vector.load %arg1[%c1616, %c0_253] : memref<2048x64xbf16, #tpu.memory_space<vmem>>, vector<16x64xbf16>
    %660 = arith.truncf %658 : vector<8x16xf32> to vector<8x16xbf16>
    %cst_254 = arith.constant dense<0.000000e+00> : vector<8x64xf32>
    %661 = tpu.matmul %660, %659, %cst_254 {dimension_numbers = #tpu.dot_dimension_numbers<[1], [0], [0], [1], [0, 0, 1, 1], [], []>} : vector<8x16xbf16>, vector<16x64xbf16>, vector<8x64xf32> -> vector<8x64xf32>
    %662 = arith.addf %655, %661 : vector<8x64xf32>
    %663 = vector.extract_strided_slice %647 {offsets = [16, 0], sizes = [8, 8], strides = [1, 1]} : vector<32x8xf32> to vector<8x8xf32>
    %664 = vector.extract_strided_slice %623 {offsets = [0, 32], sizes = [8, 16], strides = [1, 1]} : vector<8x64xf32> to vector<8x16xf32>
    %cst_255 = arith.constant dense<0.000000e+00> : vector<8x16xf32>
    %665 = tpu.matmul %663, %664, %cst_255 {dimension_numbers = #tpu.dot_dimension_numbers<[1], [0], [0], [1], [0, 0, 1, 1], [], []>} : vector<8x8xf32>, vector<8x16xf32>, vector<8x16xf32> -> vector<8x16xf32>
    %c1632 = arith.constant 1632 : index
    %c0_256 = arith.constant 0 : index
    %666 = vector.load %arg1[%c1632, %c0_256] : memref<2048x64xbf16, #tpu.memory_space<vmem>>, vector<16x64xbf16>
    %667 = arith.truncf %665 : vector<8x16xf32> to vector<8x16xbf16>
    %cst_257 = arith.constant dense<0.000000e+00> : vector<8x64xf32>
    %668 = tpu.matmul %667, %666, %cst_257 {dimension_numbers = #tpu.dot_dimension_numbers<[1], [0], [0], [1], [0, 0, 1, 1], [], []>} : vector<8x16xbf16>, vector<16x64xbf16>, vector<8x64xf32> -> vector<8x64xf32>
    %669 = arith.addf %662, %668 : vector<8x64xf32>
    %670 = vector.extract_strided_slice %647 {offsets = [24, 0], sizes = [8, 8], strides = [1, 1]} : vector<32x8xf32> to vector<8x8xf32>
    %671 = vector.extract_strided_slice %623 {offsets = [0, 48], sizes = [8, 16], strides = [1, 1]} : vector<8x64xf32> to vector<8x16xf32>
    %cst_258 = arith.constant dense<0.000000e+00> : vector<8x16xf32>
    %672 = tpu.matmul %670, %671, %cst_258 {dimension_numbers = #tpu.dot_dimension_numbers<[1], [0], [0], [1], [0, 0, 1, 1], [], []>} : vector<8x8xf32>, vector<8x16xf32>, vector<8x16xf32> -> vector<8x16xf32>
    %c1648 = arith.constant 1648 : index
    %c0_259 = arith.constant 0 : index
    %673 = vector.load %arg1[%c1648, %c0_259] : memref<2048x64xbf16, #tpu.memory_space<vmem>>, vector<16x64xbf16>
    %674 = arith.truncf %672 : vector<8x16xf32> to vector<8x16xbf16>
    %cst_260 = arith.constant dense<0.000000e+00> : vector<8x64xf32>
    %675 = tpu.matmul %674, %673, %cst_260 {dimension_numbers = #tpu.dot_dimension_numbers<[1], [0], [0], [1], [0, 0, 1, 1], [], []>} : vector<8x16xbf16>, vector<16x64xbf16>, vector<8x64xf32> -> vector<8x64xf32>
    %676 = arith.addf %669, %675 : vector<8x64xf32>
    %c40 = arith.constant 40 : index
    %c0_261 = arith.constant 0 : index
    %677 = vector.load %arg3[%c40, %c0_261] : memref<52x64xf32, #tpu.memory_space<vmem>>, vector<1x64xf32>
    %678 = vector.broadcast %677 : vector<1x64xf32> to vector<8x64xf32>
    %679 = arith.addf %676, %678 : vector<8x64xf32>
    %680 = arith.addf %603, %679 : vector<8x64xf32>
    %cst_262 = arith.constant dense<0.000000e+00> : vector<8xf32>
    %681 = vector.multi_reduction <add>, %680, %cst_262 [1] : vector<8x64xf32> to vector<8xf32>
    %682 = vector.shape_cast %681 : vector<8xf32> to vector<8x1xf32>
    %cst_263 = arith.constant 6.400000e+01 : f32
    %683 = vector.broadcast %cst_263 : f32 to vector<8x1xf32>
    %684 = arith.divf %682, %683 : vector<8x1xf32>
    %685 = vector.broadcast %684 : vector<8x1xf32> to vector<8x64xf32>
    %686 = arith.subf %680, %685 : vector<8x64xf32>
    %687 = arith.mulf %686, %686 : vector<8x64xf32>
    %cst_264 = arith.constant dense<0.000000e+00> : vector<8xf32>
    %688 = vector.multi_reduction <add>, %687, %cst_264 [1] : vector<8x64xf32> to vector<8xf32>
    %689 = vector.shape_cast %688 : vector<8xf32> to vector<8x1xf32>
    %cst_265 = arith.constant 6.400000e+01 : f32
    %690 = vector.broadcast %cst_265 : f32 to vector<8x1xf32>
    %691 = arith.divf %689, %690 : vector<8x1xf32>
    %cst_266 = arith.constant 9.99999974E-6 : f32
    %692 = vector.broadcast %cst_266 : f32 to vector<8x1xf32>
    %693 = arith.addf %691, %692 : vector<8x1xf32>
    %694 = math.rsqrt %693 : vector<8x1xf32>
    %695 = vector.broadcast %694 : vector<8x1xf32> to vector<8x64xf32>
    %696 = arith.mulf %686, %695 : vector<8x64xf32>
    %c45 = arith.constant 45 : index
    %c0_267 = arith.constant 0 : index
    %697 = vector.load %arg3[%c45, %c0_267] : memref<52x64xf32, #tpu.memory_space<vmem>>, vector<1x64xf32>
    %698 = vector.broadcast %697 : vector<1x64xf32> to vector<8x64xf32>
    %699 = arith.mulf %696, %698 : vector<8x64xf32>
    %c46 = arith.constant 46 : index
    %c0_268 = arith.constant 0 : index
    %700 = vector.load %arg3[%c46, %c0_268] : memref<52x64xf32, #tpu.memory_space<vmem>>, vector<1x64xf32>
    %701 = vector.broadcast %700 : vector<1x64xf32> to vector<8x64xf32>
    %702 = arith.addf %699, %701 : vector<8x64xf32>
    %703 = arith.truncf %702 : vector<8x64xf32> to vector<8x64xbf16>
    %c1664 = arith.constant 1664 : index
    %c0_269 = arith.constant 0 : index
    %704 = vector.load %arg1[%c1664, %c0_269] : memref<2048x64xbf16, #tpu.memory_space<vmem>>, vector<64x64xbf16>
    %cst_270 = arith.constant dense<0.000000e+00> : vector<8x64xf32>
    %705 = tpu.matmul %703, %704, %cst_270 {dimension_numbers = #tpu.dot_dimension_numbers<[1], [0], [0], [1], [0, 0, 1, 1], [], []>} : vector<8x64xbf16>, vector<64x64xbf16>, vector<8x64xf32> -> vector<8x64xf32>
    %c41 = arith.constant 41 : index
    %c0_271 = arith.constant 0 : index
    %706 = vector.load %arg3[%c41, %c0_271] : memref<52x64xf32, #tpu.memory_space<vmem>>, vector<1x64xf32>
    %707 = vector.broadcast %706 : vector<1x64xf32> to vector<8x64xf32>
    %708 = arith.addf %705, %707 : vector<8x64xf32>
    %cst_272 = arith.constant 2.500000e-01 : f32
    %709 = vector.broadcast %cst_272 : f32 to vector<8x64xf32>
    %710 = arith.mulf %708, %709 : vector<8x64xf32>
    %711 = arith.truncf %332 : vector<8x64xf32> to vector<8x64xbf16>
    %c1728 = arith.constant 1728 : index
    %c0_273 = arith.constant 0 : index
    %712 = vector.load %arg1[%c1728, %c0_273] : memref<2048x64xbf16, #tpu.memory_space<vmem>>, vector<64x64xbf16>
    %cst_274 = arith.constant dense<0.000000e+00> : vector<8x64xf32>
    %713 = tpu.matmul %711, %712, %cst_274 {dimension_numbers = #tpu.dot_dimension_numbers<[1], [0], [0], [1], [0, 0, 1, 1], [], []>} : vector<8x64xbf16>, vector<64x64xbf16>, vector<8x64xf32> -> vector<8x64xf32>
    %c42 = arith.constant 42 : index
    %c0_275 = arith.constant 0 : index
    %714 = vector.load %arg3[%c42, %c0_275] : memref<52x64xf32, #tpu.memory_space<vmem>>, vector<1x64xf32>
    %715 = vector.broadcast %714 : vector<1x64xf32> to vector<8x64xf32>
    %716 = arith.addf %713, %715 : vector<8x64xf32>
    %717 = arith.truncf %332 : vector<8x64xf32> to vector<8x64xbf16>
    %c1792 = arith.constant 1792 : index
    %c0_276 = arith.constant 0 : index
    %718 = vector.load %arg1[%c1792, %c0_276] : memref<2048x64xbf16, #tpu.memory_space<vmem>>, vector<64x64xbf16>
    %cst_277 = arith.constant dense<0.000000e+00> : vector<8x64xf32>
    %719 = tpu.matmul %717, %718, %cst_277 {dimension_numbers = #tpu.dot_dimension_numbers<[1], [0], [0], [1], [0, 0, 1, 1], [], []>} : vector<8x64xbf16>, vector<64x64xbf16>, vector<8x64xf32> -> vector<8x64xf32>
    %c43 = arith.constant 43 : index
    %c0_278 = arith.constant 0 : index
    %720 = vector.load %arg3[%c43, %c0_278] : memref<52x64xf32, #tpu.memory_space<vmem>>, vector<1x64xf32>
    %721 = vector.broadcast %720 : vector<1x64xf32> to vector<8x64xf32>
    %722 = arith.addf %719, %721 : vector<8x64xf32>
    %723 = vector.extract_strided_slice %710 {offsets = [0, 0], sizes = [8, 16], strides = [1, 1]} : vector<8x64xf32> to vector<8x16xf32>
    %724 = vector.extract_strided_slice %716 {offsets = [0, 0], sizes = [8, 16], strides = [1, 1]} : vector<8x64xf32> to vector<8x16xf32>
    %cst_279 = arith.constant dense<0.000000e+00> : vector<8x8xf32>
    %725 = tpu.matmul %723, %724, %cst_279 {dimension_numbers = #tpu.dot_dimension_numbers<[1], [1], [0], [0], [0, 0, 1, 0], [], []>} : vector<8x16xf32>, vector<8x16xf32>, vector<8x8xf32> -> vector<8x8xf32>
    %726 = vector.extract_strided_slice %710 {offsets = [0, 16], sizes = [8, 16], strides = [1, 1]} : vector<8x64xf32> to vector<8x16xf32>
    %727 = vector.extract_strided_slice %716 {offsets = [0, 16], sizes = [8, 16], strides = [1, 1]} : vector<8x64xf32> to vector<8x16xf32>
    %cst_280 = arith.constant dense<0.000000e+00> : vector<8x8xf32>
    %728 = tpu.matmul %726, %727, %cst_280 {dimension_numbers = #tpu.dot_dimension_numbers<[1], [1], [0], [0], [0, 0, 1, 0], [], []>} : vector<8x16xf32>, vector<8x16xf32>, vector<8x8xf32> -> vector<8x8xf32>
    %729 = vector.extract_strided_slice %710 {offsets = [0, 32], sizes = [8, 16], strides = [1, 1]} : vector<8x64xf32> to vector<8x16xf32>
    %730 = vector.extract_strided_slice %716 {offsets = [0, 32], sizes = [8, 16], strides = [1, 1]} : vector<8x64xf32> to vector<8x16xf32>
    %cst_281 = arith.constant dense<0.000000e+00> : vector<8x8xf32>
    %731 = tpu.matmul %729, %730, %cst_281 {dimension_numbers = #tpu.dot_dimension_numbers<[1], [1], [0], [0], [0, 0, 1, 0], [], []>} : vector<8x16xf32>, vector<8x16xf32>, vector<8x8xf32> -> vector<8x8xf32>
    %732 = vector.extract_strided_slice %710 {offsets = [0, 48], sizes = [8, 16], strides = [1, 1]} : vector<8x64xf32> to vector<8x16xf32>
    %733 = vector.extract_strided_slice %716 {offsets = [0, 48], sizes = [8, 16], strides = [1, 1]} : vector<8x64xf32> to vector<8x16xf32>
    %cst_282 = arith.constant dense<0.000000e+00> : vector<8x8xf32>
    %734 = tpu.matmul %732, %733, %cst_282 {dimension_numbers = #tpu.dot_dimension_numbers<[1], [1], [0], [0], [0, 0, 1, 0], [], []>} : vector<8x16xf32>, vector<8x16xf32>, vector<8x8xf32> -> vector<8x8xf32>
    %735 = tpu.concatenate %725, %728, %731, %734 in 0 : vector<8x8xf32>, vector<8x8xf32>, vector<8x8xf32>, vector<8x8xf32> -> vector<32x8xf32>
    %736 = vector.broadcast %5 : vector<1x8xf32> to vector<32x8xf32>
    %737 = arith.addf %735, %736 : vector<32x8xf32>
    %cst_283 = arith.constant dense<0xFF800000> : vector<32xf32>
    %738 = vector.multi_reduction <maximumf>, %737, %cst_283 [1] : vector<32x8xf32> to vector<32xf32>
    %739 = vector.shape_cast %738 : vector<32xf32> to vector<32x1xf32>
    %740 = vector.broadcast %739 : vector<32x1xf32> to vector<32x8xf32>
    %741 = arith.subf %737, %740 : vector<32x8xf32>
    %742 = math.exp %741 : vector<32x8xf32>
    %cst_284 = arith.constant dense<0.000000e+00> : vector<32xf32>
    %743 = vector.multi_reduction <add>, %742, %cst_284 [1] : vector<32x8xf32> to vector<32xf32>
    %744 = vector.shape_cast %743 : vector<32xf32> to vector<32x1xf32>
    %745 = tpu.reciprocal %744 {approx = true} : vector<32x1xf32> -> vector<32x1xf32>
    %746 = vector.broadcast %745 : vector<32x1xf32> to vector<32x8xf32>
    %747 = arith.mulf %742, %746 : vector<32x8xf32>
    %cst_285 = arith.constant 0.000000e+00 : f32
    %748 = vector.broadcast %cst_285 : f32 to vector<8x64xf32>
    %749 = vector.extract_strided_slice %747 {offsets = [0, 0], sizes = [8, 8], strides = [1, 1]} : vector<32x8xf32> to vector<8x8xf32>
    %750 = vector.extract_strided_slice %722 {offsets = [0, 0], sizes = [8, 16], strides = [1, 1]} : vector<8x64xf32> to vector<8x16xf32>
    %cst_286 = arith.constant dense<0.000000e+00> : vector<8x16xf32>
    %751 = tpu.matmul %749, %750, %cst_286 {dimension_numbers = #tpu.dot_dimension_numbers<[1], [0], [0], [1], [0, 0, 1, 1], [], []>} : vector<8x8xf32>, vector<8x16xf32>, vector<8x16xf32> -> vector<8x16xf32>
    %c1856 = arith.constant 1856 : index
    %c0_287 = arith.constant 0 : index
    %752 = vector.load %arg1[%c1856, %c0_287] : memref<2048x64xbf16, #tpu.memory_space<vmem>>, vector<16x64xbf16>
    %753 = arith.truncf %751 : vector<8x16xf32> to vector<8x16xbf16>
    %cst_288 = arith.constant dense<0.000000e+00> : vector<8x64xf32>
    %754 = tpu.matmul %753, %752, %cst_288 {dimension_numbers = #tpu.dot_dimension_numbers<[1], [0], [0], [1], [0, 0, 1, 1], [], []>} : vector<8x16xbf16>, vector<16x64xbf16>, vector<8x64xf32> -> vector<8x64xf32>
    %755 = arith.addf %748, %754 : vector<8x64xf32>
    %756 = vector.extract_strided_slice %747 {offsets = [8, 0], sizes = [8, 8], strides = [1, 1]} : vector<32x8xf32> to vector<8x8xf32>
    %757 = vector.extract_strided_slice %722 {offsets = [0, 16], sizes = [8, 16], strides = [1, 1]} : vector<8x64xf32> to vector<8x16xf32>
    %cst_289 = arith.constant dense<0.000000e+00> : vector<8x16xf32>
    %758 = tpu.matmul %756, %757, %cst_289 {dimension_numbers = #tpu.dot_dimension_numbers<[1], [0], [0], [1], [0, 0, 1, 1], [], []>} : vector<8x8xf32>, vector<8x16xf32>, vector<8x16xf32> -> vector<8x16xf32>
    %c1872 = arith.constant 1872 : index
    %c0_290 = arith.constant 0 : index
    %759 = vector.load %arg1[%c1872, %c0_290] : memref<2048x64xbf16, #tpu.memory_space<vmem>>, vector<16x64xbf16>
    %760 = arith.truncf %758 : vector<8x16xf32> to vector<8x16xbf16>
    %cst_291 = arith.constant dense<0.000000e+00> : vector<8x64xf32>
    %761 = tpu.matmul %760, %759, %cst_291 {dimension_numbers = #tpu.dot_dimension_numbers<[1], [0], [0], [1], [0, 0, 1, 1], [], []>} : vector<8x16xbf16>, vector<16x64xbf16>, vector<8x64xf32> -> vector<8x64xf32>
    %762 = arith.addf %755, %761 : vector<8x64xf32>
    %763 = vector.extract_strided_slice %747 {offsets = [16, 0], sizes = [8, 8], strides = [1, 1]} : vector<32x8xf32> to vector<8x8xf32>
    %764 = vector.extract_strided_slice %722 {offsets = [0, 32], sizes = [8, 16], strides = [1, 1]} : vector<8x64xf32> to vector<8x16xf32>
    %cst_292 = arith.constant dense<0.000000e+00> : vector<8x16xf32>
    %765 = tpu.matmul %763, %764, %cst_292 {dimension_numbers = #tpu.dot_dimension_numbers<[1], [0], [0], [1], [0, 0, 1, 1], [], []>} : vector<8x8xf32>, vector<8x16xf32>, vector<8x16xf32> -> vector<8x16xf32>
    %c1888 = arith.constant 1888 : index
    %c0_293 = arith.constant 0 : index
    %766 = vector.load %arg1[%c1888, %c0_293] : memref<2048x64xbf16, #tpu.memory_space<vmem>>, vector<16x64xbf16>
    %767 = arith.truncf %765 : vector<8x16xf32> to vector<8x16xbf16>
    %cst_294 = arith.constant dense<0.000000e+00> : vector<8x64xf32>
    %768 = tpu.matmul %767, %766, %cst_294 {dimension_numbers = #tpu.dot_dimension_numbers<[1], [0], [0], [1], [0, 0, 1, 1], [], []>} : vector<8x16xbf16>, vector<16x64xbf16>, vector<8x64xf32> -> vector<8x64xf32>
    %769 = arith.addf %762, %768 : vector<8x64xf32>
    %770 = vector.extract_strided_slice %747 {offsets = [24, 0], sizes = [8, 8], strides = [1, 1]} : vector<32x8xf32> to vector<8x8xf32>
    %771 = vector.extract_strided_slice %722 {offsets = [0, 48], sizes = [8, 16], strides = [1, 1]} : vector<8x64xf32> to vector<8x16xf32>
    %cst_295 = arith.constant dense<0.000000e+00> : vector<8x16xf32>
    %772 = tpu.matmul %770, %771, %cst_295 {dimension_numbers = #tpu.dot_dimension_numbers<[1], [0], [0], [1], [0, 0, 1, 1], [], []>} : vector<8x8xf32>, vector<8x16xf32>, vector<8x16xf32> -> vector<8x16xf32>
    %c1904 = arith.constant 1904 : index
    %c0_296 = arith.constant 0 : index
    %773 = vector.load %arg1[%c1904, %c0_296] : memref<2048x64xbf16, #tpu.memory_space<vmem>>, vector<16x64xbf16>
    %774 = arith.truncf %772 : vector<8x16xf32> to vector<8x16xbf16>
    %cst_297 = arith.constant dense<0.000000e+00> : vector<8x64xf32>
    %775 = tpu.matmul %774, %773, %cst_297 {dimension_numbers = #tpu.dot_dimension_numbers<[1], [0], [0], [1], [0, 0, 1, 1], [], []>} : vector<8x16xbf16>, vector<16x64xbf16>, vector<8x64xf32> -> vector<8x64xf32>
    %776 = arith.addf %769, %775 : vector<8x64xf32>
    %c44 = arith.constant 44 : index
    %c0_298 = arith.constant 0 : index
    %777 = vector.load %arg3[%c44, %c0_298] : memref<52x64xf32, #tpu.memory_space<vmem>>, vector<1x64xf32>
    %778 = vector.broadcast %777 : vector<1x64xf32> to vector<8x64xf32>
    %779 = arith.addf %776, %778 : vector<8x64xf32>
    %780 = arith.addf %702, %779 : vector<8x64xf32>
    %cst_299 = arith.constant dense<0.000000e+00> : vector<8xf32>
    %781 = vector.multi_reduction <add>, %780, %cst_299 [1] : vector<8x64xf32> to vector<8xf32>
    %782 = vector.shape_cast %781 : vector<8xf32> to vector<8x1xf32>
    %cst_300 = arith.constant 6.400000e+01 : f32
    %783 = vector.broadcast %cst_300 : f32 to vector<8x1xf32>
    %784 = arith.divf %782, %783 : vector<8x1xf32>
    %785 = vector.broadcast %784 : vector<8x1xf32> to vector<8x64xf32>
    %786 = arith.subf %780, %785 : vector<8x64xf32>
    %787 = arith.mulf %786, %786 : vector<8x64xf32>
    %cst_301 = arith.constant dense<0.000000e+00> : vector<8xf32>
    %788 = vector.multi_reduction <add>, %787, %cst_301 [1] : vector<8x64xf32> to vector<8xf32>
    %789 = vector.shape_cast %788 : vector<8xf32> to vector<8x1xf32>
    %cst_302 = arith.constant 6.400000e+01 : f32
    %790 = vector.broadcast %cst_302 : f32 to vector<8x1xf32>
    %791 = arith.divf %789, %790 : vector<8x1xf32>
    %cst_303 = arith.constant 9.99999974E-6 : f32
    %792 = vector.broadcast %cst_303 : f32 to vector<8x1xf32>
    %793 = arith.addf %791, %792 : vector<8x1xf32>
    %794 = math.rsqrt %793 : vector<8x1xf32>
    %795 = vector.broadcast %794 : vector<8x1xf32> to vector<8x64xf32>
    %796 = arith.mulf %786, %795 : vector<8x64xf32>
    %c47 = arith.constant 47 : index
    %c0_304 = arith.constant 0 : index
    %797 = vector.load %arg3[%c47, %c0_304] : memref<52x64xf32, #tpu.memory_space<vmem>>, vector<1x64xf32>
    %798 = vector.broadcast %797 : vector<1x64xf32> to vector<8x64xf32>
    %799 = arith.mulf %796, %798 : vector<8x64xf32>
    %c48 = arith.constant 48 : index
    %c0_305 = arith.constant 0 : index
    %800 = vector.load %arg3[%c48, %c0_305] : memref<52x64xf32, #tpu.memory_space<vmem>>, vector<1x64xf32>
    %801 = vector.broadcast %800 : vector<1x64xf32> to vector<8x64xf32>
    %802 = arith.addf %799, %801 : vector<8x64xf32>
    %803 = arith.truncf %802 : vector<8x64xf32> to vector<8x64xbf16>
    %c256_306 = arith.constant 256 : index
    %c0_307 = arith.constant 0 : index
    %804 = vector.load %arg2[%c256_306, %c0_307] : memref<320x128xbf16, #tpu.memory_space<vmem>>, vector<64x128xbf16>
    %cst_308 = arith.constant dense<0.000000e+00> : vector<8x128xf32>
    %805 = tpu.matmul %803, %804, %cst_308 {dimension_numbers = #tpu.dot_dimension_numbers<[1], [0], [0], [1], [0, 0, 1, 1], [], []>} : vector<8x64xbf16>, vector<64x128xbf16>, vector<8x128xf32> -> vector<8x128xf32>
    %c4_309 = arith.constant 4 : index
    %c0_310 = arith.constant 0 : index
    %806 = vector.load %arg4[%c4_309, %c0_310] : memref<5x128xf32, #tpu.memory_space<vmem>>, vector<1x128xf32>
    %807 = vector.broadcast %806 : vector<1x128xf32> to vector<8x128xf32>
    %808 = arith.addf %805, %807 : vector<8x128xf32>
    %cst_311 = arith.constant 5.000000e-01 : f32
    %809 = vector.broadcast %cst_311 : f32 to vector<8x128xf32>
    %810 = arith.mulf %809, %808 : vector<8x128xf32>
    %cst_312 = arith.constant 4.471500e-02 : f32
    %811 = vector.broadcast %cst_312 : f32 to vector<8x128xf32>
    %812 = arith.mulf %811, %808 : vector<8x128xf32>
    %813 = arith.mulf %812, %808 : vector<8x128xf32>
    %814 = arith.mulf %813, %808 : vector<8x128xf32>
    %815 = arith.addf %808, %814 : vector<8x128xf32>
    %cst_313 = arith.constant 0.797884583 : f32
    %816 = vector.broadcast %cst_313 : f32 to vector<8x128xf32>
    %817 = arith.mulf %816, %815 : vector<8x128xf32>
    %818 = math.tanh %817 : vector<8x128xf32>
    %cst_314 = arith.constant 1.000000e+00 : f32
    %819 = vector.broadcast %cst_314 : f32 to vector<8x128xf32>
    %820 = arith.addf %819, %818 : vector<8x128xf32>
    %821 = arith.mulf %810, %820 : vector<8x128xf32>
    %822 = arith.truncf %821 : vector<8x128xf32> to vector<8x128xbf16>
    %c1920 = arith.constant 1920 : index
    %c0_315 = arith.constant 0 : index
    %823 = vector.load %arg1[%c1920, %c0_315] : memref<2048x64xbf16, #tpu.memory_space<vmem>>, vector<128x64xbf16>
    %cst_316 = arith.constant dense<0.000000e+00> : vector<8x64xf32>
    %824 = tpu.matmul %822, %823, %cst_316 {dimension_numbers = #tpu.dot_dimension_numbers<[1], [0], [0], [1], [0, 0, 1, 1], [], []>} : vector<8x128xbf16>, vector<128x64xbf16>, vector<8x64xf32> -> vector<8x64xf32>
    %c49 = arith.constant 49 : index
    %c0_317 = arith.constant 0 : index
    %825 = vector.load %arg3[%c49, %c0_317] : memref<52x64xf32, #tpu.memory_space<vmem>>, vector<1x64xf32>
    %826 = vector.broadcast %825 : vector<1x64xf32> to vector<8x64xf32>
    %827 = arith.addf %824, %826 : vector<8x64xf32>
    %828 = arith.addf %802, %827 : vector<8x64xf32>
    %cst_318 = arith.constant dense<0.000000e+00> : vector<8xf32>
    %829 = vector.multi_reduction <add>, %828, %cst_318 [1] : vector<8x64xf32> to vector<8xf32>
    %830 = vector.shape_cast %829 : vector<8xf32> to vector<8x1xf32>
    %cst_319 = arith.constant 6.400000e+01 : f32
    %831 = vector.broadcast %cst_319 : f32 to vector<8x1xf32>
    %832 = arith.divf %830, %831 : vector<8x1xf32>
    %833 = vector.broadcast %832 : vector<8x1xf32> to vector<8x64xf32>
    %834 = arith.subf %828, %833 : vector<8x64xf32>
    %835 = arith.mulf %834, %834 : vector<8x64xf32>
    %cst_320 = arith.constant dense<0.000000e+00> : vector<8xf32>
    %836 = vector.multi_reduction <add>, %835, %cst_320 [1] : vector<8x64xf32> to vector<8xf32>
    %837 = vector.shape_cast %836 : vector<8xf32> to vector<8x1xf32>
    %cst_321 = arith.constant 6.400000e+01 : f32
    %838 = vector.broadcast %cst_321 : f32 to vector<8x1xf32>
    %839 = arith.divf %837, %838 : vector<8x1xf32>
    %cst_322 = arith.constant 9.99999974E-6 : f32
    %840 = vector.broadcast %cst_322 : f32 to vector<8x1xf32>
    %841 = arith.addf %839, %840 : vector<8x1xf32>
    %842 = math.rsqrt %841 : vector<8x1xf32>
    %843 = vector.broadcast %842 : vector<8x1xf32> to vector<8x64xf32>
    %844 = arith.mulf %834, %843 : vector<8x64xf32>
    %c50 = arith.constant 50 : index
    %c0_323 = arith.constant 0 : index
    %845 = vector.load %arg3[%c50, %c0_323] : memref<52x64xf32, #tpu.memory_space<vmem>>, vector<1x64xf32>
    %846 = vector.broadcast %845 : vector<1x64xf32> to vector<8x64xf32>
    %847 = arith.mulf %844, %846 : vector<8x64xf32>
    %c51 = arith.constant 51 : index
    %c0_324 = arith.constant 0 : index
    %848 = vector.load %arg3[%c51, %c0_324] : memref<52x64xf32, #tpu.memory_space<vmem>>, vector<1x64xf32>
    %849 = vector.broadcast %848 : vector<1x64xf32> to vector<8x64xf32>
    %850 = arith.addf %847, %849 : vector<8x64xf32>
    %851 = arith.truncf %850 : vector<8x64xf32> to vector<8x64xbf16>
    %c0_325 = arith.constant 0 : index
    %c0_326 = arith.constant 0 : index
    %852 = vector.load %arg2[%c0_325, %c0_326] : memref<320x128xbf16, #tpu.memory_space<vmem>>, vector<64x128xbf16>
    %cst_327 = arith.constant dense<0.000000e+00> : vector<8x128xf32>
    %853 = tpu.matmul %851, %852, %cst_327 {dimension_numbers = #tpu.dot_dimension_numbers<[1], [0], [0], [1], [0, 0, 1, 1], [], []>} : vector<8x64xbf16>, vector<64x128xbf16>, vector<8x128xf32> -> vector<8x128xf32>
    %c0_328 = arith.constant 0 : index
    %c0_329 = arith.constant 0 : index
    %854 = vector.load %arg4[%c0_328, %c0_329] : memref<5x128xf32, #tpu.memory_space<vmem>>, vector<1x128xf32>
    %855 = vector.broadcast %854 : vector<1x128xf32> to vector<8x128xf32>
    %856 = arith.addf %853, %855 : vector<8x128xf32>
    %c0_330 = arith.constant 0 : index
    %c0_331 = arith.constant 0 : index
    %c0_332 = arith.constant 0 : index
    %857 = vector.load %arg9[%c0_330, %c0_331, %c0_332] : memref<1x8x128xf32, #tpu.memory_space<vmem>>, vector<1x8x128xf32>
    %858 = vector.shape_cast %857 : vector<1x8x128xf32> to vector<8x128xf32>
    %859 = vector.shape_cast %856 : vector<8x128xf32> to vector<1x8x128xf32>
    tpu.vector_store %arg9[%c0_330, %c0_331, %c0_332], %859 {strides = array<i32>} : memref<1x8x128xf32, #tpu.memory_space<vmem>>, vector<1x8x128xf32>,
    %c0_333 = arith.constant 0 : index
    %c0_334 = arith.constant 0 : index
    %c0_335 = arith.constant 0 : index
    %860 = vector.load %arg8[%c0_333, %c0_334, %c0_335] : memref<1x8x1xi32, #tpu.memory_space<vmem>>, vector<1x8x1xi32>
    %861 = vector.shape_cast %860 : vector<1x8x1xi32> to vector<8x1xi32>
    %862 = tpu.iota {dimensions = array<i32: 1>} : vector<8x128xi32>
    %cst_336 = arith.constant dense<0xFF800000> : vector<8xf32>
    %863 = vector.multi_reduction <maximumf>, %856, %cst_336 [1] : vector<8x128xf32> to vector<8xf32>
    %864 = vector.shape_cast %863 : vector<8xf32> to vector<8x1xf32>
    %865 = vector.broadcast %864 : vector<8x1xf32> to vector<8x128xf32>
    %866 = arith.subf %856, %865 : vector<8x128xf32>
    %867 = math.exp %866 : vector<8x128xf32>
    %cst_337 = arith.constant dense<0.000000e+00> : vector<8xf32>
    %868 = vector.multi_reduction <add>, %867, %cst_337 [1] : vector<8x128xf32> to vector<8xf32>
    %869 = vector.shape_cast %868 : vector<8xf32> to vector<8x1xf32>
    %870 = math.log %869 : vector<8x1xf32>
    %871 = arith.addf %870, %864 : vector<8x1xf32>
    %872 = vector.broadcast %861 : vector<8x1xi32> to vector<8x128xi32>
    %873 = arith.cmpi eq, %862, %872 : vector<8x128xi32>
    %cst_338 = arith.constant 0.000000e+00 : f32
    %874 = vector.broadcast %cst_338 : f32 to vector<8x128xf32>
    %875 = arith.select %873, %856, %874 : vector<8x128xi1>, vector<8x128xf32>
    %cst_339 = arith.constant dense<0.000000e+00> : vector<8xf32>
    %876 = vector.multi_reduction <add>, %875, %cst_339 [1] : vector<8x128xf32> to vector<8xf32>
    %877 = vector.shape_cast %876 : vector<8xf32> to vector<8x1xf32>
    %c0_i32 = arith.constant 0 : i32
    %878 = vector.broadcast %c0_i32 : i32 to vector<8x1xi32>
    %879 = arith.cmpi sge, %861, %878 : vector<8x1xi32>
    %c128_i32 = arith.constant 128 : i32
    %880 = vector.broadcast %c128_i32 : i32 to vector<8x1xi32>
    %881 = arith.cmpi slt, %861, %880 : vector<8x1xi32>
    %882 = arith.andi %879, %881 : vector<8x1xi1>
    %883 = arith.extui %882 : vector<8x1xi1> to vector<8x1xi32>
    %884 = arith.sitofp %883 : vector<8x1xi32> to vector<8x1xf32>
    %885 = arith.subf %871, %877 : vector<8x1xf32>
    %886 = arith.mulf %885, %884 : vector<8x1xf32>
    %887 = vector.shape_cast %886 : vector<8x1xf32> to vector<1x8x1xf32>
    %cst_340 = arith.constant dense<0.000000e+00> : vector<1xf32>
    %888 = vector.multi_reduction <add>, %887, %cst_340 [1, 2] : vector<1x8x1xf32> to vector<1xf32>
    %889 = vector.shape_cast %888 : vector<1xf32> to vector<1x1x1xf32>
    %890 = vector.extract %889[0, 0, 0] : f32 from vector<1x1x1xf32>
    %891 = vector.broadcast %890 : f32 to vector<1x1xf32>
    %892 = vector.shape_cast %884 : vector<8x1xf32> to vector<1x8x1xf32>
    %cst_341 = arith.constant dense<0.000000e+00> : vector<1xf32>
    %893 = vector.multi_reduction <add>, %892, %cst_341 [1, 2] : vector<1x8x1xf32> to vector<1xf32>
    %894 = vector.shape_cast %893 : vector<1xf32> to vector<1x1x1xf32>
    %895 = vector.extract %894[0, 0, 0] : f32 from vector<1x1x1xf32>
    %896 = vector.broadcast %895 : f32 to vector<1x1xf32>
    %897 = tpu.iota {dimensions = array<i32: 0>} : vector<8x128xi32>
    %c0_i32_342 = arith.constant 0 : i32
    %898 = vector.broadcast %c0_i32_342 : i32 to vector<8x128xi32>
    %899 = arith.cmpi eq, %897, %898 : vector<8x128xi32>
    %c1_i32 = arith.constant 1 : i32
    %900 = vector.broadcast %c1_i32 : i32 to vector<8x128xi32>
    %901 = arith.cmpi eq, %897, %900 : vector<8x128xi32>
    %cst_343 = arith.constant 0.000000e+00 : f32
    %902 = vector.shape_cast %896 : vector<1x1xf32> to vector<1x1xf32>
    %903 = vector.broadcast %902 : vector<1x1xf32> to vector<8x128xf32>
    %904 = vector.broadcast %cst_343 : f32 to vector<8x128xf32>
    %905 = arith.select %901, %903, %904 : vector<8x128xi1>, vector<8x128xf32>
    %906 = vector.shape_cast %891 : vector<1x1xf32> to vector<1x1xf32>
    %907 = vector.broadcast %906 : vector<1x1xf32> to vector<8x128xf32>
    %908 = arith.select %899, %907, %905 : vector<8x128xi1>, vector<8x128xf32>
    %c0_344 = arith.constant 0 : index
    %c0_345 = arith.constant 0 : index
    %c0_346 = arith.constant 0 : index
    %909 = vector.load %arg10[%c0_344, %c0_345, %c0_346] : memref<1x8x128xf32, #tpu.memory_space<vmem>>, vector<1x8x128xf32>
    %910 = vector.shape_cast %909 : vector<1x8x128xf32> to vector<8x128xf32>
    %911 = vector.shape_cast %908 : vector<8x128xf32> to vector<1x8x128xf32>
    tpu.vector_store %arg10[%c0_344, %c0_345, %c0_346], %911 {strides = array<i32>} : memref<1x8x128xf32, #tpu.memory_space<vmem>>, vector<1x8x128xf32>,
    return
  }
  func.func @transform_0(%arg0: i32) -> (i32, i32) {
    %c0_i32 = arith.constant 0 : i32
    %c0_i32_0 = arith.constant 0 : i32
    %c0_i32_1 = arith.constant 0 : i32
    return %c0_i32, %c0_i32_0 : i32, i32
  }
  func.func @transform_1(%arg0: i32) -> (i32, i32) {
    %c0_i32 = arith.constant 0 : i32
    %c0_i32_0 = arith.constant 0 : i32
    %c0_i32_1 = arith.constant 0 : i32
    return %c0_i32, %c0_i32_0 : i32, i32
  }
  func.func @transform_2(%arg0: i32) -> (i32, i32) {
    %c0_i32 = arith.constant 0 : i32
    %c0_i32_0 = arith.constant 0 : i32
    %c0_i32_1 = arith.constant 0 : i32
    return %c0_i32, %c0_i32_0 : i32, i32
  }
  func.func @transform_3(%arg0: i32) -> (i32, i32) {
    %c0_i32 = arith.constant 0 : i32
    %c0_i32_0 = arith.constant 0 : i32
    %c0_i32_1 = arith.constant 0 : i32
    return %c0_i32, %c0_i32_0 : i32, i32
  }
  func.func @transform_4(%arg0: i32) -> (i32, i32, i32) {
    %c0_i32 = arith.constant 0 : i32
    %c0_i32_0 = arith.constant 0 : i32
    %c0_i32_1 = arith.constant 0 : i32
    return %arg0, %c0_i32, %c0_i32_0 : i32, i32, i32
  }
  func.func @transform_5(%arg0: i32) -> (i32, i32, i32) {
    %c0_i32 = arith.constant 0 : i32
    %c0_i32_0 = arith.constant 0 : i32
    %c0_i32_1 = arith.constant 0 : i32
    return %arg0, %c0_i32, %c0_i32_0 : i32, i32, i32
  }
  func.func @transform_6(%arg0: i32) -> (i32, i32, i32) {
    %c0_i32 = arith.constant 0 : i32
    %c0_i32_0 = arith.constant 0 : i32
    %c0_i32_1 = arith.constant 0 : i32
    return %arg0, %c0_i32, %c0_i32_0 : i32, i32, i32
  }
  func.func @transform_7(%arg0: i32) -> (i32, i32, i32) {
    %c0_i32 = arith.constant 0 : i32
    %c0_i32_0 = arith.constant 0 : i32
    %c0_i32_1 = arith.constant 0 : i32
    return %arg0, %c0_i32, %c0_i32_0 : i32, i32, i32
  }
  func.func @transform_8(%arg0: i32) -> (i32, i32, i32) {
    %c0_i32 = arith.constant 0 : i32
    %c0_i32_0 = arith.constant 0 : i32
    %c0_i32_1 = arith.constant 0 : i32
    return %arg0, %c0_i32, %c0_i32_0 : i32, i32, i32
  }
  func.func @transform_9(%arg0: i32) -> (i32, i32, i32) {
    %c0_i32 = arith.constant 0 : i32
    %c0_i32_0 = arith.constant 0 : i32
    %c0_i32_1 = arith.constant 0 : i32
    return %arg0, %c0_i32, %c0_i32_0 : i32, i32, i32
  }
}

</mosaic_0001>

<llo_original>
// kernel: bart_forward.1
$region0: #{bart_forward.1}
  #allocation0 [shape = 'u32[]', space=smem, size = 0x4, offset = 0x4, fixed_abs, tag = 'smem constant byte address 0x4 - core index']
  #allocation1 [shape = 'u32[144,128]{1,0:T(1,128)}', space=vmem, size = 0x12000, scoped, tag = 'internal scratch']
  %s0 = inlined_call_operand.vmem [shape: bf16[2048,64], index: 0, kind: input, shape index: {}]
  %s1 = inlined_call_operand.vmem [shape: bf16[320,128], index: 1, kind: input, shape index: {}]
  %s2 = inlined_call_operand.vmem [shape: f32[52,64], index: 2, kind: input, shape index: {}]
  %s3 = inlined_call_operand.vmem [shape: f32[5,128], index: 3, kind: input, shape index: {}]
  %s4 = inlined_call_operand.vmem [shape: f32[2,8,64], index: 4, kind: input, shape index: {}]
  %s5 = inlined_call_operand.vmem [shape: f32[2,8,64], index: 5, kind: input, shape index: {}]
  %s6 = inlined_call_operand.vmem [shape: f32[2,1,8], index: 6, kind: input, shape index: {}]
  %s7 = inlined_call_operand.vmem [shape: s32[2,8,1], index: 7, kind: input, shape index: {}]
  %s8 = inlined_call_operand.hbm [shape: f32[2,8,128], index: 8, kind: output, shape index: {0}]
  %s9 = inlined_call_operand.vmem [shape: f32[2,8,128], index: 9, kind: output, shape index: {1}]
  %10 = xla_tuple %s8, %s9
  %s11 = sld [smem:[#allocation0]]
  $region73: #{bart_forward.1} parent=0
    _
  %s13 = ssub.s32 1, %s11
  %s14 = scalar_select 0, %s13, %s11
  $region1: #{bart_forward.1} parent=0
    #allocation2 [shape = 'u8[8192]{0}', space=vmem, size = 0x2000, scoped, tag = 'output window, operand 0']
    #allocation3 [shape = 's32[2]{0}', space=sflag, size = 0x8, scoped, tag = 'scoped memory for bart_forward.1']
    %15 = vsyncpa [#allocation3], 0
    %s16 = scalar_lea.sflag [#allocation3], 1
    %17 = vsyncpa %s16, 0
    loop: start=0, step=1, limit=4
    $region2: #{bart_forward.1} parent=1 // loop_pre_header
      _
    $region3: #{bart_forward.1} parent=1 // loop_header
      %s19 = sphi 0, %s23
      %p20 = scmp.ge.s32.totalorder %s19, 4
      %s27 = sphi 0, %s27
      %s29 = sphi 0, %s27
      %s30 = sphi 0, %s29
      %s44 = sphi 0, %s30
      %s48 = sphi 0, %s48
      %s50 = sphi 0, %s48
      %s51 = sphi 0, %s50
      %s65 = sphi 0, %s51
      %s69 = sphi 0, %s69
      %s71 = sphi 0, %s69
      %s72 = sphi 0, %s71
      %s86 = sphi 0, %s72
      %s90 = sphi 0, %s90
      %s92 = sphi 0, %s90
      %s93 = sphi 0, %s92
      %s107 = sphi 0, %s93
      %s113 = sphi 0, %s115
      %s116 = sphi 0, %s113
      %s117 = sphi 0, %s116
      %s133 = sphi 0, %s117
      %s139 = sphi 0, %s141
      %s142 = sphi 0, %s139
      %s143 = sphi 0, %s142
      %s159 = sphi 0, %s143
      %s165 = sphi 0, %s167
      %s168 = sphi 0, %s165
      %s169 = sphi 0, %s168
      %s185 = sphi 0, %s169
      %s191 = sphi 0, %s193
      %s194 = sphi 0, %s191
      %s195 = sphi 0, %s194
      %s211 = sphi 0, %s195
      %s217 = sphi 0, %s219
      %s220 = sphi 0, %s217
      %s221 = sphi 0, %s220
      %s237 = sphi 0, %s221
      %s243 = sphi 0, %s245
      %s246 = sphi 0, %s243
      %s247 = sphi 0, %s246
      %s263 = sphi 0, %s247
    $region4: #{bart_forward.1} parent=1 // loop_header_branch
      %22 = sbr.rel (%p20) target = $region8
    $region5: #{bart_forward.1} parent=1 // loop_body
      %s24 = ssub.s32 %s19, 1
      %s25 = ssub.s32 %s19, 2
      %s26 = sadd.s32 %s19, 1
      %s28 = sadd.s32 %s27, 1
      %p31 = scmp.eq.s32.totalorder %s19, 1
      %p32 = scmp.ne.s32.totalorder %s27, %s29
      %p33 = scmp.eq.s32.totalorder %s19, 0
      %p34 = por %p32, %p33
      %p35 = scmp.ne.s32.totalorder %s27, %s29
      %p36 = scmp.eq.s32.totalorder %s24, 1
      %p37 = por %p35, %p36
      %p38 = scmp.ne.s32.totalorder %s29, %s30
      %p39 = scmp.eq.s32.totalorder %s24, 0
      %p40 = por %p38, %p39
      %p41 = scmp.ne.s32.totalorder %s29, %s30
      %p42 = scmp.eq.s32.totalorder %s25, 1
      %p43 = por %p41, %p42
      %p45 = scmp.ne.s32.totalorder %s30, %s44
      %p46 = scmp.eq.s32.totalorder %s25, 0
      %p47 = por %p45, %p46
      %s49 = sadd.s32 %s48, 1
      %p52 = scmp.eq.s32.totalorder %s19, 1
      %p53 = scmp.ne.s32.totalorder %s48, %s50
      %p54 = scmp.eq.s32.totalorder %s19, 0
      %p55 = por %p53, %p54
      %p56 = scmp.ne.s32.totalorder %s48, %s50
      %p57 = scmp.eq.s32.totalorder %s24, 1
      %p58 = por %p56, %p57
      %p59 = scmp.ne.s32.totalorder %s50, %s51
      %p60 = scmp.eq.s32.totalorder %s24, 0
      %p61 = por %p59, %p60
      %p62 = scmp.ne.s32.totalorder %s50, %s51
      %p63 = scmp.eq.s32.totalorder %s25, 1
      %p64 = por %p62, %p63
      %p66 = scmp.ne.s32.totalorder %s51, %s65
      %p67 = scmp.eq.s32.totalorder %s25, 0
      %p68 = por %p66, %p67
      %s70 = sadd.s32 %s69, 1
      %p73 = scmp.eq.s32.totalorder %s19, 1
      %p74 = scmp.ne.s32.totalorder %s69, %s71
      %p75 = scmp.eq.s32.totalorder %s19, 0
      %p76 = por %p74, %p75
      %p77 = scmp.ne.s32.totalorder %s69, %s71
      %p78 = scmp.eq.s32.totalorder %s24, 1
      %p79 = por %p77, %p78
      %p80 = scmp.ne.s32.totalorder %s71, %s72
      %p81 = scmp.eq.s32.totalorder %s24, 0
      %p82 = por %p80, %p81
      %p83 = scmp.ne.s32.totalorder %s71, %s72
      %p84 = scmp.eq.s32.totalorder %s25, 1
      %p85 = por %p83, %p84
      %p87 = scmp.ne.s32.totalorder %s72, %s86
      %p88 = scmp.eq.s32.totalorder %s25, 0
      %p89 = por %p87, %p88
      %s91 = sadd.s32 %s90, 1
      %p94 = scmp.eq.s32.totalorder %s19, 1
      %p95 = scmp.ne.s32.totalorder %s90, %s92
      %p96 = scmp.eq.s32.totalorder %s19, 0
      %p97 = por %p95, %p96
      %p98 = scmp.ne.s32.totalorder %s90, %s92
      %p99 = scmp.eq.s32.totalorder %s24, 1
      %p100 = por %p98, %p99
      %p101 = scmp.ne.s32.totalorder %s92, %s93
      %p102 = scmp.eq.s32.totalorder %s24, 0
      %p103 = por %p101, %p102
      %p104 = scmp.ne.s32.totalorder %s92, %s93
      %p105 = scmp.eq.s32.totalorder %s25, 1
      %p106 = por %p104, %p105
      %p108 = scmp.ne.s32.totalorder %s93, %s107
      %p109 = scmp.eq.s32.totalorder %s25, 0
      %p110 = por %p108, %p109
      %s111 = ssub.s32 %s19, %s26
      %p112 = scmp.eq.s32.totalorder %s111, 0
      %s114 = sadd.s32 %s113, 1
      %s115 = scalar_select %p112, %s113, %s114
      %p118 = pneg %p112
      %p119 = scmp.eq.s32.totalorder %s19, 1
      %p120 = por %p118, %p119
      %p121 = scmp.ne.s32.totalorder %s113, %s116
      %p122 = scmp.eq.s32.totalorder %s19, 0
      %p123 = por %p121, %p122
      %p124 = scmp.ne.s32.totalorder %s113, %s116
      %p125 = scmp.eq.s32.totalorder %s24, 1
      %p126 = por %p124, %p125
      %p127 = scmp.ne.s32.totalorder %s116, %s117
      %p128 = scmp.eq.s32.totalorder %s24, 0
      %p129 = por %p127, %p128
      %p130 = scmp.ne.s32.totalorder %s116, %s117
      %p131 = scmp.eq.s32.totalorder %s25, 1
      %p132 = por %p130, %p131
      %p134 = scmp.ne.s32.totalorder %s117, %s133
      %p135 = scmp.eq.s32.totalorder %s25, 0
      %p136 = por %p134, %p135
      %s137 = ssub.s32 %s19, %s26
      %p138 = scmp.eq.s32.totalorder %s137, 0
      %s140 = sadd.s32 %s139, 1
      %s141 = scalar_select %p138, %s139, %s140
      %p144 = pneg %p138
      %p145 = scmp.eq.s32.totalorder %s19, 1
      %p146 = por %p144, %p145
      %p147 = scmp.ne.s32.totalorder %s139, %s142
      %p148 = scmp.eq.s32.totalorder %s19, 0
      %p149 = por %p147, %p148
      %p150 = scmp.ne.s32.totalorder %s139, %s142
      %p151 = scmp.eq.s32.totalorder %s24, 1
      %p152 = por %p150, %p151
      %p153 = scmp.ne.s32.totalorder %s142, %s143
      %p154 = scmp.eq.s32.totalorder %s24, 0
      %p155 = por %p153, %p154
      %p156 = scmp.ne.s32.totalorder %s142, %s143
      %p157 = scmp.eq.s32.totalorder %s25, 1
      %p158 = por %p156, %p157
      %p160 = scmp.ne.s32.totalorder %s143, %s159
      %p161 = scmp.eq.s32.totalorder %s25, 0
      %p162 = por %p160, %p161
      %s163 = ssub.s32 %s19, %s26
      %p164 = scmp.eq.s32.totalorder %s163, 0
      %s166 = sadd.s32 %s165, 1
      %s167 = scalar_select %p164, %s165, %s166
      %p170 = pneg %p164
      %p171 = scmp.eq.s32.totalorder %s19, 1
      %p172 = por %p170, %p171
      %p173 = scmp.ne.s32.totalorder %s165, %s168
      %p174 = scmp.eq.s32.totalorder %s19, 0
      %p175 = por %p173, %p174
      %p176 = scmp.ne.s32.totalorder %s165, %s168
      %p177 = scmp.eq.s32.totalorder %s24, 1
      %p178 = por %p176, %p177
      %p179 = scmp.ne.s32.totalorder %s168, %s169
      %p180 = scmp.eq.s32.totalorder %s24, 0
      %p181 = por %p179, %p180
      %p182 = scmp.ne.s32.totalorder %s168, %s169
      %p183 = scmp.eq.s32.totalorder %s25, 1
      %p184 = por %p182, %p183
      %p186 = scmp.ne.s32.totalorder %s169, %s185
      %p187 = scmp.eq.s32.totalorder %s25, 0
      %p188 = por %p186, %p187
      %s189 = ssub.s32 %s19, %s26
      %p190 = scmp.eq.s32.totalorder %s189, 0
      %s192 = sadd.s32 %s191, 1
      %s193 = scalar_select %p190, %s191, %s192
      %p196 = pneg %p190
      %p197 = scmp.eq.s32.totalorder %s19, 1
      %p198 = por %p196, %p197
      %p199 = scmp.ne.s32.totalorder %s191, %s194
      %p200 = scmp.eq.s32.totalorder %s19, 0
      %p201 = por %p199, %p200
      %p202 = scmp.ne.s32.totalorder %s191, %s194
      %p203 = scmp.eq.s32.totalorder %s24, 1
      %p204 = por %p202, %p203
      %p205 = scmp.ne.s32.totalorder %s194, %s195
      %p206 = scmp.eq.s32.totalorder %s24, 0
      %p207 = por %p205, %p206
      %p208 = scmp.ne.s32.totalorder %s194, %s195
      %p209 = scmp.eq.s32.totalorder %s25, 1
      %p210 = por %p208, %p209
      %p212 = scmp.ne.s32.totalorder %s195, %s211
      %p213 = scmp.eq.s32.totalorder %s25, 0
      %p214 = por %p212, %p213
      %s215 = ssub.s32 %s19, %s26
      %p216 = scmp.eq.s32.totalorder %s215, 0
      %s218 = sadd.s32 %s217, 1
      %s219 = scalar_select %p216, %s217, %s218
      %p222 = pneg %p216
      %p223 = scmp.eq.s32.totalorder %s19, 1
      %p224 = por %p222, %p223
      %p225 = scmp.ne.s32.totalorder %s217, %s220
      %p226 = scmp.eq.s32.totalorder %s19, 0
      %p227 = por %p225, %p226
      %p228 = scmp.ne.s32.totalorder %s217, %s220
      %p229 = scmp.eq.s32.totalorder %s24, 1
      %p230 = por %p228, %p229
      %p231 = scmp.ne.s32.totalorder %s220, %s221
      %p232 = scmp.eq.s32.totalorder %s24, 0
      %p233 = por %p231, %p232
      %p234 = scmp.ne.s32.totalorder %s220, %s221
      %p235 = scmp.eq.s32.totalorder %s25, 1
      %p236 = por %p234, %p235
      %p238 = scmp.ne.s32.totalorder %s221, %s237
      %p239 = scmp.eq.s32.totalorder %s25, 0
      %p240 = por %p238, %p239
      %s241 = ssub.s32 %s19, %s26
      %p242 = scmp.eq.s32.totalorder %s241, 0
      %s244 = sadd.s32 %s243, 1
      %s245 = scalar_select %p242, %s243, %s244
      %p248 = pneg %p242
      %p249 = scmp.eq.s32.totalorder %s19, 1
      %p250 = por %p248, %p249
      %p251 = scmp.ne.s32.totalorder %s243, %s246
      %p252 = scmp.eq.s32.totalorder %s19, 0
      %p253 = por %p251, %p252
      %p254 = scmp.ne.s32.totalorder %s243, %s246
      %p255 = scmp.eq.s32.totalorder %s24, 1
      %p256 = por %p254, %p255
      %p257 = scmp.ne.s32.totalorder %s246, %s247
      %p258 = scmp.eq.s32.totalorder %s24, 0
      %p259 = por %p257, %p258
      %p260 = scmp.ne.s32.totalorder %s246, %s247
      %p261 = scmp.eq.s32.totalorder %s25, 1
      %p262 = por %p260, %p261
      %p264 = scmp.ne.s32.totalorder %s247, %s263
      %p265 = scmp.eq.s32.totalorder %s25, 0
      %p266 = por %p264, %p265
      %p267 = scmp.le.s32.totalorder 1, %s19
      %p268 = scmp.lt.s32.totalorder %s19, 3
      %p269 = pnand %p267, %p268
      %p270 = pneg %p269
      // Predicated region
      $region9: #{bart_forward.1} parent=5 // pred_check
        _
      $region10: #{bart_forward.1} parent=5 // pred_check_branch
        %272 = sbr.rel (%p269) target = $region12
      $region11: #{bart_forward.1} parent=5 // pred_region
        %s273 = ssub.s32 %s19, 1
        // Predicated region
        $region13: #{bart_forward.1} parent=11 // pred_check
          %p274 = pneg %p40
        $region14: #{bart_forward.1} parent=11 // pred_check_branch
          %276 = sbr.rel (%p274) target = $region16
        $region15: #{bart_forward.1} parent=11 // pred_region
          _
        $region16: #{bart_forward.1} parent=11 // pred_fallthru
          _
        // Predicated region
        $region17: #{bart_forward.1} parent=11 // pred_check
          %p277 = pneg %p61
        $region18: #{bart_forward.1} parent=11 // pred_check_branch
          %279 = sbr.rel (%p277) target = $region20
        $region19: #{bart_forward.1} parent=11 // pred_region
          _
        $region20: #{bart_forward.1} parent=11 // pred_fallthru
          _
        // Predicated region
        $region21: #{bart_forward.1} parent=11 // pred_check
          %p280 = pneg %p82
        $region22: #{bart_forward.1} parent=11 // pred_check_branch
          %282 = sbr.rel (%p280) target = $region24
        $region23: #{bart_forward.1} parent=11 // pred_region
          _
        $region24: #{bart_forward.1} parent=11 // pred_fallthru
          _
        // Predicated region
        $region25: #{bart_forward.1} parent=11 // pred_check
          %p283 = pneg %p103
        $region26: #{bart_forward.1} parent=11 // pred_check_branch
          %285 = sbr.rel (%p283) target = $region28
        $region27: #{bart_forward.1} parent=11 // pred_region
          _
        $region28: #{bart_forward.1} parent=11 // pred_fallthru
          _
      $region12: #{bart_forward.1} parent=5 // pred_fallthru
        _
      %p286 = scmp.lt.s32.totalorder %s19, 2
      // Predicated region
      $region29: #{bart_forward.1} parent=5 // pred_check
        %p287 = pneg %p286
      $region30: #{bart_forward.1} parent=5 // pred_check_branch
        %289 = sbr.rel (%p287) target = $region32
      $region31: #{bart_forward.1} parent=5 // pred_region
        // Predicated region
        $region33: #{bart_forward.1} parent=31 // pred_check
          %p290 = pneg %p123
        $region34: #{bart_forward.1} parent=31 // pred_check_branch
          %292 = sbr.rel (%p290) target = $region36
        $region35: #{bart_forward.1} parent=31 // pred_region
          %p293 = scmp.lt.s32.totalorder %s19, 1
          %s294 = scalar_select %p293, %s19, 1
          %s295 = smul.addr %s294, 8
          %s296 = scalar_lea.vmem %s4, %s295
        $region36: #{bart_forward.1} parent=31 // pred_fallthru
          _
        // Predicated region
        $region37: #{bart_forward.1} parent=31 // pred_check
          %p297 = pneg %p149
        $region38: #{bart_forward.1} parent=31 // pred_check_branch
          %299 = sbr.rel (%p297) target = $region40
        $region39: #{bart_forward.1} parent=31 // pred_region
          %p300 = scmp.lt.s32.totalorder %s19, 1
          %s301 = scalar_select %p300, %s19, 1
          %s302 = smul.addr %s301, 8
          %s303 = scalar_lea.vmem %s5, %s302
        $region40: #{bart_forward.1} parent=31 // pred_fallthru
          _
        // Predicated region
        $region41: #{bart_forward.1} parent=31 // pred_check
          %p304 = pneg %p175
        $region42: #{bart_forward.1} parent=31 // pred_check_branch
          %306 = sbr.rel (%p304) target = $region44
        $region43: #{bart_forward.1} parent=31 // pred_region
          %p307 = scmp.lt.s32.totalorder %s19, 1
          %s308 = scalar_select %p307, %s19, 1
          %s309 = scalar_lea.vmem %s6, %s308
        $region44: #{bart_forward.1} parent=31 // pred_fallthru
          _
        // Predicated region
        $region45: #{bart_forward.1} parent=31 // pred_check
          %p310 = pneg %p201
        $region46: #{bart_forward.1} parent=31 // pred_check_branch
          %312 = sbr.rel (%p310) target = $region48
        $region47: #{bart_forward.1} parent=31 // pred_region
          %p313 = scmp.lt.s32.totalorder %s19, 1
          %s314 = scalar_select %p313, %s19, 1
          %s315 = smul.addr %s314, 8
          %s316 = scalar_lea.vmem %s7, %s315
        $region48: #{bart_forward.1} parent=31 // pred_fallthru
          _
      $region32: #{bart_forward.1} parent=5 // pred_fallthru
        _
      %p317 = scmp.le.s32.totalorder 1, %s19
      %p318 = scmp.lt.s32.totalorder %s19, 3
      %p319 = pnand %p317, %p318
      %p320 = pneg %p319
      // Predicated region
      $region49: #{bart_forward.1} parent=5 // pred_check
        _
      $region50: #{bart_forward.1} parent=5 // pred_check_branch
        %322 = sbr.rel (%p319) target = $region52
      $region51: #{bart_forward.1} parent=5 // pred_region
        %s323 = ssub.s32 %s19, 1
        %p324 = pneg %p40
        %p325 = pneg %p37
        %p326 = pneg %p61
        %p327 = pneg %p58
        %p328 = pneg %p82
        %p329 = pneg %p79
        %p330 = pneg %p103
        %p331 = pneg %p100
        %p332 = scmp.lt.s32.totalorder %s24, 1
        %s333 = scalar_select %p332, %s24, 1
        %s334 = smul.addr %s333, 8
        %s335 = scalar_lea.vmem %s4, %s334
        %p336 = pneg %p129
        %p337 = pneg %p126
        %p338 = scmp.lt.s32.totalorder %s24, 1
        %s339 = scalar_select %p338, %s24, 1
        %s340 = smul.addr %s339, 8
        %s341 = scalar_lea.vmem %s5, %s340
        %p342 = pneg %p155
        %p343 = pneg %p152
        %p344 = scmp.lt.s32.totalorder %s24, 1
        %s345 = scalar_select %p344, %s24, 1
        %s346 = scalar_lea.vmem %s6, %s345
        %p347 = pneg %p181
        %p348 = pneg %p178
        %p349 = scmp.lt.s32.totalorder %s24, 1
        %s350 = scalar_select %p349, %s24, 1
        %s351 = smul.addr %s350, 8
        %s352 = scalar_lea.vmem %s7, %s351
        %p353 = pneg %p207
        %p354 = pneg %p204
        %p355 = pneg %p233
        %p356 = pneg %p230
        %s357 = sand.u32 %s220, 1
        %s358 = scalar_lea.sflag [#allocation3], %s357
        %s359 = sand.u32 %s220, 1
        %s360 = smul.addr %s359, 8
        %s361 = scalar_lea.vmem [#allocation2], %s360
        %p362 = pneg %p259
        %p363 = pneg %p256
        %p364 = scmp.lt.s32.totalorder %s24, 1
        %s365 = scalar_select %p364, %s24, 1
        %s366 = smul.addr %s365, 8
        %s367 = scalar_lea.vmem %s9, %s366
        %p368 = scmp.lt.s32.totalorder %s24, 1
        %s369 = scalar_select %p368, %s24, 1
        %s370 = smul.addr %s369, 8
        %s371 = scalar_lea.vmem %s4, %s370
        %p372 = scmp.lt.s32.totalorder %s24, 1
        %s373 = scalar_select %p372, %s24, 1
        %s374 = smul.addr %s373, 8
        %s375 = scalar_lea.vmem %s5, %s374
        %p376 = scmp.lt.s32.totalorder %s24, 1
        %s377 = scalar_select %p376, %s24, 1
        %s378 = scalar_lea.vmem %s6, %s377
        %p379 = scmp.lt.s32.totalorder %s24, 1
        %s380 = scalar_select %p379, %s24, 1
        %s381 = smul.addr %s380, 8
        %s382 = scalar_lea.vmem %s7, %s381
        %p383 = scmp.lt.s32.totalorder %s24, 1
        %s384 = scalar_select %p383, %s24, 1
        %s385 = smul.addr %s384, 8
        %s386 = scalar_lea.vmem %s9, %s385
        %v388 = vld [vmem:[%s378] sm:$0x1]
        %v389 = vsub.f32 1.0, %v388
        %v390 = vmul.f32 %v389, -1e+09
        %v391 = vlaneseq
        %v392 = vshrl.u32 %v391, 7
        %v393 = vlaneseq
        %v394 = vand.u32 %v393, 127
        %vm395 = vcmp.gt.s32.totalorder %v394, %v392
        %v396 = vsel %vm395, -1e+09, 0.0
        %v397 = vld [vmem:[%s371] sm:$0xff]
        %vm398 = vcmask 523264
        %v399 = vsel %vm398, %v397, 0.0
        %400 = vadd.xlane.f32.xlu0 %v399
        %v401 = vpop.xlane.xlu0 %400
        %v402 = vrcp.pop 64.0
        %v403 = vmul.f32 %v401, %v402
        %v404 = vsub.f32 %v397, %v403
        %v405 = vmul.f32 %v404, %v404
        %v406 = vsel %vm398, %v405, 0.0
        %407 = vadd.xlane.f32.xlu0 %v406
        %v408 = vpop.xlane.xlu0 %407
        %v409 = vmul.f32 %v408, %v402
        %v410 = vadd.f32 %v409, 1e-05
        %v411 = vrsqrt.pop %v410
        %v412 = vmul.f32 %v404, %v411
        %v413 = vld [vmem:[%s2] sm:$0x1]
        %v414 = vlaneseq
        %v415 = vshrl.u32 %v414, 7
        %v416 = vsub.s32 0, %v415
        %v417 = vrot.slane %v413, %v416
        %v418 = vmul.f32 %v412, %v417
        %v419 = vld [vmem:[%s2 + $0x1] sm:$0x1]
        %v420 = vlaneseq
        %v421 = vshrl.u32 %v420, 7
        %v422 = vsub.s32 0, %v421
        %v423 = vrot.slane %v419, %v422
        %v424 = vadd.f32 %v418, %v423
        %v425 = vpack.c.bf16 %v424, %v424
        %v426 = vld [vmem:[%s0] sm:$0xf]
        %v427 = vld [vmem:[%s0 + $0x4] sm:$0xf]
        %v428 = vld [vmem:[%s0 + $0x8] sm:$0xf]
        %v429 = vld [vmem:[%s0 + $0xc] sm:$0xf]
        %v430 = vld [vmem:[%s0 + $0x10] sm:$0xf]
        %v431 = vld [vmem:[%s0 + $0x14] sm:$0xf]
        %v432 = vld [vmem:[%s0 + $0x18] sm:$0xf]
        %v433 = vld [vmem:[%s0 + $0x1c] sm:$0xf]
        %v434 = vld [vmem:[%s2 + $0x4] sm:$0x1]
        %v435 = vlaneseq
        %v436 = vshrl.u32 %v435, 7
        %v437 = vsub.s32 0, %v436
        %v438 = vrot.slane %v434, %v437
        %v447 = vunpack.c.l.b16 %v426
        %v448 = vunpack.c.l.b16 %v427
        %v449 = vunpack.c.l.b16 %v428
        %v450 = vunpack.c.l.b16 %v429
        %v451 = vunpack.c.l.b16 %v430
        %v452 = vunpack.c.l.b16 %v431
        %v453 = vunpack.c.l.b16 %v432
        %v454 = vunpack.c.l.b16 %v433
        %v455 = vpack.c.b16 %v448, %v447
        %v456 = vpack.c.b16 %v450, %v449
        %v457 = vpack.c.b16 %v452, %v451
        %v458 = vpack.c.b16 %v454, %v453
        %v464 = vsel %vm398, %v425, 0
        %466 = vmatprep.subr.bf16.mxu0 0
        %467 = vmatpush1.bf16.msra.mxu0 0
        %468 = vmatprep.subr.bf16.mxu0 0
        %469 = vmatpush1.bf16.msra.mxu0 0
        %470 = vmatprep.subr.bf16.mxu0 0
        %471 = vmatpush1.bf16.msra.mxu0 0
        %472 = vmatprep.subr.bf16.mxu0 0
        %473 = vmatpush1.bf16.msra.mxu0 0
        %474 = vmatprep.subr.bf16.mxu0 0
        %475 = vmatpush1.bf16.msra.mxu0 %v458
        %476 = vmatprep.subr.bf16.mxu0 0
        %477 = vmatpush1.bf16.msra.mxu0 %v457
        %478 = vmatprep.subr.bf16.mxu0 0
        %479 = vmatpush1.bf16.msra.mxu0 %v456
        %480 = vmatprep.subr.bf16.mxu0 0
        %481 = vmatpush1.bf16.msra.mxu0 %v455
        %482 = vmatprep.subr.bf16.mxu0 0
        %483 = vmatpush2.bf16.msra.mxu0 0
        %484 = vmatprep.subr.bf16.mxu0 0
        %485 = vmatpush2.bf16.msra.mxu0 0
        %486 = vmatprep.subr.bf16.mxu0 0
        %487 = vmatpush2.bf16.msra.mxu0 0
        %488 = vmatprep.subr.bf16.mxu0 0
        %489 = vmatpush2.bf16.msra.mxu0 0
        %490 = vmatprep.subr.bf16.mxu0 0
        %491 = vmatpush2.bf16.msra.mxu0 0
        %492 = vmatprep.subr.bf16.mxu0 0
        %493 = vmatpush2.bf16.msra.mxu0 0
        %494 = vmatprep.subr.bf16.mxu0 0
        %495 = vmatpush2.bf16.msra.mxu0 0
        %496 = vmatprep.subr.bf16.mxu0 0
        %497 = vmatpush2.bf16.msra.mxu0 0
        %498 = vmatprep.mubr.bf16.mxu0 0
        %499 = vmatmul.mubr.bf16.gmra.mxu0 %v464
        %v500 = vpop.f32.mrf.mxu0
        %v501 = vadd.f32 %v438, %v500
        %v502 = vpop.f32.mrf.mxu0
        %v503 = vpop.f32.mrf.mxu0
        %v504 = vpop.f32.mrf.mxu0
        %505 = vdwg.mxu0
        %v506 = vmul.f32 %v501, 0.25
        %v507 = vld [vmem:[%s0 + $0x20] sm:$0xf]
        %v508 = vld [vmem:[%s0 + $0x24] sm:$0xf]
        %v509 = vld [vmem:[%s0 + $0x28] sm:$0xf]
        %v510 = vld [vmem:[%s0 + $0x2c] sm:$0xf]
        %v511 = vld [vmem:[%s0 + $0x30] sm:$0xf]
        %v512 = vld [vmem:[%s0 + $0x34] sm:$0xf]
        %v513 = vld [vmem:[%s0 + $0x38] sm:$0xf]
        %v514 = vld [vmem:[%s0 + $0x3c] sm:$0xf]
        %v515 = vld [vmem:[%s2 + $0x5] sm:$0x1]
        %v516 = vlaneseq
        %v517 = vshrl.u32 %v516, 7
        %v518 = vsub.s32 0, %v517
        %v519 = vrot.slane %v515, %v518
        %v528 = vunpack.c.l.b16 %v507
        %v529 = vunpack.c.l.b16 %v508
        %v530 = vunpack.c.l.b16 %v509
        %v531 = vunpack.c.l.b16 %v510
        %v532 = vunpack.c.l.b16 %v511
        %v533 = vunpack.c.l.b16 %v512
        %v534 = vunpack.c.l.b16 %v513
        %v535 = vunpack.c.l.b16 %v514
        %v536 = vpack.c.b16 %v529, %v528
        %v537 = vpack.c.b16 %v531, %v530
        %v538 = vpack.c.b16 %v533, %v532
        %v539 = vpack.c.b16 %v535, %v534
        %544 = vmatprep.subr.bf16.mxu0 0
        %545 = vmatpush1.bf16.msra.mxu0 0
        %546 = vmatprep.subr.bf16.mxu0 0
        %547 = vmatpush1.bf16.msra.mxu0 0
        %548 = vmatprep.subr.bf16.mxu0 0
        %549 = vmatpush1.bf16.msra.mxu0 0
        %550 = vmatprep.subr.bf16.mxu0 0
        %551 = vmatpush1.bf16.msra.mxu0 0
        %552 = vmatprep.subr.bf16.mxu0 0
        %553 = vmatpush1.bf16.msra.mxu0 %v539
        %554 = vmatprep.subr.bf16.mxu0 0
        %555 = vmatpush1.bf16.msra.mxu0 %v538
        %556 = vmatprep.subr.bf16.mxu0 0
        %557 = vmatpush1.bf16.msra.mxu0 %v537
        %558 = vmatprep.subr.bf16.mxu0 0
        %559 = vmatpush1.bf16.msra.mxu0 %v536
        %560 = vmatprep.subr.bf16.mxu0 0
        %561 = vmatpush2.bf16.msra.mxu0 0
        %562 = vmatprep.subr.bf16.mxu0 0
        %563 = vmatpush2.bf16.msra.mxu0 0
        %564 = vmatprep.subr.bf16.mxu0 0
        %565 = vmatpush2.bf16.msra.mxu0 0
        %566 = vmatprep.subr.bf16.mxu0 0
        %567 = vmatpush2.bf16.msra.mxu0 0
        %568 = vmatprep.subr.bf16.mxu0 0
        %569 = vmatpush2.bf16.msra.mxu0 0
        %570 = vmatprep.subr.bf16.mxu0 0
        %571 = vmatpush2.bf16.msra.mxu0 0
        %572 = vmatprep.subr.bf16.mxu0 0
        %573 = vmatpush2.bf16.msra.mxu0 0
        %574 = vmatprep.subr.bf16.mxu0 0
        %575 = vmatpush2.bf16.msra.mxu0 0
        %576 = vmatprep.mubr.bf16.mxu0 0
        %577 = vmatmul.mubr.bf16.gmra.mxu0 %v464
        %v578 = vpop.f32.mrf.mxu0
        %v579 = vadd.f32 %v519, %v578
        %v580 = vpop.f32.mrf.mxu0
        %v581 = vpop.f32.mrf.mxu0
        %v582 = vpop.f32.mrf.mxu0
        %583 = vdwg.mxu0
        %v584 = vld [vmem:[%s0 + $0x40] sm:$0xf]
        %v585 = vld [vmem:[%s0 + $0x44] sm:$0xf]
        %v586 = vld [vmem:[%s0 + $0x48] sm:$0xf]
        %v587 = vld [vmem:[%s0 + $0x4c] sm:$0xf]
        %v588 = vld [vmem:[%s0 + $0x50] sm:$0xf]
        %v589 = vld [vmem:[%s0 + $0x54] sm:$0xf]
        %v590 = vld [vmem:[%s0 + $0x58] sm:$0xf]
        %v591 = vld [vmem:[%s0 + $0x5c] sm:$0xf]
        %v592 = vld [vmem:[%s2 + $0x6] sm:$0x1]
        %v593 = vlaneseq
        %v594 = vshrl.u32 %v593, 7
        %v595 = vsub.s32 0, %v594
        %v596 = vrot.slane %v592, %v595
        %v605 = vunpack.c.l.b16 %v584
        %v606 = vunpack.c.l.b16 %v585
        %v607 = vunpack.c.l.b16 %v586
        %v608 = vunpack.c.l.b16 %v587
        %v609 = vunpack.c.l.b16 %v588
        %v610 = vunpack.c.l.b16 %v589
        %v611 = vunpack.c.l.b16 %v590
        %v612 = vunpack.c.l.b16 %v591
        %v613 = vpack.c.b16 %v606, %v605
        %v614 = vpack.c.b16 %v608, %v607
        %v615 = vpack.c.b16 %v610, %v609
        %v616 = vpack.c.b16 %v612, %v611
        %621 = vmatprep.subr.bf16.mxu0 0
        %622 = vmatpush1.bf16.msra.mxu0 0
        %623 = vmatprep.subr.bf16.mxu0 0
        %624 = vmatpush1.bf16.msra.mxu0 0
        %625 = vmatprep.subr.bf16.mxu0 0
        %626 = vmatpush1.bf16.msra.mxu0 0
        %627 = vmatprep.subr.bf16.mxu0 0
        %628 = vmatpush1.bf16.msra.mxu0 0
        %629 = vmatprep.subr.bf16.mxu0 0
        %630 = vmatpush1.bf16.msra.mxu0 %v616
        %631 = vmatprep.subr.bf16.mxu0 0
        %632 = vmatpush1.bf16.msra.mxu0 %v615
        %633 = vmatprep.subr.bf16.mxu0 0
        %634 = vmatpush1.bf16.msra.mxu0 %v614
        %635 = vmatprep.subr.bf16.mxu0 0
        %636 = vmatpush1.bf16.msra.mxu0 %v613
        %637 = vmatprep.subr.bf16.mxu0 0
        %638 = vmatpush2.bf16.msra.mxu0 0
        %639 = vmatprep.subr.bf16.mxu0 0
        %640 = vmatpush2.bf16.msra.mxu0 0
        %641 = vmatprep.subr.bf16.mxu0 0
        %642 = vmatpush2.bf16.msra.mxu0 0
        %643 = vmatprep.subr.bf16.mxu0 0
        %644 = vmatpush2.bf16.msra.mxu0 0
        %645 = vmatprep.subr.bf16.mxu0 0
        %646 = vmatpush2.bf16.msra.mxu0 0
        %647 = vmatprep.subr.bf16.mxu0 0
        %648 = vmatpush2.bf16.msra.mxu0 0
        %649 = vmatprep.subr.bf16.mxu0 0
        %650 = vmatpush2.bf16.msra.mxu0 0
        %651 = vmatprep.subr.bf16.mxu0 0
        %652 = vmatpush2.bf16.msra.mxu0 0
        %653 = vmatprep.mubr.bf16.mxu0 0
        %654 = vmatmul.mubr.bf16.gmra.mxu0 %v464
        %v655 = vpop.f32.mrf.mxu0
        %v656 = vadd.f32 %v596, %v655
        %v657 = vpop.f32.mrf.mxu0
        %v658 = vpop.f32.mrf.mxu0
        %v659 = vpop.f32.mrf.mxu0
        %660 = vdwg.mxu0
        %vm661 = vcmask 130048
        %v663 = vsel %vm661, %v506, 0
        %v666 = vsel %vm661, %v579, 0
        %668 = vmatprep.subr.mxu0 0.0
        %669 = vmatpush1.xpose.msra.mxu0 0.0
        %670 = vmatprep.subr.mxu0 0.0
        %671 = vmatpush1.xpose.msra.mxu0 0.0
        %672 = vmatprep.subr.mxu0 0.0
        %673 = vmatpush1.xpose.msra.mxu0 0.0
        %674 = vmatprep.subr.mxu0 0.0
        %675 = vmatpush1.xpose.msra.mxu0 0.0
        %676 = vmatprep.subr.mxu0 0.0
        %677 = vmatpush1.xpose.msra.mxu0 0.0
        %678 = vmatprep.subr.mxu0 0.0
        %679 = vmatpush1.xpose.msra.mxu0 0.0
        %680 = vmatprep.subr.mxu0 0.0
        %681 = vmatpush1.xpose.msra.mxu0 0.0
        %682 = vmatprep.subr.mxu0 0.0
        %683 = vmatpush1.xpose.msra.mxu0 0.0
        %684 = vmatprep.subr.mxu0 0.0
        %685 = vmatpush1.xpose.msra.mxu0 0.0
        %686 = vmatprep.subr.mxu0 0.0
        %687 = vmatpush1.xpose.msra.mxu0 0.0
        %688 = vmatprep.subr.mxu0 0.0
        %689 = vmatpush1.xpose.msra.mxu0 0.0
        %690 = vmatprep.subr.mxu0 0.0
        %691 = vmatpush1.xpose.msra.mxu0 0.0
        %692 = vmatprep.subr.mxu0 0.0
        %693 = vmatpush1.xpose.msra.mxu0 0.0
        %694 = vmatprep.subr.mxu0 0.0
        %695 = vmatpush1.xpose.msra.mxu0 0.0
        %696 = vmatprep.subr.mxu0 0.0
        %697 = vmatpush1.xpose.msra.mxu0 0.0
        %698 = vmatprep.subr.mxu0 0.0
        %699 = vmatpush1.xpose.msra.mxu0 %v666
        %700 = vmatprep.subr.mxu0 0.0
        %701 = vmatpush2.xpose.msra.mxu0 0.0
        %702 = vmatprep.subr.mxu0 0.0
        %703 = vmatpush2.xpose.msra.mxu0 0.0
        %704 = vmatprep.subr.mxu0 0.0
        %705 = vmatpush2.xpose.msra.mxu0 0.0
        %706 = vmatprep.subr.mxu0 0.0
        %707 = vmatpush2.xpose.msra.mxu0 0.0
        %708 = vmatprep.subr.mxu0 0.0
        %709 = vmatpush2.xpose.msra.mxu0 0.0
        %710 = vmatprep.subr.mxu0 0.0
        %711 = vmatpush2.xpose.msra.mxu0 0.0
        %712 = vmatprep.subr.mxu0 0.0
        %713 = vmatpush2.xpose.msra.mxu0 0.0
        %714 = vmatprep.subr.mxu0 0.0
        %715 = vmatpush2.xpose.msra.mxu0 0.0
        %716 = vmatprep.subr.mxu0 0.0
        %717 = vmatpush2.xpose.msra.mxu0 0.0
        %718 = vmatprep.subr.mxu0 0.0
        %719 = vmatpush2.xpose.msra.mxu0 0.0
        %720 = vmatprep.subr.mxu0 0.0
        %721 = vmatpush2.xpose.msra.mxu0 0.0
        %722 = vmatprep.subr.mxu0 0.0
        %723 = vmatpush2.xpose.msra.mxu0 0.0
        %724 = vmatprep.subr.mxu0 0.0
        %725 = vmatpush2.xpose.msra.mxu0 0.0
        %726 = vmatprep.subr.mxu0 0.0
        %727 = vmatpush2.xpose.msra.mxu0 0.0
        %728 = vmatprep.subr.mxu0 0.0
        %729 = vmatpush2.xpose.msra.mxu0 0.0
        %730 = vmatprep.subr.mxu0 0.0
        %731 = vmatpush2.xpose.msra.mxu0 0.0
        %732 = vmatprep.mubr.f32.mxu0 0.0
        %733 = vmatmul.mubr.f32.gmra.mxu0 %v663
        %v734 = vpop.f32.mrf.mxu0
        %v735 = vadd.f32 0.0, %v734
        %v736 = vpop.f32.mrf.mxu0
        %737 = vdwg.mxu0
        %738 = vrot.lane.b32.xlu0 %v506, 112
        %v739 = vpop.permute.xlu0 %738
        %740 = vrot.lane.b32.xlu0 %v579, 112
        %v741 = vpop.permute.xlu0 %740
        %v742 = vsel %vm661, %v739, 0
        %v744 = vsel %vm661, %v741, 0
        %746 = vmatprep.subr.mxu0 0.0
        %747 = vmatpush1.xpose.msra.mxu0 0.0
        %748 = vmatprep.subr.mxu0 0.0
        %749 = vmatpush1.xpose.msra.mxu0 0.0
        %750 = vmatprep.subr.mxu0 0.0
        %751 = vmatpush1.xpose.msra.mxu0 0.0
        %752 = vmatprep.subr.mxu0 0.0
        %753 = vmatpush1.xpose.msra.mxu0 0.0
        %754 = vmatprep.subr.mxu0 0.0
        %755 = vmatpush1.xpose.msra.mxu0 0.0
        %756 = vmatprep.subr.mxu0 0.0
        %757 = vmatpush1.xpose.msra.mxu0 0.0
        %758 = vmatprep.subr.mxu0 0.0
        %759 = vmatpush1.xpose.msra.mxu0 0.0
        %760 = vmatprep.subr.mxu0 0.0
        %761 = vmatpush1.xpose.msra.mxu0 0.0
        %762 = vmatprep.subr.mxu0 0.0
        %763 = vmatpush1.xpose.msra.mxu0 0.0
        %764 = vmatprep.subr.mxu0 0.0
        %765 = vmatpush1.xpose.msra.mxu0 0.0
        %766 = vmatprep.subr.mxu0 0.0
        %767 = vmatpush1.xpose.msra.mxu0 0.0
        %768 = vmatprep.subr.mxu0 0.0
        %769 = vmatpush1.xpose.msra.mxu0 0.0
        %770 = vmatprep.subr.mxu0 0.0
        %771 = vmatpush1.xpose.msra.mxu0 0.0
        %772 = vmatprep.subr.mxu0 0.0
        %773 = vmatpush1.xpose.msra.mxu0 0.0
        %774 = vmatprep.subr.mxu0 0.0
        %775 = vmatpush1.xpose.msra.mxu0 0.0
        %776 = vmatprep.subr.mxu0 0.0
        %777 = vmatpush1.xpose.msra.mxu0 %v744
        %778 = vmatprep.subr.mxu0 0.0
        %779 = vmatpush2.xpose.msra.mxu0 0.0
        %780 = vmatprep.subr.mxu0 0.0
        %781 = vmatpush2.xpose.msra.mxu0 0.0
        %782 = vmatprep.subr.mxu0 0.0
        %783 = vmatpush2.xpose.msra.mxu0 0.0
        %784 = vmatprep.subr.mxu0 0.0
        %785 = vmatpush2.xpose.msra.mxu0 0.0
        %786 = vmatprep.subr.mxu0 0.0
        %787 = vmatpush2.xpose.msra.mxu0 0.0
        %788 = vmatprep.subr.mxu0 0.0
        %789 = vmatpush2.xpose.msra.mxu0 0.0
        %790 = vmatprep.subr.mxu0 0.0
        %791 = vmatpush2.xpose.msra.mxu0 0.0
        %792 = vmatprep.subr.mxu0 0.0
        %793 = vmatpush2.xpose.msra.mxu0 0.0
        %794 = vmatprep.subr.mxu0 0.0
        %795 = vmatpush2.xpose.msra.mxu0 0.0
        %796 = vmatprep.subr.mxu0 0.0
        %797 = vmatpush2.xpose.msra.mxu0 0.0
        %798 = vmatprep.subr.mxu0 0.0
        %799 = vmatpush2.xpose.msra.mxu0 0.0
        %800 = vmatprep.subr.mxu0 0.0
        %801 = vmatpush2.xpose.msra.mxu0 0.0
        %802 = vmatprep.subr.mxu0 0.0
        %803 = vmatpush2.xpose.msra.mxu0 0.0
        %804 = vmatprep.subr.mxu0 0.0
        %805 = vmatpush2.xpose.msra.mxu0 0.0
        %806 = vmatprep.subr.mxu0 0.0
        %807 = vmatpush2.xpose.msra.mxu0 0.0
        %808 = vmatprep.subr.mxu0 0.0
        %809 = vmatpush2.xpose.msra.mxu0 0.0
        %810 = vmatprep.mubr.f32.mxu0 0.0
        %811 = vmatmul.mubr.f32.gmra.mxu0 %v742
        %v812 = vpop.f32.mrf.mxu0
        %v813 = vadd.f32 0.0, %v812
        %v814 = vpop.f32.mrf.mxu0
        %815 = vdwg.mxu0
        %816 = vrot.lane.b32.xlu0 %v506, 96
        %v817 = vpop.permute.xlu0 %816
        %818 = vrot.lane.b32.xlu0 %v579, 96
        %v819 = vpop.permute.xlu0 %818
        %v820 = vsel %vm661, %v817, 0
        %v822 = vsel %vm661, %v819, 0
        %824 = vmatprep.subr.mxu0 0.0
        %825 = vmatpush1.xpose.msra.mxu0 0.0
        %826 = vmatprep.subr.mxu0 0.0
        %827 = vmatpush1.xpose.msra.mxu0 0.0
        %828 = vmatprep.subr.mxu0 0.0
        %829 = vmatpush1.xpose.msra.mxu0 0.0
        %830 = vmatprep.subr.mxu0 0.0
        %831 = vmatpush1.xpose.msra.mxu0 0.0
        %832 = vmatprep.subr.mxu0 0.0
        %833 = vmatpush1.xpose.msra.mxu0 0.0
        %834 = vmatprep.subr.mxu0 0.0
        %835 = vmatpush1.xpose.msra.mxu0 0.0
        %836 = vmatprep.subr.mxu0 0.0
        %837 = vmatpush1.xpose.msra.mxu0 0.0
        %838 = vmatprep.subr.mxu0 0.0
        %839 = vmatpush1.xpose.msra.mxu0 0.0
        %840 = vmatprep.subr.mxu0 0.0
        %841 = vmatpush1.xpose.msra.mxu0 0.0
        %842 = vmatprep.subr.mxu0 0.0
        %843 = vmatpush1.xpose.msra.mxu0 0.0
        %844 = vmatprep.subr.mxu0 0.0
        %845 = vmatpush1.xpose.msra.mxu0 0.0
        %846 = vmatprep.subr.mxu0 0.0
        %847 = vmatpush1.xpose.msra.mxu0 0.0
        %848 = vmatprep.subr.mxu0 0.0
        %849 = vmatpush1.xpose.msra.mxu0 0.0
        %850 = vmatprep.subr.mxu0 0.0
        %851 = vmatpush1.xpose.msra.mxu0 0.0
        %852 = vmatprep.subr.mxu0 0.0
        %853 = vmatpush1.xpose.msra.mxu0 0.0
        %854 = vmatprep.subr.mxu0 0.0
        %855 = vmatpush1.xpose.msra.mxu0 %v822
        %856 = vmatprep.subr.mxu0 0.0
        %857 = vmatpush2.xpose.msra.mxu0 0.0
        %858 = vmatprep.subr.mxu0 0.0
        %859 = vmatpush2.xpose.msra.mxu0 0.0
        %860 = vmatprep.subr.mxu0 0.0
        %861 = vmatpush2.xpose.msra.mxu0 0.0
        %862 = vmatprep.subr.mxu0 0.0
        %863 = vmatpush2.xpose.msra.mxu0 0.0
        %864 = vmatprep.subr.mxu0 0.0
        %865 = vmatpush2.xpose.msra.mxu0 0.0
        %866 = vmatprep.subr.mxu0 0.0
        %867 = vmatpush2.xpose.msra.mxu0 0.0
        %868 = vmatprep.subr.mxu0 0.0
        %869 = vmatpush2.xpose.msra.mxu0 0.0
        %870 = vmatprep.subr.mxu0 0.0
        %871 = vmatpush2.xpose.msra.mxu0 0.0
        %872 = vmatprep.subr.mxu0 0.0
        %873 = vmatpush2.xpose.msra.mxu0 0.0
        %874 = vmatprep.subr.mxu0 0.0
        %875 = vmatpush2.xpose.msra.mxu0 0.0
        %876 = vmatprep.subr.mxu0 0.0
        %877 = vmatpush2.xpose.msra.mxu0 0.0
        %878 = vmatprep.subr.mxu0 0.0
        %879 = vmatpush2.xpose.msra.mxu0 0.0
        %880 = vmatprep.subr.mxu0 0.0
        %881 = vmatpush2.xpose.msra.mxu0 0.0
        %882 = vmatprep.subr.mxu0 0.0
        %883 = vmatpush2.xpose.msra.mxu0 0.0
        %884 = vmatprep.subr.mxu0 0.0
        %885 = vmatpush2.xpose.msra.mxu0 0.0
        %886 = vmatprep.subr.mxu0 0.0
        %887 = vmatpush2.xpose.msra.mxu0 0.0
        %888 = vmatprep.mubr.f32.mxu0 0.0
        %889 = vmatmul.mubr.f32.gmra.mxu0 %v820
        %v890 = vpop.f32.mrf.mxu0
        %v891 = vadd.f32 0.0, %v890
        %v892 = vpop.f32.mrf.mxu0
        %893 = vdwg.mxu0
        %894 = vrot.lane.b32.xlu0 %v506, 80
        %v895 = vpop.permute.xlu0 %894
        %896 = vrot.lane.b32.xlu0 %v579, 80
        %v897 = vpop.permute.xlu0 %896
        %v898 = vsel %vm661, %v895, 0
        %v900 = vsel %vm661, %v897, 0
        %902 = vmatprep.subr.mxu0 0.0
        %903 = vmatpush1.xpose.msra.mxu0 0.0
        %904 = vmatprep.subr.mxu0 0.0
        %905 = vmatpush1.xpose.msra.mxu0 0.0
        %906 = vmatprep.subr.mxu0 0.0
        %907 = vmatpush1.xpose.msra.mxu0 0.0
        %908 = vmatprep.subr.mxu0 0.0
        %909 = vmatpush1.xpose.msra.mxu0 0.0
        %910 = vmatprep.subr.mxu0 0.0
        %911 = vmatpush1.xpose.msra.mxu0 0.0
        %912 = vmatprep.subr.mxu0 0.0
        %913 = vmatpush1.xpose.msra.mxu0 0.0
        %914 = vmatprep.subr.mxu0 0.0
        %915 = vmatpush1.xpose.msra.mxu0 0.0
        %916 = vmatprep.subr.mxu0 0.0
        %917 = vmatpush1.xpose.msra.mxu0 0.0
        %918 = vmatprep.subr.mxu0 0.0
        %919 = vmatpush1.xpose.msra.mxu0 0.0
        %920 = vmatprep.subr.mxu0 0.0
        %921 = vmatpush1.xpose.msra.mxu0 0.0
        %922 = vmatprep.subr.mxu0 0.0
        %923 = vmatpush1.xpose.msra.mxu0 0.0
        %924 = vmatprep.subr.mxu0 0.0
        %925 = vmatpush1.xpose.msra.mxu0 0.0
        %926 = vmatprep.subr.mxu0 0.0
        %927 = vmatpush1.xpose.msra.mxu0 0.0
        %928 = vmatprep.subr.mxu0 0.0
        %929 = vmatpush1.xpose.msra.mxu0 0.0
        %930 = vmatprep.subr.mxu0 0.0
        %931 = vmatpush1.xpose.msra.mxu0 0.0
        %932 = vmatprep.subr.mxu0 0.0
        %933 = vmatpush1.xpose.msra.mxu0 %v900
        %934 = vmatprep.subr.mxu0 0.0
        %935 = vmatpush2.xpose.msra.mxu0 0.0
        %936 = vmatprep.subr.mxu0 0.0
        %937 = vmatpush2.xpose.msra.mxu0 0.0
        %938 = vmatprep.subr.mxu0 0.0
        %939 = vmatpush2.xpose.msra.mxu0 0.0
        %940 = vmatprep.subr.mxu0 0.0
        %941 = vmatpush2.xpose.msra.mxu0 0.0
        %942 = vmatprep.subr.mxu0 0.0
        %943 = vmatpush2.xpose.msra.mxu0 0.0
        %944 = vmatprep.subr.mxu0 0.0
        %945 = vmatpush2.xpose.msra.mxu0 0.0
        %946 = vmatprep.subr.mxu0 0.0
        %947 = vmatpush2.xpose.msra.mxu0 0.0
        %948 = vmatprep.subr.mxu0 0.0
        %949 = vmatpush2.xpose.msra.mxu0 0.0
        %950 = vmatprep.subr.mxu0 0.0
        %951 = vmatpush2.xpose.msra.mxu0 0.0
        %952 = vmatprep.subr.mxu0 0.0
        %953 = vmatpush2.xpose.msra.mxu0 0.0
        %954 = vmatprep.subr.mxu0 0.0
        %955 = vmatpush2.xpose.msra.mxu0 0.0
        %956 = vmatprep.subr.mxu0 0.0
        %957 = vmatpush2.xpose.msra.mxu0 0.0
        %958 = vmatprep.subr.mxu0 0.0
        %959 = vmatpush2.xpose.msra.mxu0 0.0
        %960 = vmatprep.subr.mxu0 0.0
        %961 = vmatpush2.xpose.msra.mxu0 0.0
        %962 = vmatprep.subr.mxu0 0.0
        %963 = vmatpush2.xpose.msra.mxu0 0.0
        %964 = vmatprep.subr.mxu0 0.0
        %965 = vmatpush2.xpose.msra.mxu0 0.0
        %966 = vmatprep.mubr.f32.mxu0 0.0
        %967 = vmatmul.mubr.f32.gmra.mxu0 %v898
        %v968 = vpop.f32.mrf.mxu0
        %v969 = vadd.f32 0.0, %v968
        %v970 = vpop.f32.mrf.mxu0
        %971 = vdwg.mxu0
        %v973 = vlaneseq
        %v974 = vshrl.u32 %v973, 7
        %v975 = vsub.s32 0, %v974
        %v976 = vrot.slane %v390, %v975
        %v978 = vadd.f32 %v735, %v976
        %v979 = vadd.f32 %v813, %v976
        %v980 = vadd.f32 %v891, %v976
        %v981 = vadd.f32 %v969, %v976
        %vm982 = vcmask 64512
        %v983 = vsel %vm982, %v978, -inf
        %984 = vmax.xlane.f32.xlu0 %v983
        %v985 = vpop.xlane.xlu0 %984
        %v986 = vsel %vm982, %v979, -inf
        %987 = vmax.xlane.f32.xlu0 %v986
        %v988 = vpop.xlane.xlu0 %987
        %v989 = vsel %vm982, %v980, -inf
        %990 = vmax.xlane.f32.xlu0 %v989
        %v991 = vpop.xlane.xlu0 %990
        %v992 = vsel %vm982, %v981, -inf
        %993 = vmax.xlane.f32.xlu0 %v992
        %v994 = vpop.xlane.xlu0 %993
        %v995 = vsub.f32 %v978, %v985
        %v996 = vsub.f32 %v979, %v988
        %v997 = vsub.f32 %v980, %v991
        %v998 = vsub.f32 %v981, %v994
        %v999 = vmul.f32 %v995, 1.442695
        %v1000 = vpow.pop %v999
        %v1001 = vmul.f32 %v996, 1.442695
        %v1002 = vpow.pop %v1001
        %v1003 = vmul.f32 %v997, 1.442695
        %v1004 = vpow.pop %v1003
        %v1005 = vmul.f32 %v998, 1.442695
        %v1006 = vpow.pop %v1005
        %v1007 = vsel %vm982, %v1000, 0.0
        %1008 = vadd.xlane.f32.xlu0 %v1007
        %v1009 = vpop.xlane.xlu0 %1008
        %v1010 = vsel %vm982, %v1002, 0.0
        %1011 = vadd.xlane.f32.xlu0 %v1010
        %v1012 = vpop.xlane.xlu0 %1011
        %v1013 = vsel %vm982, %v1004, 0.0
        %1014 = vadd.xlane.f32.xlu0 %v1013
        %v1015 = vpop.xlane.xlu0 %1014
        %v1016 = vsel %vm982, %v1006, 0.0
        %1017 = vadd.xlane.f32.xlu0 %v1016
        %v1018 = vpop.xlane.xlu0 %1017
        %v1019 = vrcp.pop %v1009
        %v1020 = vrcp.pop %v1012
        %v1021 = vrcp.pop %v1015
        %v1022 = vrcp.pop %v1018
        %v1023 = vmul.f32 %v1000, %v1019
        %v1024 = vmul.f32 %v1002, %v1020
        %v1025 = vmul.f32 %v1004, %v1021
        %v1026 = vmul.f32 %v1006, %v1022
        %v1028 = vsel %vm982, %v1023, 0
        %1030 = vmatprep.subr.mxu0 0.0
        %1031 = vmatpush1.msra.mxu0 0.0
        %1032 = vmatprep.subr.mxu0 0.0
        %1033 = vmatpush1.msra.mxu0 0.0
        %1034 = vmatprep.subr.mxu0 0.0
        %1035 = vmatpush1.msra.mxu0 0.0
        %1036 = vmatprep.subr.mxu0 0.0
        %1037 = vmatpush1.msra.mxu0 0.0
        %1038 = vmatprep.subr.mxu0 0.0
        %1039 = vmatpush1.msra.mxu0 0.0
        %1040 = vmatprep.subr.mxu0 0.0
        %1041 = vmatpush1.msra.mxu0 0.0
        %1042 = vmatprep.subr.mxu0 0.0
        %1043 = vmatpush1.msra.mxu0 0.0
        %1044 = vmatprep.subr.mxu0 0.0
        %1045 = vmatpush1.msra.mxu0 0.0
        %1046 = vmatprep.subr.mxu0 0.0
        %1047 = vmatpush1.msra.mxu0 0.0
        %1048 = vmatprep.subr.mxu0 0.0
        %1049 = vmatpush1.msra.mxu0 0.0
        %1050 = vmatprep.subr.mxu0 0.0
        %1051 = vmatpush1.msra.mxu0 0.0
        %1052 = vmatprep.subr.mxu0 0.0
        %1053 = vmatpush1.msra.mxu0 0.0
        %1054 = vmatprep.subr.mxu0 0.0
        %1055 = vmatpush1.msra.mxu0 0.0
        %1056 = vmatprep.subr.mxu0 0.0
        %1057 = vmatpush1.msra.mxu0 0.0
        %1058 = vmatprep.subr.mxu0 0.0
        %1059 = vmatpush1.msra.mxu0 0.0
        %1060 = vmatprep.subr.mxu0 0.0
        %1061 = vmatpush1.msra.mxu0 %v656
        %1062 = vmatprep.subr.mxu0 0.0
        %1063 = vmatpush2.msra.mxu0 0.0
        %1064 = vmatprep.subr.mxu0 0.0
        %1065 = vmatpush2.msra.mxu0 0.0
        %1066 = vmatprep.subr.mxu0 0.0
        %1067 = vmatpush2.msra.mxu0 0.0
        %1068 = vmatprep.subr.mxu0 0.0
        %1069 = vmatpush2.msra.mxu0 0.0
        %1070 = vmatprep.subr.mxu0 0.0
        %1071 = vmatpush2.msra.mxu0 0.0
        %1072 = vmatprep.subr.mxu0 0.0
        %1073 = vmatpush2.msra.mxu0 0.0
        %1074 = vmatprep.subr.mxu0 0.0
        %1075 = vmatpush2.msra.mxu0 0.0
        %1076 = vmatprep.subr.mxu0 0.0
        %1077 = vmatpush2.msra.mxu0 0.0
        %1078 = vmatprep.subr.mxu0 0.0
        %1079 = vmatpush2.msra.mxu0 0.0
        %1080 = vmatprep.subr.mxu0 0.0
        %1081 = vmatpush2.msra.mxu0 0.0
        %1082 = vmatprep.subr.mxu0 0.0
        %1083 = vmatpush2.msra.mxu0 0.0
        %1084 = vmatprep.subr.mxu0 0.0
        %1085 = vmatpush2.msra.mxu0 0.0
        %1086 = vmatprep.subr.mxu0 0.0
        %1087 = vmatpush2.msra.mxu0 0.0
        %1088 = vmatprep.subr.mxu0 0.0
        %1089 = vmatpush2.msra.mxu0 0.0
        %1090 = vmatprep.subr.mxu0 0.0
        %1091 = vmatpush2.msra.mxu0 0.0
        %1092 = vmatprep.subr.mxu0 0.0
        %1093 = vmatpush2.msra.mxu0 0.0
        %1094 = vmatprep.mubr.f32.mxu0 0.0
        %1095 = vmatmul.mubr.f32.gmra.mxu0 %v1028
        %v1096 = vpop.f32.mrf.mxu0
        %v1097 = vadd.f32 0.0, %v1096
        %v1098 = vpop.f32.mrf.mxu0
        %1099 = vdwg.mxu0
        %v1100 = vld [vmem:[%s0 + $0x60] sm:$0xf]
        %v1101 = vld [vmem:[%s0 + $0x64] sm:$0xf]
        %v1102 = vpack.c.bf16 %v1097, %v1097
        %1104 = vrot.lane.b32.xlu0 %v656, 112
        %v1105 = vpop.permute.xlu0 %1104
        %v1108 = vsel %vm982, %v1024, 0
        %1110 = vmatprep.subr.mxu0 0.0
        %1111 = vmatpush1.msra.mxu0 0.0
        %1112 = vmatprep.subr.mxu0 0.0
        %1113 = vmatpush1.msra.mxu0 0.0
        %1114 = vmatprep.subr.mxu0 0.0
        %1115 = vmatpush1.msra.mxu0 0.0
        %1116 = vmatprep.subr.mxu0 0.0
        %1117 = vmatpush1.msra.mxu0 0.0
        %1118 = vmatprep.subr.mxu0 0.0
        %1119 = vmatpush1.msra.mxu0 0.0
        %1120 = vmatprep.subr.mxu0 0.0
        %1121 = vmatpush1.msra.mxu0 0.0
        %1122 = vmatprep.subr.mxu0 0.0
        %1123 = vmatpush1.msra.mxu0 0.0
        %1124 = vmatprep.subr.mxu0 0.0
        %1125 = vmatpush1.msra.mxu0 0.0
        %1126 = vmatprep.subr.mxu0 0.0
        %1127 = vmatpush1.msra.mxu0 0.0
        %1128 = vmatprep.subr.mxu0 0.0
        %1129 = vmatpush1.msra.mxu0 0.0
        %1130 = vmatprep.subr.mxu0 0.0
        %1131 = vmatpush1.msra.mxu0 0.0
        %1132 = vmatprep.subr.mxu0 0.0
        %1133 = vmatpush1.msra.mxu0 0.0
        %1134 = vmatprep.subr.mxu0 0.0
        %1135 = vmatpush1.msra.mxu0 0.0
        %1136 = vmatprep.subr.mxu0 0.0
        %1137 = vmatpush1.msra.mxu0 0.0
        %1138 = vmatprep.subr.mxu0 0.0
        %1139 = vmatpush1.msra.mxu0 0.0
        %1140 = vmatprep.subr.mxu0 0.0
        %1141 = vmatpush1.msra.mxu0 %v1105
        %1142 = vmatprep.subr.mxu0 0.0
        %1143 = vmatpush2.msra.mxu0 0.0
        %1144 = vmatprep.subr.mxu0 0.0
        %1145 = vmatpush2.msra.mxu0 0.0
        %1146 = vmatprep.subr.mxu0 0.0
        %1147 = vmatpush2.msra.mxu0 0.0
        %1148 = vmatprep.subr.mxu0 0.0
        %1149 = vmatpush2.msra.mxu0 0.0
        %1150 = vmatprep.subr.mxu0 0.0
        %1151 = vmatpush2.msra.mxu0 0.0
        %1152 = vmatprep.subr.mxu0 0.0
        %1153 = vmatpush2.msra.mxu0 0.0
        %1154 = vmatprep.subr.mxu0 0.0
        %1155 = vmatpush2.msra.mxu0 0.0
        %1156 = vmatprep.subr.mxu0 0.0
        %1157 = vmatpush2.msra.mxu0 0.0
        %1158 = vmatprep.subr.mxu0 0.0
        %1159 = vmatpush2.msra.mxu0 0.0
        %1160 = vmatprep.subr.mxu0 0.0
        %1161 = vmatpush2.msra.mxu0 0.0
        %1162 = vmatprep.subr.mxu0 0.0
        %1163 = vmatpush2.msra.mxu0 0.0
        %1164 = vmatprep.subr.mxu0 0.0
        %1165 = vmatpush2.msra.mxu0 0.0
        %1166 = vmatprep.subr.mxu0 0.0
        %1167 = vmatpush2.msra.mxu0 0.0
        %1168 = vmatprep.subr.mxu0 0.0
        %1169 = vmatpush2.msra.mxu0 0.0
        %1170 = vmatprep.subr.mxu0 0.0
        %1171 = vmatpush2.msra.mxu0 0.0
        %1172 = vmatprep.subr.mxu0 0.0
        %1173 = vmatpush2.msra.mxu0 0.0
        %1174 = vmatprep.mubr.f32.mxu0 0.0
        %1175 = vmatmul.mubr.f32.gmra.mxu0 %v1108
        %v1176 = vpop.f32.mrf.mxu0
        %v1177 = vadd.f32 0.0, %v1176
        %v1178 = vpop.f32.mrf.mxu0
        %1179 = vdwg.mxu0
        %v1180 = vld [vmem:[%s0 + $0x68] sm:$0xf]
        %v1181 = vld [vmem:[%s0 + $0x6c] sm:$0xf]
        %v1182 = vpack.c.bf16 %v1177, %v1177
        %v1185 = vunpack.c.l.b16 %v1180
        %v1186 = vunpack.c.l.b16 %v1181
        %v1187 = vpack.c.b16 %v1186, %v1185
        %v1190 = vsel %vm661, %v1182, 0
        %1192 = vmatprep.subr.bf16.mxu0 0
        %1193 = vmatpush1.bf16.msra.mxu0 0
        %1194 = vmatprep.subr.bf16.mxu0 0
        %1195 = vmatpush1.bf16.msra.mxu0 0
        %1196 = vmatprep.subr.bf16.mxu0 0
        %1197 = vmatpush1.bf16.msra.mxu0 0
        %1198 = vmatprep.subr.bf16.mxu0 0
        %1199 = vmatpush1.bf16.msra.mxu0 0
        %1200 = vmatprep.subr.bf16.mxu0 0
        %1201 = vmatpush1.bf16.msra.mxu0 0
        %1202 = vmatprep.subr.bf16.mxu0 0
        %1203 = vmatpush1.bf16.msra.mxu0 0
        %1204 = vmatprep.subr.bf16.mxu0 0
        %1205 = vmatpush1.bf16.msra.mxu0 0
        %1206 = vmatprep.subr.bf16.mxu0 0
        %1207 = vmatpush1.bf16.msra.mxu0 %v1187
        %1208 = vmatprep.subr.bf16.mxu0 0
        %1209 = vmatpush2.bf16.msra.mxu0 0
        %1210 = vmatprep.subr.bf16.mxu0 0
        %1211 = vmatpush2.bf16.msra.mxu0 0
        %1212 = vmatprep.subr.bf16.mxu0 0
        %1213 = vmatpush2.bf16.msra.mxu0 0
        %1214 = vmatprep.subr.bf16.mxu0 0
        %1215 = vmatpush2.bf16.msra.mxu0 0
        %1216 = vmatprep.subr.bf16.mxu0 0
        %1217 = vmatpush2.bf16.msra.mxu0 0
        %1218 = vmatprep.subr.bf16.mxu0 0
        %1219 = vmatpush2.bf16.msra.mxu0 0
        %1220 = vmatprep.subr.bf16.mxu0 0
        %1221 = vmatpush2.bf16.msra.mxu0 0
        %1222 = vmatprep.subr.bf16.mxu0 0
        %1223 = vmatpush2.bf16.msra.mxu0 0
        %1224 = vmatprep.mubr.bf16.mxu0 0
        %1225 = vmatmul.mubr.bf16.gmra.mxu0 %v1190
        %v1226 = vpop.f32.mrf.mxu0
        %v1227 = vadd.f32 0.0, %v1226
        %v1228 = vpop.f32.mrf.mxu0
        %v1229 = vpop.f32.mrf.mxu0
        %v1230 = vpop.f32.mrf.mxu0
        %1231 = vdwg.mxu0
        %v1234 = vunpack.c.l.b16 %v1100
        %v1235 = vunpack.c.l.b16 %v1101
        %v1236 = vpack.c.b16 %v1235, %v1234
        %v1239 = vsel %vm661, %v1102, 0
        %1241 = vmatprep.subr.bf16.mxu0 0
        %1242 = vmatpush1.bf16.msra.mxu0 0
        %1243 = vmatprep.subr.bf16.mxu0 0
        %1244 = vmatpush1.bf16.msra.mxu0 0
        %1245 = vmatprep.subr.bf16.mxu0 0
        %1246 = vmatpush1.bf16.msra.mxu0 0
        %1247 = vmatprep.subr.bf16.mxu0 0
        %1248 = vmatpush1.bf16.msra.mxu0 0
        %1249 = vmatprep.subr.bf16.mxu0 0
        %1250 = vmatpush1.bf16.msra.mxu0 0
        %1251 = vmatprep.subr.bf16.mxu0 0
        %1252 = vmatpush1.bf16.msra.mxu0 0
        %1253 = vmatprep.subr.bf16.mxu0 0
        %1254 = vmatpush1.bf16.msra.mxu0 0
        %1255 = vmatprep.subr.bf16.mxu0 0
        %1256 = vmatpush1.bf16.msra.mxu0 %v1236
        %1257 = vmatprep.subr.bf16.mxu0 0
        %1258 = vmatpush2.bf16.msra.mxu0 0
        %1259 = vmatprep.subr.bf16.mxu0 0
        %1260 = vmatpush2.bf16.msra.mxu0 0
        %1261 = vmatprep.subr.bf16.mxu0 0
        %1262 = vmatpush2.bf16.msra.mxu0 0
        %1263 = vmatprep.subr.bf16.mxu0 0
        %1264 = vmatpush2.bf16.msra.mxu0 0
        %1265 = vmatprep.subr.bf16.mxu0 0
        %1266 = vmatpush2.bf16.msra.mxu0 0
        %1267 = vmatprep.subr.bf16.mxu0 0
        %1268 = vmatpush2.bf16.msra.mxu0 0
        %1269 = vmatprep.subr.bf16.mxu0 0
        %1270 = vmatpush2.bf16.msra.mxu0 0
        %1271 = vmatprep.subr.bf16.mxu0 0
        %1272 = vmatpush2.bf16.msra.mxu0 0
        %1273 = vmatprep.mubr.bf16.mxu0 0
        %1274 = vmatmul.mubr.bf16.gmra.mxu0 %v1239
        %v1275 = vpop.f32.mrf.mxu0
        %v1276 = vadd.f32 %v1227, %v1275
        %v1277 = vpop.f32.mrf.mxu0
        %v1278 = vpop.f32.mrf.mxu0
        %v1279 = vpop.f32.mrf.mxu0
        %1280 = vdwg.mxu0
        %1281 = vrot.lane.b32.xlu0 %v656, 96
        %v1282 = vpop.permute.xlu0 %1281
        %v1285 = vsel %vm982, %v1025, 0
        %1287 = vmatprep.subr.mxu0 0.0
        %1288 = vmatpush1.msra.mxu0 0.0
        %1289 = vmatprep.subr.mxu0 0.0
        %1290 = vmatpush1.msra.mxu0 0.0
        %1291 = vmatprep.subr.mxu0 0.0
        %1292 = vmatpush1.msra.mxu0 0.0
        %1293 = vmatprep.subr.mxu0 0.0
        %1294 = vmatpush1.msra.mxu0 0.0
        %1295 = vmatprep.subr.mxu0 0.0
        %1296 = vmatpush1.msra.mxu0 0.0
        %1297 = vmatprep.subr.mxu0 0.0
        %1298 = vmatpush1.msra.mxu0 0.0
        %1299 = vmatprep.subr.mxu0 0.0
        %1300 = vmatpush1.msra.mxu0 0.0
        %1301 = vmatprep.subr.mxu0 0.0
        %1302 = vmatpush1.msra.mxu0 0.0
        %1303 = vmatprep.subr.mxu0 0.0
        %1304 = vmatpush1.msra.mxu0 0.0
        %1305 = vmatprep.subr.mxu0 0.0
        %1306 = vmatpush1.msra.mxu0 0.0
        %1307 = vmatprep.subr.mxu0 0.0
        %1308 = vmatpush1.msra.mxu0 0.0
        %1309 = vmatprep.subr.mxu0 0.0
        %1310 = vmatpush1.msra.mxu0 0.0
        %1311 = vmatprep.subr.mxu0 0.0
        %1312 = vmatpush1.msra.mxu0 0.0
        %1313 = vmatprep.subr.mxu0 0.0
        %1314 = vmatpush1.msra.mxu0 0.0
        %1315 = vmatprep.subr.mxu0 0.0
        %1316 = vmatpush1.msra.mxu0 0.0
        %1317 = vmatprep.subr.mxu0 0.0
        %1318 = vmatpush1.msra.mxu0 %v1282
        %1319 = vmatprep.subr.mxu0 0.0
        %1320 = vmatpush2.msra.mxu0 0.0
        %1321 = vmatprep.subr.mxu0 0.0
        %1322 = vmatpush2.msra.mxu0 0.0
        %1323 = vmatprep.subr.mxu0 0.0
        %1324 = vmatpush2.msra.mxu0 0.0
        %1325 = vmatprep.subr.mxu0 0.0
        %1326 = vmatpush2.msra.mxu0 0.0
        %1327 = vmatprep.subr.mxu0 0.0
        %1328 = vmatpush2.msra.mxu0 0.0
        %1329 = vmatprep.subr.mxu0 0.0
        %1330 = vmatpush2.msra.mxu0 0.0
        %1331 = vmatprep.subr.mxu0 0.0
        %1332 = vmatpush2.msra.mxu0 0.0
        %1333 = vmatprep.subr.mxu0 0.0
        %1334 = vmatpush2.msra.mxu0 0.0
        %1335 = vmatprep.subr.mxu0 0.0
        %1336 = vmatpush2.msra.mxu0 0.0
        %1337 = vmatprep.subr.mxu0 0.0
        %1338 = vmatpush2.msra.mxu0 0.0
        %1339 = vmatprep.subr.mxu0 0.0
        %1340 = vmatpush2.msra.mxu0 0.0
        %1341 = vmatprep.subr.mxu0 0.0
        %1342 = vmatpush2.msra.mxu0 0.0
        %1343 = vmatprep.subr.mxu0 0.0
        %1344 = vmatpush2.msra.mxu0 0.0
        %1345 = vmatprep.subr.mxu0 0.0
        %1346 = vmatpush2.msra.mxu0 0.0
        %1347 = vmatprep.subr.mxu0 0.0
        %1348 = vmatpush2.msra.mxu0 0.0
        %1349 = vmatprep.subr.mxu0 0.0
        %1350 = vmatpush2.msra.mxu0 0.0
        %1351 = vmatprep.mubr.f32.mxu0 0.0
        %1352 = vmatmul.mubr.f32.gmra.mxu0 %v1285
        %v1353 = vpop.f32.mrf.mxu0
        %v1354 = vadd.f32 0.0, %v1353
        %v1355 = vpop.f32.mrf.mxu0
        %1356 = vdwg.mxu0
        %v1357 = vld [vmem:[%s0 + $0x70] sm:$0xf]
        %v1358 = vld [vmem:[%s0 + $0x74] sm:$0xf]
        %v1359 = vpack.c.bf16 %v1354, %v1354
        %v1362 = vunpack.c.l.b16 %v1357
        %v1363 = vunpack.c.l.b16 %v1358
        %v1364 = vpack.c.b16 %v1363, %v1362
        %v1367 = vsel %vm661, %v1359, 0
        %1369 = vmatprep.subr.bf16.mxu0 0
        %1370 = vmatpush1.bf16.msra.mxu0 0
        %1371 = vmatprep.subr.bf16.mxu0 0
        %1372 = vmatpush1.bf16.msra.mxu0 0
        %1373 = vmatprep.subr.bf16.mxu0 0
        %1374 = vmatpush1.bf16.msra.mxu0 0
        %1375 = vmatprep.subr.bf16.mxu0 0
        %1376 = vmatpush1.bf16.msra.mxu0 0
        %1377 = vmatprep.subr.bf16.mxu0 0
        %1378 = vmatpush1.bf16.msra.mxu0 0
        %1379 = vmatprep.subr.bf16.mxu0 0
        %1380 = vmatpush1.bf16.msra.mxu0 0
        %1381 = vmatprep.subr.bf16.mxu0 0
        %1382 = vmatpush1.bf16.msra.mxu0 0
        %1383 = vmatprep.subr.bf16.mxu0 0
        %1384 = vmatpush1.bf16.msra.mxu0 %v1364
        %1385 = vmatprep.subr.bf16.mxu0 0
        %1386 = vmatpush2.bf16.msra.mxu0 0
        %1387 = vmatprep.subr.bf16.mxu0 0
        %1388 = vmatpush2.bf16.msra.mxu0 0
        %1389 = vmatprep.subr.bf16.mxu0 0
        %1390 = vmatpush2.bf16.msra.mxu0 0
        %1391 = vmatprep.subr.bf16.mxu0 0
        %1392 = vmatpush2.bf16.msra.mxu0 0
        %1393 = vmatprep.subr.bf16.mxu0 0
        %1394 = vmatpush2.bf16.msra.mxu0 0
        %1395 = vmatprep.subr.bf16.mxu0 0
        %1396 = vmatpush2.bf16.msra.mxu0 0
        %1397 = vmatprep.subr.bf16.mxu0 0
        %1398 = vmatpush2.bf16.msra.mxu0 0
        %1399 = vmatprep.subr.bf16.mxu0 0
        %1400 = vmatpush2.bf16.msra.mxu0 0
        %1401 = vmatprep.mubr.bf16.mxu0 0
        %1402 = vmatmul.mubr.bf16.gmra.mxu0 %v1367
        %v1403 = vpop.f32.mrf.mxu0
        %v1404 = vadd.f32 0.0, %v1403
        %v1405 = vpop.f32.mrf.mxu0
        %v1406 = vpop.f32.mrf.mxu0
        %v1407 = vpop.f32.mrf.mxu0
        %1408 = vdwg.mxu0
        %v1409 = vadd.f32 %v1276, %v1404
        %1410 = vrot.lane.b32.xlu0 %v656, 80
        %v1411 = vpop.permute.xlu0 %1410
        %v1414 = vsel %vm982, %v1026, 0
        %1416 = vmatprep.subr.mxu0 0.0
        %1417 = vmatpush1.msra.mxu0 0.0
        %1418 = vmatprep.subr.mxu0 0.0
        %1419 = vmatpush1.msra.mxu0 0.0
        %1420 = vmatprep.subr.mxu0 0.0
        %1421 = vmatpush1.msra.mxu0 0.0
        %1422 = vmatprep.subr.mxu0 0.0
        %1423 = vmatpush1.msra.mxu0 0.0
        %1424 = vmatprep.subr.mxu0 0.0
        %1425 = vmatpush1.msra.mxu0 0.0
        %1426 = vmatprep.subr.mxu0 0.0
        %1427 = vmatpush1.msra.mxu0 0.0
        %1428 = vmatprep.subr.mxu0 0.0
        %1429 = vmatpush1.msra.mxu0 0.0
        %1430 = vmatprep.subr.mxu0 0.0
        %1431 = vmatpush1.msra.mxu0 0.0
        %1432 = vmatprep.subr.mxu0 0.0
        %1433 = vmatpush1.msra.mxu0 0.0
        %1434 = vmatprep.subr.mxu0 0.0
        %1435 = vmatpush1.msra.mxu0 0.0
        %1436 = vmatprep.subr.mxu0 0.0
        %1437 = vmatpush1.msra.mxu0 0.0
        %1438 = vmatprep.subr.mxu0 0.0
        %1439 = vmatpush1.msra.mxu0 0.0
        %1440 = vmatprep.subr.mxu0 0.0
        %1441 = vmatpush1.msra.mxu0 0.0
        %1442 = vmatprep.subr.mxu0 0.0
        %1443 = vmatpush1.msra.mxu0 0.0
        %1444 = vmatprep.subr.mxu0 0.0
        %1445 = vmatpush1.msra.mxu0 0.0
        %1446 = vmatprep.subr.mxu0 0.0
        %1447 = vmatpush1.msra.mxu0 %v1411
        %1448 = vmatprep.subr.mxu0 0.0
        %1449 = vmatpush2.msra.mxu0 0.0
        %1450 = vmatprep.subr.mxu0 0.0
        %1451 = vmatpush2.msra.mxu0 0.0
        %1452 = vmatprep.subr.mxu0 0.0
        %1453 = vmatpush2.msra.mxu0 0.0
        %1454 = vmatprep.subr.mxu0 0.0
        %1455 = vmatpush2.msra.mxu0 0.0
        %1456 = vmatprep.subr.mxu0 0.0
        %1457 = vmatpush2.msra.mxu0 0.0
        %1458 = vmatprep.subr.mxu0 0.0
        %1459 = vmatpush2.msra.mxu0 0.0
        %1460 = vmatprep.subr.mxu0 0.0
        %1461 = vmatpush2.msra.mxu0 0.0
        %1462 = vmatprep.subr.mxu0 0.0
        %1463 = vmatpush2.msra.mxu0 0.0
        %1464 = vmatprep.subr.mxu0 0.0
        %1465 = vmatpush2.msra.mxu0 0.0
        %1466 = vmatprep.subr.mxu0 0.0
        %1467 = vmatpush2.msra.mxu0 0.0
        %1468 = vmatprep.subr.mxu0 0.0
        %1469 = vmatpush2.msra.mxu0 0.0
        %1470 = vmatprep.subr.mxu0 0.0
        %1471 = vmatpush2.msra.mxu0 0.0
        %1472 = vmatprep.subr.mxu0 0.0
        %1473 = vmatpush2.msra.mxu0 0.0
        %1474 = vmatprep.subr.mxu0 0.0
        %1475 = vmatpush2.msra.mxu0 0.0
        %1476 = vmatprep.subr.mxu0 0.0
        %1477 = vmatpush2.msra.mxu0 0.0
        %1478 = vmatprep.subr.mxu0 0.0
        %1479 = vmatpush2.msra.mxu0 0.0
        %1480 = vmatprep.mubr.f32.mxu0 0.0
        %1481 = vmatmul.mubr.f32.gmra.mxu0 %v1414
        %v1482 = vpop.f32.mrf.mxu0
        %v1483 = vadd.f32 0.0, %v1482
        %v1484 = vpop.f32.mrf.mxu0
        %1485 = vdwg.mxu0
        %v1486 = vld [vmem:[%s0 + $0x78] sm:$0xf]
        %v1487 = vld [vmem:[%s0 + $0x7c] sm:$0xf]
        %v1488 = vpack.c.bf16 %v1483, %v1483
        %v1491 = vunpack.c.l.b16 %v1486
        %v1492 = vunpack.c.l.b16 %v1487
        %v1493 = vpack.c.b16 %v1492, %v1491
        %v1496 = vsel %vm661, %v1488, 0
        %1498 = vmatprep.subr.bf16.mxu0 0
        %1499 = vmatpush1.bf16.msra.mxu0 0
        %1500 = vmatprep.subr.bf16.mxu0 0
        %1501 = vmatpush1.bf16.msra.mxu0 0
        %1502 = vmatprep.subr.bf16.mxu0 0
        %1503 = vmatpush1.bf16.msra.mxu0 0
        %1504 = vmatprep.subr.bf16.mxu0 0
        %1505 = vmatpush1.bf16.msra.mxu0 0
        %1506 = vmatprep.subr.bf16.mxu0 0
        %1507 = vmatpush1.bf16.msra.mxu0 0
        %1508 = vmatprep.subr.bf16.mxu0 0
        %1509 = vmatpush1.bf16.msra.mxu0 0
        %1510 = vmatprep.subr.bf16.mxu0 0
        %1511 = vmatpush1.bf16.msra.mxu0 0
        %1512 = vmatprep.subr.bf16.mxu0 0
        %1513 = vmatpush1.bf16.msra.mxu0 %v1493
        %1514 = vmatprep.subr.bf16.mxu0 0
        %1515 = vmatpush2.bf16.msra.mxu0 0
        %1516 = vmatprep.subr.bf16.mxu0 0
        %1517 = vmatpush2.bf16.msra.mxu0 0
        %1518 = vmatprep.subr.bf16.mxu0 0
        %1519 = vmatpush2.bf16.msra.mxu0 0
        %1520 = vmatprep.subr.bf16.mxu0 0
        %1521 = vmatpush2.bf16.msra.mxu0 0
        %1522 = vmatprep.subr.bf16.mxu0 0
        %1523 = vmatpush2.bf16.msra.mxu0 0
        %1524 = vmatprep.subr.bf16.mxu0 0
        %1525 = vmatpush2.bf16.msra.mxu0 0
        %1526 = vmatprep.subr.bf16.mxu0 0
        %1527 = vmatpush2.bf16.msra.mxu0 0
        %1528 = vmatprep.subr.bf16.mxu0 0
        %1529 = vmatpush2.bf16.msra.mxu0 0
        %1530 = vmatprep.mubr.bf16.mxu0 0
        %1531 = vmatmul.mubr.bf16.gmra.mxu0 %v1496
        %v1532 = vpop.f32.mrf.mxu0
        %v1533 = vadd.f32 0.0, %v1532
        %v1534 = vpop.f32.mrf.mxu0
        %v1535 = vpop.f32.mrf.mxu0
        %v1536 = vpop.f32.mrf.mxu0
        %1537 = vdwg.mxu0
        %v1538 = vadd.f32 %v1409, %v1533
        %v1539 = vld [vmem:[%s2 + $0x7] sm:$0x1]
        %v1540 = vlaneseq
        %v1541 = vshrl.u32 %v1540, 7
        %v1542 = vsub.s32 0, %v1541
        %v1543 = vrot.slane %v1539, %v1542
        %v1544 = vadd.f32 %v1538, %v1543
        %v1545 = vadd.f32 %v424, %v1544
        %v1546 = vsel %vm398, %v1545, 0.0
        %1547 = vadd.xlane.f32.xlu0 %v1546
        %v1548 = vpop.xlane.xlu0 %1547
        %v1549 = vmul.f32 %v1548, %v402
        %v1550 = vsub.f32 %v1545, %v1549
        %v1551 = vmul.f32 %v1550, %v1550
        %v1552 = vsel %vm398, %v1551, 0.0
        %1553 = vadd.xlane.f32.xlu0 %v1552
        %v1554 = vpop.xlane.xlu0 %1553
        %v1555 = vmul.f32 %v1554, %v402
        %v1556 = vadd.f32 %v1555, 1e-05
        %v1557 = vrsqrt.pop %v1556
        %v1558 = vmul.f32 %v1550, %v1557
        %v1559 = vld [vmem:[%s2 + $0x8] sm:$0x1]
        %v1560 = vlaneseq
        %v1561 = vshrl.u32 %v1560, 7
        %v1562 = vsub.s32 0, %v1561
        %v1563 = vrot.slane %v1559, %v1562
        %v1564 = vmul.f32 %v1558, %v1563
        %v1565 = vld [vmem:[%s2 + $0x9] sm:$0x1]
        %v1566 = vlaneseq
        %v1567 = vshrl.u32 %v1566, 7
        %v1568 = vsub.s32 0, %v1567
        %v1569 = vrot.slane %v1565, %v1568
        %v1570 = vadd.f32 %v1564, %v1569
        %v1571 = vpack.c.bf16 %v1570, %v1570
        %v1572 = vld [vmem:[%s1 + $0x20] sm:$0xf]
        %v1573 = vld [vmem:[%s1 + $0x24] sm:$0xf]
        %v1574 = vld [vmem:[%s1 + $0x28] sm:$0xf]
        %v1575 = vld [vmem:[%s1 + $0x2c] sm:$0xf]
        %v1576 = vld [vmem:[%s1 + $0x30] sm:$0xf]
        %v1577 = vld [vmem:[%s1 + $0x34] sm:$0xf]
        %v1578 = vld [vmem:[%s1 + $0x38] sm:$0xf]
        %v1579 = vld [vmem:[%s1 + $0x3c] sm:$0xf]
        %v1580 = vld [vmem:[%s3 + $0x1] sm:$0x1]
        %v1581 = vlaneseq
        %v1582 = vshrl.u32 %v1581, 7
        %v1583 = vsub.s32 0, %v1582
        %v1584 = vrot.slane %v1580, %v1583
        %v1593 = vunpack.c.l.b16 %v1572
        %v1594 = vunpack.c.l.b16 %v1573
        %v1595 = vunpack.c.l.b16 %v1574
        %v1596 = vunpack.c.l.b16 %v1575
        %v1597 = vunpack.c.l.b16 %v1576
        %v1598 = vunpack.c.l.b16 %v1577
        %v1599 = vunpack.c.l.b16 %v1578
        %v1600 = vunpack.c.l.b16 %v1579
        %v1601 = vpack.c.b16 %v1594, %v1593
        %v1602 = vpack.c.b16 %v1596, %v1595
        %v1603 = vpack.c.b16 %v1598, %v1597
        %v1604 = vpack.c.b16 %v1600, %v1599
        %v1610 = vsel %vm398, %v1571, 0
        %1612 = vmatprep.subr.bf16.mxu0 0
        %1613 = vmatpush1.bf16.msra.mxu0 0
        %1614 = vmatprep.subr.bf16.mxu0 0
        %1615 = vmatpush1.bf16.msra.mxu0 0
        %1616 = vmatprep.subr.bf16.mxu0 0
        %1617 = vmatpush1.bf16.msra.mxu0 0
        %1618 = vmatprep.subr.bf16.mxu0 0
        %1619 = vmatpush1.bf16.msra.mxu0 0
        %1620 = vmatprep.subr.bf16.mxu0 0
        %1621 = vmatpush1.bf16.msra.mxu0 %v1604
        %1622 = vmatprep.subr.bf16.mxu0 0
        %1623 = vmatpush1.bf16.msra.mxu0 %v1603
        %1624 = vmatprep.subr.bf16.mxu0 0
        %1625 = vmatpush1.bf16.msra.mxu0 %v1602
        %1626 = vmatprep.subr.bf16.mxu0 0
        %1627 = vmatpush1.bf16.msra.mxu0 %v1601
        %1628 = vmatprep.subr.bf16.mxu0 0
        %1629 = vmatpush2.bf16.msra.mxu0 0
        %1630 = vmatprep.subr.bf16.mxu0 0
        %1631 = vmatpush2.bf16.msra.mxu0 0
        %1632 = vmatprep.subr.bf16.mxu0 0
        %1633 = vmatpush2.bf16.msra.mxu0 0
        %1634 = vmatprep.subr.bf16.mxu0 0
        %1635 = vmatpush2.bf16.msra.mxu0 0
        %1636 = vmatprep.subr.bf16.mxu0 0
        %1637 = vmatpush2.bf16.msra.mxu0 0
        %1638 = vmatprep.subr.bf16.mxu0 0
        %1639 = vmatpush2.bf16.msra.mxu0 0
        %1640 = vmatprep.subr.bf16.mxu0 0
        %1641 = vmatpush2.bf16.msra.mxu0 0
        %1642 = vmatprep.subr.bf16.mxu0 0
        %1643 = vmatpush2.bf16.msra.mxu0 0
        %1644 = vmatprep.mubr.bf16.mxu0 0
        %1645 = vmatmul.mubr.bf16.gmra.mxu0 %v1610
        %v1646 = vpop.f32.mrf.mxu0
        %v1647 = vadd.f32 %v1584, %v1646
        %v1648 = vpop.f32.mrf.mxu0
        %v1649 = vpop.f32.mrf.mxu0
        %v1650 = vpop.f32.mrf.mxu0
        %1651 = vdwg.mxu0
        %v1652 = vmul.f32 %v1647, 0.5
        %v1653 = vmul.f32 %v1647, 0.044715
        %v1654 = vmul.f32 %v1653, %v1647
        %v1655 = vmul.f32 %v1654, %v1647
        %v1656 = vadd.f32 %v1647, %v1655
        %v1657 = vmul.f32 %v1656, 0.7978846
        %v1658 = vtanh.pop %v1657
        %v1659 = vadd.f32 %v1658, 1.0
        %v1660 = vmul.f32 %v1652, %v1659
        %v1661 = vpack.c.bf16 %v1660, %v1660
        %v1662 = vld [vmem:[%s0 + $0x80] sm:$0xf]
        %v1663 = vld [vmem:[%s0 + $0x84] sm:$0xf]
        %v1664 = vld [vmem:[%s0 + $0x88] sm:$0xf]
        %v1665 = vld [vmem:[%s0 + $0x8c] sm:$0xf]
        %v1666 = vld [vmem:[%s0 + $0x90] sm:$0xf]
        %v1667 = vld [vmem:[%s0 + $0x94] sm:$0xf]
        %v1668 = vld [vmem:[%s0 + $0x98] sm:$0xf]
        %v1669 = vld [vmem:[%s0 + $0x9c] sm:$0xf]
        %v1670 = vld [vmem:[%s0 + $0xa0] sm:$0xf]
        %v1671 = vld [vmem:[%s0 + $0xa4] sm:$0xf]
        %v1672 = vld [vmem:[%s0 + $0xa8] sm:$0xf]
        %v1673 = vld [vmem:[%s0 + $0xac] sm:$0xf]
        %v1674 = vld [vmem:[%s0 + $0xb0] sm:$0xf]
        %v1675 = vld [vmem:[%s0 + $0xb4] sm:$0xf]
        %v1676 = vld [vmem:[%s0 + $0xb8] sm:$0xf]
        %v1677 = vld [vmem:[%s0 + $0xbc] sm:$0xf]
        %v1678 = vld [vmem:[%s2 + $0xa] sm:$0x1]
        %v1679 = vlaneseq
        %v1680 = vshrl.u32 %v1679, 7
        %v1681 = vsub.s32 0, %v1680
        %v1682 = vrot.slane %v1678, %v1681
        %v1699 = vunpack.c.l.b16 %v1662
        %v1700 = vunpack.c.l.b16 %v1663
        %v1701 = vunpack.c.l.b16 %v1664
        %v1702 = vunpack.c.l.b16 %v1665
        %v1703 = vunpack.c.l.b16 %v1666
        %v1704 = vunpack.c.l.b16 %v1667
        %v1705 = vunpack.c.l.b16 %v1668
        %v1706 = vunpack.c.l.b16 %v1669
        %v1707 = vunpack.c.l.b16 %v1670
        %v1708 = vunpack.c.l.b16 %v1671
        %v1709 = vunpack.c.l.b16 %v1672
        %v1710 = vunpack.c.l.b16 %v1673
        %v1711 = vunpack.c.l.b16 %v1674
        %v1712 = vunpack.c.l.b16 %v1675
        %v1713 = vunpack.c.l.b16 %v1676
        %v1714 = vunpack.c.l.b16 %v1677
        %v1715 = vpack.c.b16 %v1700, %v1699
        %v1716 = vpack.c.b16 %v1702, %v1701
        %v1717 = vpack.c.b16 %v1704, %v1703
        %v1718 = vpack.c.b16 %v1706, %v1705
        %v1719 = vpack.c.b16 %v1708, %v1707
        %v1720 = vpack.c.b16 %v1710, %v1709
        %v1721 = vpack.c.b16 %v1712, %v1711
        %v1722 = vpack.c.b16 %v1714, %v1713
        %1731 = vmatprep.subr.bf16.mxu0 0
        %1732 = vmatpush1.bf16.msra.mxu0 %v1722
        %1733 = vmatprep.subr.bf16.mxu0 0
        %1734 = vmatpush1.bf16.msra.mxu0 %v1721
        %1735 = vmatprep.subr.bf16.mxu0 0
        %1736 = vmatpush1.bf16.msra.mxu0 %v1720
        %1737 = vmatprep.subr.bf16.mxu0 0
        %1738 = vmatpush1.bf16.msra.mxu0 %v1719
        %1739 = vmatprep.subr.bf16.mxu0 0
        %1740 = vmatpush1.bf16.msra.mxu0 %v1718
        %1741 = vmatprep.subr.bf16.mxu0 0
        %1742 = vmatpush1.bf16.msra.mxu0 %v1717
        %1743 = vmatprep.subr.bf16.mxu0 0
        %1744 = vmatpush1.bf16.msra.mxu0 %v1716
        %1745 = vmatprep.subr.bf16.mxu0 0
        %1746 = vmatpush1.bf16.msra.mxu0 %v1715
        %1747 = vmatprep.subr.bf16.mxu0 0
        %1748 = vmatpush2.bf16.msra.mxu0 0
        %1749 = vmatprep.subr.bf16.mxu0 0
        %1750 = vmatpush2.bf16.msra.mxu0 0
        %1751 = vmatprep.subr.bf16.mxu0 0
        %1752 = vmatpush2.bf16.msra.mxu0 0
        %1753 = vmatprep.subr.bf16.mxu0 0
        %1754 = vmatpush2.bf16.msra.mxu0 0
        %1755 = vmatprep.subr.bf16.mxu0 0
        %1756 = vmatpush2.bf16.msra.mxu0 0
        %1757 = vmatprep.subr.bf16.mxu0 0
        %1758 = vmatpush2.bf16.msra.mxu0 0
        %1759 = vmatprep.subr.bf16.mxu0 0
        %1760 = vmatpush2.bf16.msra.mxu0 0
        %1761 = vmatprep.subr.bf16.mxu0 0
        %1762 = vmatpush2.bf16.msra.mxu0 0
        %1763 = vmatprep.mubr.bf16.mxu0 0
        %1764 = vmatmul.mubr.bf16.gmra.mxu0 %v1661
        %v1765 = vpop.f32.mrf.mxu0
        %v1766 = vadd.f32 %v1682, %v1765
        %v1767 = vpop.f32.mrf.mxu0
        %v1768 = vpop.f32.mrf.mxu0
        %v1769 = vpop.f32.mrf.mxu0
        %1770 = vdwg.mxu0
        %v1771 = vadd.f32 %v1570, %v1766
        %v1772 = vsel %vm398, %v1771, 0.0
        %1773 = vadd.xlane.f32.xlu0 %v1772
        %v1774 = vpop.xlane.xlu0 %1773
        %v1775 = vmul.f32 %v1774, %v402
        %v1776 = vsub.f32 %v1771, %v1775
        %v1777 = vmul.f32 %v1776, %v1776
        %v1778 = vsel %vm398, %v1777, 0.0
        %1779 = vadd.xlane.f32.xlu0 %v1778
        %v1780 = vpop.xlane.xlu0 %1779
        %v1781 = vmul.f32 %v1780, %v402
        %v1782 = vadd.f32 %v1781, 1e-05
        %v1783 = vrsqrt.pop %v1782
        %v1784 = vmul.f32 %v1776, %v1783
        %v1785 = vld [vmem:[%s2 + $0xb] sm:$0x1]
        %v1786 = vlaneseq
        %v1787 = vshrl.u32 %v1786, 7
        %v1788 = vsub.s32 0, %v1787
        %v1789 = vrot.slane %v1785, %v1788
        %v1790 = vmul.f32 %v1784, %v1789
        %v1791 = vld [vmem:[%s2 + $0xc] sm:$0x1]
        %v1792 = vlaneseq
        %v1793 = vshrl.u32 %v1792, 7
        %v1794 = vsub.s32 0, %v1793
        %v1795 = vrot.slane %v1791, %v1794
        %v1796 = vadd.f32 %v1790, %v1795
        %v1797 = vpack.c.bf16 %v1796, %v1796
        %v1798 = vld [vmem:[%s0 + $0xc0] sm:$0xf]
        %v1799 = vld [vmem:[%s0 + $0xc4] sm:$0xf]
        %v1800 = vld [vmem:[%s0 + $0xc8] sm:$0xf]
        %v1801 = vld [vmem:[%s0 + $0xcc] sm:$0xf]
        %v1802 = vld [vmem:[%s0 + $0xd0] sm:$0xf]
        %v1803 = vld [vmem:[%s0 + $0xd4] sm:$0xf]
        %v1804 = vld [vmem:[%s0 + $0xd8] sm:$0xf]
        %v1805 = vld [vmem:[%s0 + $0xdc] sm:$0xf]
        %v1806 = vld [vmem:[%s2 + $0xd] sm:$0x1]
        %v1807 = vlaneseq
        %v1808 = vshrl.u32 %v1807, 7
        %v1809 = vsub.s32 0, %v1808
        %v1810 = vrot.slane %v1806, %v1809
        %v1819 = vunpack.c.l.b16 %v1798
        %v1820 = vunpack.c.l.b16 %v1799
        %v1821 = vunpack.c.l.b16 %v1800
        %v1822 = vunpack.c.l.b16 %v1801
        %v1823 = vunpack.c.l.b16 %v1802
        %v1824 = vunpack.c.l.b16 %v1803
        %v1825 = vunpack.c.l.b16 %v1804
        %v1826 = vunpack.c.l.b16 %v1805
        %v1827 = vpack.c.b16 %v1820, %v1819
        %v1828 = vpack.c.b16 %v1822, %v1821
        %v1829 = vpack.c.b16 %v1824, %v1823
        %v1830 = vpack.c.b16 %v1826, %v1825
        %v1836 = vsel %vm398, %v1797, 0
        %1838 = vmatprep.subr.bf16.mxu0 0
        %1839 = vmatpush1.bf16.msra.mxu0 0
        %1840 = vmatprep.subr.bf16.mxu0 0
        %1841 = vmatpush1.bf16.msra.mxu0 0
        %1842 = vmatprep.subr.bf16.mxu0 0
        %1843 = vmatpush1.bf16.msra.mxu0 0
        %1844 = vmatprep.subr.bf16.mxu0 0
        %1845 = vmatpush1.bf16.msra.mxu0 0
        %1846 = vmatprep.subr.bf16.mxu0 0
        %1847 = vmatpush1.bf16.msra.mxu0 %v1830
        %1848 = vmatprep.subr.bf16.mxu0 0
        %1849 = vmatpush1.bf16.msra.mxu0 %v1829
        %1850 = vmatprep.subr.bf16.mxu0 0
        %1851 = vmatpush1.bf16.msra.mxu0 %v1828
        %1852 = vmatprep.subr.bf16.mxu0 0
        %1853 = vmatpush1.bf16.msra.mxu0 %v1827
        %1854 = vmatprep.subr.bf16.mxu0 0
        %1855 = vmatpush2.bf16.msra.mxu0 0
        %1856 = vmatprep.subr.bf16.mxu0 0
        %1857 = vmatpush2.bf16.msra.mxu0 0
        %1858 = vmatprep.subr.bf16.mxu0 0
        %1859 = vmatpush2.bf16.msra.mxu0 0
        %1860 = vmatprep.subr.bf16.mxu0 0
        %1861 = vmatpush2.bf16.msra.mxu0 0
        %1862 = vmatprep.subr.bf16.mxu0 0
        %1863 = vmatpush2.bf16.msra.mxu0 0
        %1864 = vmatprep.subr.bf16.mxu0 0
        %1865 = vmatpush2.bf16.msra.mxu0 0
        %1866 = vmatprep.subr.bf16.mxu0 0
        %1867 = vmatpush2.bf16.msra.mxu0 0
        %1868 = vmatprep.subr.bf16.mxu0 0
        %1869 = vmatpush2.bf16.msra.mxu0 0
        %1870 = vmatprep.mubr.bf16.mxu0 0
        %1871 = vmatmul.mubr.bf16.gmra.mxu0 %v1836
        %v1872 = vpop.f32.mrf.mxu0
        %v1873 = vadd.f32 %v1810, %v1872
        %v1874 = vpop.f32.mrf.mxu0
        %v1875 = vpop.f32.mrf.mxu0
        %v1876 = vpop.f32.mrf.mxu0
        %1877 = vdwg.mxu0
        %v1878 = vmul.f32 %v1873, 0.25
        %v1879 = vld [vmem:[%s0 + $0xe0] sm:$0xf]
        %v1880 = vld [vmem:[%s0 + $0xe4] sm:$0xf]
        %v1881 = vld [vmem:[%s0 + $0xe8] sm:$0xf]
        %v1882 = vld [vmem:[%s0 + $0xec] sm:$0xf]
        %v1883 = vld [vmem:[%s0 + $0xf0] sm:$0xf]
        %v1884 = vld [vmem:[%s0 + $0xf4] sm:$0xf]
        %v1885 = vld [vmem:[%s0 + $0xf8] sm:$0xf]
        %v1886 = vld [vmem:[%s0 + $0xfc] sm:$0xf]
        %v1887 = vld [vmem:[%s2 + $0xe] sm:$0x1]
        %v1888 = vlaneseq
        %v1889 = vshrl.u32 %v1888, 7
        %v1890 = vsub.s32 0, %v1889
        %v1891 = vrot.slane %v1887, %v1890
        %v1900 = vunpack.c.l.b16 %v1879
        %v1901 = vunpack.c.l.b16 %v1880
        %v1902 = vunpack.c.l.b16 %v1881
        %v1903 = vunpack.c.l.b16 %v1882
        %v1904 = vunpack.c.l.b16 %v1883
        %v1905 = vunpack.c.l.b16 %v1884
        %v1906 = vunpack.c.l.b16 %v1885
        %v1907 = vunpack.c.l.b16 %v1886
        %v1908 = vpack.c.b16 %v1901, %v1900
        %v1909 = vpack.c.b16 %v1903, %v1902
        %v1910 = vpack.c.b16 %v1905, %v1904
        %v1911 = vpack.c.b16 %v1907, %v1906
        %1916 = vmatprep.subr.bf16.mxu0 0
        %1917 = vmatpush1.bf16.msra.mxu0 0
        %1918 = vmatprep.subr.bf16.mxu0 0
        %1919 = vmatpush1.bf16.msra.mxu0 0
        %1920 = vmatprep.subr.bf16.mxu0 0
        %1921 = vmatpush1.bf16.msra.mxu0 0
        %1922 = vmatprep.subr.bf16.mxu0 0
        %1923 = vmatpush1.bf16.msra.mxu0 0
        %1924 = vmatprep.subr.bf16.mxu0 0
        %1925 = vmatpush1.bf16.msra.mxu0 %v1911
        %1926 = vmatprep.subr.bf16.mxu0 0
        %1927 = vmatpush1.bf16.msra.mxu0 %v1910
        %1928 = vmatprep.subr.bf16.mxu0 0
        %1929 = vmatpush1.bf16.msra.mxu0 %v1909
        %1930 = vmatprep.subr.bf16.mxu0 0
        %1931 = vmatpush1.bf16.msra.mxu0 %v1908
        %1932 = vmatprep.subr.bf16.mxu0 0
        %1933 = vmatpush2.bf16.msra.mxu0 0
        %1934 = vmatprep.subr.bf16.mxu0 0
        %1935 = vmatpush2.bf16.msra.mxu0 0
        %1936 = vmatprep.subr.bf16.mxu0 0
        %1937 = vmatpush2.bf16.msra.mxu0 0
        %1938 = vmatprep.subr.bf16.mxu0 0
        %1939 = vmatpush2.bf16.msra.mxu0 0
        %1940 = vmatprep.subr.bf16.mxu0 0
        %1941 = vmatpush2.bf16.msra.mxu0 0
        %1942 = vmatprep.subr.bf16.mxu0 0
        %1943 = vmatpush2.bf16.msra.mxu0 0
        %1944 = vmatprep.subr.bf16.mxu0 0
        %1945 = vmatpush2.bf16.msra.mxu0 0
        %1946 = vmatprep.subr.bf16.mxu0 0
        %1947 = vmatpush2.bf16.msra.mxu0 0
        %1948 = vmatprep.mubr.bf16.mxu0 0
        %1949 = vmatmul.mubr.bf16.gmra.mxu0 %v1836
        %v1950 = vpop.f32.mrf.mxu0
        %v1951 = vadd.f32 %v1891, %v1950
        %v1952 = vpop.f32.mrf.mxu0
        %v1953 = vpop.f32.mrf.mxu0
        %v1954 = vpop.f32.mrf.mxu0
        %1955 = vdwg.mxu0
        %v1956 = vld [vmem:[%s0 + $0x100] sm:$0xf]
        %v1957 = vld [vmem:[%s0 + $0x104] sm:$0xf]
        %v1958 = vld [vmem:[%s0 + $0x108] sm:$0xf]
        %v1959 = vld [vmem:[%s0 + $0x10c] sm:$0xf]
        %v1960 = vld [vmem:[%s0 + $0x110] sm:$0xf]
        %v1961 = vld [vmem:[%s0 + $0x114] sm:$0xf]
        %v1962 = vld [vmem:[%s0 + $0x118] sm:$0xf]
        %v1963 = vld [vmem:[%s0 + $0x11c] sm:$0xf]
        %v1964 = vld [vmem:[%s2 + $0xf] sm:$0x1]
        %v1965 = vlaneseq
        %v1966 = vshrl.u32 %v1965, 7
        %v1967 = vsub.s32 0, %v1966
        %v1968 = vrot.slane %v1964, %v1967
        %v1977 = vunpack.c.l.b16 %v1956
        %v1978 = vunpack.c.l.b16 %v1957
        %v1979 = vunpack.c.l.b16 %v1958
        %v1980 = vunpack.c.l.b16 %v1959
        %v1981 = vunpack.c.l.b16 %v1960
        %v1982 = vunpack.c.l.b16 %v1961
        %v1983 = vunpack.c.l.b16 %v1962
        %v1984 = vunpack.c.l.b16 %v1963
        %v1985 = vpack.c.b16 %v1978, %v1977
        %v1986 = vpack.c.b16 %v1980, %v1979
        %v1987 = vpack.c.b16 %v1982, %v1981
        %v1988 = vpack.c.b16 %v1984, %v1983
        %1993 = vmatprep.subr.bf16.mxu0 0
        %1994 = vmatpush1.bf16.msra.mxu0 0
        %1995 = vmatprep.subr.bf16.mxu0 0
        %1996 = vmatpush1.bf16.msra.mxu0 0
        %1997 = vmatprep.subr.bf16.mxu0 0
        %1998 = vmatpush1.bf16.msra.mxu0 0
        %1999 = vmatprep.subr.bf16.mxu0 0
        %2000 = vmatpush1.bf16.msra.mxu0 0
        %2001 = vmatprep.subr.bf16.mxu0 0
        %2002 = vmatpush1.bf16.msra.mxu0 %v1988
        %2003 = vmatprep.subr.bf16.mxu0 0
        %2004 = vmatpush1.bf16.msra.mxu0 %v1987
        %2005 = vmatprep.subr.bf16.mxu0 0
        %2006 = vmatpush1.bf16.msra.mxu0 %v1986
        %2007 = vmatprep.subr.bf16.mxu0 0
        %2008 = vmatpush1.bf16.msra.mxu0 %v1985
        %2009 = vmatprep.subr.bf16.mxu0 0
        %2010 = vmatpush2.bf16.msra.mxu0 0
        %2011 = vmatprep.subr.bf16.mxu0 0
        %2012 = vmatpush2.bf16.msra.mxu0 0
        %2013 = vmatprep.subr.bf16.mxu0 0
        %2014 = vmatpush2.bf16.msra.mxu0 0
        %2015 = vmatprep.subr.bf16.mxu0 0
        %2016 = vmatpush2.bf16.msra.mxu0 0
        %2017 = vmatprep.subr.bf16.mxu0 0
        %2018 = vmatpush2.bf16.msra.mxu0 0
        %2019 = vmatprep.subr.bf16.mxu0 0
        %2020 = vmatpush2.bf16.msra.mxu0 0
        %2021 = vmatprep.subr.bf16.mxu0 0
        %2022 = vmatpush2.bf16.msra.mxu0 0
        %2023 = vmatprep.subr.bf16.mxu0 0
        %2024 = vmatpush2.bf16.msra.mxu0 0
        %2025 = vmatprep.mubr.bf16.mxu0 0
        %2026 = vmatmul.mubr.bf16.gmra.mxu0 %v1836
        %v2027 = vpop.f32.mrf.mxu0
        %v2028 = vadd.f32 %v1968, %v2027
        %v2029 = vpop.f32.mrf.mxu0
        %v2030 = vpop.f32.mrf.mxu0
        %v2031 = vpop.f32.mrf.mxu0
        %2032 = vdwg.mxu0
        %v2034 = vsel %vm661, %v1878, 0
        %v2037 = vsel %vm661, %v1951, 0
        %2039 = vmatprep.subr.mxu0 0.0
        %2040 = vmatpush1.xpose.msra.mxu0 0.0
        %2041 = vmatprep.subr.mxu0 0.0
        %2042 = vmatpush1.xpose.msra.mxu0 0.0
        %2043 = vmatprep.subr.mxu0 0.0
        %2044 = vmatpush1.xpose.msra.mxu0 0.0
        %2045 = vmatprep.subr.mxu0 0.0
        %2046 = vmatpush1.xpose.msra.mxu0 0.0
        %2047 = vmatprep.subr.mxu0 0.0
        %2048 = vmatpush1.xpose.msra.mxu0 0.0
        %2049 = vmatprep.subr.mxu0 0.0
        %2050 = vmatpush1.xpose.msra.mxu0 0.0
        %2051 = vmatprep.subr.mxu0 0.0
        %2052 = vmatpush1.xpose.msra.mxu0 0.0
        %2053 = vmatprep.subr.mxu0 0.0
        %2054 = vmatpush1.xpose.msra.mxu0 0.0
        %2055 = vmatprep.subr.mxu0 0.0
        %2056 = vmatpush1.xpose.msra.mxu0 0.0
        %2057 = vmatprep.subr.mxu0 0.0
        %2058 = vmatpush1.xpose.msra.mxu0 0.0
        %2059 = vmatprep.subr.mxu0 0.0
        %2060 = vmatpush1.xpose.msra.mxu0 0.0
        %2061 = vmatprep.subr.mxu0 0.0
        %2062 = vmatpush1.xpose.msra.mxu0 0.0
        %2063 = vmatprep.subr.mxu0 0.0
        %2064 = vmatpush1.xpose.msra.mxu0 0.0
        %2065 = vmatprep.subr.mxu0 0.0
        %2066 = vmatpush1.xpose.msra.mxu0 0.0
        %2067 = vmatprep.subr.mxu0 0.0
        %2068 = vmatpush1.xpose.msra.mxu0 0.0
        %2069 = vmatprep.subr.mxu0 0.0
        %2070 = vmatpush1.xpose.msra.mxu0 %v2037
        %2071 = vmatprep.subr.mxu0 0.0
        %2072 = vmatpush2.xpose.msra.mxu0 0.0
        %2073 = vmatprep.subr.mxu0 0.0
        %2074 = vmatpush2.xpose.msra.mxu0 0.0
        %2075 = vmatprep.subr.mxu0 0.0
        %2076 = vmatpush2.xpose.msra.mxu0 0.0
        %2077 = vmatprep.subr.mxu0 0.0
        %2078 = vmatpush2.xpose.msra.mxu0 0.0
        %2079 = vmatprep.subr.mxu0 0.0
        %2080 = vmatpush2.xpose.msra.mxu0 0.0
        %2081 = vmatprep.subr.mxu0 0.0
        %2082 = vmatpush2.xpose.msra.mxu0 0.0
        %2083 = vmatprep.subr.mxu0 0.0
        %2084 = vmatpush2.xpose.msra.mxu0 0.0
        %2085 = vmatprep.subr.mxu0 0.0
        %2086 = vmatpush2.xpose.msra.mxu0 0.0
        %2087 = vmatprep.subr.mxu0 0.0
        %2088 = vmatpush2.xpose.msra.mxu0 0.0
        %2089 = vmatprep.subr.mxu0 0.0
        %2090 = vmatpush2.xpose.msra.mxu0 0.0
        %2091 = vmatprep.subr.mxu0 0.0
        %2092 = vmatpush2.xpose.msra.mxu0 0.0
        %2093 = vmatprep.subr.mxu0 0.0
        %2094 = vmatpush2.xpose.msra.mxu0 0.0
        %2095 = vmatprep.subr.mxu0 0.0
        %2096 = vmatpush2.xpose.msra.mxu0 0.0
        %2097 = vmatprep.subr.mxu0 0.0
        %2098 = vmatpush2.xpose.msra.mxu0 0.0
        %2099 = vmatprep.subr.mxu0 0.0
        %2100 = vmatpush2.xpose.msra.mxu0 0.0
        %2101 = vmatprep.subr.mxu0 0.0
        %2102 = vmatpush2.xpose.msra.mxu0 0.0
        %2103 = vmatprep.mubr.f32.mxu0 0.0
        %2104 = vmatmul.mubr.f32.gmra.mxu0 %v2034
        %v2105 = vpop.f32.mrf.mxu0
        %v2106 = vadd.f32 0.0, %v2105
        %v2107 = vpop.f32.mrf.mxu0
        %2108 = vdwg.mxu0
        %2109 = vrot.lane.b32.xlu0 %v1878, 112
        %v2110 = vpop.permute.xlu0 %2109
        %2111 = vrot.lane.b32.xlu0 %v1951, 112
        %v2112 = vpop.permute.xlu0 %2111
        %v2113 = vsel %vm661, %v2110, 0
        %v2115 = vsel %vm661, %v2112, 0
        %2117 = vmatprep.subr.mxu0 0.0
        %2118 = vmatpush1.xpose.msra.mxu0 0.0
        %2119 = vmatprep.subr.mxu0 0.0
        %2120 = vmatpush1.xpose.msra.mxu0 0.0
        %2121 = vmatprep.subr.mxu0 0.0
        %2122 = vmatpush1.xpose.msra.mxu0 0.0
        %2123 = vmatprep.subr.mxu0 0.0
        %2124 = vmatpush1.xpose.msra.mxu0 0.0
        %2125 = vmatprep.subr.mxu0 0.0
        %2126 = vmatpush1.xpose.msra.mxu0 0.0
        %2127 = vmatprep.subr.mxu0 0.0
        %2128 = vmatpush1.xpose.msra.mxu0 0.0
        %2129 = vmatprep.subr.mxu0 0.0
        %2130 = vmatpush1.xpose.msra.mxu0 0.0
        %2131 = vmatprep.subr.mxu0 0.0
        %2132 = vmatpush1.xpose.msra.mxu0 0.0
        %2133 = vmatprep.subr.mxu0 0.0
        %2134 = vmatpush1.xpose.msra.mxu0 0.0
        %2135 = vmatprep.subr.mxu0 0.0
        %2136 = vmatpush1.xpose.msra.mxu0 0.0
        %2137 = vmatprep.subr.mxu0 0.0
        %2138 = vmatpush1.xpose.msra.mxu0 0.0
        %2139 = vmatprep.subr.mxu0 0.0
        %2140 = vmatpush1.xpose.msra.mxu0 0.0
        %2141 = vmatprep.subr.mxu0 0.0
        %2142 = vmatpush1.xpose.msra.mxu0 0.0
        %2143 = vmatprep.subr.mxu0 0.0
        %2144 = vmatpush1.xpose.msra.mxu0 0.0
        %2145 = vmatprep.subr.mxu0 0.0
        %2146 = vmatpush1.xpose.msra.mxu0 0.0
        %2147 = vmatprep.subr.mxu0 0.0
        %2148 = vmatpush1.xpose.msra.mxu0 %v2115
        %2149 = vmatprep.subr.mxu0 0.0
        %2150 = vmatpush2.xpose.msra.mxu0 0.0
        %2151 = vmatprep.subr.mxu0 0.0
        %2152 = vmatpush2.xpose.msra.mxu0 0.0
        %2153 = vmatprep.subr.mxu0 0.0
        %2154 = vmatpush2.xpose.msra.mxu0 0.0
        %2155 = vmatprep.subr.mxu0 0.0
        %2156 = vmatpush2.xpose.msra.mxu0 0.0
        %2157 = vmatprep.subr.mxu0 0.0
        %2158 = vmatpush2.xpose.msra.mxu0 0.0
        %2159 = vmatprep.subr.mxu0 0.0
        %2160 = vmatpush2.xpose.msra.mxu0 0.0
        %2161 = vmatprep.subr.mxu0 0.0
        %2162 = vmatpush2.xpose.msra.mxu0 0.0
        %2163 = vmatprep.subr.mxu0 0.0
        %2164 = vmatpush2.xpose.msra.mxu0 0.0
        %2165 = vmatprep.subr.mxu0 0.0
        %2166 = vmatpush2.xpose.msra.mxu0 0.0
        %2167 = vmatprep.subr.mxu0 0.0
        %2168 = vmatpush2.xpose.msra.mxu0 0.0
        %2169 = vmatprep.subr.mxu0 0.0
        %2170 = vmatpush2.xpose.msra.mxu0 0.0
        %2171 = vmatprep.subr.mxu0 0.0
        %2172 = vmatpush2.xpose.msra.mxu0 0.0
        %2173 = vmatprep.subr.mxu0 0.0
        %2174 = vmatpush2.xpose.msra.mxu0 0.0
        %2175 = vmatprep.subr.mxu0 0.0
        %2176 = vmatpush2.xpose.msra.mxu0 0.0
        %2177 = vmatprep.subr.mxu0 0.0
        %2178 = vmatpush2.xpose.msra.mxu0 0.0
        %2179 = vmatprep.subr.mxu0 0.0
        %2180 = vmatpush2.xpose.msra.mxu0 0.0
        %2181 = vmatprep.mubr.f32.mxu0 0.0
        %2182 = vmatmul.mubr.f32.gmra.mxu0 %v2113
        %v2183 = vpop.f32.mrf.mxu0
        %v2184 = vadd.f32 0.0, %v2183
        %v2185 = vpop.f32.mrf.mxu0
        %2186 = vdwg.mxu0
        %2187 = vrot.lane.b32.xlu0 %v1878, 96
        %v2188 = vpop.permute.xlu0 %2187
        %2189 = vrot.lane.b32.xlu0 %v1951, 96
        %v2190 = vpop.permute.xlu0 %2189
        %v2191 = vsel %vm661, %v2188, 0
        %v2193 = vsel %vm661, %v2190, 0
        %2195 = vmatprep.subr.mxu0 0.0
        %2196 = vmatpush1.xpose.msra.mxu0 0.0
        %2197 = vmatprep.subr.mxu0 0.0
        %2198 = vmatpush1.xpose.msra.mxu0 0.0
        %2199 = vmatprep.subr.mxu0 0.0
        %2200 = vmatpush1.xpose.msra.mxu0 0.0
        %2201 = vmatprep.subr.mxu0 0.0
        %2202 = vmatpush1.xpose.msra.mxu0 0.0
        %2203 = vmatprep.subr.mxu0 0.0
        %2204 = vmatpush1.xpose.msra.mxu0 0.0
        %2205 = vmatprep.subr.mxu0 0.0
        %2206 = vmatpush1.xpose.msra.mxu0 0.0
        %2207 = vmatprep.subr.mxu0 0.0
        %2208 = vmatpush1.xpose.msra.mxu0 0.0
        %2209 = vmatprep.subr.mxu0 0.0
        %2210 = vmatpush1.xpose.msra.mxu0 0.0
        %2211 = vmatprep.subr.mxu0 0.0
        %2212 = vmatpush1.xpose.msra.mxu0 0.0
        %2213 = vmatprep.subr.mxu0 0.0
        %2214 = vmatpush1.xpose.msra.mxu0 0.0
        %2215 = vmatprep.subr.mxu0 0.0
        %2216 = vmatpush1.xpose.msra.mxu0 0.0
        %2217 = vmatprep.subr.mxu0 0.0
        %2218 = vmatpush1.xpose.msra.mxu0 0.0
        %2219 = vmatprep.subr.mxu0 0.0
        %2220 = vmatpush1.xpose.msra.mxu0 0.0
        %2221 = vmatprep.subr.mxu0 0.0
        %2222 = vmatpush1.xpose.msra.mxu0 0.0
        %2223 = vmatprep.subr.mxu0 0.0
        %2224 = vmatpush1.xpose.msra.mxu0 0.0
        %2225 = vmatprep.subr.mxu0 0.0
        %2226 = vmatpush1.xpose.msra.mxu0 %v2193
        %2227 = vmatprep.subr.mxu0 0.0
        %2228 = vmatpush2.xpose.msra.mxu0 0.0
        %2229 = vmatprep.subr.mxu0 0.0
        %2230 = vmatpush2.xpose.msra.mxu0 0.0
        %2231 = vmatprep.subr.mxu0 0.0
        %2232 = vmatpush2.xpose.msra.mxu0 0.0
        %2233 = vmatprep.subr.mxu0 0.0
        %2234 = vmatpush2.xpose.msra.mxu0 0.0
        %2235 = vmatprep.subr.mxu0 0.0
        %2236 = vmatpush2.xpose.msra.mxu0 0.0
        %2237 = vmatprep.subr.mxu0 0.0
        %2238 = vmatpush2.xpose.msra.mxu0 0.0
        %2239 = vmatprep.subr.mxu0 0.0
        %2240 = vmatpush2.xpose.msra.mxu0 0.0
        %2241 = vmatprep.subr.mxu0 0.0
        %2242 = vmatpush2.xpose.msra.mxu0 0.0
        %2243 = vmatprep.subr.mxu0 0.0
        %2244 = vmatpush2.xpose.msra.mxu0 0.0
        %2245 = vmatprep.subr.mxu0 0.0
        %2246 = vmatpush2.xpose.msra.mxu0 0.0
        %2247 = vmatprep.subr.mxu0 0.0
        %2248 = vmatpush2.xpose.msra.mxu0 0.0
        %2249 = vmatprep.subr.mxu0 0.0
        %2250 = vmatpush2.xpose.msra.mxu0 0.0
        %2251 = vmatprep.subr.mxu0 0.0
        %2252 = vmatpush2.xpose.msra.mxu0 0.0
        %2253 = vmatprep.subr.mxu0 0.0
        %2254 = vmatpush2.xpose.msra.mxu0 0.0
        %2255 = vmatprep.subr.mxu0 0.0
        %2256 = vmatpush2.xpose.msra.mxu0 0.0
        %2257 = vmatprep.subr.mxu0 0.0
        %2258 = vmatpush2.xpose.msra.mxu0 0.0
        %2259 = vmatprep.mubr.f32.mxu0 0.0
        %2260 = vmatmul.mubr.f32.gmra.mxu0 %v2191
        %v2261 = vpop.f32.mrf.mxu0
        %v2262 = vadd.f32 0.0, %v2261
        %v2263 = vpop.f32.mrf.mxu0
        %2264 = vdwg.mxu0
        %2265 = vrot.lane.b32.xlu0 %v1878, 80
        %v2266 = vpop.permute.xlu0 %2265
        %2267 = vrot.lane.b32.xlu0 %v1951, 80
        %v2268 = vpop.permute.xlu0 %2267
        %v2269 = vsel %vm661, %v2266, 0
        %v2271 = vsel %vm661, %v2268, 0
        %2273 = vmatprep.subr.mxu0 0.0
        %2274 = vmatpush1.xpose.msra.mxu0 0.0
        %2275 = vmatprep.subr.mxu0 0.0
        %2276 = vmatpush1.xpose.msra.mxu0 0.0
        %2277 = vmatprep.subr.mxu0 0.0
        %2278 = vmatpush1.xpose.msra.mxu0 0.0
        %2279 = vmatprep.subr.mxu0 0.0
        %2280 = vmatpush1.xpose.msra.mxu0 0.0
        %2281 = vmatprep.subr.mxu0 0.0
        %2282 = vmatpush1.xpose.msra.mxu0 0.0
        %2283 = vmatprep.subr.mxu0 0.0
        %2284 = vmatpush1.xpose.msra.mxu0 0.0
        %2285 = vmatprep.subr.mxu0 0.0
        %2286 = vmatpush1.xpose.msra.mxu0 0.0
        %2287 = vmatprep.subr.mxu0 0.0
        %2288 = vmatpush1.xpose.msra.mxu0 0.0
        %2289 = vmatprep.subr.mxu0 0.0
        %2290 = vmatpush1.xpose.msra.mxu0 0.0
        %2291 = vmatprep.subr.mxu0 0.0
        %2292 = vmatpush1.xpose.msra.mxu0 0.0
        %2293 = vmatprep.subr.mxu0 0.0
        %2294 = vmatpush1.xpose.msra.mxu0 0.0
        %2295 = vmatprep.subr.mxu0 0.0
        %2296 = vmatpush1.xpose.msra.mxu0 0.0
        %2297 = vmatprep.subr.mxu0 0.0
        %2298 = vmatpush1.xpose.msra.mxu0 0.0
        %2299 = vmatprep.subr.mxu0 0.0
        %2300 = vmatpush1.xpose.msra.mxu0 0.0
        %2301 = vmatprep.subr.mxu0 0.0
        %2302 = vmatpush1.xpose.msra.mxu0 0.0
        %2303 = vmatprep.subr.mxu0 0.0
        %2304 = vmatpush1.xpose.msra.mxu0 %v2271
        %2305 = vmatprep.subr.mxu0 0.0
        %2306 = vmatpush2.xpose.msra.mxu0 0.0
        %2307 = vmatprep.subr.mxu0 0.0
        %2308 = vmatpush2.xpose.msra.mxu0 0.0
        %2309 = vmatprep.subr.mxu0 0.0
        %2310 = vmatpush2.xpose.msra.mxu0 0.0
        %2311 = vmatprep.subr.mxu0 0.0
        %2312 = vmatpush2.xpose.msra.mxu0 0.0
        %2313 = vmatprep.subr.mxu0 0.0
        %2314 = vmatpush2.xpose.msra.mxu0 0.0
        %2315 = vmatprep.subr.mxu0 0.0
        %2316 = vmatpush2.xpose.msra.mxu0 0.0
        %2317 = vmatprep.subr.mxu0 0.0
        %2318 = vmatpush2.xpose.msra.mxu0 0.0
        %2319 = vmatprep.subr.mxu0 0.0
        %2320 = vmatpush2.xpose.msra.mxu0 0.0
        %2321 = vmatprep.subr.mxu0 0.0
        %2322 = vmatpush2.xpose.msra.mxu0 0.0
        %2323 = vmatprep.subr.mxu0 0.0
        %2324 = vmatpush2.xpose.msra.mxu0 0.0
        %2325 = vmatprep.subr.mxu0 0.0
        %2326 = vmatpush2.xpose.msra.mxu0 0.0
        %2327 = vmatprep.subr.mxu0 0.0
        %2328 = vmatpush2.xpose.msra.mxu0 0.0
        %2329 = vmatprep.subr.mxu0 0.0
        %2330 = vmatpush2.xpose.msra.mxu0 0.0
        %2331 = vmatprep.subr.mxu0 0.0
        %2332 = vmatpush2.xpose.msra.mxu0 0.0
        %2333 = vmatprep.subr.mxu0 0.0
        %2334 = vmatpush2.xpose.msra.mxu0 0.0
        %2335 = vmatprep.subr.mxu0 0.0
        %2336 = vmatpush2.xpose.msra.mxu0 0.0
        %2337 = vmatprep.mubr.f32.mxu0 0.0
        %2338 = vmatmul.mubr.f32.gmra.mxu0 %v2269
        %v2339 = vpop.f32.mrf.mxu0
        %v2340 = vadd.f32 0.0, %v2339
        %v2341 = vpop.f32.mrf.mxu0
        %2342 = vdwg.mxu0
        %v2343 = vadd.f32 %v2106, %v976
        %v2344 = vadd.f32 %v2184, %v976
        %v2345 = vadd.f32 %v2262, %v976
        %v2346 = vadd.f32 %v2340, %v976
        %v2347 = vsel %vm982, %v2343, -inf
        %2348 = vmax.xlane.f32.xlu0 %v2347
        %v2349 = vpop.xlane.xlu0 %2348
        %v2350 = vsel %vm982, %v2344, -inf
        %2351 = vmax.xlane.f32.xlu0 %v2350
        %v2352 = vpop.xlane.xlu0 %2351
        %v2353 = vsel %vm982, %v2345, -inf
        %2354 = vmax.xlane.f32.xlu0 %v2353
        %v2355 = vpop.xlane.xlu0 %2354
        %v2356 = vsel %vm982, %v2346, -inf
        %2357 = vmax.xlane.f32.xlu0 %v2356
        %v2358 = vpop.xlane.xlu0 %2357
        %v2359 = vsub.f32 %v2343, %v2349
        %v2360 = vsub.f32 %v2344, %v2352
        %v2361 = vsub.f32 %v2345, %v2355
        %v2362 = vsub.f32 %v2346, %v2358
        %v2363 = vmul.f32 %v2359, 1.442695
        %v2364 = vpow.pop %v2363
        %v2365 = vmul.f32 %v2360, 1.442695
        %v2366 = vpow.pop %v2365
        %v2367 = vmul.f32 %v2361, 1.442695
        %v2368 = vpow.pop %v2367
        %v2369 = vmul.f32 %v2362, 1.442695
        %v2370 = vpow.pop %v2369
        %v2371 = vsel %vm982, %v2364, 0.0
        %2372 = vadd.xlane.f32.xlu0 %v2371
        %v2373 = vpop.xlane.xlu0 %2372
        %v2374 = vsel %vm982, %v2366, 0.0
        %2375 = vadd.xlane.f32.xlu0 %v2374
        %v2376 = vpop.xlane.xlu0 %2375
        %v2377 = vsel %vm982, %v2368, 0.0
        %2378 = vadd.xlane.f32.xlu0 %v2377
        %v2379 = vpop.xlane.xlu0 %2378
        %v2380 = vsel %vm982, %v2370, 0.0
        %2381 = vadd.xlane.f32.xlu0 %v2380
        %v2382 = vpop.xlane.xlu0 %2381
        %v2383 = vrcp.pop %v2373
        %v2384 = vrcp.pop %v2376
        %v2385 = vrcp.pop %v2379
        %v2386 = vrcp.pop %v2382
        %v2387 = vmul.f32 %v2364, %v2383
        %v2388 = vmul.f32 %v2366, %v2384
        %v2389 = vmul.f32 %v2368, %v2385
        %v2390 = vmul.f32 %v2370, %v2386
        %v2392 = vsel %vm982, %v2387, 0
        %2394 = vmatprep.subr.mxu0 0.0
        %2395 = vmatpush1.msra.mxu0 0.0
        %2396 = vmatprep.subr.mxu0 0.0
        %2397 = vmatpush1.msra.mxu0 0.0
        %2398 = vmatprep.subr.mxu0 0.0
        %2399 = vmatpush1.msra.mxu0 0.0
        %2400 = vmatprep.subr.mxu0 0.0
        %2401 = vmatpush1.msra.mxu0 0.0
        %2402 = vmatprep.subr.mxu0 0.0
        %2403 = vmatpush1.msra.mxu0 0.0
        %2404 = vmatprep.subr.mxu0 0.0
        %2405 = vmatpush1.msra.mxu0 0.0
        %2406 = vmatprep.subr.mxu0 0.0
        %2407 = vmatpush1.msra.mxu0 0.0
        %2408 = vmatprep.subr.mxu0 0.0
        %2409 = vmatpush1.msra.mxu0 0.0
        %2410 = vmatprep.subr.mxu0 0.0
        %2411 = vmatpush1.msra.mxu0 0.0
        %2412 = vmatprep.subr.mxu0 0.0
        %2413 = vmatpush1.msra.mxu0 0.0
        %2414 = vmatprep.subr.mxu0 0.0
        %2415 = vmatpush1.msra.mxu0 0.0
        %2416 = vmatprep.subr.mxu0 0.0
        %2417 = vmatpush1.msra.mxu0 0.0
        %2418 = vmatprep.subr.mxu0 0.0
        %2419 = vmatpush1.msra.mxu0 0.0
        %2420 = vmatprep.subr.mxu0 0.0
        %2421 = vmatpush1.msra.mxu0 0.0
        %2422 = vmatprep.subr.mxu0 0.0
        %2423 = vmatpush1.msra.mxu0 0.0
        %2424 = vmatprep.subr.mxu0 0.0
        %2425 = vmatpush1.msra.mxu0 %v2028
        %2426 = vmatprep.subr.mxu0 0.0
        %2427 = vmatpush2.msra.mxu0 0.0
        %2428 = vmatprep.subr.mxu0 0.0
        %2429 = vmatpush2.msra.mxu0 0.0
        %2430 = vmatprep.subr.mxu0 0.0
        %2431 = vmatpush2.msra.mxu0 0.0
        %2432 = vmatprep.subr.mxu0 0.0
        %2433 = vmatpush2.msra.mxu0 0.0
        %2434 = vmatprep.subr.mxu0 0.0
        %2435 = vmatpush2.msra.mxu0 0.0
        %2436 = vmatprep.subr.mxu0 0.0
        %2437 = vmatpush2.msra.mxu0 0.0
        %2438 = vmatprep.subr.mxu0 0.0
        %2439 = vmatpush2.msra.mxu0 0.0
        %2440 = vmatprep.subr.mxu0 0.0
        %2441 = vmatpush2.msra.mxu0 0.0
        %2442 = vmatprep.subr.mxu0 0.0
        %2443 = vmatpush2.msra.mxu0 0.0
        %2444 = vmatprep.subr.mxu0 0.0
        %2445 = vmatpush2.msra.mxu0 0.0
        %2446 = vmatprep.subr.mxu0 0.0
        %2447 = vmatpush2.msra.mxu0 0.0
        %2448 = vmatprep.subr.mxu0 0.0
        %2449 = vmatpush2.msra.mxu0 0.0
        %2450 = vmatprep.subr.mxu0 0.0
        %2451 = vmatpush2.msra.mxu0 0.0
        %2452 = vmatprep.subr.mxu0 0.0
        %2453 = vmatpush2.msra.mxu0 0.0
        %2454 = vmatprep.subr.mxu0 0.0
        %2455 = vmatpush2.msra.mxu0 0.0
        %2456 = vmatprep.subr.mxu0 0.0
        %2457 = vmatpush2.msra.mxu0 0.0
        %2458 = vmatprep.mubr.f32.mxu0 0.0
        %2459 = vmatmul.mubr.f32.gmra.mxu0 %v2392
        %v2460 = vpop.f32.mrf.mxu0
        %v2461 = vadd.f32 0.0, %v2460
        %v2462 = vpop.f32.mrf.mxu0
        %2463 = vdwg.mxu0
        %v2464 = vld [vmem:[%s0 + $0x120] sm:$0xf]
        %v2465 = vld [vmem:[%s0 + $0x124] sm:$0xf]
        %v2466 = vpack.c.bf16 %v2461, %v2461
        %2468 = vrot.lane.b32.xlu0 %v2028, 112
        %v2469 = vpop.permute.xlu0 %2468
        %v2472 = vsel %vm982, %v2388, 0
        %2474 = vmatprep.subr.mxu0 0.0
        %2475 = vmatpush1.msra.mxu0 0.0
        %2476 = vmatprep.subr.mxu0 0.0
        %2477 = vmatpush1.msra.mxu0 0.0
        %2478 = vmatprep.subr.mxu0 0.0
        %2479 = vmatpush1.msra.mxu0 0.0
        %2480 = vmatprep.subr.mxu0 0.0
        %2481 = vmatpush1.msra.mxu0 0.0
        %2482 = vmatprep.subr.mxu0 0.0
        %2483 = vmatpush1.msra.mxu0 0.0
        %2484 = vmatprep.subr.mxu0 0.0
        %2485 = vmatpush1.msra.mxu0 0.0
        %2486 = vmatprep.subr.mxu0 0.0
        %2487 = vmatpush1.msra.mxu0 0.0
        %2488 = vmatprep.subr.mxu0 0.0
        %2489 = vmatpush1.msra.mxu0 0.0
        %2490 = vmatprep.subr.mxu0 0.0
        %2491 = vmatpush1.msra.mxu0 0.0
        %2492 = vmatprep.subr.mxu0 0.0
        %2493 = vmatpush1.msra.mxu0 0.0
        %2494 = vmatprep.subr.mxu0 0.0
        %2495 = vmatpush1.msra.mxu0 0.0
        %2496 = vmatprep.subr.mxu0 0.0
        %2497 = vmatpush1.msra.mxu0 0.0
        %2498 = vmatprep.subr.mxu0 0.0
        %2499 = vmatpush1.msra.mxu0 0.0
        %2500 = vmatprep.subr.mxu0 0.0
        %2501 = vmatpush1.msra.mxu0 0.0
        %2502 = vmatprep.subr.mxu0 0.0
        %2503 = vmatpush1.msra.mxu0 0.0
        %2504 = vmatprep.subr.mxu0 0.0
        %2505 = vmatpush1.msra.mxu0 %v2469
        %2506 = vmatprep.subr.mxu0 0.0
        %2507 = vmatpush2.msra.mxu0 0.0
        %2508 = vmatprep.subr.mxu0 0.0
        %2509 = vmatpush2.msra.mxu0 0.0
        %2510 = vmatprep.subr.mxu0 0.0
        %2511 = vmatpush2.msra.mxu0 0.0
        %2512 = vmatprep.subr.mxu0 0.0
        %2513 = vmatpush2.msra.mxu0 0.0
        %2514 = vmatprep.subr.mxu0 0.0
        %2515 = vmatpush2.msra.mxu0 0.0
        %2516 = vmatprep.subr.mxu0 0.0
        %2517 = vmatpush2.msra.mxu0 0.0
        %2518 = vmatprep.subr.mxu0 0.0
        %2519 = vmatpush2.msra.mxu0 0.0
        %2520 = vmatprep.subr.mxu0 0.0
        %2521 = vmatpush2.msra.mxu0 0.0
        %2522 = vmatprep.subr.mxu0 0.0
        %2523 = vmatpush2.msra.mxu0 0.0
        %2524 = vmatprep.subr.mxu0 0.0
        %2525 = vmatpush2.msra.mxu0 0.0
        %2526 = vmatprep.subr.mxu0 0.0
        %2527 = vmatpush2.msra.mxu0 0.0
        %2528 = vmatprep.subr.mxu0 0.0
        %2529 = vmatpush2.msra.mxu0 0.0
        %2530 = vmatprep.subr.mxu0 0.0
        %2531 = vmatpush2.msra.mxu0 0.0
        %2532 = vmatprep.subr.mxu0 0.0
        %2533 = vmatpush2.msra.mxu0 0.0
        %2534 = vmatprep.subr.mxu0 0.0
        %2535 = vmatpush2.msra.mxu0 0.0
        %2536 = vmatprep.subr.mxu0 0.0
        %2537 = vmatpush2.msra.mxu0 0.0
        %2538 = vmatprep.mubr.f32.mxu0 0.0
        %2539 = vmatmul.mubr.f32.gmra.mxu0 %v2472
        %v2540 = vpop.f32.mrf.mxu0
        %v2541 = vadd.f32 0.0, %v2540
        %v2542 = vpop.f32.mrf.mxu0
        %2543 = vdwg.mxu0
        %v2544 = vld [vmem:[%s0 + $0x128] sm:$0xf]
        %v2545 = vld [vmem:[%s0 + $0x12c] sm:$0xf]
        %v2546 = vpack.c.bf16 %v2541, %v2541
        %v2549 = vunpack.c.l.b16 %v2544
        %v2550 = vunpack.c.l.b16 %v2545
        %v2551 = vpack.c.b16 %v2550, %v2549
        %v2554 = vsel %vm661, %v2546, 0
        %2556 = vmatprep.subr.bf16.mxu0 0
        %2557 = vmatpush1.bf16.msra.mxu0 0
        %2558 = vmatprep.subr.bf16.mxu0 0
        %2559 = vmatpush1.bf16.msra.mxu0 0
        %2560 = vmatprep.subr.bf16.mxu0 0
        %2561 = vmatpush1.bf16.msra.mxu0 0
        %2562 = vmatprep.subr.bf16.mxu0 0
        %2563 = vmatpush1.bf16.msra.mxu0 0
        %2564 = vmatprep.subr.bf16.mxu0 0
        %2565 = vmatpush1.bf16.msra.mxu0 0
        %2566 = vmatprep.subr.bf16.mxu0 0
        %2567 = vmatpush1.bf16.msra.mxu0 0
        %2568 = vmatprep.subr.bf16.mxu0 0
        %2569 = vmatpush1.bf16.msra.mxu0 0
        %2570 = vmatprep.subr.bf16.mxu0 0
        %2571 = vmatpush1.bf16.msra.mxu0 %v2551
        %2572 = vmatprep.subr.bf16.mxu0 0
        %2573 = vmatpush2.bf16.msra.mxu0 0
        %2574 = vmatprep.subr.bf16.mxu0 0
        %2575 = vmatpush2.bf16.msra.mxu0 0
        %2576 = vmatprep.subr.bf16.mxu0 0
        %2577 = vmatpush2.bf16.msra.mxu0 0
        %2578 = vmatprep.subr.bf16.mxu0 0
        %2579 = vmatpush2.bf16.msra.mxu0 0
        %2580 = vmatprep.subr.bf16.mxu0 0
        %2581 = vmatpush2.bf16.msra.mxu0 0
        %2582 = vmatprep.subr.bf16.mxu0 0
        %2583 = vmatpush2.bf16.msra.mxu0 0
        %2584 = vmatprep.subr.bf16.mxu0 0
        %2585 = vmatpush2.bf16.msra.mxu0 0
        %2586 = vmatprep.subr.bf16.mxu0 0
        %2587 = vmatpush2.bf16.msra.mxu0 0
        %2588 = vmatprep.mubr.bf16.mxu0 0
        %2589 = vmatmul.mubr.bf16.gmra.mxu0 %v2554
        %v2590 = vpop.f32.mrf.mxu0
        %v2591 = vadd.f32 0.0, %v2590
        %v2592 = vpop.f32.mrf.mxu0
        %v2593 = vpop.f32.mrf.mxu0
        %v2594 = vpop.f32.mrf.mxu0
        %2595 = vdwg.mxu0
        %v2598 = vunpack.c.l.b16 %v2464
        %v2599 = vunpack.c.l.b16 %v2465
        %v2600 = vpack.c.b16 %v2599, %v2598
        %v2603 = vsel %vm661, %v2466, 0
        %2605 = vmatprep.subr.bf16.mxu0 0
        %2606 = vmatpush1.bf16.msra.mxu0 0
        %2607 = vmatprep.subr.bf16.mxu0 0
        %2608 = vmatpush1.bf16.msra.mxu0 0
        %2609 = vmatprep.subr.bf16.mxu0 0
        %2610 = vmatpush1.bf16.msra.mxu0 0
        %2611 = vmatprep.subr.bf16.mxu0 0
        %2612 = vmatpush1.bf16.msra.mxu0 0
        %2613 = vmatprep.subr.bf16.mxu0 0
        %2614 = vmatpush1.bf16.msra.mxu0 0
        %2615 = vmatprep.subr.bf16.mxu0 0
        %2616 = vmatpush1.bf16.msra.mxu0 0
        %2617 = vmatprep.subr.bf16.mxu0 0
        %2618 = vmatpush1.bf16.msra.mxu0 0
        %2619 = vmatprep.subr.bf16.mxu0 0
        %2620 = vmatpush1.bf16.msra.mxu0 %v2600
        %2621 = vmatprep.subr.bf16.mxu0 0
        %2622 = vmatpush2.bf16.msra.mxu0 0
        %2623 = vmatprep.subr.bf16.mxu0 0
        %2624 = vmatpush2.bf16.msra.mxu0 0
        %2625 = vmatprep.subr.bf16.mxu0 0
        %2626 = vmatpush2.bf16.msra.mxu0 0
        %2627 = vmatprep.subr.bf16.mxu0 0
        %2628 = vmatpush2.bf16.msra.mxu0 0
        %2629 = vmatprep.subr.bf16.mxu0 0
        %2630 = vmatpush2.bf16.msra.mxu0 0
        %2631 = vmatprep.subr.bf16.mxu0 0
        %2632 = vmatpush2.bf16.msra.mxu0 0
        %2633 = vmatprep.subr.bf16.mxu0 0
        %2634 = vmatpush2.bf16.msra.mxu0 0
        %2635 = vmatprep.subr.bf16.mxu0 0
        %2636 = vmatpush2.bf16.msra.mxu0 0
        %2637 = vmatprep.mubr.bf16.mxu0 0
        %2638 = vmatmul.mubr.bf16.gmra.mxu0 %v2603
        %v2639 = vpop.f32.mrf.mxu0
        %v2640 = vadd.f32 %v2591, %v2639
        %v2641 = vpop.f32.mrf.mxu0
        %v2642 = vpop.f32.mrf.mxu0
        %v2643 = vpop.f32.mrf.mxu0
        %2644 = vdwg.mxu0
        %2645 = vrot.lane.b32.xlu0 %v2028, 96
        %v2646 = vpop.permute.xlu0 %2645
        %v2649 = vsel %vm982, %v2389, 0
        %2651 = vmatprep.subr.mxu0 0.0
        %2652 = vmatpush1.msra.mxu0 0.0
        %2653 = vmatprep.subr.mxu0 0.0
        %2654 = vmatpush1.msra.mxu0 0.0
        %2655 = vmatprep.subr.mxu0 0.0
        %2656 = vmatpush1.msra.mxu0 0.0
        %2657 = vmatprep.subr.mxu0 0.0
        %2658 = vmatpush1.msra.mxu0 0.0
        %2659 = vmatprep.subr.mxu0 0.0
        %2660 = vmatpush1.msra.mxu0 0.0
        %2661 = vmatprep.subr.mxu0 0.0
        %2662 = vmatpush1.msra.mxu0 0.0
        %2663 = vmatprep.subr.mxu0 0.0
        %2664 = vmatpush1.msra.mxu0 0.0
        %2665 = vmatprep.subr.mxu0 0.0
        %2666 = vmatpush1.msra.mxu0 0.0
        %2667 = vmatprep.subr.mxu0 0.0
        %2668 = vmatpush1.msra.mxu0 0.0
        %2669 = vmatprep.subr.mxu0 0.0
        %2670 = vmatpush1.msra.mxu0 0.0
        %2671 = vmatprep.subr.mxu0 0.0
        %2672 = vmatpush1.msra.mxu0 0.0
        %2673 = vmatprep.subr.mxu0 0.0
        %2674 = vmatpush1.msra.mxu0 0.0
        %2675 = vmatprep.subr.mxu0 0.0
        %2676 = vmatpush1.msra.mxu0 0.0
        %2677 = vmatprep.subr.mxu0 0.0
        %2678 = vmatpush1.msra.mxu0 0.0
        %2679 = vmatprep.subr.mxu0 0.0
        %2680 = vmatpush1.msra.mxu0 0.0
        %2681 = vmatprep.subr.mxu0 0.0
        %2682 = vmatpush1.msra.mxu0 %v2646
        %2683 = vmatprep.subr.mxu0 0.0
        %2684 = vmatpush2.msra.mxu0 0.0
        %2685 = vmatprep.subr.mxu0 0.0
        %2686 = vmatpush2.msra.mxu0 0.0
        %2687 = vmatprep.subr.mxu0 0.0
        %2688 = vmatpush2.msra.mxu0 0.0
        %2689 = vmatprep.subr.mxu0 0.0
        %2690 = vmatpush2.msra.mxu0 0.0
        %2691 = vmatprep.subr.mxu0 0.0
        %2692 = vmatpush2.msra.mxu0 0.0
        %2693 = vmatprep.subr.mxu0 0.0
        %2694 = vmatpush2.msra.mxu0 0.0
        %2695 = vmatprep.subr.mxu0 0.0
        %2696 = vmatpush2.msra.mxu0 0.0
        %2697 = vmatprep.subr.mxu0 0.0
        %2698 = vmatpush2.msra.mxu0 0.0
        %2699 = vmatprep.subr.mxu0 0.0
        %2700 = vmatpush2.msra.mxu0 0.0
        %2701 = vmatprep.subr.mxu0 0.0
        %2702 = vmatpush2.msra.mxu0 0.0
        %2703 = vmatprep.subr.mxu0 0.0
        %2704 = vmatpush2.msra.mxu0 0.0
        %2705 = vmatprep.subr.mxu0 0.0
        %2706 = vmatpush2.msra.mxu0 0.0
        %2707 = vmatprep.subr.mxu0 0.0
        %2708 = vmatpush2.msra.mxu0 0.0
        %2709 = vmatprep.subr.mxu0 0.0
        %2710 = vmatpush2.msra.mxu0 0.0
        %2711 = vmatprep.subr.mxu0 0.0
        %2712 = vmatpush2.msra.mxu0 0.0
        %2713 = vmatprep.subr.mxu0 0.0
        %2714 = vmatpush2.msra.mxu0 0.0
        %2715 = vmatprep.mubr.f32.mxu0 0.0
        %2716 = vmatmul.mubr.f32.gmra.mxu0 %v2649
        %v2717 = vpop.f32.mrf.mxu0
        %v2718 = vadd.f32 0.0, %v2717
        %v2719 = vpop.f32.mrf.mxu0
        %2720 = vdwg.mxu0
        %v2721 = vld [vmem:[%s0 + $0x130] sm:$0xf]
        %v2722 = vld [vmem:[%s0 + $0x134] sm:$0xf]
        %v2723 = vpack.c.bf16 %v2718, %v2718
        %v2726 = vunpack.c.l.b16 %v2721
        %v2727 = vunpack.c.l.b16 %v2722
        %v2728 = vpack.c.b16 %v2727, %v2726
        %v2731 = vsel %vm661, %v2723, 0
        %2733 = vmatprep.subr.bf16.mxu0 0
        %2734 = vmatpush1.bf16.msra.mxu0 0
        %2735 = vmatprep.subr.bf16.mxu0 0
        %2736 = vmatpush1.bf16.msra.mxu0 0
        %2737 = vmatprep.subr.bf16.mxu0 0
        %2738 = vmatpush1.bf16.msra.mxu0 0
        %2739 = vmatprep.subr.bf16.mxu0 0
        %2740 = vmatpush1.bf16.msra.mxu0 0
        %2741 = vmatprep.subr.bf16.mxu0 0
        %2742 = vmatpush1.bf16.msra.mxu0 0
        %2743 = vmatprep.subr.bf16.mxu0 0
        %2744 = vmatpush1.bf16.msra.mxu0 0
        %2745 = vmatprep.subr.bf16.mxu0 0
        %2746 = vmatpush1.bf16.msra.mxu0 0
        %2747 = vmatprep.subr.bf16.mxu0 0
        %2748 = vmatpush1.bf16.msra.mxu0 %v2728
        %2749 = vmatprep.subr.bf16.mxu0 0
        %2750 = vmatpush2.bf16.msra.mxu0 0
        %2751 = vmatprep.subr.bf16.mxu0 0
        %2752 = vmatpush2.bf16.msra.mxu0 0
        %2753 = vmatprep.subr.bf16.mxu0 0
        %2754 = vmatpush2.bf16.msra.mxu0 0
        %2755 = vmatprep.subr.bf16.mxu0 0
        %2756 = vmatpush2.bf16.msra.mxu0 0
        %2757 = vmatprep.subr.bf16.mxu0 0
        %2758 = vmatpush2.bf16.msra.mxu0 0
        %2759 = vmatprep.subr.bf16.mxu0 0
        %2760 = vmatpush2.bf16.msra.mxu0 0
        %2761 = vmatprep.subr.bf16.mxu0 0
        %2762 = vmatpush2.bf16.msra.mxu0 0
        %2763 = vmatprep.subr.bf16.mxu0 0
        %2764 = vmatpush2.bf16.msra.mxu0 0
        %2765 = vmatprep.mubr.bf16.mxu0 0
        %2766 = vmatmul.mubr.bf16.gmra.mxu0 %v2731
        %v2767 = vpop.f32.mrf.mxu0
        %v2768 = vadd.f32 0.0, %v2767
        %v2769 = vpop.f32.mrf.mxu0
        %v2770 = vpop.f32.mrf.mxu0
        %v2771 = vpop.f32.mrf.mxu0
        %2772 = vdwg.mxu0
        %v2773 = vadd.f32 %v2640, %v2768
        %2774 = vrot.lane.b32.xlu0 %v2028, 80
        %v2775 = vpop.permute.xlu0 %2774
        %v2778 = vsel %vm982, %v2390, 0
        %2780 = vmatprep.subr.mxu0 0.0
        %2781 = vmatpush1.msra.mxu0 0.0
        %2782 = vmatprep.subr.mxu0 0.0
        %2783 = vmatpush1.msra.mxu0 0.0
        %2784 = vmatprep.subr.mxu0 0.0
        %2785 = vmatpush1.msra.mxu0 0.0
        %2786 = vmatprep.subr.mxu0 0.0
        %2787 = vmatpush1.msra.mxu0 0.0
        %2788 = vmatprep.subr.mxu0 0.0
        %2789 = vmatpush1.msra.mxu0 0.0
        %2790 = vmatprep.subr.mxu0 0.0
        %2791 = vmatpush1.msra.mxu0 0.0
        %2792 = vmatprep.subr.mxu0 0.0
        %2793 = vmatpush1.msra.mxu0 0.0
        %2794 = vmatprep.subr.mxu0 0.0
        %2795 = vmatpush1.msra.mxu0 0.0
        %2796 = vmatprep.subr.mxu0 0.0
        %2797 = vmatpush1.msra.mxu0 0.0
        %2798 = vmatprep.subr.mxu0 0.0
        %2799 = vmatpush1.msra.mxu0 0.0
        %2800 = vmatprep.subr.mxu0 0.0
        %2801 = vmatpush1.msra.mxu0 0.0
        %2802 = vmatprep.subr.mxu0 0.0
        %2803 = vmatpush1.msra.mxu0 0.0
        %2804 = vmatprep.subr.mxu0 0.0
        %2805 = vmatpush1.msra.mxu0 0.0
        %2806 = vmatprep.subr.mxu0 0.0
        %2807 = vmatpush1.msra.mxu0 0.0
        %2808 = vmatprep.subr.mxu0 0.0
        %2809 = vmatpush1.msra.mxu0 0.0
        %2810 = vmatprep.subr.mxu0 0.0
        %2811 = vmatpush1.msra.mxu0 %v2775
        %2812 = vmatprep.subr.mxu0 0.0
        %2813 = vmatpush2.msra.mxu0 0.0
        %2814 = vmatprep.subr.mxu0 0.0
        %2815 = vmatpush2.msra.mxu0 0.0
        %2816 = vmatprep.subr.mxu0 0.0
        %2817 = vmatpush2.msra.mxu0 0.0
        %2818 = vmatprep.subr.mxu0 0.0
        %2819 = vmatpush2.msra.mxu0 0.0
        %2820 = vmatprep.subr.mxu0 0.0
        %2821 = vmatpush2.msra.mxu0 0.0
        %2822 = vmatprep.subr.mxu0 0.0
        %2823 = vmatpush2.msra.mxu0 0.0
        %2824 = vmatprep.subr.mxu0 0.0
        %2825 = vmatpush2.msra.mxu0 0.0
        %2826 = vmatprep.subr.mxu0 0.0
        %2827 = vmatpush2.msra.mxu0 0.0
        %2828 = vmatprep.subr.mxu0 0.0
        %2829 = vmatpush2.msra.mxu0 0.0
        %2830 = vmatprep.subr.mxu0 0.0
        %2831 = vmatpush2.msra.mxu0 0.0
        %2832 = vmatprep.subr.mxu0 0.0
        %2833 = vmatpush2.msra.mxu0 0.0
        %2834 = vmatprep.subr.mxu0 0.0
        %2835 = vmatpush2.msra.mxu0 0.0
        %2836 = vmatprep.subr.mxu0 0.0
        %2837 = vmatpush2.msra.mxu0 0.0
        %2838 = vmatprep.subr.mxu0 0.0
        %2839 = vmatpush2.msra.mxu0 0.0
        %2840 = vmatprep.subr.mxu0 0.0
        %2841 = vmatpush2.msra.mxu0 0.0
        %2842 = vmatprep.subr.mxu0 0.0
        %2843 = vmatpush2.msra.mxu0 0.0
        %2844 = vmatprep.mubr.f32.mxu0 0.0
        %2845 = vmatmul.mubr.f32.gmra.mxu0 %v2778
        %v2846 = vpop.f32.mrf.mxu0
        %v2847 = vadd.f32 0.0, %v2846
        %v2848 = vpop.f32.mrf.mxu0
        %2849 = vdwg.mxu0
        %v2850 = vld [vmem:[%s0 + $0x138] sm:$0xf]
        %v2851 = vld [vmem:[%s0 + $0x13c] sm:$0xf]
        %v2852 = vpack.c.bf16 %v2847, %v2847
        %v2855 = vunpack.c.l.b16 %v2850
        %v2856 = vunpack.c.l.b16 %v2851
        %v2857 = vpack.c.b16 %v2856, %v2855
        %v2860 = vsel %vm661, %v2852, 0
        %2862 = vmatprep.subr.bf16.mxu0 0
        %2863 = vmatpush1.bf16.msra.mxu0 0
        %2864 = vmatprep.subr.bf16.mxu0 0
        %2865 = vmatpush1.bf16.msra.mxu0 0
        %2866 = vmatprep.subr.bf16.mxu0 0
        %2867 = vmatpush1.bf16.msra.mxu0 0
        %2868 = vmatprep.subr.bf16.mxu0 0
        %2869 = vmatpush1.bf16.msra.mxu0 0
        %2870 = vmatprep.subr.bf16.mxu0 0
        %2871 = vmatpush1.bf16.msra.mxu0 0
        %2872 = vmatprep.subr.bf16.mxu0 0
        %2873 = vmatpush1.bf16.msra.mxu0 0
        %2874 = vmatprep.subr.bf16.mxu0 0
        %2875 = vmatpush1.bf16.msra.mxu0 0
        %2876 = vmatprep.subr.bf16.mxu0 0
        %2877 = vmatpush1.bf16.msra.mxu0 %v2857
        %2878 = vmatprep.subr.bf16.mxu0 0
        %2879 = vmatpush2.bf16.msra.mxu0 0
        %2880 = vmatprep.subr.bf16.mxu0 0
        %2881 = vmatpush2.bf16.msra.mxu0 0
        %2882 = vmatprep.subr.bf16.mxu0 0
        %2883 = vmatpush2.bf16.msra.mxu0 0
        %2884 = vmatprep.subr.bf16.mxu0 0
        %2885 = vmatpush2.bf16.msra.mxu0 0
        %2886 = vmatprep.subr.bf16.mxu0 0
        %2887 = vmatpush2.bf16.msra.mxu0 0
        %2888 = vmatprep.subr.bf16.mxu0 0
        %2889 = vmatpush2.bf16.msra.mxu0 0
        %2890 = vmatprep.subr.bf16.mxu0 0
        %2891 = vmatpush2.bf16.msra.mxu0 0
        %2892 = vmatprep.subr.bf16.mxu0 0
        %2893 = vmatpush2.bf16.msra.mxu0 0
        %2894 = vmatprep.mubr.bf16.mxu0 0
        %2895 = vmatmul.mubr.bf16.gmra.mxu0 %v2860
        %v2896 = vpop.f32.mrf.mxu0
        %v2897 = vadd.f32 0.0, %v2896
        %v2898 = vpop.f32.mrf.mxu0
        %v2899 = vpop.f32.mrf.mxu0
        %v2900 = vpop.f32.mrf.mxu0
        %2901 = vdwg.mxu0
        %v2902 = vadd.f32 %v2773, %v2897
        %v2903 = vld [vmem:[%s2 + $0x10] sm:$0x1]
        %v2904 = vlaneseq
        %v2905 = vshrl.u32 %v2904, 7
        %v2906 = vsub.s32 0, %v2905
        %v2907 = vrot.slane %v2903, %v2906
        %v2908 = vadd.f32 %v2902, %v2907
        %v2909 = vadd.f32 %v1796, %v2908
        %v2910 = vsel %vm398, %v2909, 0.0
        %2911 = vadd.xlane.f32.xlu0 %v2910
        %v2912 = vpop.xlane.xlu0 %2911
        %v2913 = vmul.f32 %v2912, %v402
        %v2914 = vsub.f32 %v2909, %v2913
        %v2915 = vmul.f32 %v2914, %v2914
        %v2916 = vsel %vm398, %v2915, 0.0
        %2917 = vadd.xlane.f32.xlu0 %v2916
        %v2918 = vpop.xlane.xlu0 %2917
        %v2919 = vmul.f32 %v2918, %v402
        %v2920 = vadd.f32 %v2919, 1e-05
        %v2921 = vrsqrt.pop %v2920
        %v2922 = vmul.f32 %v2914, %v2921
        %v2923 = vld [vmem:[%s2 + $0x11] sm:$0x1]
        %v2924 = vlaneseq
        %v2925 = vshrl.u32 %v2924, 7
        %v2926 = vsub.s32 0, %v2925
        %v2927 = vrot.slane %v2923, %v2926
        %v2928 = vmul.f32 %v2922, %v2927
        %v2929 = vld [vmem:[%s2 + $0x12] sm:$0x1]
        %v2930 = vlaneseq
        %v2931 = vshrl.u32 %v2930, 7
        %v2932 = vsub.s32 0, %v2931
        %v2933 = vrot.slane %v2929, %v2932
        %v2934 = vadd.f32 %v2928, %v2933
        %v2935 = vpack.c.bf16 %v2934, %v2934
        %v2936 = vld [vmem:[%s1 + $0x40] sm:$0xf]
        %v2937 = vld [vmem:[%s1 + $0x44] sm:$0xf]
        %v2938 = vld [vmem:[%s1 + $0x48] sm:$0xf]
        %v2939 = vld [vmem:[%s1 + $0x4c] sm:$0xf]
        %v2940 = vld [vmem:[%s1 + $0x50] sm:$0xf]
        %v2941 = vld [vmem:[%s1 + $0x54] sm:$0xf]
        %v2942 = vld [vmem:[%s1 + $0x58] sm:$0xf]
        %v2943 = vld [vmem:[%s1 + $0x5c] sm:$0xf]
        %v2944 = vld [vmem:[%s3 + $0x2] sm:$0x1]
        %v2945 = vlaneseq
        %v2946 = vshrl.u32 %v2945, 7
        %v2947 = vsub.s32 0, %v2946
        %v2948 = vrot.slane %v2944, %v2947
        %v2957 = vunpack.c.l.b16 %v2936
        %v2958 = vunpack.c.l.b16 %v2937
        %v2959 = vunpack.c.l.b16 %v2938
        %v2960 = vunpack.c.l.b16 %v2939
        %v2961 = vunpack.c.l.b16 %v2940
        %v2962 = vunpack.c.l.b16 %v2941
        %v2963 = vunpack.c.l.b16 %v2942
        %v2964 = vunpack.c.l.b16 %v2943
        %v2965 = vpack.c.b16 %v2958, %v2957
        %v2966 = vpack.c.b16 %v2960, %v2959
        %v2967 = vpack.c.b16 %v2962, %v2961
        %v2968 = vpack.c.b16 %v2964, %v2963
        %v2974 = vsel %vm398, %v2935, 0
        %2976 = vmatprep.subr.bf16.mxu0 0
        %2977 = vmatpush1.bf16.msra.mxu0 0
        %2978 = vmatprep.subr.bf16.mxu0 0
        %2979 = vmatpush1.bf16.msra.mxu0 0
        %2980 = vmatprep.subr.bf16.mxu0 0
        %2981 = vmatpush1.bf16.msra.mxu0 0
        %2982 = vmatprep.subr.bf16.mxu0 0
        %2983 = vmatpush1.bf16.msra.mxu0 0
        %2984 = vmatprep.subr.bf16.mxu0 0
        %2985 = vmatpush1.bf16.msra.mxu0 %v2968
        %2986 = vmatprep.subr.bf16.mxu0 0
        %2987 = vmatpush1.bf16.msra.mxu0 %v2967
        %2988 = vmatprep.subr.bf16.mxu0 0
        %2989 = vmatpush1.bf16.msra.mxu0 %v2966
        %2990 = vmatprep.subr.bf16.mxu0 0
        %2991 = vmatpush1.bf16.msra.mxu0 %v2965
        %2992 = vmatprep.subr.bf16.mxu0 0
        %2993 = vmatpush2.bf16.msra.mxu0 0
        %2994 = vmatprep.subr.bf16.mxu0 0
        %2995 = vmatpush2.bf16.msra.mxu0 0
        %2996 = vmatprep.subr.bf16.mxu0 0
        %2997 = vmatpush2.bf16.msra.mxu0 0
        %2998 = vmatprep.subr.bf16.mxu0 0
        %2999 = vmatpush2.bf16.msra.mxu0 0
        %3000 = vmatprep.subr.bf16.mxu0 0
        %3001 = vmatpush2.bf16.msra.mxu0 0
        %3002 = vmatprep.subr.bf16.mxu0 0
        %3003 = vmatpush2.bf16.msra.mxu0 0
        %3004 = vmatprep.subr.bf16.mxu0 0
        %3005 = vmatpush2.bf16.msra.mxu0 0
        %3006 = vmatprep.subr.bf16.mxu0 0
        %3007 = vmatpush2.bf16.msra.mxu0 0
        %3008 = vmatprep.mubr.bf16.mxu0 0
        %3009 = vmatmul.mubr.bf16.gmra.mxu0 %v2974
        %v3010 = vpop.f32.mrf.mxu0
        %v3011 = vadd.f32 %v2948, %v3010
        %v3012 = vpop.f32.mrf.mxu0
        %v3013 = vpop.f32.mrf.mxu0
        %v3014 = vpop.f32.mrf.mxu0
        %3015 = vdwg.mxu0
        %v3016 = vmul.f32 %v3011, 0.5
        %v3017 = vmul.f32 %v3011, 0.044715
        %v3018 = vmul.f32 %v3017, %v3011
        %v3019 = vmul.f32 %v3018, %v3011
        %v3020 = vadd.f32 %v3011, %v3019
        %v3021 = vmul.f32 %v3020, 0.7978846
        %v3022 = vtanh.pop %v3021
        %v3023 = vadd.f32 %v3022, 1.0
        %v3024 = vmul.f32 %v3016, %v3023
        %v3025 = vpack.c.bf16 %v3024, %v3024
        %v3026 = vld [vmem:[%s0 + $0x140] sm:$0xf]
        %v3027 = vld [vmem:[%s0 + $0x144] sm:$0xf]
        %v3028 = vld [vmem:[%s0 + $0x148] sm:$0xf]
        %v3029 = vld [vmem:[%s0 + $0x14c] sm:$0xf]
        %v3030 = vld [vmem:[%s0 + $0x150] sm:$0xf]
        %v3031 = vld [vmem:[%s0 + $0x154] sm:$0xf]
        %v3032 = vld [vmem:[%s0 + $0x158] sm:$0xf]
        %v3033 = vld [vmem:[%s0 + $0x15c] sm:$0xf]
        %v3034 = vld [vmem:[%s0 + $0x160] sm:$0xf]
        %v3035 = vld [vmem:[%s0 + $0x164] sm:$0xf]
        %v3036 = vld [vmem:[%s0 + $0x168] sm:$0xf]
        %v3037 = vld [vmem:[%s0 + $0x16c] sm:$0xf]
        %v3038 = vld [vmem:[%s0 + $0x170] sm:$0xf]
        %v3039 = vld [vmem:[%s0 + $0x174] sm:$0xf]
        %v3040 = vld [vmem:[%s0 + $0x178] sm:$0xf]
        %v3041 = vld [vmem:[%s0 + $0x17c] sm:$0xf]
        %v3042 = vld [vmem:[%s2 + $0x13] sm:$0x1]
        %v3043 = vlaneseq
        %v3044 = vshrl.u32 %v3043, 7
        %v3045 = vsub.s32 0, %v3044
        %v3046 = vrot.slane %v3042, %v3045
        %v3063 = vunpack.c.l.b16 %v3026
        %v3064 = vunpack.c.l.b16 %v3027
        %v3065 = vunpack.c.l.b16 %v3028
        %v3066 = vunpack.c.l.b16 %v3029
        %v3067 = vunpack.c.l.b16 %v3030
        %v3068 = vunpack.c.l.b16 %v3031
        %v3069 = vunpack.c.l.b16 %v3032
        %v3070 = vunpack.c.l.b16 %v3033
        %v3071 = vunpack.c.l.b16 %v3034
        %v3072 = vunpack.c.l.b16 %v3035
        %v3073 = vunpack.c.l.b16 %v3036
        %v3074 = vunpack.c.l.b16 %v3037
        %v3075 = vunpack.c.l.b16 %v3038
        %v3076 = vunpack.c.l.b16 %v3039
        %v3077 = vunpack.c.l.b16 %v3040
        %v3078 = vunpack.c.l.b16 %v3041
        %v3079 = vpack.c.b16 %v3064, %v3063
        %v3080 = vpack.c.b16 %v3066, %v3065
        %v3081 = vpack.c.b16 %v3068, %v3067
        %v3082 = vpack.c.b16 %v3070, %v3069
        %v3083 = vpack.c.b16 %v3072, %v3071
        %v3084 = vpack.c.b16 %v3074, %v3073
        %v3085 = vpack.c.b16 %v3076, %v3075
        %v3086 = vpack.c.b16 %v3078, %v3077
        %3095 = vmatprep.subr.bf16.mxu0 0
        %3096 = vmatpush1.bf16.msra.mxu0 %v3086
        %3097 = vmatprep.subr.bf16.mxu0 0
        %3098 = vmatpush1.bf16.msra.mxu0 %v3085
        %3099 = vmatprep.subr.bf16.mxu0 0
        %3100 = vmatpush1.bf16.msra.mxu0 %v3084
        %3101 = vmatprep.subr.bf16.mxu0 0
        %3102 = vmatpush1.bf16.msra.mxu0 %v3083
        %3103 = vmatprep.subr.bf16.mxu0 0
        %3104 = vmatpush1.bf16.msra.mxu0 %v3082
        %3105 = vmatprep.subr.bf16.mxu0 0
        %3106 = vmatpush1.bf16.msra.mxu0 %v3081
        %3107 = vmatprep.subr.bf16.mxu0 0
        %3108 = vmatpush1.bf16.msra.mxu0 %v3080
        %3109 = vmatprep.subr.bf16.mxu0 0
        %3110 = vmatpush1.bf16.msra.mxu0 %v3079
        %3111 = vmatprep.subr.bf16.mxu0 0
        %3112 = vmatpush2.bf16.msra.mxu0 0
        %3113 = vmatprep.subr.bf16.mxu0 0
        %3114 = vmatpush2.bf16.msra.mxu0 0
        %3115 = vmatprep.subr.bf16.mxu0 0
        %3116 = vmatpush2.bf16.msra.mxu0 0
        %3117 = vmatprep.subr.bf16.mxu0 0
        %3118 = vmatpush2.bf16.msra.mxu0 0
        %3119 = vmatprep.subr.bf16.mxu0 0
        %3120 = vmatpush2.bf16.msra.mxu0 0
        %3121 = vmatprep.subr.bf16.mxu0 0
        %3122 = vmatpush2.bf16.msra.mxu0 0
        %3123 = vmatprep.subr.bf16.mxu0 0
        %3124 = vmatpush2.bf16.msra.mxu0 0
        %3125 = vmatprep.subr.bf16.mxu0 0
        %3126 = vmatpush2.bf16.msra.mxu0 0
        %3127 = vmatprep.mubr.bf16.mxu0 0
        %3128 = vmatmul.mubr.bf16.gmra.mxu0 %v3025
        %v3129 = vpop.f32.mrf.mxu0
        %v3130 = vadd.f32 %v3046, %v3129
        %v3131 = vpop.f32.mrf.mxu0
        %v3132 = vpop.f32.mrf.mxu0
        %v3133 = vpop.f32.mrf.mxu0
        %3134 = vdwg.mxu0
        %v3135 = vadd.f32 %v2934, %v3130
        %v3136 = vsel %vm398, %v3135, 0.0
        %3137 = vadd.xlane.f32.xlu0 %v3136
        %v3138 = vpop.xlane.xlu0 %3137
        %v3139 = vmul.f32 %v3138, %v402
        %v3140 = vsub.f32 %v3135, %v3139
        %v3141 = vmul.f32 %v3140, %v3140
        %v3142 = vsel %vm398, %v3141, 0.0
        %3143 = vadd.xlane.f32.xlu0 %v3142
        %v3144 = vpop.xlane.xlu0 %3143
        %v3145 = vmul.f32 %v3144, %v402
        %v3146 = vadd.f32 %v3145, 1e-05
        %v3147 = vrsqrt.pop %v3146
        %v3148 = vmul.f32 %v3140, %v3147
        %v3149 = vld [vmem:[%s2 + $0x14] sm:$0x1]
        %v3150 = vlaneseq
        %v3151 = vshrl.u32 %v3150, 7
        %v3152 = vsub.s32 0, %v3151
        %v3153 = vrot.slane %v3149, %v3152
        %v3154 = vmul.f32 %v3148, %v3153
        %v3155 = vld [vmem:[%s2 + $0x15] sm:$0x1]
        %v3156 = vlaneseq
        %v3157 = vshrl.u32 %v3156, 7
        %v3158 = vsub.s32 0, %v3157
        %v3159 = vrot.slane %v3155, %v3158
        %v3160 = vadd.f32 %v3154, %v3159
        %v3161 = vld [vmem:[%s375] sm:$0xff]
        %v3162 = vsel %vm398, %v3161, 0.0
        %3163 = vadd.xlane.f32.xlu0 %v3162
        %v3164 = vpop.xlane.xlu0 %3163
        %v3165 = vmul.f32 %v3164, %v402
        %v3166 = vsub.f32 %v3161, %v3165
        %v3167 = vmul.f32 %v3166, %v3166
        %v3168 = vsel %vm398, %v3167, 0.0
        %3169 = vadd.xlane.f32.xlu0 %v3168
        %v3170 = vpop.xlane.xlu0 %3169
        %v3171 = vmul.f32 %v3170, %v402
        %v3172 = vadd.f32 %v3171, 1e-05
        %v3173 = vrsqrt.pop %v3172
        %v3174 = vmul.f32 %v3166, %v3173
        %v3175 = vld [vmem:[%s2 + $0x2] sm:$0x1]
        %v3176 = vlaneseq
        %v3177 = vshrl.u32 %v3176, 7
        %v3178 = vsub.s32 0, %v3177
        %v3179 = vrot.slane %v3175, %v3178
        %v3180 = vmul.f32 %v3174, %v3179
        %v3181 = vld [vmem:[%s2 + $0x3] sm:$0x1]
        %v3182 = vlaneseq
        %v3183 = vshrl.u32 %v3182, 7
        %v3184 = vsub.s32 0, %v3183
        %v3185 = vrot.slane %v3181, %v3184
        %v3186 = vadd.f32 %v3180, %v3185
        %v3187 = vpack.c.bf16 %v3186, %v3186
        %v3188 = vld [vmem:[%s0 + $0x180] sm:$0xf]
        %v3189 = vld [vmem:[%s0 + $0x184] sm:$0xf]
        %v3190 = vld [vmem:[%s0 + $0x188] sm:$0xf]
        %v3191 = vld [vmem:[%s0 + $0x18c] sm:$0xf]
        %v3192 = vld [vmem:[%s0 + $0x190] sm:$0xf]
        %v3193 = vld [vmem:[%s0 + $0x194] sm:$0xf]
        %v3194 = vld [vmem:[%s0 + $0x198] sm:$0xf]
        %v3195 = vld [vmem:[%s0 + $0x19c] sm:$0xf]
        %v3196 = vld [vmem:[%s2 + $0x16] sm:$0x1]
        %v3197 = vlaneseq
        %v3198 = vshrl.u32 %v3197, 7
        %v3199 = vsub.s32 0, %v3198
        %v3200 = vrot.slane %v3196, %v3199
        %v3209 = vunpack.c.l.b16 %v3188
        %v3210 = vunpack.c.l.b16 %v3189
        %v3211 = vunpack.c.l.b16 %v3190
        %v3212 = vunpack.c.l.b16 %v3191
        %v3213 = vunpack.c.l.b16 %v3192
        %v3214 = vunpack.c.l.b16 %v3193
        %v3215 = vunpack.c.l.b16 %v3194
        %v3216 = vunpack.c.l.b16 %v3195
        %v3217 = vpack.c.b16 %v3210, %v3209
        %v3218 = vpack.c.b16 %v3212, %v3211
        %v3219 = vpack.c.b16 %v3214, %v3213
        %v3220 = vpack.c.b16 %v3216, %v3215
        %v3226 = vsel %vm398, %v3187, 0
        %3228 = vmatprep.subr.bf16.mxu0 0
        %3229 = vmatpush1.bf16.msra.mxu0 0
        %3230 = vmatprep.subr.bf16.mxu0 0
        %3231 = vmatpush1.bf16.msra.mxu0 0
        %3232 = vmatprep.subr.bf16.mxu0 0
        %3233 = vmatpush1.bf16.msra.mxu0 0
        %3234 = vmatprep.subr.bf16.mxu0 0
        %3235 = vmatpush1.bf16.msra.mxu0 0
        %3236 = vmatprep.subr.bf16.mxu0 0
        %3237 = vmatpush1.bf16.msra.mxu0 %v3220
        %3238 = vmatprep.subr.bf16.mxu0 0
        %3239 = vmatpush1.bf16.msra.mxu0 %v3219
        %3240 = vmatprep.subr.bf16.mxu0 0
        %3241 = vmatpush1.bf16.msra.mxu0 %v3218
        %3242 = vmatprep.subr.bf16.mxu0 0
        %3243 = vmatpush1.bf16.msra.mxu0 %v3217
        %3244 = vmatprep.subr.bf16.mxu0 0
        %3245 = vmatpush2.bf16.msra.mxu0 0
        %3246 = vmatprep.subr.bf16.mxu0 0
        %3247 = vmatpush2.bf16.msra.mxu0 0
        %3248 = vmatprep.subr.bf16.mxu0 0
        %3249 = vmatpush2.bf16.msra.mxu0 0
        %3250 = vmatprep.subr.bf16.mxu0 0
        %3251 = vmatpush2.bf16.msra.mxu0 0
        %3252 = vmatprep.subr.bf16.mxu0 0
        %3253 = vmatpush2.bf16.msra.mxu0 0
        %3254 = vmatprep.subr.bf16.mxu0 0
        %3255 = vmatpush2.bf16.msra.mxu0 0
        %3256 = vmatprep.subr.bf16.mxu0 0
        %3257 = vmatpush2.bf16.msra.mxu0 0
        %3258 = vmatprep.subr.bf16.mxu0 0
        %3259 = vmatpush2.bf16.msra.mxu0 0
        %3260 = vmatprep.mubr.bf16.mxu0 0
        %3261 = vmatmul.mubr.bf16.gmra.mxu0 %v3226
        %v3262 = vpop.f32.mrf.mxu0
        %v3263 = vadd.f32 %v3200, %v3262
        %v3264 = vpop.f32.mrf.mxu0
        %v3265 = vpop.f32.mrf.mxu0
        %v3266 = vpop.f32.mrf.mxu0
        %3267 = vdwg.mxu0
        %v3268 = vmul.f32 %v3263, 0.25
        %v3269 = vld [vmem:[%s0 + $0x1a0] sm:$0xf]
        %v3270 = vld [vmem:[%s0 + $0x1a4] sm:$0xf]
        %v3271 = vld [vmem:[%s0 + $0x1a8] sm:$0xf]
        %v3272 = vld [vmem:[%s0 + $0x1ac] sm:$0xf]
        %v3273 = vld [vmem:[%s0 + $0x1b0] sm:$0xf]
        %v3274 = vld [vmem:[%s0 + $0x1b4] sm:$0xf]
        %v3275 = vld [vmem:[%s0 + $0x1b8] sm:$0xf]
        %v3276 = vld [vmem:[%s0 + $0x1bc] sm:$0xf]
        %v3277 = vld [vmem:[%s2 + $0x17] sm:$0x1]
        %v3278 = vlaneseq
        %v3279 = vshrl.u32 %v3278, 7
        %v3280 = vsub.s32 0, %v3279
        %v3281 = vrot.slane %v3277, %v3280
        %v3290 = vunpack.c.l.b16 %v3269
        %v3291 = vunpack.c.l.b16 %v3270
        %v3292 = vunpack.c.l.b16 %v3271
        %v3293 = vunpack.c.l.b16 %v3272
        %v3294 = vunpack.c.l.b16 %v3273
        %v3295 = vunpack.c.l.b16 %v3274
        %v3296 = vunpack.c.l.b16 %v3275
        %v3297 = vunpack.c.l.b16 %v3276
        %v3298 = vpack.c.b16 %v3291, %v3290
        %v3299 = vpack.c.b16 %v3293, %v3292
        %v3300 = vpack.c.b16 %v3295, %v3294
        %v3301 = vpack.c.b16 %v3297, %v3296
        %3306 = vmatprep.subr.bf16.mxu0 0
        %3307 = vmatpush1.bf16.msra.mxu0 0
        %3308 = vmatprep.subr.bf16.mxu0 0
        %3309 = vmatpush1.bf16.msra.mxu0 0
        %3310 = vmatprep.subr.bf16.mxu0 0
        %3311 = vmatpush1.bf16.msra.mxu0 0
        %3312 = vmatprep.subr.bf16.mxu0 0
        %3313 = vmatpush1.bf16.msra.mxu0 0
        %3314 = vmatprep.subr.bf16.mxu0 0
        %3315 = vmatpush1.bf16.msra.mxu0 %v3301
        %3316 = vmatprep.subr.bf16.mxu0 0
        %3317 = vmatpush1.bf16.msra.mxu0 %v3300
        %3318 = vmatprep.subr.bf16.mxu0 0
        %3319 = vmatpush1.bf16.msra.mxu0 %v3299
        %3320 = vmatprep.subr.bf16.mxu0 0
        %3321 = vmatpush1.bf16.msra.mxu0 %v3298
        %3322 = vmatprep.subr.bf16.mxu0 0
        %3323 = vmatpush2.bf16.msra.mxu0 0
        %3324 = vmatprep.subr.bf16.mxu0 0
        %3325 = vmatpush2.bf16.msra.mxu0 0
        %3326 = vmatprep.subr.bf16.mxu0 0
        %3327 = vmatpush2.bf16.msra.mxu0 0
        %3328 = vmatprep.subr.bf16.mxu0 0
        %3329 = vmatpush2.bf16.msra.mxu0 0
        %3330 = vmatprep.subr.bf16.mxu0 0
        %3331 = vmatpush2.bf16.msra.mxu0 0
        %3332 = vmatprep.subr.bf16.mxu0 0
        %3333 = vmatpush2.bf16.msra.mxu0 0
        %3334 = vmatprep.subr.bf16.mxu0 0
        %3335 = vmatpush2.bf16.msra.mxu0 0
        %3336 = vmatprep.subr.bf16.mxu0 0
        %3337 = vmatpush2.bf16.msra.mxu0 0
        %3338 = vmatprep.mubr.bf16.mxu0 0
        %3339 = vmatmul.mubr.bf16.gmra.mxu0 %v3226
        %v3340 = vpop.f32.mrf.mxu0
        %v3341 = vadd.f32 %v3281, %v3340
        %v3342 = vpop.f32.mrf.mxu0
        %v3343 = vpop.f32.mrf.mxu0
        %v3344 = vpop.f32.mrf.mxu0
        %3345 = vdwg.mxu0
        %v3346 = vld [vmem:[%s0 + $0x1c0] sm:$0xf]
        %v3347 = vld [vmem:[%s0 + $0x1c4] sm:$0xf]
        %v3348 = vld [vmem:[%s0 + $0x1c8] sm:$0xf]
        %v3349 = vld [vmem:[%s0 + $0x1cc] sm:$0xf]
        %v3350 = vld [vmem:[%s0 + $0x1d0] sm:$0xf]
        %v3351 = vld [vmem:[%s0 + $0x1d4] sm:$0xf]
        %v3352 = vld [vmem:[%s0 + $0x1d8] sm:$0xf]
        %v3353 = vld [vmem:[%s0 + $0x1dc] sm:$0xf]
        %v3354 = vld [vmem:[%s2 + $0x18] sm:$0x1]
        %v3355 = vlaneseq
        %v3356 = vshrl.u32 %v3355, 7
        %v3357 = vsub.s32 0, %v3356
        %v3358 = vrot.slane %v3354, %v3357
        %v3367 = vunpack.c.l.b16 %v3346
        %v3368 = vunpack.c.l.b16 %v3347
        %v3369 = vunpack.c.l.b16 %v3348
        %v3370 = vunpack.c.l.b16 %v3349
        %v3371 = vunpack.c.l.b16 %v3350
        %v3372 = vunpack.c.l.b16 %v3351
        %v3373 = vunpack.c.l.b16 %v3352
        %v3374 = vunpack.c.l.b16 %v3353
        %v3375 = vpack.c.b16 %v3368, %v3367
        %v3376 = vpack.c.b16 %v3370, %v3369
        %v3377 = vpack.c.b16 %v3372, %v3371
        %v3378 = vpack.c.b16 %v3374, %v3373
        %3383 = vmatprep.subr.bf16.mxu0 0
        %3384 = vmatpush1.bf16.msra.mxu0 0
        %3385 = vmatprep.subr.bf16.mxu0 0
        %3386 = vmatpush1.bf16.msra.mxu0 0
        %3387 = vmatprep.subr.bf16.mxu0 0
        %3388 = vmatpush1.bf16.msra.mxu0 0
        %3389 = vmatprep.subr.bf16.mxu0 0
        %3390 = vmatpush1.bf16.msra.mxu0 0
        %3391 = vmatprep.subr.bf16.mxu0 0
        %3392 = vmatpush1.bf16.msra.mxu0 %v3378
        %3393 = vmatprep.subr.bf16.mxu0 0
        %3394 = vmatpush1.bf16.msra.mxu0 %v3377
        %3395 = vmatprep.subr.bf16.mxu0 0
        %3396 = vmatpush1.bf16.msra.mxu0 %v3376
        %3397 = vmatprep.subr.bf16.mxu0 0
        %3398 = vmatpush1.bf16.msra.mxu0 %v3375
        %3399 = vmatprep.subr.bf16.mxu0 0
        %3400 = vmatpush2.bf16.msra.mxu0 0
        %3401 = vmatprep.subr.bf16.mxu0 0
        %3402 = vmatpush2.bf16.msra.mxu0 0
        %3403 = vmatprep.subr.bf16.mxu0 0
        %3404 = vmatpush2.bf16.msra.mxu0 0
        %3405 = vmatprep.subr.bf16.mxu0 0
        %3406 = vmatpush2.bf16.msra.mxu0 0
        %3407 = vmatprep.subr.bf16.mxu0 0
        %3408 = vmatpush2.bf16.msra.mxu0 0
        %3409 = vmatprep.subr.bf16.mxu0 0
        %3410 = vmatpush2.bf16.msra.mxu0 0
        %3411 = vmatprep.subr.bf16.mxu0 0
        %3412 = vmatpush2.bf16.msra.mxu0 0
        %3413 = vmatprep.subr.bf16.mxu0 0
        %3414 = vmatpush2.bf16.msra.mxu0 0
        %3415 = vmatprep.mubr.bf16.mxu0 0
        %3416 = vmatmul.mubr.bf16.gmra.mxu0 %v3226
        %v3417 = vpop.f32.mrf.mxu0
        %v3418 = vadd.f32 %v3358, %v3417
        %v3419 = vpop.f32.mrf.mxu0
        %v3420 = vpop.f32.mrf.mxu0
        %v3421 = vpop.f32.mrf.mxu0
        %3422 = vdwg.mxu0
        %v3424 = vsel %vm661, %v3268, 0
        %v3427 = vsel %vm661, %v3341, 0
        %3429 = vmatprep.subr.mxu0 0.0
        %3430 = vmatpush1.xpose.msra.mxu0 0.0
        %3431 = vmatprep.subr.mxu0 0.0
        %3432 = vmatpush1.xpose.msra.mxu0 0.0
        %3433 = vmatprep.subr.mxu0 0.0
        %3434 = vmatpush1.xpose.msra.mxu0 0.0
        %3435 = vmatprep.subr.mxu0 0.0
        %3436 = vmatpush1.xpose.msra.mxu0 0.0
        %3437 = vmatprep.subr.mxu0 0.0
        %3438 = vmatpush1.xpose.msra.mxu0 0.0
        %3439 = vmatprep.subr.mxu0 0.0
        %3440 = vmatpush1.xpose.msra.mxu0 0.0
        %3441 = vmatprep.subr.mxu0 0.0
        %3442 = vmatpush1.xpose.msra.mxu0 0.0
        %3443 = vmatprep.subr.mxu0 0.0
        %3444 = vmatpush1.xpose.msra.mxu0 0.0
        %3445 = vmatprep.subr.mxu0 0.0
        %3446 = vmatpush1.xpose.msra.mxu0 0.0
        %3447 = vmatprep.subr.mxu0 0.0
        %3448 = vmatpush1.xpose.msra.mxu0 0.0
        %3449 = vmatprep.subr.mxu0 0.0
        %3450 = vmatpush1.xpose.msra.mxu0 0.0
        %3451 = vmatprep.subr.mxu0 0.0
        %3452 = vmatpush1.xpose.msra.mxu0 0.0
        %3453 = vmatprep.subr.mxu0 0.0
        %3454 = vmatpush1.xpose.msra.mxu0 0.0
        %3455 = vmatprep.subr.mxu0 0.0
        %3456 = vmatpush1.xpose.msra.mxu0 0.0
        %3457 = vmatprep.subr.mxu0 0.0
        %3458 = vmatpush1.xpose.msra.mxu0 0.0
        %3459 = vmatprep.subr.mxu0 0.0
        %3460 = vmatpush1.xpose.msra.mxu0 %v3427
        %3461 = vmatprep.subr.mxu0 0.0
        %3462 = vmatpush2.xpose.msra.mxu0 0.0
        %3463 = vmatprep.subr.mxu0 0.0
        %3464 = vmatpush2.xpose.msra.mxu0 0.0
        %3465 = vmatprep.subr.mxu0 0.0
        %3466 = vmatpush2.xpose.msra.mxu0 0.0
        %3467 = vmatprep.subr.mxu0 0.0
        %3468 = vmatpush2.xpose.msra.mxu0 0.0
        %3469 = vmatprep.subr.mxu0 0.0
        %3470 = vmatpush2.xpose.msra.mxu0 0.0
        %3471 = vmatprep.subr.mxu0 0.0
        %3472 = vmatpush2.xpose.msra.mxu0 0.0
        %3473 = vmatprep.subr.mxu0 0.0
        %3474 = vmatpush2.xpose.msra.mxu0 0.0
        %3475 = vmatprep.subr.mxu0 0.0
        %3476 = vmatpush2.xpose.msra.mxu0 0.0
        %3477 = vmatprep.subr.mxu0 0.0
        %3478 = vmatpush2.xpose.msra.mxu0 0.0
        %3479 = vmatprep.subr.mxu0 0.0
        %3480 = vmatpush2.xpose.msra.mxu0 0.0
        %3481 = vmatprep.subr.mxu0 0.0
        %3482 = vmatpush2.xpose.msra.mxu0 0.0
        %3483 = vmatprep.subr.mxu0 0.0
        %3484 = vmatpush2.xpose.msra.mxu0 0.0
        %3485 = vmatprep.subr.mxu0 0.0
        %3486 = vmatpush2.xpose.msra.mxu0 0.0
        %3487 = vmatprep.subr.mxu0 0.0
        %3488 = vmatpush2.xpose.msra.mxu0 0.0
        %3489 = vmatprep.subr.mxu0 0.0
        %3490 = vmatpush2.xpose.msra.mxu0 0.0
        %3491 = vmatprep.subr.mxu0 0.0
        %3492 = vmatpush2.xpose.msra.mxu0 0.0
        %3493 = vmatprep.mubr.f32.mxu0 0.0
        %3494 = vmatmul.mubr.f32.gmra.mxu0 %v3424
        %v3495 = vpop.f32.mrf.mxu0
        %v3496 = vadd.f32 0.0, %v3495
        %v3497 = vpop.f32.mrf.mxu0
        %3498 = vdwg.mxu0
        %3499 = vrot.lane.b32.xlu0 %v3268, 112
        %v3500 = vpop.permute.xlu0 %3499
        %3501 = vrot.lane.b32.xlu0 %v3341, 112
        %v3502 = vpop.permute.xlu0 %3501
        %v3503 = vsel %vm661, %v3500, 0
        %v3505 = vsel %vm661, %v3502, 0
        %3507 = vmatprep.subr.mxu0 0.0
        %3508 = vmatpush1.xpose.msra.mxu0 0.0
        %3509 = vmatprep.subr.mxu0 0.0
        %3510 = vmatpush1.xpose.msra.mxu0 0.0
        %3511 = vmatprep.subr.mxu0 0.0
        %3512 = vmatpush1.xpose.msra.mxu0 0.0
        %3513 = vmatprep.subr.mxu0 0.0
        %3514 = vmatpush1.xpose.msra.mxu0 0.0
        %3515 = vmatprep.subr.mxu0 0.0
        %3516 = vmatpush1.xpose.msra.mxu0 0.0
        %3517 = vmatprep.subr.mxu0 0.0
        %3518 = vmatpush1.xpose.msra.mxu0 0.0
        %3519 = vmatprep.subr.mxu0 0.0
        %3520 = vmatpush1.xpose.msra.mxu0 0.0
        %3521 = vmatprep.subr.mxu0 0.0
        %3522 = vmatpush1.xpose.msra.mxu0 0.0
        %3523 = vmatprep.subr.mxu0 0.0
        %3524 = vmatpush1.xpose.msra.mxu0 0.0
        %3525 = vmatprep.subr.mxu0 0.0
        %3526 = vmatpush1.xpose.msra.mxu0 0.0
        %3527 = vmatprep.subr.mxu0 0.0
        %3528 = vmatpush1.xpose.msra.mxu0 0.0
        %3529 = vmatprep.subr.mxu0 0.0
        %3530 = vmatpush1.xpose.msra.mxu0 0.0
        %3531 = vmatprep.subr.mxu0 0.0
        %3532 = vmatpush1.xpose.msra.mxu0 0.0
        %3533 = vmatprep.subr.mxu0 0.0
        %3534 = vmatpush1.xpose.msra.mxu0 0.0
        %3535 = vmatprep.subr.mxu0 0.0
        %3536 = vmatpush1.xpose.msra.mxu0 0.0
        %3537 = vmatprep.subr.mxu0 0.0
        %3538 = vmatpush1.xpose.msra.mxu0 %v3505
        %3539 = vmatprep.subr.mxu0 0.0
        %3540 = vmatpush2.xpose.msra.mxu0 0.0
        %3541 = vmatprep.subr.mxu0 0.0
        %3542 = vmatpush2.xpose.msra.mxu0 0.0
        %3543 = vmatprep.subr.mxu0 0.0
        %3544 = vmatpush2.xpose.msra.mxu0 0.0
        %3545 = vmatprep.subr.mxu0 0.0
        %3546 = vmatpush2.xpose.msra.mxu0 0.0
        %3547 = vmatprep.subr.mxu0 0.0
        %3548 = vmatpush2.xpose.msra.mxu0 0.0
        %3549 = vmatprep.subr.mxu0 0.0
        %3550 = vmatpush2.xpose.msra.mxu0 0.0
        %3551 = vmatprep.subr.mxu0 0.0
        %3552 = vmatpush2.xpose.msra.mxu0 0.0
        %3553 = vmatprep.subr.mxu0 0.0
        %3554 = vmatpush2.xpose.msra.mxu0 0.0
        %3555 = vmatprep.subr.mxu0 0.0
        %3556 = vmatpush2.xpose.msra.mxu0 0.0
        %3557 = vmatprep.subr.mxu0 0.0
        %3558 = vmatpush2.xpose.msra.mxu0 0.0
        %3559 = vmatprep.subr.mxu0 0.0
        %3560 = vmatpush2.xpose.msra.mxu0 0.0
        %3561 = vmatprep.subr.mxu0 0.0
        %3562 = vmatpush2.xpose.msra.mxu0 0.0
        %3563 = vmatprep.subr.mxu0 0.0
        %3564 = vmatpush2.xpose.msra.mxu0 0.0
        %3565 = vmatprep.subr.mxu0 0.0
        %3566 = vmatpush2.xpose.msra.mxu0 0.0
        %3567 = vmatprep.subr.mxu0 0.0
        %3568 = vmatpush2.xpose.msra.mxu0 0.0
        %3569 = vmatprep.subr.mxu0 0.0
        %3570 = vmatpush2.xpose.msra.mxu0 0.0
        %3571 = vmatprep.mubr.f32.mxu0 0.0
        %3572 = vmatmul.mubr.f32.gmra.mxu0 %v3503
        %v3573 = vpop.f32.mrf.mxu0
        %v3574 = vadd.f32 0.0, %v3573
        %v3575 = vpop.f32.mrf.mxu0
        %3576 = vdwg.mxu0
        %3577 = vrot.lane.b32.xlu0 %v3268, 96
        %v3578 = vpop.permute.xlu0 %3577
        %3579 = vrot.lane.b32.xlu0 %v3341, 96
        %v3580 = vpop.permute.xlu0 %3579
        %v3581 = vsel %vm661, %v3578, 0
        %v3583 = vsel %vm661, %v3580, 0
        %3585 = vmatprep.subr.mxu0 0.0
        %3586 = vmatpush1.xpose.msra.mxu0 0.0
        %3587 = vmatprep.subr.mxu0 0.0
        %3588 = vmatpush1.xpose.msra.mxu0 0.0
        %3589 = vmatprep.subr.mxu0 0.0
        %3590 = vmatpush1.xpose.msra.mxu0 0.0
        %3591 = vmatprep.subr.mxu0 0.0
        %3592 = vmatpush1.xpose.msra.mxu0 0.0
        %3593 = vmatprep.subr.mxu0 0.0
        %3594 = vmatpush1.xpose.msra.mxu0 0.0
        %3595 = vmatprep.subr.mxu0 0.0
        %3596 = vmatpush1.xpose.msra.mxu0 0.0
        %3597 = vmatprep.subr.mxu0 0.0
        %3598 = vmatpush1.xpose.msra.mxu0 0.0
        %3599 = vmatprep.subr.mxu0 0.0
        %3600 = vmatpush1.xpose.msra.mxu0 0.0
        %3601 = vmatprep.subr.mxu0 0.0
        %3602 = vmatpush1.xpose.msra.mxu0 0.0
        %3603 = vmatprep.subr.mxu0 0.0
        %3604 = vmatpush1.xpose.msra.mxu0 0.0
        %3605 = vmatprep.subr.mxu0 0.0
        %3606 = vmatpush1.xpose.msra.mxu0 0.0
        %3607 = vmatprep.subr.mxu0 0.0
        %3608 = vmatpush1.xpose.msra.mxu0 0.0
        %3609 = vmatprep.subr.mxu0 0.0
        %3610 = vmatpush1.xpose.msra.mxu0 0.0
        %3611 = vmatprep.subr.mxu0 0.0
        %3612 = vmatpush1.xpose.msra.mxu0 0.0
        %3613 = vmatprep.subr.mxu0 0.0
        %3614 = vmatpush1.xpose.msra.mxu0 0.0
        %3615 = vmatprep.subr.mxu0 0.0
        %3616 = vmatpush1.xpose.msra.mxu0 %v3583
        %3617 = vmatprep.subr.mxu0 0.0
        %3618 = vmatpush2.xpose.msra.mxu0 0.0
        %3619 = vmatprep.subr.mxu0 0.0
        %3620 = vmatpush2.xpose.msra.mxu0 0.0
        %3621 = vmatprep.subr.mxu0 0.0
        %3622 = vmatpush2.xpose.msra.mxu0 0.0
        %3623 = vmatprep.subr.mxu0 0.0
        %3624 = vmatpush2.xpose.msra.mxu0 0.0
        %3625 = vmatprep.subr.mxu0 0.0
        %3626 = vmatpush2.xpose.msra.mxu0 0.0
        %3627 = vmatprep.subr.mxu0 0.0
        %3628 = vmatpush2.xpose.msra.mxu0 0.0
        %3629 = vmatprep.subr.mxu0 0.0
        %3630 = vmatpush2.xpose.msra.mxu0 0.0
        %3631 = vmatprep.subr.mxu0 0.0
        %3632 = vmatpush2.xpose.msra.mxu0 0.0
        %3633 = vmatprep.subr.mxu0 0.0
        %3634 = vmatpush2.xpose.msra.mxu0 0.0
        %3635 = vmatprep.subr.mxu0 0.0
        %3636 = vmatpush2.xpose.msra.mxu0 0.0
        %3637 = vmatprep.subr.mxu0 0.0
        %3638 = vmatpush2.xpose.msra.mxu0 0.0
        %3639 = vmatprep.subr.mxu0 0.0
        %3640 = vmatpush2.xpose.msra.mxu0 0.0
        %3641 = vmatprep.subr.mxu0 0.0
        %3642 = vmatpush2.xpose.msra.mxu0 0.0
        %3643 = vmatprep.subr.mxu0 0.0
        %3644 = vmatpush2.xpose.msra.mxu0 0.0
        %3645 = vmatprep.subr.mxu0 0.0
        %3646 = vmatpush2.xpose.msra.mxu0 0.0
        %3647 = vmatprep.subr.mxu0 0.0
        %3648 = vmatpush2.xpose.msra.mxu0 0.0
        %3649 = vmatprep.mubr.f32.mxu0 0.0
        %3650 = vmatmul.mubr.f32.gmra.mxu0 %v3581
        %v3651 = vpop.f32.mrf.mxu0
        %v3652 = vadd.f32 0.0, %v3651
        %v3653 = vpop.f32.mrf.mxu0
        %3654 = vdwg.mxu0
        %3655 = vrot.lane.b32.xlu0 %v3268, 80
        %v3656 = vpop.permute.xlu0 %3655
        %3657 = vrot.lane.b32.xlu0 %v3341, 80
        %v3658 = vpop.permute.xlu0 %3657
        %v3659 = vsel %vm661, %v3656, 0
        %v3661 = vsel %vm661, %v3658, 0
        %3663 = vmatprep.subr.mxu0 0.0
        %3664 = vmatpush1.xpose.msra.mxu0 0.0
        %3665 = vmatprep.subr.mxu0 0.0
        %3666 = vmatpush1.xpose.msra.mxu0 0.0
        %3667 = vmatprep.subr.mxu0 0.0
        %3668 = vmatpush1.xpose.msra.mxu0 0.0
        %3669 = vmatprep.subr.mxu0 0.0
        %3670 = vmatpush1.xpose.msra.mxu0 0.0
        %3671 = vmatprep.subr.mxu0 0.0
        %3672 = vmatpush1.xpose.msra.mxu0 0.0
        %3673 = vmatprep.subr.mxu0 0.0
        %3674 = vmatpush1.xpose.msra.mxu0 0.0
        %3675 = vmatprep.subr.mxu0 0.0
        %3676 = vmatpush1.xpose.msra.mxu0 0.0
        %3677 = vmatprep.subr.mxu0 0.0
        %3678 = vmatpush1.xpose.msra.mxu0 0.0
        %3679 = vmatprep.subr.mxu0 0.0
        %3680 = vmatpush1.xpose.msra.mxu0 0.0
        %3681 = vmatprep.subr.mxu0 0.0
        %3682 = vmatpush1.xpose.msra.mxu0 0.0
        %3683 = vmatprep.subr.mxu0 0.0
        %3684 = vmatpush1.xpose.msra.mxu0 0.0
        %3685 = vmatprep.subr.mxu0 0.0
        %3686 = vmatpush1.xpose.msra.mxu0 0.0
        %3687 = vmatprep.subr.mxu0 0.0
        %3688 = vmatpush1.xpose.msra.mxu0 0.0
        %3689 = vmatprep.subr.mxu0 0.0
        %3690 = vmatpush1.xpose.msra.mxu0 0.0
        %3691 = vmatprep.subr.mxu0 0.0
        %3692 = vmatpush1.xpose.msra.mxu0 0.0
        %3693 = vmatprep.subr.mxu0 0.0
        %3694 = vmatpush1.xpose.msra.mxu0 %v3661
        %3695 = vmatprep.subr.mxu0 0.0
        %3696 = vmatpush2.xpose.msra.mxu0 0.0
        %3697 = vmatprep.subr.mxu0 0.0
        %3698 = vmatpush2.xpose.msra.mxu0 0.0
        %3699 = vmatprep.subr.mxu0 0.0
        %3700 = vmatpush2.xpose.msra.mxu0 0.0
        %3701 = vmatprep.subr.mxu0 0.0
        %3702 = vmatpush2.xpose.msra.mxu0 0.0
        %3703 = vmatprep.subr.mxu0 0.0
        %3704 = vmatpush2.xpose.msra.mxu0 0.0
        %3705 = vmatprep.subr.mxu0 0.0
        %3706 = vmatpush2.xpose.msra.mxu0 0.0
        %3707 = vmatprep.subr.mxu0 0.0
        %3708 = vmatpush2.xpose.msra.mxu0 0.0
        %3709 = vmatprep.subr.mxu0 0.0
        %3710 = vmatpush2.xpose.msra.mxu0 0.0
        %3711 = vmatprep.subr.mxu0 0.0
        %3712 = vmatpush2.xpose.msra.mxu0 0.0
        %3713 = vmatprep.subr.mxu0 0.0
        %3714 = vmatpush2.xpose.msra.mxu0 0.0
        %3715 = vmatprep.subr.mxu0 0.0
        %3716 = vmatpush2.xpose.msra.mxu0 0.0
        %3717 = vmatprep.subr.mxu0 0.0
        %3718 = vmatpush2.xpose.msra.mxu0 0.0
        %3719 = vmatprep.subr.mxu0 0.0
        %3720 = vmatpush2.xpose.msra.mxu0 0.0
        %3721 = vmatprep.subr.mxu0 0.0
        %3722 = vmatpush2.xpose.msra.mxu0 0.0
        %3723 = vmatprep.subr.mxu0 0.0
        %3724 = vmatpush2.xpose.msra.mxu0 0.0
        %3725 = vmatprep.subr.mxu0 0.0
        %3726 = vmatpush2.xpose.msra.mxu0 0.0
        %3727 = vmatprep.mubr.f32.mxu0 0.0
        %3728 = vmatmul.mubr.f32.gmra.mxu0 %v3659
        %v3729 = vpop.f32.mrf.mxu0
        %v3730 = vadd.f32 0.0, %v3729
        %v3731 = vpop.f32.mrf.mxu0
        %3732 = vdwg.mxu0
        %v3733 = vadd.f32 %v3496, %v396
        %v3734 = vadd.f32 %v3574, %v396
        %v3735 = vadd.f32 %v3652, %v396
        %v3736 = vadd.f32 %v3730, %v396
        %v3737 = vsel %vm982, %v3733, -inf
        %3738 = vmax.xlane.f32.xlu0 %v3737
        %v3739 = vpop.xlane.xlu0 %3738
        %v3740 = vsel %vm982, %v3734, -inf
        %3741 = vmax.xlane.f32.xlu0 %v3740
        %v3742 = vpop.xlane.xlu0 %3741
        %v3743 = vsel %vm982, %v3735, -inf
        %3744 = vmax.xlane.f32.xlu0 %v3743
        %v3745 = vpop.xlane.xlu0 %3744
        %v3746 = vsel %vm982, %v3736, -inf
        %3747 = vmax.xlane.f32.xlu0 %v3746
        %v3748 = vpop.xlane.xlu0 %3747
        %v3749 = vsub.f32 %v3733, %v3739
        %v3750 = vsub.f32 %v3734, %v3742
        %v3751 = vsub.f32 %v3735, %v3745
        %v3752 = vsub.f32 %v3736, %v3748
        %v3753 = vmul.f32 %v3749, 1.442695
        %v3754 = vpow.pop %v3753
        %v3755 = vmul.f32 %v3750, 1.442695
        %v3756 = vpow.pop %v3755
        %v3757 = vmul.f32 %v3751, 1.442695
        %v3758 = vpow.pop %v3757
        %v3759 = vmul.f32 %v3752, 1.442695
        %v3760 = vpow.pop %v3759
        %v3761 = vsel %vm982, %v3754, 0.0
        %3762 = vadd.xlane.f32.xlu0 %v3761
        %v3763 = vpop.xlane.xlu0 %3762
        %v3764 = vsel %vm982, %v3756, 0.0
        %3765 = vadd.xlane.f32.xlu0 %v3764
        %v3766 = vpop.xlane.xlu0 %3765
        %v3767 = vsel %vm982, %v3758, 0.0
        %3768 = vadd.xlane.f32.xlu0 %v3767
        %v3769 = vpop.xlane.xlu0 %3768
        %v3770 = vsel %vm982, %v3760, 0.0
        %3771 = vadd.xlane.f32.xlu0 %v3770
        %v3772 = vpop.xlane.xlu0 %3771
        %v3773 = vrcp.pop %v3763
        %v3774 = vrcp.pop %v3766
        %v3775 = vrcp.pop %v3769
        %v3776 = vrcp.pop %v3772
        %v3777 = vmul.f32 %v3754, %v3773
        %v3778 = vmul.f32 %v3756, %v3774
        %v3779 = vmul.f32 %v3758, %v3775
        %v3780 = vmul.f32 %v3760, %v3776
        %v3782 = vsel %vm982, %v3777, 0
        %3784 = vmatprep.subr.mxu0 0.0
        %3785 = vmatpush1.msra.mxu0 0.0
        %3786 = vmatprep.subr.mxu0 0.0
        %3787 = vmatpush1.msra.mxu0 0.0
        %3788 = vmatprep.subr.mxu0 0.0
        %3789 = vmatpush1.msra.mxu0 0.0
        %3790 = vmatprep.subr.mxu0 0.0
        %3791 = vmatpush1.msra.mxu0 0.0
        %3792 = vmatprep.subr.mxu0 0.0
        %3793 = vmatpush1.msra.mxu0 0.0
        %3794 = vmatprep.subr.mxu0 0.0
        %3795 = vmatpush1.msra.mxu0 0.0
        %3796 = vmatprep.subr.mxu0 0.0
        %3797 = vmatpush1.msra.mxu0 0.0
        %3798 = vmatprep.subr.mxu0 0.0
        %3799 = vmatpush1.msra.mxu0 0.0
        %3800 = vmatprep.subr.mxu0 0.0
        %3801 = vmatpush1.msra.mxu0 0.0
        %3802 = vmatprep.subr.mxu0 0.0
        %3803 = vmatpush1.msra.mxu0 0.0
        %3804 = vmatprep.subr.mxu0 0.0
        %3805 = vmatpush1.msra.mxu0 0.0
        %3806 = vmatprep.subr.mxu0 0.0
        %3807 = vmatpush1.msra.mxu0 0.0
        %3808 = vmatprep.subr.mxu0 0.0
        %3809 = vmatpush1.msra.mxu0 0.0
        %3810 = vmatprep.subr.mxu0 0.0
        %3811 = vmatpush1.msra.mxu0 0.0
        %3812 = vmatprep.subr.mxu0 0.0
        %3813 = vmatpush1.msra.mxu0 0.0
        %3814 = vmatprep.subr.mxu0 0.0
        %3815 = vmatpush1.msra.mxu0 %v3418
        %3816 = vmatprep.subr.mxu0 0.0
        %3817 = vmatpush2.msra.mxu0 0.0
        %3818 = vmatprep.subr.mxu0 0.0
        %3819 = vmatpush2.msra.mxu0 0.0
        %3820 = vmatprep.subr.mxu0 0.0
        %3821 = vmatpush2.msra.mxu0 0.0
        %3822 = vmatprep.subr.mxu0 0.0
        %3823 = vmatpush2.msra.mxu0 0.0
        %3824 = vmatprep.subr.mxu0 0.0
        %3825 = vmatpush2.msra.mxu0 0.0
        %3826 = vmatprep.subr.mxu0 0.0
        %3827 = vmatpush2.msra.mxu0 0.0
        %3828 = vmatprep.subr.mxu0 0.0
        %3829 = vmatpush2.msra.mxu0 0.0
        %3830 = vmatprep.subr.mxu0 0.0
        %3831 = vmatpush2.msra.mxu0 0.0
        %3832 = vmatprep.subr.mxu0 0.0
        %3833 = vmatpush2.msra.mxu0 0.0
        %3834 = vmatprep.subr.mxu0 0.0
        %3835 = vmatpush2.msra.mxu0 0.0
        %3836 = vmatprep.subr.mxu0 0.0
        %3837 = vmatpush2.msra.mxu0 0.0
        %3838 = vmatprep.subr.mxu0 0.0
        %3839 = vmatpush2.msra.mxu0 0.0
        %3840 = vmatprep.subr.mxu0 0.0
        %3841 = vmatpush2.msra.mxu0 0.0
        %3842 = vmatprep.subr.mxu0 0.0
        %3843 = vmatpush2.msra.mxu0 0.0
        %3844 = vmatprep.subr.mxu0 0.0
        %3845 = vmatpush2.msra.mxu0 0.0
        %3846 = vmatprep.subr.mxu0 0.0
        %3847 = vmatpush2.msra.mxu0 0.0
        %3848 = vmatprep.mubr.f32.mxu0 0.0
        %3849 = vmatmul.mubr.f32.gmra.mxu0 %v3782
        %v3850 = vpop.f32.mrf.mxu0
        %v3851 = vadd.f32 0.0, %v3850
        %v3852 = vpop.f32.mrf.mxu0
        %3853 = vdwg.mxu0
        %v3854 = vld [vmem:[%s0 + $0x1e0] sm:$0xf]
        %v3855 = vld [vmem:[%s0 + $0x1e4] sm:$0xf]
        %v3856 = vpack.c.bf16 %v3851, %v3851
        %3858 = vrot.lane.b32.xlu0 %v3418, 112
        %v3859 = vpop.permute.xlu0 %3858
        %v3862 = vsel %vm982, %v3778, 0
        %3864 = vmatprep.subr.mxu0 0.0
        %3865 = vmatpush1.msra.mxu0 0.0
        %3866 = vmatprep.subr.mxu0 0.0
        %3867 = vmatpush1.msra.mxu0 0.0
        %3868 = vmatprep.subr.mxu0 0.0
        %3869 = vmatpush1.msra.mxu0 0.0
        %3870 = vmatprep.subr.mxu0 0.0
        %3871 = vmatpush1.msra.mxu0 0.0
        %3872 = vmatprep.subr.mxu0 0.0
        %3873 = vmatpush1.msra.mxu0 0.0
        %3874 = vmatprep.subr.mxu0 0.0
        %3875 = vmatpush1.msra.mxu0 0.0
        %3876 = vmatprep.subr.mxu0 0.0
        %3877 = vmatpush1.msra.mxu0 0.0
        %3878 = vmatprep.subr.mxu0 0.0
        %3879 = vmatpush1.msra.mxu0 0.0
        %3880 = vmatprep.subr.mxu0 0.0
        %3881 = vmatpush1.msra.mxu0 0.0
        %3882 = vmatprep.subr.mxu0 0.0
        %3883 = vmatpush1.msra.mxu0 0.0
        %3884 = vmatprep.subr.mxu0 0.0
        %3885 = vmatpush1.msra.mxu0 0.0
        %3886 = vmatprep.subr.mxu0 0.0
        %3887 = vmatpush1.msra.mxu0 0.0
        %3888 = vmatprep.subr.mxu0 0.0
        %3889 = vmatpush1.msra.mxu0 0.0
        %3890 = vmatprep.subr.mxu0 0.0
        %3891 = vmatpush1.msra.mxu0 0.0
        %3892 = vmatprep.subr.mxu0 0.0
        %3893 = vmatpush1.msra.mxu0 0.0
        %3894 = vmatprep.subr.mxu0 0.0
        %3895 = vmatpush1.msra.mxu0 %v3859
        %3896 = vmatprep.subr.mxu0 0.0
        %3897 = vmatpush2.msra.mxu0 0.0
        %3898 = vmatprep.subr.mxu0 0.0
        %3899 = vmatpush2.msra.mxu0 0.0
        %3900 = vmatprep.subr.mxu0 0.0
        %3901 = vmatpush2.msra.mxu0 0.0
        %3902 = vmatprep.subr.mxu0 0.0
        %3903 = vmatpush2.msra.mxu0 0.0
        %3904 = vmatprep.subr.mxu0 0.0
        %3905 = vmatpush2.msra.mxu0 0.0
        %3906 = vmatprep.subr.mxu0 0.0
        %3907 = vmatpush2.msra.mxu0 0.0
        %3908 = vmatprep.subr.mxu0 0.0
        %3909 = vmatpush2.msra.mxu0 0.0
        %3910 = vmatprep.subr.mxu0 0.0
        %3911 = vmatpush2.msra.mxu0 0.0
        %3912 = vmatprep.subr.mxu0 0.0
        %3913 = vmatpush2.msra.mxu0 0.0
        %3914 = vmatprep.subr.mxu0 0.0
        %3915 = vmatpush2.msra.mxu0 0.0
        %3916 = vmatprep.subr.mxu0 0.0
        %3917 = vmatpush2.msra.mxu0 0.0
        %3918 = vmatprep.subr.mxu0 0.0
        %3919 = vmatpush2.msra.mxu0 0.0
        %3920 = vmatprep.subr.mxu0 0.0
        %3921 = vmatpush2.msra.mxu0 0.0
        %3922 = vmatprep.subr.mxu0 0.0
        %3923 = vmatpush2.msra.mxu0 0.0
        %3924 = vmatprep.subr.mxu0 0.0
        %3925 = vmatpush2.msra.mxu0 0.0
        %3926 = vmatprep.subr.mxu0 0.0
        %3927 = vmatpush2.msra.mxu0 0.0
        %3928 = vmatprep.mubr.f32.mxu0 0.0
        %3929 = vmatmul.mubr.f32.gmra.mxu0 %v3862
        %v3930 = vpop.f32.mrf.mxu0
        %v3931 = vadd.f32 0.0, %v3930
        %v3932 = vpop.f32.mrf.mxu0
        %3933 = vdwg.mxu0
        %v3934 = vld [vmem:[%s0 + $0x1e8] sm:$0xf]
        %v3935 = vld [vmem:[%s0 + $0x1ec] sm:$0xf]
        %v3936 = vpack.c.bf16 %v3931, %v3931
        %v3939 = vunpack.c.l.b16 %v3934
        %v3940 = vunpack.c.l.b16 %v3935
        %v3941 = vpack.c.b16 %v3940, %v3939
        %v3944 = vsel %vm661, %v3936, 0
        %3946 = vmatprep.subr.bf16.mxu0 0
        %3947 = vmatpush1.bf16.msra.mxu0 0
        %3948 = vmatprep.subr.bf16.mxu0 0
        %3949 = vmatpush1.bf16.msra.mxu0 0
        %3950 = vmatprep.subr.bf16.mxu0 0
        %3951 = vmatpush1.bf16.msra.mxu0 0
        %3952 = vmatprep.subr.bf16.mxu0 0
        %3953 = vmatpush1.bf16.msra.mxu0 0
        %3954 = vmatprep.subr.bf16.mxu0 0
        %3955 = vmatpush1.bf16.msra.mxu0 0
        %3956 = vmatprep.subr.bf16.mxu0 0
        %3957 = vmatpush1.bf16.msra.mxu0 0
        %3958 = vmatprep.subr.bf16.mxu0 0
        %3959 = vmatpush1.bf16.msra.mxu0 0
        %3960 = vmatprep.subr.bf16.mxu0 0
        %3961 = vmatpush1.bf16.msra.mxu0 %v3941
        %3962 = vmatprep.subr.bf16.mxu0 0
        %3963 = vmatpush2.bf16.msra.mxu0 0
        %3964 = vmatprep.subr.bf16.mxu0 0
        %3965 = vmatpush2.bf16.msra.mxu0 0
        %3966 = vmatprep.subr.bf16.mxu0 0
        %3967 = vmatpush2.bf16.msra.mxu0 0
        %3968 = vmatprep.subr.bf16.mxu0 0
        %3969 = vmatpush2.bf16.msra.mxu0 0
        %3970 = vmatprep.subr.bf16.mxu0 0
        %3971 = vmatpush2.bf16.msra.mxu0 0
        %3972 = vmatprep.subr.bf16.mxu0 0
        %3973 = vmatpush2.bf16.msra.mxu0 0
        %3974 = vmatprep.subr.bf16.mxu0 0
        %3975 = vmatpush2.bf16.msra.mxu0 0
        %3976 = vmatprep.subr.bf16.mxu0 0
        %3977 = vmatpush2.bf16.msra.mxu0 0
        %3978 = vmatprep.mubr.bf16.mxu0 0
        %3979 = vmatmul.mubr.bf16.gmra.mxu0 %v3944
        %v3980 = vpop.f32.mrf.mxu0
        %v3981 = vadd.f32 0.0, %v3980
        %v3982 = vpop.f32.mrf.mxu0
        %v3983 = vpop.f32.mrf.mxu0
        %v3984 = vpop.f32.mrf.mxu0
        %3985 = vdwg.mxu0
        %v3988 = vunpack.c.l.b16 %v3854
        %v3989 = vunpack.c.l.b16 %v3855
        %v3990 = vpack.c.b16 %v3989, %v3988
        %v3993 = vsel %vm661, %v3856, 0
        %3995 = vmatprep.subr.bf16.mxu0 0
        %3996 = vmatpush1.bf16.msra.mxu0 0
        %3997 = vmatprep.subr.bf16.mxu0 0
        %3998 = vmatpush1.bf16.msra.mxu0 0
        %3999 = vmatprep.subr.bf16.mxu0 0
        %4000 = vmatpush1.bf16.msra.mxu0 0
        %4001 = vmatprep.subr.bf16.mxu0 0
        %4002 = vmatpush1.bf16.msra.mxu0 0
        %4003 = vmatprep.subr.bf16.mxu0 0
        %4004 = vmatpush1.bf16.msra.mxu0 0
        %4005 = vmatprep.subr.bf16.mxu0 0
        %4006 = vmatpush1.bf16.msra.mxu0 0
        %4007 = vmatprep.subr.bf16.mxu0 0
        %4008 = vmatpush1.bf16.msra.mxu0 0
        %4009 = vmatprep.subr.bf16.mxu0 0
        %4010 = vmatpush1.bf16.msra.mxu0 %v3990
        %4011 = vmatprep.subr.bf16.mxu0 0
        %4012 = vmatpush2.bf16.msra.mxu0 0
        %4013 = vmatprep.subr.bf16.mxu0 0
        %4014 = vmatpush2.bf16.msra.mxu0 0
        %4015 = vmatprep.subr.bf16.mxu0 0
        %4016 = vmatpush2.bf16.msra.mxu0 0
        %4017 = vmatprep.subr.bf16.mxu0 0
        %4018 = vmatpush2.bf16.msra.mxu0 0
        %4019 = vmatprep.subr.bf16.mxu0 0
        %4020 = vmatpush2.bf16.msra.mxu0 0
        %4021 = vmatprep.subr.bf16.mxu0 0
        %4022 = vmatpush2.bf16.msra.mxu0 0
        %4023 = vmatprep.subr.bf16.mxu0 0
        %4024 = vmatpush2.bf16.msra.mxu0 0
        %4025 = vmatprep.subr.bf16.mxu0 0
        %4026 = vmatpush2.bf16.msra.mxu0 0
        %4027 = vmatprep.mubr.bf16.mxu0 0
        %4028 = vmatmul.mubr.bf16.gmra.mxu0 %v3993
        %v4029 = vpop.f32.mrf.mxu0
        %v4030 = vadd.f32 %v3981, %v4029
        %v4031 = vpop.f32.mrf.mxu0
        %v4032 = vpop.f32.mrf.mxu0
        %v4033 = vpop.f32.mrf.mxu0
        %4034 = vdwg.mxu0
        %4035 = vrot.lane.b32.xlu0 %v3418, 96
        %v4036 = vpop.permute.xlu0 %4035
        %v4039 = vsel %vm982, %v3779, 0
        %4041 = vmatprep.subr.mxu0 0.0
        %4042 = vmatpush1.msra.mxu0 0.0
        %4043 = vmatprep.subr.mxu0 0.0
        %4044 = vmatpush1.msra.mxu0 0.0
        %4045 = vmatprep.subr.mxu0 0.0
        %4046 = vmatpush1.msra.mxu0 0.0
        %4047 = vmatprep.subr.mxu0 0.0
        %4048 = vmatpush1.msra.mxu0 0.0
        %4049 = vmatprep.subr.mxu0 0.0
        %4050 = vmatpush1.msra.mxu0 0.0
        %4051 = vmatprep.subr.mxu0 0.0
        %4052 = vmatpush1.msra.mxu0 0.0
        %4053 = vmatprep.subr.mxu0 0.0
        %4054 = vmatpush1.msra.mxu0 0.0
        %4055 = vmatprep.subr.mxu0 0.0
        %4056 = vmatpush1.msra.mxu0 0.0
        %4057 = vmatprep.subr.mxu0 0.0
        %4058 = vmatpush1.msra.mxu0 0.0
        %4059 = vmatprep.subr.mxu0 0.0
        %4060 = vmatpush1.msra.mxu0 0.0
        %4061 = vmatprep.subr.mxu0 0.0
        %4062 = vmatpush1.msra.mxu0 0.0
        %4063 = vmatprep.subr.mxu0 0.0
        %4064 = vmatpush1.msra.mxu0 0.0
        %4065 = vmatprep.subr.mxu0 0.0
        %4066 = vmatpush1.msra.mxu0 0.0
        %4067 = vmatprep.subr.mxu0 0.0
        %4068 = vmatpush1.msra.mxu0 0.0
        %4069 = vmatprep.subr.mxu0 0.0
        %4070 = vmatpush1.msra.mxu0 0.0
        %4071 = vmatprep.subr.mxu0 0.0
        %4072 = vmatpush1.msra.mxu0 %v4036
        %4073 = vmatprep.subr.mxu0 0.0
        %4074 = vmatpush2.msra.mxu0 0.0
        %4075 = vmatprep.subr.mxu0 0.0
        %4076 = vmatpush2.msra.mxu0 0.0
        %4077 = vmatprep.subr.mxu0 0.0
        %4078 = vmatpush2.msra.mxu0 0.0
        %4079 = vmatprep.subr.mxu0 0.0
        %4080 = vmatpush2.msra.mxu0 0.0
        %4081 = vmatprep.subr.mxu0 0.0
        %4082 = vmatpush2.msra.mxu0 0.0
        %4083 = vmatprep.subr.mxu0 0.0
        %4084 = vmatpush2.msra.mxu0 0.0
        %4085 = vmatprep.subr.mxu0 0.0
        %4086 = vmatpush2.msra.mxu0 0.0
        %4087 = vmatprep.subr.mxu0 0.0
        %4088 = vmatpush2.msra.mxu0 0.0
        %4089 = vmatprep.subr.mxu0 0.0
        %4090 = vmatpush2.msra.mxu0 0.0
        %4091 = vmatprep.subr.mxu0 0.0
        %4092 = vmatpush2.msra.mxu0 0.0
        %4093 = vmatprep.subr.mxu0 0.0
        %4094 = vmatpush2.msra.mxu0 0.0
        %4095 = vmatprep.subr.mxu0 0.0
        %4096 = vmatpush2.msra.mxu0 0.0
        %4097 = vmatprep.subr.mxu0 0.0
        %4098 = vmatpush2.msra.mxu0 0.0
        %4099 = vmatprep.subr.mxu0 0.0
        %4100 = vmatpush2.msra.mxu0 0.0
        %4101 = vmatprep.subr.mxu0 0.0
        %4102 = vmatpush2.msra.mxu0 0.0
        %4103 = vmatprep.subr.mxu0 0.0
        %4104 = vmatpush2.msra.mxu0 0.0
        %4105 = vmatprep.mubr.f32.mxu0 0.0
        %4106 = vmatmul.mubr.f32.gmra.mxu0 %v4039
        %v4107 = vpop.f32.mrf.mxu0
        %v4108 = vadd.f32 0.0, %v4107
        %v4109 = vpop.f32.mrf.mxu0
        %4110 = vdwg.mxu0
        %v4111 = vld [vmem:[%s0 + $0x1f0] sm:$0xf]
        %v4112 = vld [vmem:[%s0 + $0x1f4] sm:$0xf]
        %v4113 = vpack.c.bf16 %v4108, %v4108
        %v4116 = vunpack.c.l.b16 %v4111
        %v4117 = vunpack.c.l.b16 %v4112
        %v4118 = vpack.c.b16 %v4117, %v4116
        %v4121 = vsel %vm661, %v4113, 0
        %4123 = vmatprep.subr.bf16.mxu0 0
        %4124 = vmatpush1.bf16.msra.mxu0 0
        %4125 = vmatprep.subr.bf16.mxu0 0
        %4126 = vmatpush1.bf16.msra.mxu0 0
        %4127 = vmatprep.subr.bf16.mxu0 0
        %4128 = vmatpush1.bf16.msra.mxu0 0
        %4129 = vmatprep.subr.bf16.mxu0 0
        %4130 = vmatpush1.bf16.msra.mxu0 0
        %4131 = vmatprep.subr.bf16.mxu0 0
        %4132 = vmatpush1.bf16.msra.mxu0 0
        %4133 = vmatprep.subr.bf16.mxu0 0
        %4134 = vmatpush1.bf16.msra.mxu0 0
        %4135 = vmatprep.subr.bf16.mxu0 0
        %4136 = vmatpush1.bf16.msra.mxu0 0
        %4137 = vmatprep.subr.bf16.mxu0 0
        %4138 = vmatpush1.bf16.msra.mxu0 %v4118
        %4139 = vmatprep.subr.bf16.mxu0 0
        %4140 = vmatpush2.bf16.msra.mxu0 0
        %4141 = vmatprep.subr.bf16.mxu0 0
        %4142 = vmatpush2.bf16.msra.mxu0 0
        %4143 = vmatprep.subr.bf16.mxu0 0
        %4144 = vmatpush2.bf16.msra.mxu0 0
        %4145 = vmatprep.subr.bf16.mxu0 0
        %4146 = vmatpush2.bf16.msra.mxu0 0
        %4147 = vmatprep.subr.bf16.mxu0 0
        %4148 = vmatpush2.bf16.msra.mxu0 0
        %4149 = vmatprep.subr.bf16.mxu0 0
        %4150 = vmatpush2.bf16.msra.mxu0 0
        %4151 = vmatprep.subr.bf16.mxu0 0
        %4152 = vmatpush2.bf16.msra.mxu0 0
        %4153 = vmatprep.subr.bf16.mxu0 0
        %4154 = vmatpush2.bf16.msra.mxu0 0
        %4155 = vmatprep.mubr.bf16.mxu0 0
        %4156 = vmatmul.mubr.bf16.gmra.mxu0 %v4121
        %v4157 = vpop.f32.mrf.mxu0
        %v4158 = vadd.f32 0.0, %v4157
        %v4159 = vpop.f32.mrf.mxu0
        %v4160 = vpop.f32.mrf.mxu0
        %v4161 = vpop.f32.mrf.mxu0
        %4162 = vdwg.mxu0
        %v4163 = vadd.f32 %v4030, %v4158
        %4164 = vrot.lane.b32.xlu0 %v3418, 80
        %v4165 = vpop.permute.xlu0 %4164
        %v4168 = vsel %vm982, %v3780, 0
        %4170 = vmatprep.subr.mxu0 0.0
        %4171 = vmatpush1.msra.mxu0 0.0
        %4172 = vmatprep.subr.mxu0 0.0
        %4173 = vmatpush1.msra.mxu0 0.0
        %4174 = vmatprep.subr.mxu0 0.0
        %4175 = vmatpush1.msra.mxu0 0.0
        %4176 = vmatprep.subr.mxu0 0.0
        %4177 = vmatpush1.msra.mxu0 0.0
        %4178 = vmatprep.subr.mxu0 0.0
        %4179 = vmatpush1.msra.mxu0 0.0
        %4180 = vmatprep.subr.mxu0 0.0
        %4181 = vmatpush1.msra.mxu0 0.0
        %4182 = vmatprep.subr.mxu0 0.0
        %4183 = vmatpush1.msra.mxu0 0.0
        %4184 = vmatprep.subr.mxu0 0.0
        %4185 = vmatpush1.msra.mxu0 0.0
        %4186 = vmatprep.subr.mxu0 0.0
        %4187 = vmatpush1.msra.mxu0 0.0
        %4188 = vmatprep.subr.mxu0 0.0
        %4189 = vmatpush1.msra.mxu0 0.0
        %4190 = vmatprep.subr.mxu0 0.0
        %4191 = vmatpush1.msra.mxu0 0.0
        %4192 = vmatprep.subr.mxu0 0.0
        %4193 = vmatpush1.msra.mxu0 0.0
        %4194 = vmatprep.subr.mxu0 0.0
        %4195 = vmatpush1.msra.mxu0 0.0
        %4196 = vmatprep.subr.mxu0 0.0
        %4197 = vmatpush1.msra.mxu0 0.0
        %4198 = vmatprep.subr.mxu0 0.0
        %4199 = vmatpush1.msra.mxu0 0.0
        %4200 = vmatprep.subr.mxu0 0.0
        %4201 = vmatpush1.msra.mxu0 %v4165
        %4202 = vmatprep.subr.mxu0 0.0
        %4203 = vmatpush2.msra.mxu0 0.0
        %4204 = vmatprep.subr.mxu0 0.0
        %4205 = vmatpush2.msra.mxu0 0.0
        %4206 = vmatprep.subr.mxu0 0.0
        %4207 = vmatpush2.msra.mxu0 0.0
        %4208 = vmatprep.subr.mxu0 0.0
        %4209 = vmatpush2.msra.mxu0 0.0
        %4210 = vmatprep.subr.mxu0 0.0
        %4211 = vmatpush2.msra.mxu0 0.0
        %4212 = vmatprep.subr.mxu0 0.0
        %4213 = vmatpush2.msra.mxu0 0.0
        %4214 = vmatprep.subr.mxu0 0.0
        %4215 = vmatpush2.msra.mxu0 0.0
        %4216 = vmatprep.subr.mxu0 0.0
        %4217 = vmatpush2.msra.mxu0 0.0
        %4218 = vmatprep.subr.mxu0 0.0
        %4219 = vmatpush2.msra.mxu0 0.0
        %4220 = vmatprep.subr.mxu0 0.0
        %4221 = vmatpush2.msra.mxu0 0.0
        %4222 = vmatprep.subr.mxu0 0.0
        %4223 = vmatpush2.msra.mxu0 0.0
        %4224 = vmatprep.subr.mxu0 0.0
        %4225 = vmatpush2.msra.mxu0 0.0
        %4226 = vmatprep.subr.mxu0 0.0
        %4227 = vmatpush2.msra.mxu0 0.0
        %4228 = vmatprep.subr.mxu0 0.0
        %4229 = vmatpush2.msra.mxu0 0.0
        %4230 = vmatprep.subr.mxu0 0.0
        %4231 = vmatpush2.msra.mxu0 0.0
        %4232 = vmatprep.subr.mxu0 0.0
        %4233 = vmatpush2.msra.mxu0 0.0
        %4234 = vmatprep.mubr.f32.mxu0 0.0
        %4235 = vmatmul.mubr.f32.gmra.mxu0 %v4168
        %v4236 = vpop.f32.mrf.mxu0
        %v4237 = vadd.f32 0.0, %v4236
        %v4238 = vpop.f32.mrf.mxu0
        %4239 = vdwg.mxu0
        %v4240 = vld [vmem:[%s0 + $0x1f8] sm:$0xf]
        %v4241 = vld [vmem:[%s0 + $0x1fc] sm:$0xf]
        %v4242 = vpack.c.bf16 %v4237, %v4237
        %v4245 = vunpack.c.l.b16 %v4240
        %v4246 = vunpack.c.l.b16 %v4241
        %v4247 = vpack.c.b16 %v4246, %v4245
        %v4250 = vsel %vm661, %v4242, 0
        %4252 = vmatprep.subr.bf16.mxu0 0
        %4253 = vmatpush1.bf16.msra.mxu0 0
        %4254 = vmatprep.subr.bf16.mxu0 0
        %4255 = vmatpush1.bf16.msra.mxu0 0
        %4256 = vmatprep.subr.bf16.mxu0 0
        %4257 = vmatpush1.bf16.msra.mxu0 0
        %4258 = vmatprep.subr.bf16.mxu0 0
        %4259 = vmatpush1.bf16.msra.mxu0 0
        %4260 = vmatprep.subr.bf16.mxu0 0
        %4261 = vmatpush1.bf16.msra.mxu0 0
        %4262 = vmatprep.subr.bf16.mxu0 0
        %4263 = vmatpush1.bf16.msra.mxu0 0
        %4264 = vmatprep.subr.bf16.mxu0 0
        %4265 = vmatpush1.bf16.msra.mxu0 0
        %4266 = vmatprep.subr.bf16.mxu0 0
        %4267 = vmatpush1.bf16.msra.mxu0 %v4247
        %4268 = vmatprep.subr.bf16.mxu0 0
        %4269 = vmatpush2.bf16.msra.mxu0 0
        %4270 = vmatprep.subr.bf16.mxu0 0
        %4271 = vmatpush2.bf16.msra.mxu0 0
        %4272 = vmatprep.subr.bf16.mxu0 0
        %4273 = vmatpush2.bf16.msra.mxu0 0
        %4274 = vmatprep.subr.bf16.mxu0 0
        %4275 = vmatpush2.bf16.msra.mxu0 0
        %4276 = vmatprep.subr.bf16.mxu0 0
        %4277 = vmatpush2.bf16.msra.mxu0 0
        %4278 = vmatprep.subr.bf16.mxu0 0
        %4279 = vmatpush2.bf16.msra.mxu0 0
        %4280 = vmatprep.subr.bf16.mxu0 0
        %4281 = vmatpush2.bf16.msra.mxu0 0
        %4282 = vmatprep.subr.bf16.mxu0 0
        %4283 = vmatpush2.bf16.msra.mxu0 0
        %4284 = vmatprep.mubr.bf16.mxu0 0
        %4285 = vmatmul.mubr.bf16.gmra.mxu0 %v4250
        %v4286 = vpop.f32.mrf.mxu0
        %v4287 = vadd.f32 0.0, %v4286
        %v4288 = vpop.f32.mrf.mxu0
        %v4289 = vpop.f32.mrf.mxu0
        %v4290 = vpop.f32.mrf.mxu0
        %4291 = vdwg.mxu0
        %v4292 = vadd.f32 %v4163, %v4287
        %v4293 = vld [vmem:[%s2 + $0x19] sm:$0x1]
        %v4294 = vlaneseq
        %v4295 = vshrl.u32 %v4294, 7
        %v4296 = vsub.s32 0, %v4295
        %v4297 = vrot.slane %v4293, %v4296
        %v4298 = vadd.f32 %v4292, %v4297
        %v4299 = vadd.f32 %v3186, %v4298
        %v4300 = vsel %vm398, %v4299, 0.0
        %4301 = vadd.xlane.f32.xlu0 %v4300
        %v4302 = vpop.xlane.xlu0 %4301
        %v4303 = vmul.f32 %v4302, %v402
        %v4304 = vsub.f32 %v4299, %v4303
        %v4305 = vmul.f32 %v4304, %v4304
        %v4306 = vsel %vm398, %v4305, 0.0
        %4307 = vadd.xlane.f32.xlu0 %v4306
        %v4308 = vpop.xlane.xlu0 %4307
        %v4309 = vmul.f32 %v4308, %v402
        %v4310 = vadd.f32 %v4309, 1e-05
        %v4311 = vrsqrt.pop %v4310
        %v4312 = vmul.f32 %v4304, %v4311
        %v4313 = vld [vmem:[%s2 + $0x1e] sm:$0x1]
        %v4314 = vlaneseq
        %v4315 = vshrl.u32 %v4314, 7
        %v4316 = vsub.s32 0, %v4315
        %v4317 = vrot.slane %v4313, %v4316
        %v4318 = vmul.f32 %v4312, %v4317
        %v4319 = vld [vmem:[%s2 + $0x1f] sm:$0x1]
        %v4320 = vlaneseq
        %v4321 = vshrl.u32 %v4320, 7
        %v4322 = vsub.s32 0, %v4321
        %v4323 = vrot.slane %v4319, %v4322
        %v4324 = vadd.f32 %v4318, %v4323
        %v4325 = vpack.c.bf16 %v4324, %v4324
        %v4326 = vld [vmem:[%s0 + $0x200] sm:$0xf]
        %v4327 = vld [vmem:[%s0 + $0x204] sm:$0xf]
        %v4328 = vld [vmem:[%s0 + $0x208] sm:$0xf]
        %v4329 = vld [vmem:[%s0 + $0x20c] sm:$0xf]
        %v4330 = vld [vmem:[%s0 + $0x210] sm:$0xf]
        %v4331 = vld [vmem:[%s0 + $0x214] sm:$0xf]
        %v4332 = vld [vmem:[%s0 + $0x218] sm:$0xf]
        %v4333 = vld [vmem:[%s0 + $0x21c] sm:$0xf]
        %v4334 = vld [vmem:[%s2 + $0x1a] sm:$0x1]
        %v4335 = vlaneseq
        %v4336 = vshrl.u32 %v4335, 7
        %v4337 = vsub.s32 0, %v4336
        %v4338 = vrot.slane %v4334, %v4337
        %v4347 = vunpack.c.l.b16 %v4326
        %v4348 = vunpack.c.l.b16 %v4327
        %v4349 = vunpack.c.l.b16 %v4328
        %v4350 = vunpack.c.l.b16 %v4329
        %v4351 = vunpack.c.l.b16 %v4330
        %v4352 = vunpack.c.l.b16 %v4331
        %v4353 = vunpack.c.l.b16 %v4332
        %v4354 = vunpack.c.l.b16 %v4333
        %v4355 = vpack.c.b16 %v4348, %v4347
        %v4356 = vpack.c.b16 %v4350, %v4349
        %v4357 = vpack.c.b16 %v4352, %v4351
        %v4358 = vpack.c.b16 %v4354, %v4353
        %v4364 = vsel %vm398, %v4325, 0
        %4366 = vmatprep.subr.bf16.mxu0 0
        %4367 = vmatpush1.bf16.msra.mxu0 0
        %4368 = vmatprep.subr.bf16.mxu0 0
        %4369 = vmatpush1.bf16.msra.mxu0 0
        %4370 = vmatprep.subr.bf16.mxu0 0
        %4371 = vmatpush1.bf16.msra.mxu0 0
        %4372 = vmatprep.subr.bf16.mxu0 0
        %4373 = vmatpush1.bf16.msra.mxu0 0
        %4374 = vmatprep.subr.bf16.mxu0 0
        %4375 = vmatpush1.bf16.msra.mxu0 %v4358
        %4376 = vmatprep.subr.bf16.mxu0 0
        %4377 = vmatpush1.bf16.msra.mxu0 %v4357
        %4378 = vmatprep.subr.bf16.mxu0 0
        %4379 = vmatpush1.bf16.msra.mxu0 %v4356
        %4380 = vmatprep.subr.bf16.mxu0 0
        %4381 = vmatpush1.bf16.msra.mxu0 %v4355
        %4382 = vmatprep.subr.bf16.mxu0 0
        %4383 = vmatpush2.bf16.msra.mxu0 0
        %4384 = vmatprep.subr.bf16.mxu0 0
        %4385 = vmatpush2.bf16.msra.mxu0 0
        %4386 = vmatprep.subr.bf16.mxu0 0
        %4387 = vmatpush2.bf16.msra.mxu0 0
        %4388 = vmatprep.subr.bf16.mxu0 0
        %4389 = vmatpush2.bf16.msra.mxu0 0
        %4390 = vmatprep.subr.bf16.mxu0 0
        %4391 = vmatpush2.bf16.msra.mxu0 0
        %4392 = vmatprep.subr.bf16.mxu0 0
        %4393 = vmatpush2.bf16.msra.mxu0 0
        %4394 = vmatprep.subr.bf16.mxu0 0
        %4395 = vmatpush2.bf16.msra.mxu0 0
        %4396 = vmatprep.subr.bf16.mxu0 0
        %4397 = vmatpush2.bf16.msra.mxu0 0
        %4398 = vmatprep.mubr.bf16.mxu0 0
        %4399 = vmatmul.mubr.bf16.gmra.mxu0 %v4364
        %v4400 = vpop.f32.mrf.mxu0
        %v4401 = vadd.f32 %v4338, %v4400
        %v4402 = vpop.f32.mrf.mxu0
        %v4403 = vpop.f32.mrf.mxu0
        %v4404 = vpop.f32.mrf.mxu0
        %4405 = vdwg.mxu0
        %v4406 = vmul.f32 %v4401, 0.25
        %v4407 = vpack.c.bf16 %v3160, %v3160
        %v4408 = vld [vmem:[%s0 + $0x220] sm:$0xf]
        %v4409 = vld [vmem:[%s0 + $0x224] sm:$0xf]
        %v4410 = vld [vmem:[%s0 + $0x228] sm:$0xf]
        %v4411 = vld [vmem:[%s0 + $0x22c] sm:$0xf]
        %v4412 = vld [vmem:[%s0 + $0x230] sm:$0xf]
        %v4413 = vld [vmem:[%s0 + $0x234] sm:$0xf]
        %v4414 = vld [vmem:[%s0 + $0x238] sm:$0xf]
        %v4415 = vld [vmem:[%s0 + $0x23c] sm:$0xf]
        %v4416 = vld [vmem:[%s2 + $0x1b] sm:$0x1]
        %v4417 = vlaneseq
        %v4418 = vshrl.u32 %v4417, 7
        %v4419 = vsub.s32 0, %v4418
        %v4420 = vrot.slane %v4416, %v4419
        %v4429 = vunpack.c.l.b16 %v4408
        %v4430 = vunpack.c.l.b16 %v4409
        %v4431 = vunpack.c.l.b16 %v4410
        %v4432 = vunpack.c.l.b16 %v4411
        %v4433 = vunpack.c.l.b16 %v4412
        %v4434 = vunpack.c.l.b16 %v4413
        %v4435 = vunpack.c.l.b16 %v4414
        %v4436 = vunpack.c.l.b16 %v4415
        %v4437 = vpack.c.b16 %v4430, %v4429
        %v4438 = vpack.c.b16 %v4432, %v4431
        %v4439 = vpack.c.b16 %v4434, %v4433
        %v4440 = vpack.c.b16 %v4436, %v4435
        %v4446 = vsel %vm398, %v4407, 0
        %4448 = vmatprep.subr.bf16.mxu0 0
        %4449 = vmatpush1.bf16.msra.mxu0 0
        %4450 = vmatprep.subr.bf16.mxu0 0
        %4451 = vmatpush1.bf16.msra.mxu0 0
        %4452 = vmatprep.subr.bf16.mxu0 0
        %4453 = vmatpush1.bf16.msra.mxu0 0
        %4454 = vmatprep.subr.bf16.mxu0 0
        %4455 = vmatpush1.bf16.msra.mxu0 0
        %4456 = vmatprep.subr.bf16.mxu0 0
        %4457 = vmatpush1.bf16.msra.mxu0 %v4440
        %4458 = vmatprep.subr.bf16.mxu0 0
        %4459 = vmatpush1.bf16.msra.mxu0 %v4439
        %4460 = vmatprep.subr.bf16.mxu0 0
        %4461 = vmatpush1.bf16.msra.mxu0 %v4438
        %4462 = vmatprep.subr.bf16.mxu0 0
        %4463 = vmatpush1.bf16.msra.mxu0 %v4437
        %4464 = vmatprep.subr.bf16.mxu0 0
        %4465 = vmatpush2.bf16.msra.mxu0 0
        %4466 = vmatprep.subr.bf16.mxu0 0
        %4467 = vmatpush2.bf16.msra.mxu0 0
        %4468 = vmatprep.subr.bf16.mxu0 0
        %4469 = vmatpush2.bf16.msra.mxu0 0
        %4470 = vmatprep.subr.bf16.mxu0 0
        %4471 = vmatpush2.bf16.msra.mxu0 0
        %4472 = vmatprep.subr.bf16.mxu0 0
        %4473 = vmatpush2.bf16.msra.mxu0 0
        %4474 = vmatprep.subr.bf16.mxu0 0
        %4475 = vmatpush2.bf16.msra.mxu0 0
        %4476 = vmatprep.subr.bf16.mxu0 0
        %4477 = vmatpush2.bf16.msra.mxu0 0
        %4478 = vmatprep.subr.bf16.mxu0 0
        %4479 = vmatpush2.bf16.msra.mxu0 0
        %4480 = vmatprep.mubr.bf16.mxu0 0
        %4481 = vmatmul.mubr.bf16.gmra.mxu0 %v4446
        %v4482 = vpop.f32.mrf.mxu0
        %v4483 = vadd.f32 %v4420, %v4482
        %v4484 = vpop.f32.mrf.mxu0
        %v4485 = vpop.f32.mrf.mxu0
        %v4486 = vpop.f32.mrf.mxu0
        %4487 = vdwg.mxu0
        %v4488 = vld [vmem:[%s0 + $0x240] sm:$0xf]
        %v4489 = vld [vmem:[%s0 + $0x244] sm:$0xf]
        %v4490 = vld [vmem:[%s0 + $0x248] sm:$0xf]
        %v4491 = vld [vmem:[%s0 + $0x24c] sm:$0xf]
        %v4492 = vld [vmem:[%s0 + $0x250] sm:$0xf]
        %v4493 = vld [vmem:[%s0 + $0x254] sm:$0xf]
        %v4494 = vld [vmem:[%s0 + $0x258] sm:$0xf]
        %v4495 = vld [vmem:[%s0 + $0x25c] sm:$0xf]
        %v4496 = vld [vmem:[%s2 + $0x1c] sm:$0x1]
        %v4497 = vlaneseq
        %v4498 = vshrl.u32 %v4497, 7
        %v4499 = vsub.s32 0, %v4498
        %v4500 = vrot.slane %v4496, %v4499
        %v4509 = vunpack.c.l.b16 %v4488
        %v4510 = vunpack.c.l.b16 %v4489
        %v4511 = vunpack.c.l.b16 %v4490
        %v4512 = vunpack.c.l.b16 %v4491
        %v4513 = vunpack.c.l.b16 %v4492
        %v4514 = vunpack.c.l.b16 %v4493
        %v4515 = vunpack.c.l.b16 %v4494
        %v4516 = vunpack.c.l.b16 %v4495
        %v4517 = vpack.c.b16 %v4510, %v4509
        %v4518 = vpack.c.b16 %v4512, %v4511
        %v4519 = vpack.c.b16 %v4514, %v4513
        %v4520 = vpack.c.b16 %v4516, %v4515
        %4525 = vmatprep.subr.bf16.mxu0 0
        %4526 = vmatpush1.bf16.msra.mxu0 0
        %4527 = vmatprep.subr.bf16.mxu0 0
        %4528 = vmatpush1.bf16.msra.mxu0 0
        %4529 = vmatprep.subr.bf16.mxu0 0
        %4530 = vmatpush1.bf16.msra.mxu0 0
        %4531 = vmatprep.subr.bf16.mxu0 0
        %4532 = vmatpush1.bf16.msra.mxu0 0
        %4533 = vmatprep.subr.bf16.mxu0 0
        %4534 = vmatpush1.bf16.msra.mxu0 %v4520
        %4535 = vmatprep.subr.bf16.mxu0 0
        %4536 = vmatpush1.bf16.msra.mxu0 %v4519
        %4537 = vmatprep.subr.bf16.mxu0 0
        %4538 = vmatpush1.bf16.msra.mxu0 %v4518
        %4539 = vmatprep.subr.bf16.mxu0 0
        %4540 = vmatpush1.bf16.msra.mxu0 %v4517
        %4541 = vmatprep.subr.bf16.mxu0 0
        %4542 = vmatpush2.bf16.msra.mxu0 0
        %4543 = vmatprep.subr.bf16.mxu0 0
        %4544 = vmatpush2.bf16.msra.mxu0 0
        %4545 = vmatprep.subr.bf16.mxu0 0
        %4546 = vmatpush2.bf16.msra.mxu0 0
        %4547 = vmatprep.subr.bf16.mxu0 0
        %4548 = vmatpush2.bf16.msra.mxu0 0
        %4549 = vmatprep.subr.bf16.mxu0 0
        %4550 = vmatpush2.bf16.msra.mxu0 0
        %4551 = vmatprep.subr.bf16.mxu0 0
        %4552 = vmatpush2.bf16.msra.mxu0 0
        %4553 = vmatprep.subr.bf16.mxu0 0
        %4554 = vmatpush2.bf16.msra.mxu0 0
        %4555 = vmatprep.subr.bf16.mxu0 0
        %4556 = vmatpush2.bf16.msra.mxu0 0
        %4557 = vmatprep.mubr.bf16.mxu0 0
        %4558 = vmatmul.mubr.bf16.gmra.mxu0 %v4446
        %v4559 = vpop.f32.mrf.mxu0
        %v4560 = vadd.f32 %v4500, %v4559
        %v4561 = vpop.f32.mrf.mxu0
        %v4562 = vpop.f32.mrf.mxu0
        %v4563 = vpop.f32.mrf.mxu0
        %4564 = vdwg.mxu0
        %v4566 = vsel %vm661, %v4406, 0
        %v4569 = vsel %vm661, %v4483, 0
        %4571 = vmatprep.subr.mxu0 0.0
        %4572 = vmatpush1.xpose.msra.mxu0 0.0
        %4573 = vmatprep.subr.mxu0 0.0
        %4574 = vmatpush1.xpose.msra.mxu0 0.0
        %4575 = vmatprep.subr.mxu0 0.0
        %4576 = vmatpush1.xpose.msra.mxu0 0.0
        %4577 = vmatprep.subr.mxu0 0.0
        %4578 = vmatpush1.xpose.msra.mxu0 0.0
        %4579 = vmatprep.subr.mxu0 0.0
        %4580 = vmatpush1.xpose.msra.mxu0 0.0
        %4581 = vmatprep.subr.mxu0 0.0
        %4582 = vmatpush1.xpose.msra.mxu0 0.0
        %4583 = vmatprep.subr.mxu0 0.0
        %4584 = vmatpush1.xpose.msra.mxu0 0.0
        %4585 = vmatprep.subr.mxu0 0.0
        %4586 = vmatpush1.xpose.msra.mxu0 0.0
        %4587 = vmatprep.subr.mxu0 0.0
        %4588 = vmatpush1.xpose.msra.mxu0 0.0
        %4589 = vmatprep.subr.mxu0 0.0
        %4590 = vmatpush1.xpose.msra.mxu0 0.0
        %4591 = vmatprep.subr.mxu0 0.0
        %4592 = vmatpush1.xpose.msra.mxu0 0.0
        %4593 = vmatprep.subr.mxu0 0.0
        %4594 = vmatpush1.xpose.msra.mxu0 0.0
        %4595 = vmatprep.subr.mxu0 0.0
        %4596 = vmatpush1.xpose.msra.mxu0 0.0
        %4597 = vmatprep.subr.mxu0 0.0
        %4598 = vmatpush1.xpose.msra.mxu0 0.0
        %4599 = vmatprep.subr.mxu0 0.0
        %4600 = vmatpush1.xpose.msra.mxu0 0.0
        %4601 = vmatprep.subr.mxu0 0.0
        %4602 = vmatpush1.xpose.msra.mxu0 %v4569
        %4603 = vmatprep.subr.mxu0 0.0
        %4604 = vmatpush2.xpose.msra.mxu0 0.0
        %4605 = vmatprep.subr.mxu0 0.0
        %4606 = vmatpush2.xpose.msra.mxu0 0.0
        %4607 = vmatprep.subr.mxu0 0.0
        %4608 = vmatpush2.xpose.msra.mxu0 0.0
        %4609 = vmatprep.subr.mxu0 0.0
        %4610 = vmatpush2.xpose.msra.mxu0 0.0
        %4611 = vmatprep.subr.mxu0 0.0
        %4612 = vmatpush2.xpose.msra.mxu0 0.0
        %4613 = vmatprep.subr.mxu0 0.0
        %4614 = vmatpush2.xpose.msra.mxu0 0.0
        %4615 = vmatprep.subr.mxu0 0.0
        %4616 = vmatpush2.xpose.msra.mxu0 0.0
        %4617 = vmatprep.subr.mxu0 0.0
        %4618 = vmatpush2.xpose.msra.mxu0 0.0
        %4619 = vmatprep.subr.mxu0 0.0
        %4620 = vmatpush2.xpose.msra.mxu0 0.0
        %4621 = vmatprep.subr.mxu0 0.0
        %4622 = vmatpush2.xpose.msra.mxu0 0.0
        %4623 = vmatprep.subr.mxu0 0.0
        %4624 = vmatpush2.xpose.msra.mxu0 0.0
        %4625 = vmatprep.subr.mxu0 0.0
        %4626 = vmatpush2.xpose.msra.mxu0 0.0
        %4627 = vmatprep.subr.mxu0 0.0
        %4628 = vmatpush2.xpose.msra.mxu0 0.0
        %4629 = vmatprep.subr.mxu0 0.0
        %4630 = vmatpush2.xpose.msra.mxu0 0.0
        %4631 = vmatprep.subr.mxu0 0.0
        %4632 = vmatpush2.xpose.msra.mxu0 0.0
        %4633 = vmatprep.subr.mxu0 0.0
        %4634 = vmatpush2.xpose.msra.mxu0 0.0
        %4635 = vmatprep.mubr.f32.mxu0 0.0
        %4636 = vmatmul.mubr.f32.gmra.mxu0 %v4566
        %v4637 = vpop.f32.mrf.mxu0
        %v4638 = vadd.f32 0.0, %v4637
        %v4639 = vpop.f32.mrf.mxu0
        %4640 = vdwg.mxu0
        %4641 = vrot.lane.b32.xlu0 %v4406, 112
        %v4642 = vpop.permute.xlu0 %4641
        %4643 = vrot.lane.b32.xlu0 %v4483, 112
        %v4644 = vpop.permute.xlu0 %4643
        %v4645 = vsel %vm661, %v4642, 0
        %v4647 = vsel %vm661, %v4644, 0
        %4649 = vmatprep.subr.mxu0 0.0
        %4650 = vmatpush1.xpose.msra.mxu0 0.0
        %4651 = vmatprep.subr.mxu0 0.0
        %4652 = vmatpush1.xpose.msra.mxu0 0.0
        %4653 = vmatprep.subr.mxu0 0.0
        %4654 = vmatpush1.xpose.msra.mxu0 0.0
        %4655 = vmatprep.subr.mxu0 0.0
        %4656 = vmatpush1.xpose.msra.mxu0 0.0
        %4657 = vmatprep.subr.mxu0 0.0
        %4658 = vmatpush1.xpose.msra.mxu0 0.0
        %4659 = vmatprep.subr.mxu0 0.0
        %4660 = vmatpush1.xpose.msra.mxu0 0.0
        %4661 = vmatprep.subr.mxu0 0.0
        %4662 = vmatpush1.xpose.msra.mxu0 0.0
        %4663 = vmatprep.subr.mxu0 0.0
        %4664 = vmatpush1.xpose.msra.mxu0 0.0
        %4665 = vmatprep.subr.mxu0 0.0
        %4666 = vmatpush1.xpose.msra.mxu0 0.0
        %4667 = vmatprep.subr.mxu0 0.0
        %4668 = vmatpush1.xpose.msra.mxu0 0.0
        %4669 = vmatprep.subr.mxu0 0.0
        %4670 = vmatpush1.xpose.msra.mxu0 0.0
        %4671 = vmatprep.subr.mxu0 0.0
        %4672 = vmatpush1.xpose.msra.mxu0 0.0
        %4673 = vmatprep.subr.mxu0 0.0
        %4674 = vmatpush1.xpose.msra.mxu0 0.0
        %4675 = vmatprep.subr.mxu0 0.0
        %4676 = vmatpush1.xpose.msra.mxu0 0.0
        %4677 = vmatprep.subr.mxu0 0.0
        %4678 = vmatpush1.xpose.msra.mxu0 0.0
        %4679 = vmatprep.subr.mxu0 0.0
        %4680 = vmatpush1.xpose.msra.mxu0 %v4647
        %4681 = vmatprep.subr.mxu0 0.0
        %4682 = vmatpush2.xpose.msra.mxu0 0.0
        %4683 = vmatprep.subr.mxu0 0.0
        %4684 = vmatpush2.xpose.msra.mxu0 0.0
        %4685 = vmatprep.subr.mxu0 0.0
        %4686 = vmatpush2.xpose.msra.mxu0 0.0
        %4687 = vmatprep.subr.mxu0 0.0
        %4688 = vmatpush2.xpose.msra.mxu0 0.0
        %4689 = vmatprep.subr.mxu0 0.0
        %4690 = vmatpush2.xpose.msra.mxu0 0.0
        %4691 = vmatprep.subr.mxu0 0.0
        %4692 = vmatpush2.xpose.msra.mxu0 0.0
        %4693 = vmatprep.subr.mxu0 0.0
        %4694 = vmatpush2.xpose.msra.mxu0 0.0
        %4695 = vmatprep.subr.mxu0 0.0
        %4696 = vmatpush2.xpose.msra.mxu0 0.0
        %4697 = vmatprep.subr.mxu0 0.0
        %4698 = vmatpush2.xpose.msra.mxu0 0.0
        %4699 = vmatprep.subr.mxu0 0.0
        %4700 = vmatpush2.xpose.msra.mxu0 0.0
        %4701 = vmatprep.subr.mxu0 0.0
        %4702 = vmatpush2.xpose.msra.mxu0 0.0
        %4703 = vmatprep.subr.mxu0 0.0
        %4704 = vmatpush2.xpose.msra.mxu0 0.0
        %4705 = vmatprep.subr.mxu0 0.0
        %4706 = vmatpush2.xpose.msra.mxu0 0.0
        %4707 = vmatprep.subr.mxu0 0.0
        %4708 = vmatpush2.xpose.msra.mxu0 0.0
        %4709 = vmatprep.subr.mxu0 0.0
        %4710 = vmatpush2.xpose.msra.mxu0 0.0
        %4711 = vmatprep.subr.mxu0 0.0
        %4712 = vmatpush2.xpose.msra.mxu0 0.0
        %4713 = vmatprep.mubr.f32.mxu0 0.0
        %4714 = vmatmul.mubr.f32.gmra.mxu0 %v4645
        %v4715 = vpop.f32.mrf.mxu0
        %v4716 = vadd.f32 0.0, %v4715
        %v4717 = vpop.f32.mrf.mxu0
        %4718 = vdwg.mxu0
        %4719 = vrot.lane.b32.xlu0 %v4406, 96
        %v4720 = vpop.permute.xlu0 %4719
        %4721 = vrot.lane.b32.xlu0 %v4483, 96
        %v4722 = vpop.permute.xlu0 %4721
        %v4723 = vsel %vm661, %v4720, 0
        %v4725 = vsel %vm661, %v4722, 0
        %4727 = vmatprep.subr.mxu0 0.0
        %4728 = vmatpush1.xpose.msra.mxu0 0.0
        %4729 = vmatprep.subr.mxu0 0.0
        %4730 = vmatpush1.xpose.msra.mxu0 0.0
        %4731 = vmatprep.subr.mxu0 0.0
        %4732 = vmatpush1.xpose.msra.mxu0 0.0
        %4733 = vmatprep.subr.mxu0 0.0
        %4734 = vmatpush1.xpose.msra.mxu0 0.0
        %4735 = vmatprep.subr.mxu0 0.0
        %4736 = vmatpush1.xpose.msra.mxu0 0.0
        %4737 = vmatprep.subr.mxu0 0.0
        %4738 = vmatpush1.xpose.msra.mxu0 0.0
        %4739 = vmatprep.subr.mxu0 0.0
        %4740 = vmatpush1.xpose.msra.mxu0 0.0
        %4741 = vmatprep.subr.mxu0 0.0
        %4742 = vmatpush1.xpose.msra.mxu0 0.0
        %4743 = vmatprep.subr.mxu0 0.0
        %4744 = vmatpush1.xpose.msra.mxu0 0.0
        %4745 = vmatprep.subr.mxu0 0.0
        %4746 = vmatpush1.xpose.msra.mxu0 0.0
        %4747 = vmatprep.subr.mxu0 0.0
        %4748 = vmatpush1.xpose.msra.mxu0 0.0
        %4749 = vmatprep.subr.mxu0 0.0
        %4750 = vmatpush1.xpose.msra.mxu0 0.0
        %4751 = vmatprep.subr.mxu0 0.0
        %4752 = vmatpush1.xpose.msra.mxu0 0.0
        %4753 = vmatprep.subr.mxu0 0.0
        %4754 = vmatpush1.xpose.msra.mxu0 0.0
        %4755 = vmatprep.subr.mxu0 0.0
        %4756 = vmatpush1.xpose.msra.mxu0 0.0
        %4757 = vmatprep.subr.mxu0 0.0
        %4758 = vmatpush1.xpose.msra.mxu0 %v4725
        %4759 = vmatprep.subr.mxu0 0.0
        %4760 = vmatpush2.xpose.msra.mxu0 0.0
        %4761 = vmatprep.subr.mxu0 0.0
        %4762 = vmatpush2.xpose.msra.mxu0 0.0
        %4763 = vmatprep.subr.mxu0 0.0
        %4764 = vmatpush2.xpose.msra.mxu0 0.0
        %4765 = vmatprep.subr.mxu0 0.0
        %4766 = vmatpush2.xpose.msra.mxu0 0.0
        %4767 = vmatprep.subr.mxu0 0.0
        %4768 = vmatpush2.xpose.msra.mxu0 0.0
        %4769 = vmatprep.subr.mxu0 0.0
        %4770 = vmatpush2.xpose.msra.mxu0 0.0
        %4771 = vmatprep.subr.mxu0 0.0
        %4772 = vmatpush2.xpose.msra.mxu0 0.0
        %4773 = vmatprep.subr.mxu0 0.0
        %4774 = vmatpush2.xpose.msra.mxu0 0.0
        %4775 = vmatprep.subr.mxu0 0.0
        %4776 = vmatpush2.xpose.msra.mxu0 0.0
        %4777 = vmatprep.subr.mxu0 0.0
        %4778 = vmatpush2.xpose.msra.mxu0 0.0
        %4779 = vmatprep.subr.mxu0 0.0
        %4780 = vmatpush2.xpose.msra.mxu0 0.0
        %4781 = vmatprep.subr.mxu0 0.0
        %4782 = vmatpush2.xpose.msra.mxu0 0.0
        %4783 = vmatprep.subr.mxu0 0.0
        %4784 = vmatpush2.xpose.msra.mxu0 0.0
        %4785 = vmatprep.subr.mxu0 0.0
        %4786 = vmatpush2.xpose.msra.mxu0 0.0
        %4787 = vmatprep.subr.mxu0 0.0
        %4788 = vmatpush2.xpose.msra.mxu0 0.0
        %4789 = vmatprep.subr.mxu0 0.0
        %4790 = vmatpush2.xpose.msra.mxu0 0.0
        %4791 = vmatprep.mubr.f32.mxu0 0.0
        %4792 = vmatmul.mubr.f32.gmra.mxu0 %v4723
        %v4793 = vpop.f32.mrf.mxu0
        %v4794 = vadd.f32 0.0, %v4793
        %v4795 = vpop.f32.mrf.mxu0
        %4796 = vdwg.mxu0
        %4797 = vrot.lane.b32.xlu0 %v4406, 80
        %v4798 = vpop.permute.xlu0 %4797
        %4799 = vrot.lane.b32.xlu0 %v4483, 80
        %v4800 = vpop.permute.xlu0 %4799
        %v4801 = vsel %vm661, %v4798, 0
        %v4803 = vsel %vm661, %v4800, 0
        %4805 = vmatprep.subr.mxu0 0.0
        %4806 = vmatpush1.xpose.msra.mxu0 0.0
        %4807 = vmatprep.subr.mxu0 0.0
        %4808 = vmatpush1.xpose.msra.mxu0 0.0
        %4809 = vmatprep.subr.mxu0 0.0
        %4810 = vmatpush1.xpose.msra.mxu0 0.0
        %4811 = vmatprep.subr.mxu0 0.0
        %4812 = vmatpush1.xpose.msra.mxu0 0.0
        %4813 = vmatprep.subr.mxu0 0.0
        %4814 = vmatpush1.xpose.msra.mxu0 0.0
        %4815 = vmatprep.subr.mxu0 0.0
        %4816 = vmatpush1.xpose.msra.mxu0 0.0
        %4817 = vmatprep.subr.mxu0 0.0
        %4818 = vmatpush1.xpose.msra.mxu0 0.0
        %4819 = vmatprep.subr.mxu0 0.0
        %4820 = vmatpush1.xpose.msra.mxu0 0.0
        %4821 = vmatprep.subr.mxu0 0.0
        %4822 = vmatpush1.xpose.msra.mxu0 0.0
        %4823 = vmatprep.subr.mxu0 0.0
        %4824 = vmatpush1.xpose.msra.mxu0 0.0
        %4825 = vmatprep.subr.mxu0 0.0
        %4826 = vmatpush1.xpose.msra.mxu0 0.0
        %4827 = vmatprep.subr.mxu0 0.0
        %4828 = vmatpush1.xpose.msra.mxu0 0.0
        %4829 = vmatprep.subr.mxu0 0.0
        %4830 = vmatpush1.xpose.msra.mxu0 0.0
        %4831 = vmatprep.subr.mxu0 0.0
        %4832 = vmatpush1.xpose.msra.mxu0 0.0
        %4833 = vmatprep.subr.mxu0 0.0
        %4834 = vmatpush1.xpose.msra.mxu0 0.0
        %4835 = vmatprep.subr.mxu0 0.0
        %4836 = vmatpush1.xpose.msra.mxu0 %v4803
        %4837 = vmatprep.subr.mxu0 0.0
        %4838 = vmatpush2.xpose.msra.mxu0 0.0
        %4839 = vmatprep.subr.mxu0 0.0
        %4840 = vmatpush2.xpose.msra.mxu0 0.0
        %4841 = vmatprep.subr.mxu0 0.0
        %4842 = vmatpush2.xpose.msra.mxu0 0.0
        %4843 = vmatprep.subr.mxu0 0.0
        %4844 = vmatpush2.xpose.msra.mxu0 0.0
        %4845 = vmatprep.subr.mxu0 0.0
        %4846 = vmatpush2.xpose.msra.mxu0 0.0
        %4847 = vmatprep.subr.mxu0 0.0
        %4848 = vmatpush2.xpose.msra.mxu0 0.0
        %4849 = vmatprep.subr.mxu0 0.0
        %4850 = vmatpush2.xpose.msra.mxu0 0.0
        %4851 = vmatprep.subr.mxu0 0.0
        %4852 = vmatpush2.xpose.msra.mxu0 0.0
        %4853 = vmatprep.subr.mxu0 0.0
        %4854 = vmatpush2.xpose.msra.mxu0 0.0
        %4855 = vmatprep.subr.mxu0 0.0
        %4856 = vmatpush2.xpose.msra.mxu0 0.0
        %4857 = vmatprep.subr.mxu0 0.0
        %4858 = vmatpush2.xpose.msra.mxu0 0.0
        %4859 = vmatprep.subr.mxu0 0.0
        %4860 = vmatpush2.xpose.msra.mxu0 0.0
        %4861 = vmatprep.subr.mxu0 0.0
        %4862 = vmatpush2.xpose.msra.mxu0 0.0
        %4863 = vmatprep.subr.mxu0 0.0
        %4864 = vmatpush2.xpose.msra.mxu0 0.0
        %4865 = vmatprep.subr.mxu0 0.0
        %4866 = vmatpush2.xpose.msra.mxu0 0.0
        %4867 = vmatprep.subr.mxu0 0.0
        %4868 = vmatpush2.xpose.msra.mxu0 0.0
        %4869 = vmatprep.mubr.f32.mxu0 0.0
        %4870 = vmatmul.mubr.f32.gmra.mxu0 %v4801
        %v4871 = vpop.f32.mrf.mxu0
        %v4872 = vadd.f32 0.0, %v4871
        %v4873 = vpop.f32.mrf.mxu0
        %4874 = vdwg.mxu0
        %v4875 = vadd.f32 %v4638, %v976
        %v4876 = vadd.f32 %v4716, %v976
        %v4877 = vadd.f32 %v4794, %v976
        %v4878 = vadd.f32 %v4872, %v976
        %v4879 = vsel %vm982, %v4875, -inf
        %4880 = vmax.xlane.f32.xlu0 %v4879
        %v4881 = vpop.xlane.xlu0 %4880
        %v4882 = vsel %vm982, %v4876, -inf
        %4883 = vmax.xlane.f32.xlu0 %v4882
        %v4884 = vpop.xlane.xlu0 %4883
        %v4885 = vsel %vm982, %v4877, -inf
        %4886 = vmax.xlane.f32.xlu0 %v4885
        %v4887 = vpop.xlane.xlu0 %4886
        %v4888 = vsel %vm982, %v4878, -inf
        %4889 = vmax.xlane.f32.xlu0 %v4888
        %v4890 = vpop.xlane.xlu0 %4889
        %v4891 = vsub.f32 %v4875, %v4881
        %v4892 = vsub.f32 %v4876, %v4884
        %v4893 = vsub.f32 %v4877, %v4887
        %v4894 = vsub.f32 %v4878, %v4890
        %v4895 = vmul.f32 %v4891, 1.442695
        %v4896 = vpow.pop %v4895
        %v4897 = vmul.f32 %v4892, 1.442695
        %v4898 = vpow.pop %v4897
        %v4899 = vmul.f32 %v4893, 1.442695
        %v4900 = vpow.pop %v4899
        %v4901 = vmul.f32 %v4894, 1.442695
        %v4902 = vpow.pop %v4901
        %v4903 = vsel %vm982, %v4896, 0.0
        %4904 = vadd.xlane.f32.xlu0 %v4903
        %v4905 = vpop.xlane.xlu0 %4904
        %v4906 = vsel %vm982, %v4898, 0.0
        %4907 = vadd.xlane.f32.xlu0 %v4906
        %v4908 = vpop.xlane.xlu0 %4907
        %v4909 = vsel %vm982, %v4900, 0.0
        %4910 = vadd.xlane.f32.xlu0 %v4909
        %v4911 = vpop.xlane.xlu0 %4910
        %v4912 = vsel %vm982, %v4902, 0.0
        %4913 = vadd.xlane.f32.xlu0 %v4912
        %v4914 = vpop.xlane.xlu0 %4913
        %v4915 = vrcp.pop %v4905
        %v4916 = vrcp.pop %v4908
        %v4917 = vrcp.pop %v4911
        %v4918 = vrcp.pop %v4914
        %v4919 = vmul.f32 %v4896, %v4915
        %v4920 = vmul.f32 %v4898, %v4916
        %v4921 = vmul.f32 %v4900, %v4917
        %v4922 = vmul.f32 %v4902, %v4918
        %v4924 = vsel %vm982, %v4919, 0
        %4926 = vmatprep.subr.mxu0 0.0
        %4927 = vmatpush1.msra.mxu0 0.0
        %4928 = vmatprep.subr.mxu0 0.0
        %4929 = vmatpush1.msra.mxu0 0.0
        %4930 = vmatprep.subr.mxu0 0.0
        %4931 = vmatpush1.msra.mxu0 0.0
        %4932 = vmatprep.subr.mxu0 0.0
        %4933 = vmatpush1.msra.mxu0 0.0
        %4934 = vmatprep.subr.mxu0 0.0
        %4935 = vmatpush1.msra.mxu0 0.0
        %4936 = vmatprep.subr.mxu0 0.0
        %4937 = vmatpush1.msra.mxu0 0.0
        %4938 = vmatprep.subr.mxu0 0.0
        %4939 = vmatpush1.msra.mxu0 0.0
        %4940 = vmatprep.subr.mxu0 0.0
        %4941 = vmatpush1.msra.mxu0 0.0
        %4942 = vmatprep.subr.mxu0 0.0
        %4943 = vmatpush1.msra.mxu0 0.0
        %4944 = vmatprep.subr.mxu0 0.0
        %4945 = vmatpush1.msra.mxu0 0.0
        %4946 = vmatprep.subr.mxu0 0.0
        %4947 = vmatpush1.msra.mxu0 0.0
        %4948 = vmatprep.subr.mxu0 0.0
        %4949 = vmatpush1.msra.mxu0 0.0
        %4950 = vmatprep.subr.mxu0 0.0
        %4951 = vmatpush1.msra.mxu0 0.0
        %4952 = vmatprep.subr.mxu0 0.0
        %4953 = vmatpush1.msra.mxu0 0.0
        %4954 = vmatprep.subr.mxu0 0.0
        %4955 = vmatpush1.msra.mxu0 0.0
        %4956 = vmatprep.subr.mxu0 0.0
        %4957 = vmatpush1.msra.mxu0 %v4560
        %4958 = vmatprep.subr.mxu0 0.0
        %4959 = vmatpush2.msra.mxu0 0.0
        %4960 = vmatprep.subr.mxu0 0.0
        %4961 = vmatpush2.msra.mxu0 0.0
        %4962 = vmatprep.subr.mxu0 0.0
        %4963 = vmatpush2.msra.mxu0 0.0
        %4964 = vmatprep.subr.mxu0 0.0
        %4965 = vmatpush2.msra.mxu0 0.0
        %4966 = vmatprep.subr.mxu0 0.0
        %4967 = vmatpush2.msra.mxu0 0.0
        %4968 = vmatprep.subr.mxu0 0.0
        %4969 = vmatpush2.msra.mxu0 0.0
        %4970 = vmatprep.subr.mxu0 0.0
        %4971 = vmatpush2.msra.mxu0 0.0
        %4972 = vmatprep.subr.mxu0 0.0
        %4973 = vmatpush2.msra.mxu0 0.0
        %4974 = vmatprep.subr.mxu0 0.0
        %4975 = vmatpush2.msra.mxu0 0.0
        %4976 = vmatprep.subr.mxu0 0.0
        %4977 = vmatpush2.msra.mxu0 0.0
        %4978 = vmatprep.subr.mxu0 0.0
        %4979 = vmatpush2.msra.mxu0 0.0
        %4980 = vmatprep.subr.mxu0 0.0
        %4981 = vmatpush2.msra.mxu0 0.0
        %4982 = vmatprep.subr.mxu0 0.0
        %4983 = vmatpush2.msra.mxu0 0.0
        %4984 = vmatprep.subr.mxu0 0.0
        %4985 = vmatpush2.msra.mxu0 0.0
        %4986 = vmatprep.subr.mxu0 0.0
        %4987 = vmatpush2.msra.mxu0 0.0
        %4988 = vmatprep.subr.mxu0 0.0
        %4989 = vmatpush2.msra.mxu0 0.0
        %4990 = vmatprep.mubr.f32.mxu0 0.0
        %4991 = vmatmul.mubr.f32.gmra.mxu0 %v4924
        %v4992 = vpop.f32.mrf.mxu0
        %v4993 = vadd.f32 0.0, %v4992
        %v4994 = vpop.f32.mrf.mxu0
        %4995 = vdwg.mxu0
        %v4996 = vld [vmem:[%s0 + $0x260] sm:$0xf]
        %v4997 = vld [vmem:[%s0 + $0x264] sm:$0xf]
        %v4998 = vpack.c.bf16 %v4993, %v4993
        %5000 = vrot.lane.b32.xlu0 %v4560, 112
        %v5001 = vpop.permute.xlu0 %5000
        %v5004 = vsel %vm982, %v4920, 0
        %5006 = vmatprep.subr.mxu0 0.0
        %5007 = vmatpush1.msra.mxu0 0.0
        %5008 = vmatprep.subr.mxu0 0.0
        %5009 = vmatpush1.msra.mxu0 0.0
        %5010 = vmatprep.subr.mxu0 0.0
        %5011 = vmatpush1.msra.mxu0 0.0
        %5012 = vmatprep.subr.mxu0 0.0
        %5013 = vmatpush1.msra.mxu0 0.0
        %5014 = vmatprep.subr.mxu0 0.0
        %5015 = vmatpush1.msra.mxu0 0.0
        %5016 = vmatprep.subr.mxu0 0.0
        %5017 = vmatpush1.msra.mxu0 0.0
        %5018 = vmatprep.subr.mxu0 0.0
        %5019 = vmatpush1.msra.mxu0 0.0
        %5020 = vmatprep.subr.mxu0 0.0
        %5021 = vmatpush1.msra.mxu0 0.0
        %5022 = vmatprep.subr.mxu0 0.0
        %5023 = vmatpush1.msra.mxu0 0.0
        %5024 = vmatprep.subr.mxu0 0.0
        %5025 = vmatpush1.msra.mxu0 0.0
        %5026 = vmatprep.subr.mxu0 0.0
        %5027 = vmatpush1.msra.mxu0 0.0
        %5028 = vmatprep.subr.mxu0 0.0
        %5029 = vmatpush1.msra.mxu0 0.0
        %5030 = vmatprep.subr.mxu0 0.0
        %5031 = vmatpush1.msra.mxu0 0.0
        %5032 = vmatprep.subr.mxu0 0.0
        %5033 = vmatpush1.msra.mxu0 0.0
        %5034 = vmatprep.subr.mxu0 0.0
        %5035 = vmatpush1.msra.mxu0 0.0
        %5036 = vmatprep.subr.mxu0 0.0
        %5037 = vmatpush1.msra.mxu0 %v5001
        %5038 = vmatprep.subr.mxu0 0.0
        %5039 = vmatpush2.msra.mxu0 0.0
        %5040 = vmatprep.subr.mxu0 0.0
        %5041 = vmatpush2.msra.mxu0 0.0
        %5042 = vmatprep.subr.mxu0 0.0
        %5043 = vmatpush2.msra.mxu0 0.0
        %5044 = vmatprep.subr.mxu0 0.0
        %5045 = vmatpush2.msra.mxu0 0.0
        %5046 = vmatprep.subr.mxu0 0.0
        %5047 = vmatpush2.msra.mxu0 0.0
        %5048 = vmatprep.subr.mxu0 0.0
        %5049 = vmatpush2.msra.mxu0 0.0
        %5050 = vmatprep.subr.mxu0 0.0
        %5051 = vmatpush2.msra.mxu0 0.0
        %5052 = vmatprep.subr.mxu0 0.0
        %5053 = vmatpush2.msra.mxu0 0.0
        %5054 = vmatprep.subr.mxu0 0.0
        %5055 = vmatpush2.msra.mxu0 0.0
        %5056 = vmatprep.subr.mxu0 0.0
        %5057 = vmatpush2.msra.mxu0 0.0
        %5058 = vmatprep.subr.mxu0 0.0
        %5059 = vmatpush2.msra.mxu0 0.0
        %5060 = vmatprep.subr.mxu0 0.0
        %5061 = vmatpush2.msra.mxu0 0.0
        %5062 = vmatprep.subr.mxu0 0.0
        %5063 = vmatpush2.msra.mxu0 0.0
        %5064 = vmatprep.subr.mxu0 0.0
        %5065 = vmatpush2.msra.mxu0 0.0
        %5066 = vmatprep.subr.mxu0 0.0
        %5067 = vmatpush2.msra.mxu0 0.0
        %5068 = vmatprep.subr.mxu0 0.0
        %5069 = vmatpush2.msra.mxu0 0.0
        %5070 = vmatprep.mubr.f32.mxu0 0.0
        %5071 = vmatmul.mubr.f32.gmra.mxu0 %v5004
        %v5072 = vpop.f32.mrf.mxu0
        %v5073 = vadd.f32 0.0, %v5072
        %v5074 = vpop.f32.mrf.mxu0
        %5075 = vdwg.mxu0
        %v5076 = vld [vmem:[%s0 + $0x268] sm:$0xf]
        %v5077 = vld [vmem:[%s0 + $0x26c] sm:$0xf]
        %v5078 = vpack.c.bf16 %v5073, %v5073
        %v5081 = vunpack.c.l.b16 %v5076
        %v5082 = vunpack.c.l.b16 %v5077
        %v5083 = vpack.c.b16 %v5082, %v5081
        %v5086 = vsel %vm661, %v5078, 0
        %5088 = vmatprep.subr.bf16.mxu0 0
        %5089 = vmatpush1.bf16.msra.mxu0 0
        %5090 = vmatprep.subr.bf16.mxu0 0
        %5091 = vmatpush1.bf16.msra.mxu0 0
        %5092 = vmatprep.subr.bf16.mxu0 0
        %5093 = vmatpush1.bf16.msra.mxu0 0
        %5094 = vmatprep.subr.bf16.mxu0 0
        %5095 = vmatpush1.bf16.msra.mxu0 0
        %5096 = vmatprep.subr.bf16.mxu0 0
        %5097 = vmatpush1.bf16.msra.mxu0 0
        %5098 = vmatprep.subr.bf16.mxu0 0
        %5099 = vmatpush1.bf16.msra.mxu0 0
        %5100 = vmatprep.subr.bf16.mxu0 0
        %5101 = vmatpush1.bf16.msra.mxu0 0
        %5102 = vmatprep.subr.bf16.mxu0 0
        %5103 = vmatpush1.bf16.msra.mxu0 %v5083
        %5104 = vmatprep.subr.bf16.mxu0 0
        %5105 = vmatpush2.bf16.msra.mxu0 0
        %5106 = vmatprep.subr.bf16.mxu0 0
        %5107 = vmatpush2.bf16.msra.mxu0 0
        %5108 = vmatprep.subr.bf16.mxu0 0
        %5109 = vmatpush2.bf16.msra.mxu0 0
        %5110 = vmatprep.subr.bf16.mxu0 0
        %5111 = vmatpush2.bf16.msra.mxu0 0
        %5112 = vmatprep.subr.bf16.mxu0 0
        %5113 = vmatpush2.bf16.msra.mxu0 0
        %5114 = vmatprep.subr.bf16.mxu0 0
        %5115 = vmatpush2.bf16.msra.mxu0 0
        %5116 = vmatprep.subr.bf16.mxu0 0
        %5117 = vmatpush2.bf16.msra.mxu0 0
        %5118 = vmatprep.subr.bf16.mxu0 0
        %5119 = vmatpush2.bf16.msra.mxu0 0
        %5120 = vmatprep.mubr.bf16.mxu0 0
        %5121 = vmatmul.mubr.bf16.gmra.mxu0 %v5086
        %v5122 = vpop.f32.mrf.mxu0
        %v5123 = vadd.f32 0.0, %v5122
        %v5124 = vpop.f32.mrf.mxu0
        %v5125 = vpop.f32.mrf.mxu0
        %v5126 = vpop.f32.mrf.mxu0
        %5127 = vdwg.mxu0
        %v5130 = vunpack.c.l.b16 %v4996
        %v5131 = vunpack.c.l.b16 %v4997
        %v5132 = vpack.c.b16 %v5131, %v5130
        %v5135 = vsel %vm661, %v4998, 0
        %5137 = vmatprep.subr.bf16.mxu0 0
        %5138 = vmatpush1.bf16.msra.mxu0 0
        %5139 = vmatprep.subr.bf16.mxu0 0
        %5140 = vmatpush1.bf16.msra.mxu0 0
        %5141 = vmatprep.subr.bf16.mxu0 0
        %5142 = vmatpush1.bf16.msra.mxu0 0
        %5143 = vmatprep.subr.bf16.mxu0 0
        %5144 = vmatpush1.bf16.msra.mxu0 0
        %5145 = vmatprep.subr.bf16.mxu0 0
        %5146 = vmatpush1.bf16.msra.mxu0 0
        %5147 = vmatprep.subr.bf16.mxu0 0
        %5148 = vmatpush1.bf16.msra.mxu0 0
        %5149 = vmatprep.subr.bf16.mxu0 0
        %5150 = vmatpush1.bf16.msra.mxu0 0
        %5151 = vmatprep.subr.bf16.mxu0 0
        %5152 = vmatpush1.bf16.msra.mxu0 %v5132
        %5153 = vmatprep.subr.bf16.mxu0 0
        %5154 = vmatpush2.bf16.msra.mxu0 0
        %5155 = vmatprep.subr.bf16.mxu0 0
        %5156 = vmatpush2.bf16.msra.mxu0 0
        %5157 = vmatprep.subr.bf16.mxu0 0
        %5158 = vmatpush2.bf16.msra.mxu0 0
        %5159 = vmatprep.subr.bf16.mxu0 0
        %5160 = vmatpush2.bf16.msra.mxu0 0
        %5161 = vmatprep.subr.bf16.mxu0 0
        %5162 = vmatpush2.bf16.msra.mxu0 0
        %5163 = vmatprep.subr.bf16.mxu0 0
        %5164 = vmatpush2.bf16.msra.mxu0 0
        %5165 = vmatprep.subr.bf16.mxu0 0
        %5166 = vmatpush2.bf16.msra.mxu0 0
        %5167 = vmatprep.subr.bf16.mxu0 0
        %5168 = vmatpush2.bf16.msra.mxu0 0
        %5169 = vmatprep.mubr.bf16.mxu0 0
        %5170 = vmatmul.mubr.bf16.gmra.mxu0 %v5135
        %v5171 = vpop.f32.mrf.mxu0
        %v5172 = vadd.f32 %v5123, %v5171
        %v5173 = vpop.f32.mrf.mxu0
        %v5174 = vpop.f32.mrf.mxu0
        %v5175 = vpop.f32.mrf.mxu0
        %5176 = vdwg.mxu0
        %5177 = vrot.lane.b32.xlu0 %v4560, 96
        %v5178 = vpop.permute.xlu0 %5177
        %v5181 = vsel %vm982, %v4921, 0
        %5183 = vmatprep.subr.mxu0 0.0
        %5184 = vmatpush1.msra.mxu0 0.0
        %5185 = vmatprep.subr.mxu0 0.0
        %5186 = vmatpush1.msra.mxu0 0.0
        %5187 = vmatprep.subr.mxu0 0.0
        %5188 = vmatpush1.msra.mxu0 0.0
        %5189 = vmatprep.subr.mxu0 0.0
        %5190 = vmatpush1.msra.mxu0 0.0
        %5191 = vmatprep.subr.mxu0 0.0
        %5192 = vmatpush1.msra.mxu0 0.0
        %5193 = vmatprep.subr.mxu0 0.0
        %5194 = vmatpush1.msra.mxu0 0.0
        %5195 = vmatprep.subr.mxu0 0.0
        %5196 = vmatpush1.msra.mxu0 0.0
        %5197 = vmatprep.subr.mxu0 0.0
        %5198 = vmatpush1.msra.mxu0 0.0
        %5199 = vmatprep.subr.mxu0 0.0
        %5200 = vmatpush1.msra.mxu0 0.0
        %5201 = vmatprep.subr.mxu0 0.0
        %5202 = vmatpush1.msra.mxu0 0.0
        %5203 = vmatprep.subr.mxu0 0.0
        %5204 = vmatpush1.msra.mxu0 0.0
        %5205 = vmatprep.subr.mxu0 0.0
        %5206 = vmatpush1.msra.mxu0 0.0
        %5207 = vmatprep.subr.mxu0 0.0
        %5208 = vmatpush1.msra.mxu0 0.0
        %5209 = vmatprep.subr.mxu0 0.0
        %5210 = vmatpush1.msra.mxu0 0.0
        %5211 = vmatprep.subr.mxu0 0.0
        %5212 = vmatpush1.msra.mxu0 0.0
        %5213 = vmatprep.subr.mxu0 0.0
        %5214 = vmatpush1.msra.mxu0 %v5178
        %5215 = vmatprep.subr.mxu0 0.0
        %5216 = vmatpush2.msra.mxu0 0.0
        %5217 = vmatprep.subr.mxu0 0.0
        %5218 = vmatpush2.msra.mxu0 0.0
        %5219 = vmatprep.subr.mxu0 0.0
        %5220 = vmatpush2.msra.mxu0 0.0
        %5221 = vmatprep.subr.mxu0 0.0
        %5222 = vmatpush2.msra.mxu0 0.0
        %5223 = vmatprep.subr.mxu0 0.0
        %5224 = vmatpush2.msra.mxu0 0.0
        %5225 = vmatprep.subr.mxu0 0.0
        %5226 = vmatpush2.msra.mxu0 0.0
        %5227 = vmatprep.subr.mxu0 0.0
        %5228 = vmatpush2.msra.mxu0 0.0
        %5229 = vmatprep.subr.mxu0 0.0
        %5230 = vmatpush2.msra.mxu0 0.0
        %5231 = vmatprep.subr.mxu0 0.0
        %5232 = vmatpush2.msra.mxu0 0.0
        %5233 = vmatprep.subr.mxu0 0.0
        %5234 = vmatpush2.msra.mxu0 0.0
        %5235 = vmatprep.subr.mxu0 0.0
        %5236 = vmatpush2.msra.mxu0 0.0
        %5237 = vmatprep.subr.mxu0 0.0
        %5238 = vmatpush2.msra.mxu0 0.0
        %5239 = vmatprep.subr.mxu0 0.0
        %5240 = vmatpush2.msra.mxu0 0.0
        %5241 = vmatprep.subr.mxu0 0.0
        %5242 = vmatpush2.msra.mxu0 0.0
        %5243 = vmatprep.subr.mxu0 0.0
        %5244 = vmatpush2.msra.mxu0 0.0
        %5245 = vmatprep.subr.mxu0 0.0
        %5246 = vmatpush2.msra.mxu0 0.0
        %5247 = vmatprep.mubr.f32.mxu0 0.0
        %5248 = vmatmul.mubr.f32.gmra.mxu0 %v5181
        %v5249 = vpop.f32.mrf.mxu0
        %v5250 = vadd.f32 0.0, %v5249
        %v5251 = vpop.f32.mrf.mxu0
        %5252 = vdwg.mxu0
        %v5253 = vld [vmem:[%s0 + $0x270] sm:$0xf]
        %v5254 = vld [vmem:[%s0 + $0x274] sm:$0xf]
        %v5255 = vpack.c.bf16 %v5250, %v5250
        %v5258 = vunpack.c.l.b16 %v5253
        %v5259 = vunpack.c.l.b16 %v5254
        %v5260 = vpack.c.b16 %v5259, %v5258
        %v5263 = vsel %vm661, %v5255, 0
        %5265 = vmatprep.subr.bf16.mxu0 0
        %5266 = vmatpush1.bf16.msra.mxu0 0
        %5267 = vmatprep.subr.bf16.mxu0 0
        %5268 = vmatpush1.bf16.msra.mxu0 0
        %5269 = vmatprep.subr.bf16.mxu0 0
        %5270 = vmatpush1.bf16.msra.mxu0 0
        %5271 = vmatprep.subr.bf16.mxu0 0
        %5272 = vmatpush1.bf16.msra.mxu0 0
        %5273 = vmatprep.subr.bf16.mxu0 0
        %5274 = vmatpush1.bf16.msra.mxu0 0
        %5275 = vmatprep.subr.bf16.mxu0 0
        %5276 = vmatpush1.bf16.msra.mxu0 0
        %5277 = vmatprep.subr.bf16.mxu0 0
        %5278 = vmatpush1.bf16.msra.mxu0 0
        %5279 = vmatprep.subr.bf16.mxu0 0
        %5280 = vmatpush1.bf16.msra.mxu0 %v5260
        %5281 = vmatprep.subr.bf16.mxu0 0
        %5282 = vmatpush2.bf16.msra.mxu0 0
        %5283 = vmatprep.subr.bf16.mxu0 0
        %5284 = vmatpush2.bf16.msra.mxu0 0
        %5285 = vmatprep.subr.bf16.mxu0 0
        %5286 = vmatpush2.bf16.msra.mxu0 0
        %5287 = vmatprep.subr.bf16.mxu0 0
        %5288 = vmatpush2.bf16.msra.mxu0 0
        %5289 = vmatprep.subr.bf16.mxu0 0
        %5290 = vmatpush2.bf16.msra.mxu0 0
        %5291 = vmatprep.subr.bf16.mxu0 0
        %5292 = vmatpush2.bf16.msra.mxu0 0
        %5293 = vmatprep.subr.bf16.mxu0 0
        %5294 = vmatpush2.bf16.msra.mxu0 0
        %5295 = vmatprep.subr.bf16.mxu0 0
        %5296 = vmatpush2.bf16.msra.mxu0 0
        %5297 = vmatprep.mubr.bf16.mxu0 0
        %5298 = vmatmul.mubr.bf16.gmra.mxu0 %v5263
        %v5299 = vpop.f32.mrf.mxu0
        %v5300 = vadd.f32 0.0, %v5299
        %v5301 = vpop.f32.mrf.mxu0
        %v5302 = vpop.f32.mrf.mxu0
        %v5303 = vpop.f32.mrf.mxu0
        %5304 = vdwg.mxu0
        %v5305 = vadd.f32 %v5172, %v5300
        %5306 = vrot.lane.b32.xlu0 %v4560, 80
        %v5307 = vpop.permute.xlu0 %5306
        %v5310 = vsel %vm982, %v4922, 0
        %5312 = vmatprep.subr.mxu0 0.0
        %5313 = vmatpush1.msra.mxu0 0.0
        %5314 = vmatprep.subr.mxu0 0.0
        %5315 = vmatpush1.msra.mxu0 0.0
        %5316 = vmatprep.subr.mxu0 0.0
        %5317 = vmatpush1.msra.mxu0 0.0
        %5318 = vmatprep.subr.mxu0 0.0
        %5319 = vmatpush1.msra.mxu0 0.0
        %5320 = vmatprep.subr.mxu0 0.0
        %5321 = vmatpush1.msra.mxu0 0.0
        %5322 = vmatprep.subr.mxu0 0.0
        %5323 = vmatpush1.msra.mxu0 0.0
        %5324 = vmatprep.subr.mxu0 0.0
        %5325 = vmatpush1.msra.mxu0 0.0
        %5326 = vmatprep.subr.mxu0 0.0
        %5327 = vmatpush1.msra.mxu0 0.0
        %5328 = vmatprep.subr.mxu0 0.0
        %5329 = vmatpush1.msra.mxu0 0.0
        %5330 = vmatprep.subr.mxu0 0.0
        %5331 = vmatpush1.msra.mxu0 0.0
        %5332 = vmatprep.subr.mxu0 0.0
        %5333 = vmatpush1.msra.mxu0 0.0
        %5334 = vmatprep.subr.mxu0 0.0
        %5335 = vmatpush1.msra.mxu0 0.0
        %5336 = vmatprep.subr.mxu0 0.0
        %5337 = vmatpush1.msra.mxu0 0.0
        %5338 = vmatprep.subr.mxu0 0.0
        %5339 = vmatpush1.msra.mxu0 0.0
        %5340 = vmatprep.subr.mxu0 0.0
        %5341 = vmatpush1.msra.mxu0 0.0
        %5342 = vmatprep.subr.mxu0 0.0
        %5343 = vmatpush1.msra.mxu0 %v5307
        %5344 = vmatprep.subr.mxu0 0.0
        %5345 = vmatpush2.msra.mxu0 0.0
        %5346 = vmatprep.subr.mxu0 0.0
        %5347 = vmatpush2.msra.mxu0 0.0
        %5348 = vmatprep.subr.mxu0 0.0
        %5349 = vmatpush2.msra.mxu0 0.0
        %5350 = vmatprep.subr.mxu0 0.0
        %5351 = vmatpush2.msra.mxu0 0.0
        %5352 = vmatprep.subr.mxu0 0.0
        %5353 = vmatpush2.msra.mxu0 0.0
        %5354 = vmatprep.subr.mxu0 0.0
        %5355 = vmatpush2.msra.mxu0 0.0
        %5356 = vmatprep.subr.mxu0 0.0
        %5357 = vmatpush2.msra.mxu0 0.0
        %5358 = vmatprep.subr.mxu0 0.0
        %5359 = vmatpush2.msra.mxu0 0.0
        %5360 = vmatprep.subr.mxu0 0.0
        %5361 = vmatpush2.msra.mxu0 0.0
        %5362 = vmatprep.subr.mxu0 0.0
        %5363 = vmatpush2.msra.mxu0 0.0
        %5364 = vmatprep.subr.mxu0 0.0
        %5365 = vmatpush2.msra.mxu0 0.0
        %5366 = vmatprep.subr.mxu0 0.0
        %5367 = vmatpush2.msra.mxu0 0.0
        %5368 = vmatprep.subr.mxu0 0.0
        %5369 = vmatpush2.msra.mxu0 0.0
        %5370 = vmatprep.subr.mxu0 0.0
        %5371 = vmatpush2.msra.mxu0 0.0
        %5372 = vmatprep.subr.mxu0 0.0
        %5373 = vmatpush2.msra.mxu0 0.0
        %5374 = vmatprep.subr.mxu0 0.0
        %5375 = vmatpush2.msra.mxu0 0.0
        %5376 = vmatprep.mubr.f32.mxu0 0.0
        %5377 = vmatmul.mubr.f32.gmra.mxu0 %v5310
        %v5378 = vpop.f32.mrf.mxu0
        %v5379 = vadd.f32 0.0, %v5378
        %v5380 = vpop.f32.mrf.mxu0
        %5381 = vdwg.mxu0
        %v5382 = vld [vmem:[%s0 + $0x278] sm:$0xf]
        %v5383 = vld [vmem:[%s0 + $0x27c] sm:$0xf]
        %v5384 = vpack.c.bf16 %v5379, %v5379
        %v5387 = vunpack.c.l.b16 %v5382
        %v5388 = vunpack.c.l.b16 %v5383
        %v5389 = vpack.c.b16 %v5388, %v5387
        %v5392 = vsel %vm661, %v5384, 0
        %5394 = vmatprep.subr.bf16.mxu0 0
        %5395 = vmatpush1.bf16.msra.mxu0 0
        %5396 = vmatprep.subr.bf16.mxu0 0
        %5397 = vmatpush1.bf16.msra.mxu0 0
        %5398 = vmatprep.subr.bf16.mxu0 0
        %5399 = vmatpush1.bf16.msra.mxu0 0
        %5400 = vmatprep.subr.bf16.mxu0 0
        %5401 = vmatpush1.bf16.msra.mxu0 0
        %5402 = vmatprep.subr.bf16.mxu0 0
        %5403 = vmatpush1.bf16.msra.mxu0 0
        %5404 = vmatprep.subr.bf16.mxu0 0
        %5405 = vmatpush1.bf16.msra.mxu0 0
        %5406 = vmatprep.subr.bf16.mxu0 0
        %5407 = vmatpush1.bf16.msra.mxu0 0
        %5408 = vmatprep.subr.bf16.mxu0 0
        %5409 = vmatpush1.bf16.msra.mxu0 %v5389
        %5410 = vmatprep.subr.bf16.mxu0 0
        %5411 = vmatpush2.bf16.msra.mxu0 0
        %5412 = vmatprep.subr.bf16.mxu0 0
        %5413 = vmatpush2.bf16.msra.mxu0 0
        %5414 = vmatprep.subr.bf16.mxu0 0
        %5415 = vmatpush2.bf16.msra.mxu0 0
        %5416 = vmatprep.subr.bf16.mxu0 0
        %5417 = vmatpush2.bf16.msra.mxu0 0
        %5418 = vmatprep.subr.bf16.mxu0 0
        %5419 = vmatpush2.bf16.msra.mxu0 0
        %5420 = vmatprep.subr.bf16.mxu0 0
        %5421 = vmatpush2.bf16.msra.mxu0 0
        %5422 = vmatprep.subr.bf16.mxu0 0
        %5423 = vmatpush2.bf16.msra.mxu0 0
        %5424 = vmatprep.subr.bf16.mxu0 0
        %5425 = vmatpush2.bf16.msra.mxu0 0
        %5426 = vmatprep.mubr.bf16.mxu0 0
        %5427 = vmatmul.mubr.bf16.gmra.mxu0 %v5392
        %v5428 = vpop.f32.mrf.mxu0
        %v5429 = vadd.f32 0.0, %v5428
        %v5430 = vpop.f32.mrf.mxu0
        %v5431 = vpop.f32.mrf.mxu0
        %v5432 = vpop.f32.mrf.mxu0
        %5433 = vdwg.mxu0
        %v5434 = vadd.f32 %v5305, %v5429
        %v5435 = vld [vmem:[%s2 + $0x1d] sm:$0x1]
        %v5436 = vlaneseq
        %v5437 = vshrl.u32 %v5436, 7
        %v5438 = vsub.s32 0, %v5437
        %v5439 = vrot.slane %v5435, %v5438
        %v5440 = vadd.f32 %v5434, %v5439
        %v5441 = vadd.f32 %v4324, %v5440
        %v5442 = vsel %vm398, %v5441, 0.0
        %5443 = vadd.xlane.f32.xlu0 %v5442
        %v5444 = vpop.xlane.xlu0 %5443
        %v5445 = vmul.f32 %v5444, %v402
        %v5446 = vsub.f32 %v5441, %v5445
        %v5447 = vmul.f32 %v5446, %v5446
        %v5448 = vsel %vm398, %v5447, 0.0
        %5449 = vadd.xlane.f32.xlu0 %v5448
        %v5450 = vpop.xlane.xlu0 %5449
        %v5451 = vmul.f32 %v5450, %v402
        %v5452 = vadd.f32 %v5451, 1e-05
        %v5453 = vrsqrt.pop %v5452
        %v5454 = vmul.f32 %v5446, %v5453
        %v5455 = vld [vmem:[%s2 + $0x20] sm:$0x1]
        %v5456 = vlaneseq
        %v5457 = vshrl.u32 %v5456, 7
        %v5458 = vsub.s32 0, %v5457
        %v5459 = vrot.slane %v5455, %v5458
        %v5460 = vmul.f32 %v5454, %v5459
        %v5461 = vld [vmem:[%s2 + $0x21] sm:$0x1]
        %v5462 = vlaneseq
        %v5463 = vshrl.u32 %v5462, 7
        %v5464 = vsub.s32 0, %v5463
        %v5465 = vrot.slane %v5461, %v5464
        %v5466 = vadd.f32 %v5460, %v5465
        %v5467 = vpack.c.bf16 %v5466, %v5466
        %v5468 = vld [vmem:[%s1 + $0x60] sm:$0xf]
        %v5469 = vld [vmem:[%s1 + $0x64] sm:$0xf]
        %v5470 = vld [vmem:[%s1 + $0x68] sm:$0xf]
        %v5471 = vld [vmem:[%s1 + $0x6c] sm:$0xf]
        %v5472 = vld [vmem:[%s1 + $0x70] sm:$0xf]
        %v5473 = vld [vmem:[%s1 + $0x74] sm:$0xf]
        %v5474 = vld [vmem:[%s1 + $0x78] sm:$0xf]
        %v5475 = vld [vmem:[%s1 + $0x7c] sm:$0xf]
        %v5476 = vld [vmem:[%s3 + $0x3] sm:$0x1]
        %v5477 = vlaneseq
        %v5478 = vshrl.u32 %v5477, 7
        %v5479 = vsub.s32 0, %v5478
        %v5480 = vrot.slane %v5476, %v5479
        %v5489 = vunpack.c.l.b16 %v5468
        %v5490 = vunpack.c.l.b16 %v5469
        %v5491 = vunpack.c.l.b16 %v5470
        %v5492 = vunpack.c.l.b16 %v5471
        %v5493 = vunpack.c.l.b16 %v5472
        %v5494 = vunpack.c.l.b16 %v5473
        %v5495 = vunpack.c.l.b16 %v5474
        %v5496 = vunpack.c.l.b16 %v5475
        %v5497 = vpack.c.b16 %v5490, %v5489
        %v5498 = vpack.c.b16 %v5492, %v5491
        %v5499 = vpack.c.b16 %v5494, %v5493
        %v5500 = vpack.c.b16 %v5496, %v5495
        %v5506 = vsel %vm398, %v5467, 0
        %5508 = vmatprep.subr.bf16.mxu0 0
        %5509 = vmatpush1.bf16.msra.mxu0 0
        %5510 = vmatprep.subr.bf16.mxu0 0
        %5511 = vmatpush1.bf16.msra.mxu0 0
        %5512 = vmatprep.subr.bf16.mxu0 0
        %5513 = vmatpush1.bf16.msra.mxu0 0
        %5514 = vmatprep.subr.bf16.mxu0 0
        %5515 = vmatpush1.bf16.msra.mxu0 0
        %5516 = vmatprep.subr.bf16.mxu0 0
        %5517 = vmatpush1.bf16.msra.mxu0 %v5500
        %5518 = vmatprep.subr.bf16.mxu0 0
        %5519 = vmatpush1.bf16.msra.mxu0 %v5499
        %5520 = vmatprep.subr.bf16.mxu0 0
        %5521 = vmatpush1.bf16.msra.mxu0 %v5498
        %5522 = vmatprep.subr.bf16.mxu0 0
        %5523 = vmatpush1.bf16.msra.mxu0 %v5497
        %5524 = vmatprep.subr.bf16.mxu0 0
        %5525 = vmatpush2.bf16.msra.mxu0 0
        %5526 = vmatprep.subr.bf16.mxu0 0
        %5527 = vmatpush2.bf16.msra.mxu0 0
        %5528 = vmatprep.subr.bf16.mxu0 0
        %5529 = vmatpush2.bf16.msra.mxu0 0
        %5530 = vmatprep.subr.bf16.mxu0 0
        %5531 = vmatpush2.bf16.msra.mxu0 0
        %5532 = vmatprep.subr.bf16.mxu0 0
        %5533 = vmatpush2.bf16.msra.mxu0 0
        %5534 = vmatprep.subr.bf16.mxu0 0
        %5535 = vmatpush2.bf16.msra.mxu0 0
        %5536 = vmatprep.subr.bf16.mxu0 0
        %5537 = vmatpush2.bf16.msra.mxu0 0
        %5538 = vmatprep.subr.bf16.mxu0 0
        %5539 = vmatpush2.bf16.msra.mxu0 0
        %5540 = vmatprep.mubr.bf16.mxu0 0
        %5541 = vmatmul.mubr.bf16.gmra.mxu0 %v5506
        %v5542 = vpop.f32.mrf.mxu0
        %v5543 = vadd.f32 %v5480, %v5542
        %v5544 = vpop.f32.mrf.mxu0
        %v5545 = vpop.f32.mrf.mxu0
        %v5546 = vpop.f32.mrf.mxu0
        %5547 = vdwg.mxu0
        %v5548 = vmul.f32 %v5543, 0.5
        %v5549 = vmul.f32 %v5543, 0.044715
        %v5550 = vmul.f32 %v5549, %v5543
        %v5551 = vmul.f32 %v5550, %v5543
        %v5552 = vadd.f32 %v5543, %v5551
        %v5553 = vmul.f32 %v5552, 0.7978846
        %v5554 = vtanh.pop %v5553
        %v5555 = vadd.f32 %v5554, 1.0
        %v5556 = vmul.f32 %v5548, %v5555
        %v5557 = vpack.c.bf16 %v5556, %v5556
        %v5558 = vld [vmem:[%s0 + $0x280] sm:$0xf]
        %v5559 = vld [vmem:[%s0 + $0x284] sm:$0xf]
        %v5560 = vld [vmem:[%s0 + $0x288] sm:$0xf]
        %v5561 = vld [vmem:[%s0 + $0x28c] sm:$0xf]
        %v5562 = vld [vmem:[%s0 + $0x290] sm:$0xf]
        %v5563 = vld [vmem:[%s0 + $0x294] sm:$0xf]
        %v5564 = vld [vmem:[%s0 + $0x298] sm:$0xf]
        %v5565 = vld [vmem:[%s0 + $0x29c] sm:$0xf]
        %v5566 = vld [vmem:[%s0 + $0x2a0] sm:$0xf]
        %v5567 = vld [vmem:[%s0 + $0x2a4] sm:$0xf]
        %v5568 = vld [vmem:[%s0 + $0x2a8] sm:$0xf]
        %v5569 = vld [vmem:[%s0 + $0x2ac] sm:$0xf]
        %v5570 = vld [vmem:[%s0 + $0x2b0] sm:$0xf]
        %v5571 = vld [vmem:[%s0 + $0x2b4] sm:$0xf]
        %v5572 = vld [vmem:[%s0 + $0x2b8] sm:$0xf]
        %v5573 = vld [vmem:[%s0 + $0x2bc] sm:$0xf]
        %v5574 = vld [vmem:[%s2 + $0x22] sm:$0x1]
        %v5575 = vlaneseq
        %v5576 = vshrl.u32 %v5575, 7
        %v5577 = vsub.s32 0, %v5576
        %v5578 = vrot.slane %v5574, %v5577
        %v5595 = vunpack.c.l.b16 %v5558
        %v5596 = vunpack.c.l.b16 %v5559
        %v5597 = vunpack.c.l.b16 %v5560
        %v5598 = vunpack.c.l.b16 %v5561
        %v5599 = vunpack.c.l.b16 %v5562
        %v5600 = vunpack.c.l.b16 %v5563
        %v5601 = vunpack.c.l.b16 %v5564
        %v5602 = vunpack.c.l.b16 %v5565
        %v5603 = vunpack.c.l.b16 %v5566
        %v5604 = vunpack.c.l.b16 %v5567
        %v5605 = vunpack.c.l.b16 %v5568
        %v5606 = vunpack.c.l.b16 %v5569
        %v5607 = vunpack.c.l.b16 %v5570
        %v5608 = vunpack.c.l.b16 %v5571
        %v5609 = vunpack.c.l.b16 %v5572
        %v5610 = vunpack.c.l.b16 %v5573
        %v5611 = vpack.c.b16 %v5596, %v5595
        %v5612 = vpack.c.b16 %v5598, %v5597
        %v5613 = vpack.c.b16 %v5600, %v5599
        %v5614 = vpack.c.b16 %v5602, %v5601
        %v5615 = vpack.c.b16 %v5604, %v5603
        %v5616 = vpack.c.b16 %v5606, %v5605
        %v5617 = vpack.c.b16 %v5608, %v5607
        %v5618 = vpack.c.b16 %v5610, %v5609
        %5627 = vmatprep.subr.bf16.mxu0 0
        %5628 = vmatpush1.bf16.msra.mxu0 %v5618
        %5629 = vmatprep.subr.bf16.mxu0 0
        %5630 = vmatpush1.bf16.msra.mxu0 %v5617
        %5631 = vmatprep.subr.bf16.mxu0 0
        %5632 = vmatpush1.bf16.msra.mxu0 %v5616
        %5633 = vmatprep.subr.bf16.mxu0 0
        %5634 = vmatpush1.bf16.msra.mxu0 %v5615
        %5635 = vmatprep.subr.bf16.mxu0 0
        %5636 = vmatpush1.bf16.msra.mxu0 %v5614
        %5637 = vmatprep.subr.bf16.mxu0 0
        %5638 = vmatpush1.bf16.msra.mxu0 %v5613
        %5639 = vmatprep.subr.bf16.mxu0 0
        %5640 = vmatpush1.bf16.msra.mxu0 %v5612
        %5641 = vmatprep.subr.bf16.mxu0 0
        %5642 = vmatpush1.bf16.msra.mxu0 %v5611
        %5643 = vmatprep.subr.bf16.mxu0 0
        %5644 = vmatpush2.bf16.msra.mxu0 0
        %5645 = vmatprep.subr.bf16.mxu0 0
        %5646 = vmatpush2.bf16.msra.mxu0 0
        %5647 = vmatprep.subr.bf16.mxu0 0
        %5648 = vmatpush2.bf16.msra.mxu0 0
        %5649 = vmatprep.subr.bf16.mxu0 0
        %5650 = vmatpush2.bf16.msra.mxu0 0
        %5651 = vmatprep.subr.bf16.mxu0 0
        %5652 = vmatpush2.bf16.msra.mxu0 0
        %5653 = vmatprep.subr.bf16.mxu0 0
        %5654 = vmatpush2.bf16.msra.mxu0 0
        %5655 = vmatprep.subr.bf16.mxu0 0
        %5656 = vmatpush2.bf16.msra.mxu0 0
        %5657 = vmatprep.subr.bf16.mxu0 0
        %5658 = vmatpush2.bf16.msra.mxu0 0
        %5659 = vmatprep.mubr.bf16.mxu0 0
        %5660 = vmatmul.mubr.bf16.gmra.mxu0 %v5557
        %v5661 = vpop.f32.mrf.mxu0
        %v5662 = vadd.f32 %v5578, %v5661
        %v5663 = vpop.f32.mrf.mxu0
        %v5664 = vpop.f32.mrf.mxu0
        %v5665 = vpop.f32.mrf.mxu0
        %5666 = vdwg.mxu0
        %v5667 = vadd.f32 %v5466, %v5662
        %v5668 = vsel %vm398, %v5667, 0.0
        %5669 = vadd.xlane.f32.xlu0 %v5668
        %v5670 = vpop.xlane.xlu0 %5669
        %v5671 = vmul.f32 %v5670, %v402
        %v5672 = vsub.f32 %v5667, %v5671
        %v5673 = vmul.f32 %v5672, %v5672
        %v5674 = vsel %vm398, %v5673, 0.0
        %5675 = vadd.xlane.f32.xlu0 %v5674
        %v5676 = vpop.xlane.xlu0 %5675
        %v5677 = vmul.f32 %v5676, %v402
        %v5678 = vadd.f32 %v5677, 1e-05
        %v5679 = vrsqrt.pop %v5678
        %v5680 = vmul.f32 %v5672, %v5679
        %v5681 = vld [vmem:[%s2 + $0x23] sm:$0x1]
        %v5682 = vlaneseq
        %v5683 = vshrl.u32 %v5682, 7
        %v5684 = vsub.s32 0, %v5683
        %v5685 = vrot.slane %v5681, %v5684
        %v5686 = vmul.f32 %v5680, %v5685
        %v5687 = vld [vmem:[%s2 + $0x24] sm:$0x1]
        %v5688 = vlaneseq
        %v5689 = vshrl.u32 %v5688, 7
        %v5690 = vsub.s32 0, %v5689
        %v5691 = vrot.slane %v5687, %v5690
        %v5692 = vadd.f32 %v5686, %v5691
        %v5693 = vpack.c.bf16 %v5692, %v5692
        %v5694 = vld [vmem:[%s0 + $0x2c0] sm:$0xf]
        %v5695 = vld [vmem:[%s0 + $0x2c4] sm:$0xf]
        %v5696 = vld [vmem:[%s0 + $0x2c8] sm:$0xf]
        %v5697 = vld [vmem:[%s0 + $0x2cc] sm:$0xf]
        %v5698 = vld [vmem:[%s0 + $0x2d0] sm:$0xf]
        %v5699 = vld [vmem:[%s0 + $0x2d4] sm:$0xf]
        %v5700 = vld [vmem:[%s0 + $0x2d8] sm:$0xf]
        %v5701 = vld [vmem:[%s0 + $0x2dc] sm:$0xf]
        %v5702 = vld [vmem:[%s2 + $0x25] sm:$0x1]
        %v5703 = vlaneseq
        %v5704 = vshrl.u32 %v5703, 7
        %v5705 = vsub.s32 0, %v5704
        %v5706 = vrot.slane %v5702, %v5705
        %v5715 = vunpack.c.l.b16 %v5694
        %v5716 = vunpack.c.l.b16 %v5695
        %v5717 = vunpack.c.l.b16 %v5696
        %v5718 = vunpack.c.l.b16 %v5697
        %v5719 = vunpack.c.l.b16 %v5698
        %v5720 = vunpack.c.l.b16 %v5699
        %v5721 = vunpack.c.l.b16 %v5700
        %v5722 = vunpack.c.l.b16 %v5701
        %v5723 = vpack.c.b16 %v5716, %v5715
        %v5724 = vpack.c.b16 %v5718, %v5717
        %v5725 = vpack.c.b16 %v5720, %v5719
        %v5726 = vpack.c.b16 %v5722, %v5721
        %v5732 = vsel %vm398, %v5693, 0
        %5734 = vmatprep.subr.bf16.mxu0 0
        %5735 = vmatpush1.bf16.msra.mxu0 0
        %5736 = vmatprep.subr.bf16.mxu0 0
        %5737 = vmatpush1.bf16.msra.mxu0 0
        %5738 = vmatprep.subr.bf16.mxu0 0
        %5739 = vmatpush1.bf16.msra.mxu0 0
        %5740 = vmatprep.subr.bf16.mxu0 0
        %5741 = vmatpush1.bf16.msra.mxu0 0
        %5742 = vmatprep.subr.bf16.mxu0 0
        %5743 = vmatpush1.bf16.msra.mxu0 %v5726
        %5744 = vmatprep.subr.bf16.mxu0 0
        %5745 = vmatpush1.bf16.msra.mxu0 %v5725
        %5746 = vmatprep.subr.bf16.mxu0 0
        %5747 = vmatpush1.bf16.msra.mxu0 %v5724
        %5748 = vmatprep.subr.bf16.mxu0 0
        %5749 = vmatpush1.bf16.msra.mxu0 %v5723
        %5750 = vmatprep.subr.bf16.mxu0 0
        %5751 = vmatpush2.bf16.msra.mxu0 0
        %5752 = vmatprep.subr.bf16.mxu0 0
        %5753 = vmatpush2.bf16.msra.mxu0 0
        %5754 = vmatprep.subr.bf16.mxu0 0
        %5755 = vmatpush2.bf16.msra.mxu0 0
        %5756 = vmatprep.subr.bf16.mxu0 0
        %5757 = vmatpush2.bf16.msra.mxu0 0
        %5758 = vmatprep.subr.bf16.mxu0 0
        %5759 = vmatpush2.bf16.msra.mxu0 0
        %5760 = vmatprep.subr.bf16.mxu0 0
        %5761 = vmatpush2.bf16.msra.mxu0 0
        %5762 = vmatprep.subr.bf16.mxu0 0
        %5763 = vmatpush2.bf16.msra.mxu0 0
        %5764 = vmatprep.subr.bf16.mxu0 0
        %5765 = vmatpush2.bf16.msra.mxu0 0
        %5766 = vmatprep.mubr.bf16.mxu0 0
        %5767 = vmatmul.mubr.bf16.gmra.mxu0 %v5732
        %v5768 = vpop.f32.mrf.mxu0
        %v5769 = vadd.f32 %v5706, %v5768
        %v5770 = vpop.f32.mrf.mxu0
        %v5771 = vpop.f32.mrf.mxu0
        %v5772 = vpop.f32.mrf.mxu0
        %5773 = vdwg.mxu0
        %v5774 = vmul.f32 %v5769, 0.25
        %v5775 = vld [vmem:[%s0 + $0x2e0] sm:$0xf]
        %v5776 = vld [vmem:[%s0 + $0x2e4] sm:$0xf]
        %v5777 = vld [vmem:[%s0 + $0x2e8] sm:$0xf]
        %v5778 = vld [vmem:[%s0 + $0x2ec] sm:$0xf]
        %v5779 = vld [vmem:[%s0 + $0x2f0] sm:$0xf]
        %v5780 = vld [vmem:[%s0 + $0x2f4] sm:$0xf]
        %v5781 = vld [vmem:[%s0 + $0x2f8] sm:$0xf]
        %v5782 = vld [vmem:[%s0 + $0x2fc] sm:$0xf]
        %v5783 = vld [vmem:[%s2 + $0x26] sm:$0x1]
        %v5784 = vlaneseq
        %v5785 = vshrl.u32 %v5784, 7
        %v5786 = vsub.s32 0, %v5785
        %v5787 = vrot.slane %v5783, %v5786
        %v5796 = vunpack.c.l.b16 %v5775
        %v5797 = vunpack.c.l.b16 %v5776
        %v5798 = vunpack.c.l.b16 %v5777
        %v5799 = vunpack.c.l.b16 %v5778
        %v5800 = vunpack.c.l.b16 %v5779
        %v5801 = vunpack.c.l.b16 %v5780
        %v5802 = vunpack.c.l.b16 %v5781
        %v5803 = vunpack.c.l.b16 %v5782
        %v5804 = vpack.c.b16 %v5797, %v5796
        %v5805 = vpack.c.b16 %v5799, %v5798
        %v5806 = vpack.c.b16 %v5801, %v5800
        %v5807 = vpack.c.b16 %v5803, %v5802
        %5812 = vmatprep.subr.bf16.mxu0 0
        %5813 = vmatpush1.bf16.msra.mxu0 0
        %5814 = vmatprep.subr.bf16.mxu0 0
        %5815 = vmatpush1.bf16.msra.mxu0 0
        %5816 = vmatprep.subr.bf16.mxu0 0
        %5817 = vmatpush1.bf16.msra.mxu0 0
        %5818 = vmatprep.subr.bf16.mxu0 0
        %5819 = vmatpush1.bf16.msra.mxu0 0
        %5820 = vmatprep.subr.bf16.mxu0 0
        %5821 = vmatpush1.bf16.msra.mxu0 %v5807
        %5822 = vmatprep.subr.bf16.mxu0 0
        %5823 = vmatpush1.bf16.msra.mxu0 %v5806
        %5824 = vmatprep.subr.bf16.mxu0 0
        %5825 = vmatpush1.bf16.msra.mxu0 %v5805
        %5826 = vmatprep.subr.bf16.mxu0 0
        %5827 = vmatpush1.bf16.msra.mxu0 %v5804
        %5828 = vmatprep.subr.bf16.mxu0 0
        %5829 = vmatpush2.bf16.msra.mxu0 0
        %5830 = vmatprep.subr.bf16.mxu0 0
        %5831 = vmatpush2.bf16.msra.mxu0 0
        %5832 = vmatprep.subr.bf16.mxu0 0
        %5833 = vmatpush2.bf16.msra.mxu0 0
        %5834 = vmatprep.subr.bf16.mxu0 0
        %5835 = vmatpush2.bf16.msra.mxu0 0
        %5836 = vmatprep.subr.bf16.mxu0 0
        %5837 = vmatpush2.bf16.msra.mxu0 0
        %5838 = vmatprep.subr.bf16.mxu0 0
        %5839 = vmatpush2.bf16.msra.mxu0 0
        %5840 = vmatprep.subr.bf16.mxu0 0
        %5841 = vmatpush2.bf16.msra.mxu0 0
        %5842 = vmatprep.subr.bf16.mxu0 0
        %5843 = vmatpush2.bf16.msra.mxu0 0
        %5844 = vmatprep.mubr.bf16.mxu0 0
        %5845 = vmatmul.mubr.bf16.gmra.mxu0 %v5732
        %v5846 = vpop.f32.mrf.mxu0
        %v5847 = vadd.f32 %v5787, %v5846
        %v5848 = vpop.f32.mrf.mxu0
        %v5849 = vpop.f32.mrf.mxu0
        %v5850 = vpop.f32.mrf.mxu0
        %5851 = vdwg.mxu0
        %v5852 = vld [vmem:[%s0 + $0x300] sm:$0xf]
        %v5853 = vld [vmem:[%s0 + $0x304] sm:$0xf]
        %v5854 = vld [vmem:[%s0 + $0x308] sm:$0xf]
        %v5855 = vld [vmem:[%s0 + $0x30c] sm:$0xf]
        %v5856 = vld [vmem:[%s0 + $0x310] sm:$0xf]
        %v5857 = vld [vmem:[%s0 + $0x314] sm:$0xf]
        %v5858 = vld [vmem:[%s0 + $0x318] sm:$0xf]
        %v5859 = vld [vmem:[%s0 + $0x31c] sm:$0xf]
        %v5860 = vld [vmem:[%s2 + $0x27] sm:$0x1]
        %v5861 = vlaneseq
        %v5862 = vshrl.u32 %v5861, 7
        %v5863 = vsub.s32 0, %v5862
        %v5864 = vrot.slane %v5860, %v5863
        %v5873 = vunpack.c.l.b16 %v5852
        %v5874 = vunpack.c.l.b16 %v5853
        %v5875 = vunpack.c.l.b16 %v5854
        %v5876 = vunpack.c.l.b16 %v5855
        %v5877 = vunpack.c.l.b16 %v5856
        %v5878 = vunpack.c.l.b16 %v5857
        %v5879 = vunpack.c.l.b16 %v5858
        %v5880 = vunpack.c.l.b16 %v5859
        %v5881 = vpack.c.b16 %v5874, %v5873
        %v5882 = vpack.c.b16 %v5876, %v5875
        %v5883 = vpack.c.b16 %v5878, %v5877
        %v5884 = vpack.c.b16 %v5880, %v5879
        %5889 = vmatprep.subr.bf16.mxu0 0
        %5890 = vmatpush1.bf16.msra.mxu0 0
        %5891 = vmatprep.subr.bf16.mxu0 0
        %5892 = vmatpush1.bf16.msra.mxu0 0
        %5893 = vmatprep.subr.bf16.mxu0 0
        %5894 = vmatpush1.bf16.msra.mxu0 0
        %5895 = vmatprep.subr.bf16.mxu0 0
        %5896 = vmatpush1.bf16.msra.mxu0 0
        %5897 = vmatprep.subr.bf16.mxu0 0
        %5898 = vmatpush1.bf16.msra.mxu0 %v5884
        %5899 = vmatprep.subr.bf16.mxu0 0
        %5900 = vmatpush1.bf16.msra.mxu0 %v5883
        %5901 = vmatprep.subr.bf16.mxu0 0
        %5902 = vmatpush1.bf16.msra.mxu0 %v5882
        %5903 = vmatprep.subr.bf16.mxu0 0
        %5904 = vmatpush1.bf16.msra.mxu0 %v5881
        %5905 = vmatprep.subr.bf16.mxu0 0
        %5906 = vmatpush2.bf16.msra.mxu0 0
        %5907 = vmatprep.subr.bf16.mxu0 0
        %5908 = vmatpush2.bf16.msra.mxu0 0
        %5909 = vmatprep.subr.bf16.mxu0 0
        %5910 = vmatpush2.bf16.msra.mxu0 0
        %5911 = vmatprep.subr.bf16.mxu0 0
        %5912 = vmatpush2.bf16.msra.mxu0 0
        %5913 = vmatprep.subr.bf16.mxu0 0
        %5914 = vmatpush2.bf16.msra.mxu0 0
        %5915 = vmatprep.subr.bf16.mxu0 0
        %5916 = vmatpush2.bf16.msra.mxu0 0
        %5917 = vmatprep.subr.bf16.mxu0 0
        %5918 = vmatpush2.bf16.msra.mxu0 0
        %5919 = vmatprep.subr.bf16.mxu0 0
        %5920 = vmatpush2.bf16.msra.mxu0 0
        %5921 = vmatprep.mubr.bf16.mxu0 0
        %5922 = vmatmul.mubr.bf16.gmra.mxu0 %v5732
        %v5923 = vpop.f32.mrf.mxu0
        %v5924 = vadd.f32 %v5864, %v5923
        %v5925 = vpop.f32.mrf.mxu0
        %v5926 = vpop.f32.mrf.mxu0
        %v5927 = vpop.f32.mrf.mxu0
        %5928 = vdwg.mxu0
        %v5930 = vsel %vm661, %v5774, 0
        %v5933 = vsel %vm661, %v5847, 0
        %5935 = vmatprep.subr.mxu0 0.0
        %5936 = vmatpush1.xpose.msra.mxu0 0.0
        %5937 = vmatprep.subr.mxu0 0.0
        %5938 = vmatpush1.xpose.msra.mxu0 0.0
        %5939 = vmatprep.subr.mxu0 0.0
        %5940 = vmatpush1.xpose.msra.mxu0 0.0
        %5941 = vmatprep.subr.mxu0 0.0
        %5942 = vmatpush1.xpose.msra.mxu0 0.0
        %5943 = vmatprep.subr.mxu0 0.0
        %5944 = vmatpush1.xpose.msra.mxu0 0.0
        %5945 = vmatprep.subr.mxu0 0.0
        %5946 = vmatpush1.xpose.msra.mxu0 0.0
        %5947 = vmatprep.subr.mxu0 0.0
        %5948 = vmatpush1.xpose.msra.mxu0 0.0
        %5949 = vmatprep.subr.mxu0 0.0
        %5950 = vmatpush1.xpose.msra.mxu0 0.0
        %5951 = vmatprep.subr.mxu0 0.0
        %5952 = vmatpush1.xpose.msra.mxu0 0.0
        %5953 = vmatprep.subr.mxu0 0.0
        %5954 = vmatpush1.xpose.msra.mxu0 0.0
        %5955 = vmatprep.subr.mxu0 0.0
        %5956 = vmatpush1.xpose.msra.mxu0 0.0
        %5957 = vmatprep.subr.mxu0 0.0
        %5958 = vmatpush1.xpose.msra.mxu0 0.0
        %5959 = vmatprep.subr.mxu0 0.0
        %5960 = vmatpush1.xpose.msra.mxu0 0.0
        %5961 = vmatprep.subr.mxu0 0.0
        %5962 = vmatpush1.xpose.msra.mxu0 0.0
        %5963 = vmatprep.subr.mxu0 0.0
        %5964 = vmatpush1.xpose.msra.mxu0 0.0
        %5965 = vmatprep.subr.mxu0 0.0
        %5966 = vmatpush1.xpose.msra.mxu0 %v5933
        %5967 = vmatprep.subr.mxu0 0.0
        %5968 = vmatpush2.xpose.msra.mxu0 0.0
        %5969 = vmatprep.subr.mxu0 0.0
        %5970 = vmatpush2.xpose.msra.mxu0 0.0
        %5971 = vmatprep.subr.mxu0 0.0
        %5972 = vmatpush2.xpose.msra.mxu0 0.0
        %5973 = vmatprep.subr.mxu0 0.0
        %5974 = vmatpush2.xpose.msra.mxu0 0.0
        %5975 = vmatprep.subr.mxu0 0.0
        %5976 = vmatpush2.xpose.msra.mxu0 0.0
        %5977 = vmatprep.subr.mxu0 0.0
        %5978 = vmatpush2.xpose.msra.mxu0 0.0
        %5979 = vmatprep.subr.mxu0 0.0
        %5980 = vmatpush2.xpose.msra.mxu0 0.0
        %5981 = vmatprep.subr.mxu0 0.0
        %5982 = vmatpush2.xpose.msra.mxu0 0.0
        %5983 = vmatprep.subr.mxu0 0.0
        %5984 = vmatpush2.xpose.msra.mxu0 0.0
        %5985 = vmatprep.subr.mxu0 0.0
        %5986 = vmatpush2.xpose.msra.mxu0 0.0
        %5987 = vmatprep.subr.mxu0 0.0
        %5988 = vmatpush2.xpose.msra.mxu0 0.0
        %5989 = vmatprep.subr.mxu0 0.0
        %5990 = vmatpush2.xpose.msra.mxu0 0.0
        %5991 = vmatprep.subr.mxu0 0.0
        %5992 = vmatpush2.xpose.msra.mxu0 0.0
        %5993 = vmatprep.subr.mxu0 0.0
        %5994 = vmatpush2.xpose.msra.mxu0 0.0
        %5995 = vmatprep.subr.mxu0 0.0
        %5996 = vmatpush2.xpose.msra.mxu0 0.0
        %5997 = vmatprep.subr.mxu0 0.0
        %5998 = vmatpush2.xpose.msra.mxu0 0.0
        %5999 = vmatprep.mubr.f32.mxu0 0.0
        %6000 = vmatmul.mubr.f32.gmra.mxu0 %v5930
        %v6001 = vpop.f32.mrf.mxu0
        %v6002 = vadd.f32 0.0, %v6001
        %v6003 = vpop.f32.mrf.mxu0
        %6004 = vdwg.mxu0
        %6005 = vrot.lane.b32.xlu0 %v5774, 112
        %v6006 = vpop.permute.xlu0 %6005
        %6007 = vrot.lane.b32.xlu0 %v5847, 112
        %v6008 = vpop.permute.xlu0 %6007
        %v6009 = vsel %vm661, %v6006, 0
        %v6011 = vsel %vm661, %v6008, 0
        %6013 = vmatprep.subr.mxu0 0.0
        %6014 = vmatpush1.xpose.msra.mxu0 0.0
        %6015 = vmatprep.subr.mxu0 0.0
        %6016 = vmatpush1.xpose.msra.mxu0 0.0
        %6017 = vmatprep.subr.mxu0 0.0
        %6018 = vmatpush1.xpose.msra.mxu0 0.0
        %6019 = vmatprep.subr.mxu0 0.0
        %6020 = vmatpush1.xpose.msra.mxu0 0.0
        %6021 = vmatprep.subr.mxu0 0.0
        %6022 = vmatpush1.xpose.msra.mxu0 0.0
        %6023 = vmatprep.subr.mxu0 0.0
        %6024 = vmatpush1.xpose.msra.mxu0 0.0
        %6025 = vmatprep.subr.mxu0 0.0
        %6026 = vmatpush1.xpose.msra.mxu0 0.0
        %6027 = vmatprep.subr.mxu0 0.0
        %6028 = vmatpush1.xpose.msra.mxu0 0.0
        %6029 = vmatprep.subr.mxu0 0.0
        %6030 = vmatpush1.xpose.msra.mxu0 0.0
        %6031 = vmatprep.subr.mxu0 0.0
        %6032 = vmatpush1.xpose.msra.mxu0 0.0
        %6033 = vmatprep.subr.mxu0 0.0
        %6034 = vmatpush1.xpose.msra.mxu0 0.0
        %6035 = vmatprep.subr.mxu0 0.0
        %6036 = vmatpush1.xpose.msra.mxu0 0.0
        %6037 = vmatprep.subr.mxu0 0.0
        %6038 = vmatpush1.xpose.msra.mxu0 0.0
        %6039 = vmatprep.subr.mxu0 0.0
        %6040 = vmatpush1.xpose.msra.mxu0 0.0
        %6041 = vmatprep.subr.mxu0 0.0
        %6042 = vmatpush1.xpose.msra.mxu0 0.0
        %6043 = vmatprep.subr.mxu0 0.0
        %6044 = vmatpush1.xpose.msra.mxu0 %v6011
        %6045 = vmatprep.subr.mxu0 0.0
        %6046 = vmatpush2.xpose.msra.mxu0 0.0
        %6047 = vmatprep.subr.mxu0 0.0
        %6048 = vmatpush2.xpose.msra.mxu0 0.0
        %6049 = vmatprep.subr.mxu0 0.0
        %6050 = vmatpush2.xpose.msra.mxu0 0.0
        %6051 = vmatprep.subr.mxu0 0.0
        %6052 = vmatpush2.xpose.msra.mxu0 0.0
        %6053 = vmatprep.subr.mxu0 0.0
        %6054 = vmatpush2.xpose.msra.mxu0 0.0
        %6055 = vmatprep.subr.mxu0 0.0
        %6056 = vmatpush2.xpose.msra.mxu0 0.0
        %6057 = vmatprep.subr.mxu0 0.0
        %6058 = vmatpush2.xpose.msra.mxu0 0.0
        %6059 = vmatprep.subr.mxu0 0.0
        %6060 = vmatpush2.xpose.msra.mxu0 0.0
        %6061 = vmatprep.subr.mxu0 0.0
        %6062 = vmatpush2.xpose.msra.mxu0 0.0
        %6063 = vmatprep.subr.mxu0 0.0
        %6064 = vmatpush2.xpose.msra.mxu0 0.0
        %6065 = vmatprep.subr.mxu0 0.0
        %6066 = vmatpush2.xpose.msra.mxu0 0.0
        %6067 = vmatprep.subr.mxu0 0.0
        %6068 = vmatpush2.xpose.msra.mxu0 0.0
        %6069 = vmatprep.subr.mxu0 0.0
        %6070 = vmatpush2.xpose.msra.mxu0 0.0
        %6071 = vmatprep.subr.mxu0 0.0
        %6072 = vmatpush2.xpose.msra.mxu0 0.0
        %6073 = vmatprep.subr.mxu0 0.0
        %6074 = vmatpush2.xpose.msra.mxu0 0.0
        %6075 = vmatprep.subr.mxu0 0.0
        %6076 = vmatpush2.xpose.msra.mxu0 0.0
        %6077 = vmatprep.mubr.f32.mxu0 0.0
        %6078 = vmatmul.mubr.f32.gmra.mxu0 %v6009
        %v6079 = vpop.f32.mrf.mxu0
        %v6080 = vadd.f32 0.0, %v6079
        %v6081 = vpop.f32.mrf.mxu0
        %6082 = vdwg.mxu0
        %6083 = vrot.lane.b32.xlu0 %v5774, 96
        %v6084 = vpop.permute.xlu0 %6083
        %6085 = vrot.lane.b32.xlu0 %v5847, 96
        %v6086 = vpop.permute.xlu0 %6085
        %v6087 = vsel %vm661, %v6084, 0
        %v6089 = vsel %vm661, %v6086, 0
        %6091 = vmatprep.subr.mxu0 0.0
        %6092 = vmatpush1.xpose.msra.mxu0 0.0
        %6093 = vmatprep.subr.mxu0 0.0
        %6094 = vmatpush1.xpose.msra.mxu0 0.0
        %6095 = vmatprep.subr.mxu0 0.0
        %6096 = vmatpush1.xpose.msra.mxu0 0.0
        %6097 = vmatprep.subr.mxu0 0.0
        %6098 = vmatpush1.xpose.msra.mxu0 0.0
        %6099 = vmatprep.subr.mxu0 0.0
        %6100 = vmatpush1.xpose.msra.mxu0 0.0
        %6101 = vmatprep.subr.mxu0 0.0
        %6102 = vmatpush1.xpose.msra.mxu0 0.0
        %6103 = vmatprep.subr.mxu0 0.0
        %6104 = vmatpush1.xpose.msra.mxu0 0.0
        %6105 = vmatprep.subr.mxu0 0.0
        %6106 = vmatpush1.xpose.msra.mxu0 0.0
        %6107 = vmatprep.subr.mxu0 0.0
        %6108 = vmatpush1.xpose.msra.mxu0 0.0
        %6109 = vmatprep.subr.mxu0 0.0
        %6110 = vmatpush1.xpose.msra.mxu0 0.0
        %6111 = vmatprep.subr.mxu0 0.0
        %6112 = vmatpush1.xpose.msra.mxu0 0.0
        %6113 = vmatprep.subr.mxu0 0.0
        %6114 = vmatpush1.xpose.msra.mxu0 0.0
        %6115 = vmatprep.subr.mxu0 0.0
        %6116 = vmatpush1.xpose.msra.mxu0 0.0
        %6117 = vmatprep.subr.mxu0 0.0
        %6118 = vmatpush1.xpose.msra.mxu0 0.0
        %6119 = vmatprep.subr.mxu0 0.0
        %6120 = vmatpush1.xpose.msra.mxu0 0.0
        %6121 = vmatprep.subr.mxu0 0.0
        %6122 = vmatpush1.xpose.msra.mxu0 %v6089
        %6123 = vmatprep.subr.mxu0 0.0
        %6124 = vmatpush2.xpose.msra.mxu0 0.0
        %6125 = vmatprep.subr.mxu0 0.0
        %6126 = vmatpush2.xpose.msra.mxu0 0.0
        %6127 = vmatprep.subr.mxu0 0.0
        %6128 = vmatpush2.xpose.msra.mxu0 0.0
        %6129 = vmatprep.subr.mxu0 0.0
        %6130 = vmatpush2.xpose.msra.mxu0 0.0
        %6131 = vmatprep.subr.mxu0 0.0
        %6132 = vmatpush2.xpose.msra.mxu0 0.0
        %6133 = vmatprep.subr.mxu0 0.0
        %6134 = vmatpush2.xpose.msra.mxu0 0.0
        %6135 = vmatprep.subr.mxu0 0.0
        %6136 = vmatpush2.xpose.msra.mxu0 0.0
        %6137 = vmatprep.subr.mxu0 0.0
        %6138 = vmatpush2.xpose.msra.mxu0 0.0
        %6139 = vmatprep.subr.mxu0 0.0
        %6140 = vmatpush2.xpose.msra.mxu0 0.0
        %6141 = vmatprep.subr.mxu0 0.0
        %6142 = vmatpush2.xpose.msra.mxu0 0.0
        %6143 = vmatprep.subr.mxu0 0.0
        %6144 = vmatpush2.xpose.msra.mxu0 0.0
        %6145 = vmatprep.subr.mxu0 0.0
        %6146 = vmatpush2.xpose.msra.mxu0 0.0
        %6147 = vmatprep.subr.mxu0 0.0
        %6148 = vmatpush2.xpose.msra.mxu0 0.0
        %6149 = vmatprep.subr.mxu0 0.0
        %6150 = vmatpush2.xpose.msra.mxu0 0.0
        %6151 = vmatprep.subr.mxu0 0.0
        %6152 = vmatpush2.xpose.msra.mxu0 0.0
        %6153 = vmatprep.subr.mxu0 0.0
        %6154 = vmatpush2.xpose.msra.mxu0 0.0
        %6155 = vmatprep.mubr.f32.mxu0 0.0
        %6156 = vmatmul.mubr.f32.gmra.mxu0 %v6087
        %v6157 = vpop.f32.mrf.mxu0
        %v6158 = vadd.f32 0.0, %v6157
        %v6159 = vpop.f32.mrf.mxu0
        %6160 = vdwg.mxu0
        %6161 = vrot.lane.b32.xlu0 %v5774, 80
        %v6162 = vpop.permute.xlu0 %6161
        %6163 = vrot.lane.b32.xlu0 %v5847, 80
        %v6164 = vpop.permute.xlu0 %6163
        %v6165 = vsel %vm661, %v6162, 0
        %v6167 = vsel %vm661, %v6164, 0
        %6169 = vmatprep.subr.mxu0 0.0
        %6170 = vmatpush1.xpose.msra.mxu0 0.0
        %6171 = vmatprep.subr.mxu0 0.0
        %6172 = vmatpush1.xpose.msra.mxu0 0.0
        %6173 = vmatprep.subr.mxu0 0.0
        %6174 = vmatpush1.xpose.msra.mxu0 0.0
        %6175 = vmatprep.subr.mxu0 0.0
        %6176 = vmatpush1.xpose.msra.mxu0 0.0
        %6177 = vmatprep.subr.mxu0 0.0
        %6178 = vmatpush1.xpose.msra.mxu0 0.0
        %6179 = vmatprep.subr.mxu0 0.0
        %6180 = vmatpush1.xpose.msra.mxu0 0.0
        %6181 = vmatprep.subr.mxu0 0.0
        %6182 = vmatpush1.xpose.msra.mxu0 0.0
        %6183 = vmatprep.subr.mxu0 0.0
        %6184 = vmatpush1.xpose.msra.mxu0 0.0
        %6185 = vmatprep.subr.mxu0 0.0
        %6186 = vmatpush1.xpose.msra.mxu0 0.0
        %6187 = vmatprep.subr.mxu0 0.0
        %6188 = vmatpush1.xpose.msra.mxu0 0.0
        %6189 = vmatprep.subr.mxu0 0.0
        %6190 = vmatpush1.xpose.msra.mxu0 0.0
        %6191 = vmatprep.subr.mxu0 0.0
        %6192 = vmatpush1.xpose.msra.mxu0 0.0
        %6193 = vmatprep.subr.mxu0 0.0
        %6194 = vmatpush1.xpose.msra.mxu0 0.0
        %6195 = vmatprep.subr.mxu0 0.0
        %6196 = vmatpush1.xpose.msra.mxu0 0.0
        %6197 = vmatprep.subr.mxu0 0.0
        %6198 = vmatpush1.xpose.msra.mxu0 0.0
        %6199 = vmatprep.subr.mxu0 0.0
        %6200 = vmatpush1.xpose.msra.mxu0 %v6167
        %6201 = vmatprep.subr.mxu0 0.0
        %6202 = vmatpush2.xpose.msra.mxu0 0.0
        %6203 = vmatprep.subr.mxu0 0.0
        %6204 = vmatpush2.xpose.msra.mxu0 0.0
        %6205 = vmatprep.subr.mxu0 0.0
        %6206 = vmatpush2.xpose.msra.mxu0 0.0
        %6207 = vmatprep.subr.mxu0 0.0
        %6208 = vmatpush2.xpose.msra.mxu0 0.0
        %6209 = vmatprep.subr.mxu0 0.0
        %6210 = vmatpush2.xpose.msra.mxu0 0.0
        %6211 = vmatprep.subr.mxu0 0.0
        %6212 = vmatpush2.xpose.msra.mxu0 0.0
        %6213 = vmatprep.subr.mxu0 0.0
        %6214 = vmatpush2.xpose.msra.mxu0 0.0
        %6215 = vmatprep.subr.mxu0 0.0
        %6216 = vmatpush2.xpose.msra.mxu0 0.0
        %6217 = vmatprep.subr.mxu0 0.0
        %6218 = vmatpush2.xpose.msra.mxu0 0.0
        %6219 = vmatprep.subr.mxu0 0.0
        %6220 = vmatpush2.xpose.msra.mxu0 0.0
        %6221 = vmatprep.subr.mxu0 0.0
        %6222 = vmatpush2.xpose.msra.mxu0 0.0
        %6223 = vmatprep.subr.mxu0 0.0
        %6224 = vmatpush2.xpose.msra.mxu0 0.0
        %6225 = vmatprep.subr.mxu0 0.0
        %6226 = vmatpush2.xpose.msra.mxu0 0.0
        %6227 = vmatprep.subr.mxu0 0.0
        %6228 = vmatpush2.xpose.msra.mxu0 0.0
        %6229 = vmatprep.subr.mxu0 0.0
        %6230 = vmatpush2.xpose.msra.mxu0 0.0
        %6231 = vmatprep.subr.mxu0 0.0
        %6232 = vmatpush2.xpose.msra.mxu0 0.0
        %6233 = vmatprep.mubr.f32.mxu0 0.0
        %6234 = vmatmul.mubr.f32.gmra.mxu0 %v6165
        %v6235 = vpop.f32.mrf.mxu0
        %v6236 = vadd.f32 0.0, %v6235
        %v6237 = vpop.f32.mrf.mxu0
        %6238 = vdwg.mxu0
        %v6239 = vadd.f32 %v6002, %v396
        %v6240 = vadd.f32 %v6080, %v396
        %v6241 = vadd.f32 %v6158, %v396
        %v6242 = vadd.f32 %v6236, %v396
        %v6243 = vsel %vm982, %v6239, -inf
        %6244 = vmax.xlane.f32.xlu0 %v6243
        %v6245 = vpop.xlane.xlu0 %6244
        %v6246 = vsel %vm982, %v6240, -inf
        %6247 = vmax.xlane.f32.xlu0 %v6246
        %v6248 = vpop.xlane.xlu0 %6247
        %v6249 = vsel %vm982, %v6241, -inf
        %6250 = vmax.xlane.f32.xlu0 %v6249
        %v6251 = vpop.xlane.xlu0 %6250
        %v6252 = vsel %vm982, %v6242, -inf
        %6253 = vmax.xlane.f32.xlu0 %v6252
        %v6254 = vpop.xlane.xlu0 %6253
        %v6255 = vsub.f32 %v6239, %v6245
        %v6256 = vsub.f32 %v6240, %v6248
        %v6257 = vsub.f32 %v6241, %v6251
        %v6258 = vsub.f32 %v6242, %v6254
        %v6259 = vmul.f32 %v6255, 1.442695
        %v6260 = vpow.pop %v6259
        %v6261 = vmul.f32 %v6256, 1.442695
        %v6262 = vpow.pop %v6261
        %v6263 = vmul.f32 %v6257, 1.442695
        %v6264 = vpow.pop %v6263
        %v6265 = vmul.f32 %v6258, 1.442695
        %v6266 = vpow.pop %v6265
        %v6267 = vsel %vm982, %v6260, 0.0
        %6268 = vadd.xlane.f32.xlu0 %v6267
        %v6269 = vpop.xlane.xlu0 %6268
        %v6270 = vsel %vm982, %v6262, 0.0
        %6271 = vadd.xlane.f32.xlu0 %v6270
        %v6272 = vpop.xlane.xlu0 %6271
        %v6273 = vsel %vm982, %v6264, 0.0
        %6274 = vadd.xlane.f32.xlu0 %v6273
        %v6275 = vpop.xlane.xlu0 %6274
        %v6276 = vsel %vm982, %v6266, 0.0
        %6277 = vadd.xlane.f32.xlu0 %v6276
        %v6278 = vpop.xlane.xlu0 %6277
        %v6279 = vrcp.pop %v6269
        %v6280 = vrcp.pop %v6272
        %v6281 = vrcp.pop %v6275
        %v6282 = vrcp.pop %v6278
        %v6283 = vmul.f32 %v6260, %v6279
        %v6284 = vmul.f32 %v6262, %v6280
        %v6285 = vmul.f32 %v6264, %v6281
        %v6286 = vmul.f32 %v6266, %v6282
        %v6288 = vsel %vm982, %v6283, 0
        %6290 = vmatprep.subr.mxu0 0.0
        %6291 = vmatpush1.msra.mxu0 0.0
        %6292 = vmatprep.subr.mxu0 0.0
        %6293 = vmatpush1.msra.mxu0 0.0
        %6294 = vmatprep.subr.mxu0 0.0
        %6295 = vmatpush1.msra.mxu0 0.0
        %6296 = vmatprep.subr.mxu0 0.0
        %6297 = vmatpush1.msra.mxu0 0.0
        %6298 = vmatprep.subr.mxu0 0.0
        %6299 = vmatpush1.msra.mxu0 0.0
        %6300 = vmatprep.subr.mxu0 0.0
        %6301 = vmatpush1.msra.mxu0 0.0
        %6302 = vmatprep.subr.mxu0 0.0
        %6303 = vmatpush1.msra.mxu0 0.0
        %6304 = vmatprep.subr.mxu0 0.0
        %6305 = vmatpush1.msra.mxu0 0.0
        %6306 = vmatprep.subr.mxu0 0.0
        %6307 = vmatpush1.msra.mxu0 0.0
        %6308 = vmatprep.subr.mxu0 0.0
        %6309 = vmatpush1.msra.mxu0 0.0
        %6310 = vmatprep.subr.mxu0 0.0
        %6311 = vmatpush1.msra.mxu0 0.0
        %6312 = vmatprep.subr.mxu0 0.0
        %6313 = vmatpush1.msra.mxu0 0.0
        %6314 = vmatprep.subr.mxu0 0.0
        %6315 = vmatpush1.msra.mxu0 0.0
        %6316 = vmatprep.subr.mxu0 0.0
        %6317 = vmatpush1.msra.mxu0 0.0
        %6318 = vmatprep.subr.mxu0 0.0
        %6319 = vmatpush1.msra.mxu0 0.0
        %6320 = vmatprep.subr.mxu0 0.0
        %6321 = vmatpush1.msra.mxu0 %v5924
        %6322 = vmatprep.subr.mxu0 0.0
        %6323 = vmatpush2.msra.mxu0 0.0
        %6324 = vmatprep.subr.mxu0 0.0
        %6325 = vmatpush2.msra.mxu0 0.0
        %6326 = vmatprep.subr.mxu0 0.0
        %6327 = vmatpush2.msra.mxu0 0.0
        %6328 = vmatprep.subr.mxu0 0.0
        %6329 = vmatpush2.msra.mxu0 0.0
        %6330 = vmatprep.subr.mxu0 0.0
        %6331 = vmatpush2.msra.mxu0 0.0
        %6332 = vmatprep.subr.mxu0 0.0
        %6333 = vmatpush2.msra.mxu0 0.0
        %6334 = vmatprep.subr.mxu0 0.0
        %6335 = vmatpush2.msra.mxu0 0.0
        %6336 = vmatprep.subr.mxu0 0.0
        %6337 = vmatpush2.msra.mxu0 0.0
        %6338 = vmatprep.subr.mxu0 0.0
        %6339 = vmatpush2.msra.mxu0 0.0
        %6340 = vmatprep.subr.mxu0 0.0
        %6341 = vmatpush2.msra.mxu0 0.0
        %6342 = vmatprep.subr.mxu0 0.0
        %6343 = vmatpush2.msra.mxu0 0.0
        %6344 = vmatprep.subr.mxu0 0.0
        %6345 = vmatpush2.msra.mxu0 0.0
        %6346 = vmatprep.subr.mxu0 0.0
        %6347 = vmatpush2.msra.mxu0 0.0
        %6348 = vmatprep.subr.mxu0 0.0
        %6349 = vmatpush2.msra.mxu0 0.0
        %6350 = vmatprep.subr.mxu0 0.0
        %6351 = vmatpush2.msra.mxu0 0.0
        %6352 = vmatprep.subr.mxu0 0.0
        %6353 = vmatpush2.msra.mxu0 0.0
        %6354 = vmatprep.mubr.f32.mxu0 0.0
        %6355 = vmatmul.mubr.f32.gmra.mxu0 %v6288
        %v6356 = vpop.f32.mrf.mxu0
        %v6357 = vadd.f32 0.0, %v6356
        %v6358 = vpop.f32.mrf.mxu0
        %6359 = vdwg.mxu0
        %v6360 = vld [vmem:[%s0 + $0x320] sm:$0xf]
        %v6361 = vld [vmem:[%s0 + $0x324] sm:$0xf]
        %v6362 = vpack.c.bf16 %v6357, %v6357
        %6364 = vrot.lane.b32.xlu0 %v5924, 112
        %v6365 = vpop.permute.xlu0 %6364
        %v6368 = vsel %vm982, %v6284, 0
        %6370 = vmatprep.subr.mxu0 0.0
        %6371 = vmatpush1.msra.mxu0 0.0
        %6372 = vmatprep.subr.mxu0 0.0
        %6373 = vmatpush1.msra.mxu0 0.0
        %6374 = vmatprep.subr.mxu0 0.0
        %6375 = vmatpush1.msra.mxu0 0.0
        %6376 = vmatprep.subr.mxu0 0.0
        %6377 = vmatpush1.msra.mxu0 0.0
        %6378 = vmatprep.subr.mxu0 0.0
        %6379 = vmatpush1.msra.mxu0 0.0
        %6380 = vmatprep.subr.mxu0 0.0
        %6381 = vmatpush1.msra.mxu0 0.0
        %6382 = vmatprep.subr.mxu0 0.0
        %6383 = vmatpush1.msra.mxu0 0.0
        %6384 = vmatprep.subr.mxu0 0.0
        %6385 = vmatpush1.msra.mxu0 0.0
        %6386 = vmatprep.subr.mxu0 0.0
        %6387 = vmatpush1.msra.mxu0 0.0
        %6388 = vmatprep.subr.mxu0 0.0
        %6389 = vmatpush1.msra.mxu0 0.0
        %6390 = vmatprep.subr.mxu0 0.0
        %6391 = vmatpush1.msra.mxu0 0.0
        %6392 = vmatprep.subr.mxu0 0.0
        %6393 = vmatpush1.msra.mxu0 0.0
        %6394 = vmatprep.subr.mxu0 0.0
        %6395 = vmatpush1.msra.mxu0 0.0
        %6396 = vmatprep.subr.mxu0 0.0
        %6397 = vmatpush1.msra.mxu0 0.0
        %6398 = vmatprep.subr.mxu0 0.0
        %6399 = vmatpush1.msra.mxu0 0.0
        %6400 = vmatprep.subr.mxu0 0.0
        %6401 = vmatpush1.msra.mxu0 %v6365
        %6402 = vmatprep.subr.mxu0 0.0
        %6403 = vmatpush2.msra.mxu0 0.0
        %6404 = vmatprep.subr.mxu0 0.0
        %6405 = vmatpush2.msra.mxu0 0.0
        %6406 = vmatprep.subr.mxu0 0.0
        %6407 = vmatpush2.msra.mxu0 0.0
        %6408 = vmatprep.subr.mxu0 0.0
        %6409 = vmatpush2.msra.mxu0 0.0
        %6410 = vmatprep.subr.mxu0 0.0
        %6411 = vmatpush2.msra.mxu0 0.0
        %6412 = vmatprep.subr.mxu0 0.0
        %6413 = vmatpush2.msra.mxu0 0.0
        %6414 = vmatprep.subr.mxu0 0.0
        %6415 = vmatpush2.msra.mxu0 0.0
        %6416 = vmatprep.subr.mxu0 0.0
        %6417 = vmatpush2.msra.mxu0 0.0
        %6418 = vmatprep.subr.mxu0 0.0
        %6419 = vmatpush2.msra.mxu0 0.0
        %6420 = vmatprep.subr.mxu0 0.0
        %6421 = vmatpush2.msra.mxu0 0.0
        %6422 = vmatprep.subr.mxu0 0.0
        %6423 = vmatpush2.msra.mxu0 0.0
        %6424 = vmatprep.subr.mxu0 0.0
        %6425 = vmatpush2.msra.mxu0 0.0
        %6426 = vmatprep.subr.mxu0 0.0
        %6427 = vmatpush2.msra.mxu0 0.0
        %6428 = vmatprep.subr.mxu0 0.0
        %6429 = vmatpush2.msra.mxu0 0.0
        %6430 = vmatprep.subr.mxu0 0.0
        %6431 = vmatpush2.msra.mxu0 0.0
        %6432 = vmatprep.subr.mxu0 0.0
        %6433 = vmatpush2.msra.mxu0 0.0
        %6434 = vmatprep.mubr.f32.mxu0 0.0
        %6435 = vmatmul.mubr.f32.gmra.mxu0 %v6368
        %v6436 = vpop.f32.mrf.mxu0
        %v6437 = vadd.f32 0.0, %v6436
        %v6438 = vpop.f32.mrf.mxu0
        %6439 = vdwg.mxu0
        %v6440 = vld [vmem:[%s0 + $0x328] sm:$0xf]
        %v6441 = vld [vmem:[%s0 + $0x32c] sm:$0xf]
        %v6442 = vpack.c.bf16 %v6437, %v6437
        %v6445 = vunpack.c.l.b16 %v6440
        %v6446 = vunpack.c.l.b16 %v6441
        %v6447 = vpack.c.b16 %v6446, %v6445
        %v6450 = vsel %vm661, %v6442, 0
        %6452 = vmatprep.subr.bf16.mxu0 0
        %6453 = vmatpush1.bf16.msra.mxu0 0
        %6454 = vmatprep.subr.bf16.mxu0 0
        %6455 = vmatpush1.bf16.msra.mxu0 0
        %6456 = vmatprep.subr.bf16.mxu0 0
        %6457 = vmatpush1.bf16.msra.mxu0 0
        %6458 = vmatprep.subr.bf16.mxu0 0
        %6459 = vmatpush1.bf16.msra.mxu0 0
        %6460 = vmatprep.subr.bf16.mxu0 0
        %6461 = vmatpush1.bf16.msra.mxu0 0
        %6462 = vmatprep.subr.bf16.mxu0 0
        %6463 = vmatpush1.bf16.msra.mxu0 0
        %6464 = vmatprep.subr.bf16.mxu0 0
        %6465 = vmatpush1.bf16.msra.mxu0 0
        %6466 = vmatprep.subr.bf16.mxu0 0
        %6467 = vmatpush1.bf16.msra.mxu0 %v6447
        %6468 = vmatprep.subr.bf16.mxu0 0
        %6469 = vmatpush2.bf16.msra.mxu0 0
        %6470 = vmatprep.subr.bf16.mxu0 0
        %6471 = vmatpush2.bf16.msra.mxu0 0
        %6472 = vmatprep.subr.bf16.mxu0 0
        %6473 = vmatpush2.bf16.msra.mxu0 0
        %6474 = vmatprep.subr.bf16.mxu0 0
        %6475 = vmatpush2.bf16.msra.mxu0 0
        %6476 = vmatprep.subr.bf16.mxu0 0
        %6477 = vmatpush2.bf16.msra.mxu0 0
        %6478 = vmatprep.subr.bf16.mxu0 0
        %6479 = vmatpush2.bf16.msra.mxu0 0
        %6480 = vmatprep.subr.bf16.mxu0 0
        %6481 = vmatpush2.bf16.msra.mxu0 0
        %6482 = vmatprep.subr.bf16.mxu0 0
        %6483 = vmatpush2.bf16.msra.mxu0 0
        %6484 = vmatprep.mubr.bf16.mxu0 0
        %6485 = vmatmul.mubr.bf16.gmra.mxu0 %v6450
        %v6486 = vpop.f32.mrf.mxu0
        %v6487 = vadd.f32 0.0, %v6486
        %v6488 = vpop.f32.mrf.mxu0
        %v6489 = vpop.f32.mrf.mxu0
        %v6490 = vpop.f32.mrf.mxu0
        %6491 = vdwg.mxu0
        %v6494 = vunpack.c.l.b16 %v6360
        %v6495 = vunpack.c.l.b16 %v6361
        %v6496 = vpack.c.b16 %v6495, %v6494
        %v6499 = vsel %vm661, %v6362, 0
        %6501 = vmatprep.subr.bf16.mxu0 0
        %6502 = vmatpush1.bf16.msra.mxu0 0
        %6503 = vmatprep.subr.bf16.mxu0 0
        %6504 = vmatpush1.bf16.msra.mxu0 0
        %6505 = vmatprep.subr.bf16.mxu0 0
        %6506 = vmatpush1.bf16.msra.mxu0 0
        %6507 = vmatprep.subr.bf16.mxu0 0
        %6508 = vmatpush1.bf16.msra.mxu0 0
        %6509 = vmatprep.subr.bf16.mxu0 0
        %6510 = vmatpush1.bf16.msra.mxu0 0
        %6511 = vmatprep.subr.bf16.mxu0 0
        %6512 = vmatpush1.bf16.msra.mxu0 0
        %6513 = vmatprep.subr.bf16.mxu0 0
        %6514 = vmatpush1.bf16.msra.mxu0 0
        %6515 = vmatprep.subr.bf16.mxu0 0
        %6516 = vmatpush1.bf16.msra.mxu0 %v6496
        %6517 = vmatprep.subr.bf16.mxu0 0
        %6518 = vmatpush2.bf16.msra.mxu0 0
        %6519 = vmatprep.subr.bf16.mxu0 0
        %6520 = vmatpush2.bf16.msra.mxu0 0
        %6521 = vmatprep.subr.bf16.mxu0 0
        %6522 = vmatpush2.bf16.msra.mxu0 0
        %6523 = vmatprep.subr.bf16.mxu0 0
        %6524 = vmatpush2.bf16.msra.mxu0 0
        %6525 = vmatprep.subr.bf16.mxu0 0
        %6526 = vmatpush2.bf16.msra.mxu0 0
        %6527 = vmatprep.subr.bf16.mxu0 0
        %6528 = vmatpush2.bf16.msra.mxu0 0
        %6529 = vmatprep.subr.bf16.mxu0 0
        %6530 = vmatpush2.bf16.msra.mxu0 0
        %6531 = vmatprep.subr.bf16.mxu0 0
        %6532 = vmatpush2.bf16.msra.mxu0 0
        %6533 = vmatprep.mubr.bf16.mxu0 0
        %6534 = vmatmul.mubr.bf16.gmra.mxu0 %v6499
        %v6535 = vpop.f32.mrf.mxu0
        %v6536 = vadd.f32 %v6487, %v6535
        %v6537 = vpop.f32.mrf.mxu0
        %v6538 = vpop.f32.mrf.mxu0
        %v6539 = vpop.f32.mrf.mxu0
        %6540 = vdwg.mxu0
        %6541 = vrot.lane.b32.xlu0 %v5924, 96
        %v6542 = vpop.permute.xlu0 %6541
        %v6545 = vsel %vm982, %v6285, 0
        %6547 = vmatprep.subr.mxu0 0.0
        %6548 = vmatpush1.msra.mxu0 0.0
        %6549 = vmatprep.subr.mxu0 0.0
        %6550 = vmatpush1.msra.mxu0 0.0
        %6551 = vmatprep.subr.mxu0 0.0
        %6552 = vmatpush1.msra.mxu0 0.0
        %6553 = vmatprep.subr.mxu0 0.0
        %6554 = vmatpush1.msra.mxu0 0.0
        %6555 = vmatprep.subr.mxu0 0.0
        %6556 = vmatpush1.msra.mxu0 0.0
        %6557 = vmatprep.subr.mxu0 0.0
        %6558 = vmatpush1.msra.mxu0 0.0
        %6559 = vmatprep.subr.mxu0 0.0
        %6560 = vmatpush1.msra.mxu0 0.0
        %6561 = vmatprep.subr.mxu0 0.0
        %6562 = vmatpush1.msra.mxu0 0.0
        %6563 = vmatprep.subr.mxu0 0.0
        %6564 = vmatpush1.msra.mxu0 0.0
        %6565 = vmatprep.subr.mxu0 0.0
        %6566 = vmatpush1.msra.mxu0 0.0
        %6567 = vmatprep.subr.mxu0 0.0
        %6568 = vmatpush1.msra.mxu0 0.0
        %6569 = vmatprep.subr.mxu0 0.0
        %6570 = vmatpush1.msra.mxu0 0.0
        %6571 = vmatprep.subr.mxu0 0.0
        %6572 = vmatpush1.msra.mxu0 0.0
        %6573 = vmatprep.subr.mxu0 0.0
        %6574 = vmatpush1.msra.mxu0 0.0
        %6575 = vmatprep.subr.mxu0 0.0
        %6576 = vmatpush1.msra.mxu0 0.0
        %6577 = vmatprep.subr.mxu0 0.0
        %6578 = vmatpush1.msra.mxu0 %v6542
        %6579 = vmatprep.subr.mxu0 0.0
        %6580 = vmatpush2.msra.mxu0 0.0
        %6581 = vmatprep.subr.mxu0 0.0
        %6582 = vmatpush2.msra.mxu0 0.0
        %6583 = vmatprep.subr.mxu0 0.0
        %6584 = vmatpush2.msra.mxu0 0.0
        %6585 = vmatprep.subr.mxu0 0.0
        %6586 = vmatpush2.msra.mxu0 0.0
        %6587 = vmatprep.subr.mxu0 0.0
        %6588 = vmatpush2.msra.mxu0 0.0
        %6589 = vmatprep.subr.mxu0 0.0
        %6590 = vmatpush2.msra.mxu0 0.0
        %6591 = vmatprep.subr.mxu0 0.0
        %6592 = vmatpush2.msra.mxu0 0.0
        %6593 = vmatprep.subr.mxu0 0.0
        %6594 = vmatpush2.msra.mxu0 0.0
        %6595 = vmatprep.subr.mxu0 0.0
        %6596 = vmatpush2.msra.mxu0 0.0
        %6597 = vmatprep.subr.mxu0 0.0
        %6598 = vmatpush2.msra.mxu0 0.0
        %6599 = vmatprep.subr.mxu0 0.0
        %6600 = vmatpush2.msra.mxu0 0.0
        %6601 = vmatprep.subr.mxu0 0.0
        %6602 = vmatpush2.msra.mxu0 0.0
        %6603 = vmatprep.subr.mxu0 0.0
        %6604 = vmatpush2.msra.mxu0 0.0
        %6605 = vmatprep.subr.mxu0 0.0
        %6606 = vmatpush2.msra.mxu0 0.0
        %6607 = vmatprep.subr.mxu0 0.0
        %6608 = vmatpush2.msra.mxu0 0.0
        %6609 = vmatprep.subr.mxu0 0.0
        %6610 = vmatpush2.msra.mxu0 0.0
        %6611 = vmatprep.mubr.f32.mxu0 0.0
        %6612 = vmatmul.mubr.f32.gmra.mxu0 %v6545
        %v6613 = vpop.f32.mrf.mxu0
        %v6614 = vadd.f32 0.0, %v6613
        %v6615 = vpop.f32.mrf.mxu0
        %6616 = vdwg.mxu0
        %v6617 = vld [vmem:[%s0 + $0x330] sm:$0xf]
        %v6618 = vld [vmem:[%s0 + $0x334] sm:$0xf]
        %v6619 = vpack.c.bf16 %v6614, %v6614
        %v6622 = vunpack.c.l.b16 %v6617
        %v6623 = vunpack.c.l.b16 %v6618
        %v6624 = vpack.c.b16 %v6623, %v6622
        %v6627 = vsel %vm661, %v6619, 0
        %6629 = vmatprep.subr.bf16.mxu0 0
        %6630 = vmatpush1.bf16.msra.mxu0 0
        %6631 = vmatprep.subr.bf16.mxu0 0
        %6632 = vmatpush1.bf16.msra.mxu0 0
        %6633 = vmatprep.subr.bf16.mxu0 0
        %6634 = vmatpush1.bf16.msra.mxu0 0
        %6635 = vmatprep.subr.bf16.mxu0 0
        %6636 = vmatpush1.bf16.msra.mxu0 0
        %6637 = vmatprep.subr.bf16.mxu0 0
        %6638 = vmatpush1.bf16.msra.mxu0 0
        %6639 = vmatprep.subr.bf16.mxu0 0
        %6640 = vmatpush1.bf16.msra.mxu0 0
        %6641 = vmatprep.subr.bf16.mxu0 0
        %6642 = vmatpush1.bf16.msra.mxu0 0
        %6643 = vmatprep.subr.bf16.mxu0 0
        %6644 = vmatpush1.bf16.msra.mxu0 %v6624
        %6645 = vmatprep.subr.bf16.mxu0 0
        %6646 = vmatpush2.bf16.msra.mxu0 0
        %6647 = vmatprep.subr.bf16.mxu0 0
        %6648 = vmatpush2.bf16.msra.mxu0 0
        %6649 = vmatprep.subr.bf16.mxu0 0
        %6650 = vmatpush2.bf16.msra.mxu0 0
        %6651 = vmatprep.subr.bf16.mxu0 0
        %6652 = vmatpush2.bf16.msra.mxu0 0
        %6653 = vmatprep.subr.bf16.mxu0 0
        %6654 = vmatpush2.bf16.msra.mxu0 0
        %6655 = vmatprep.subr.bf16.mxu0 0
        %6656 = vmatpush2.bf16.msra.mxu0 0
        %6657 = vmatprep.subr.bf16.mxu0 0
        %6658 = vmatpush2.bf16.msra.mxu0 0
        %6659 = vmatprep.subr.bf16.mxu0 0
        %6660 = vmatpush2.bf16.msra.mxu0 0
        %6661 = vmatprep.mubr.bf16.mxu0 0
        %6662 = vmatmul.mubr.bf16.gmra.mxu0 %v6627
        %v6663 = vpop.f32.mrf.mxu0
        %v6664 = vadd.f32 0.0, %v6663
        %v6665 = vpop.f32.mrf.mxu0
        %v6666 = vpop.f32.mrf.mxu0
        %v6667 = vpop.f32.mrf.mxu0
        %6668 = vdwg.mxu0
        %v6669 = vadd.f32 %v6536, %v6664
        %6670 = vrot.lane.b32.xlu0 %v5924, 80
        %v6671 = vpop.permute.xlu0 %6670
        %v6674 = vsel %vm982, %v6286, 0
        %6676 = vmatprep.subr.mxu0 0.0
        %6677 = vmatpush1.msra.mxu0 0.0
        %6678 = vmatprep.subr.mxu0 0.0
        %6679 = vmatpush1.msra.mxu0 0.0
        %6680 = vmatprep.subr.mxu0 0.0
        %6681 = vmatpush1.msra.mxu0 0.0
        %6682 = vmatprep.subr.mxu0 0.0
        %6683 = vmatpush1.msra.mxu0 0.0
        %6684 = vmatprep.subr.mxu0 0.0
        %6685 = vmatpush1.msra.mxu0 0.0
        %6686 = vmatprep.subr.mxu0 0.0
        %6687 = vmatpush1.msra.mxu0 0.0
        %6688 = vmatprep.subr.mxu0 0.0
        %6689 = vmatpush1.msra.mxu0 0.0
        %6690 = vmatprep.subr.mxu0 0.0
        %6691 = vmatpush1.msra.mxu0 0.0
        %6692 = vmatprep.subr.mxu0 0.0
        %6693 = vmatpush1.msra.mxu0 0.0
        %6694 = vmatprep.subr.mxu0 0.0
        %6695 = vmatpush1.msra.mxu0 0.0
        %6696 = vmatprep.subr.mxu0 0.0
        %6697 = vmatpush1.msra.mxu0 0.0
        %6698 = vmatprep.subr.mxu0 0.0
        %6699 = vmatpush1.msra.mxu0 0.0
        %6700 = vmatprep.subr.mxu0 0.0
        %6701 = vmatpush1.msra.mxu0 0.0
        %6702 = vmatprep.subr.mxu0 0.0
        %6703 = vmatpush1.msra.mxu0 0.0
        %6704 = vmatprep.subr.mxu0 0.0
        %6705 = vmatpush1.msra.mxu0 0.0
        %6706 = vmatprep.subr.mxu0 0.0
        %6707 = vmatpush1.msra.mxu0 %v6671
        %6708 = vmatprep.subr.mxu0 0.0
        %6709 = vmatpush2.msra.mxu0 0.0
        %6710 = vmatprep.subr.mxu0 0.0
        %6711 = vmatpush2.msra.mxu0 0.0
        %6712 = vmatprep.subr.mxu0 0.0
        %6713 = vmatpush2.msra.mxu0 0.0
        %6714 = vmatprep.subr.mxu0 0.0
        %6715 = vmatpush2.msra.mxu0 0.0
        %6716 = vmatprep.subr.mxu0 0.0
        %6717 = vmatpush2.msra.mxu0 0.0
        %6718 = vmatprep.subr.mxu0 0.0
        %6719 = vmatpush2.msra.mxu0 0.0
        %6720 = vmatprep.subr.mxu0 0.0
        %6721 = vmatpush2.msra.mxu0 0.0
        %6722 = vmatprep.subr.mxu0 0.0
        %6723 = vmatpush2.msra.mxu0 0.0
        %6724 = vmatprep.subr.mxu0 0.0
        %6725 = vmatpush2.msra.mxu0 0.0
        %6726 = vmatprep.subr.mxu0 0.0
        %6727 = vmatpush2.msra.mxu0 0.0
        %6728 = vmatprep.subr.mxu0 0.0
        %6729 = vmatpush2.msra.mxu0 0.0
        %6730 = vmatprep.subr.mxu0 0.0
        %6731 = vmatpush2.msra.mxu0 0.0
        %6732 = vmatprep.subr.mxu0 0.0
        %6733 = vmatpush2.msra.mxu0 0.0
        %6734 = vmatprep.subr.mxu0 0.0
        %6735 = vmatpush2.msra.mxu0 0.0
        %6736 = vmatprep.subr.mxu0 0.0
        %6737 = vmatpush2.msra.mxu0 0.0
        %6738 = vmatprep.subr.mxu0 0.0
        %6739 = vmatpush2.msra.mxu0 0.0
        %6740 = vmatprep.mubr.f32.mxu0 0.0
        %6741 = vmatmul.mubr.f32.gmra.mxu0 %v6674
        %v6742 = vpop.f32.mrf.mxu0
        %v6743 = vadd.f32 0.0, %v6742
        %v6744 = vpop.f32.mrf.mxu0
        %6745 = vdwg.mxu0
        %v6746 = vld [vmem:[%s0 + $0x338] sm:$0xf]
        %v6747 = vld [vmem:[%s0 + $0x33c] sm:$0xf]
        %v6748 = vpack.c.bf16 %v6743, %v6743
        %v6751 = vunpack.c.l.b16 %v6746
        %v6752 = vunpack.c.l.b16 %v6747
        %v6753 = vpack.c.b16 %v6752, %v6751
        %v6756 = vsel %vm661, %v6748, 0
        %6758 = vmatprep.subr.bf16.mxu0 0
        %6759 = vmatpush1.bf16.msra.mxu0 0
        %6760 = vmatprep.subr.bf16.mxu0 0
        %6761 = vmatpush1.bf16.msra.mxu0 0
        %6762 = vmatprep.subr.bf16.mxu0 0
        %6763 = vmatpush1.bf16.msra.mxu0 0
        %6764 = vmatprep.subr.bf16.mxu0 0
        %6765 = vmatpush1.bf16.msra.mxu0 0
        %6766 = vmatprep.subr.bf16.mxu0 0
        %6767 = vmatpush1.bf16.msra.mxu0 0
        %6768 = vmatprep.subr.bf16.mxu0 0
        %6769 = vmatpush1.bf16.msra.mxu0 0
        %6770 = vmatprep.subr.bf16.mxu0 0
        %6771 = vmatpush1.bf16.msra.mxu0 0
        %6772 = vmatprep.subr.bf16.mxu0 0
        %6773 = vmatpush1.bf16.msra.mxu0 %v6753
        %6774 = vmatprep.subr.bf16.mxu0 0
        %6775 = vmatpush2.bf16.msra.mxu0 0
        %6776 = vmatprep.subr.bf16.mxu0 0
        %6777 = vmatpush2.bf16.msra.mxu0 0
        %6778 = vmatprep.subr.bf16.mxu0 0
        %6779 = vmatpush2.bf16.msra.mxu0 0
        %6780 = vmatprep.subr.bf16.mxu0 0
        %6781 = vmatpush2.bf16.msra.mxu0 0
        %6782 = vmatprep.subr.bf16.mxu0 0
        %6783 = vmatpush2.bf16.msra.mxu0 0
        %6784 = vmatprep.subr.bf16.mxu0 0
        %6785 = vmatpush2.bf16.msra.mxu0 0
        %6786 = vmatprep.subr.bf16.mxu0 0
        %6787 = vmatpush2.bf16.msra.mxu0 0
        %6788 = vmatprep.subr.bf16.mxu0 0
        %6789 = vmatpush2.bf16.msra.mxu0 0
        %6790 = vmatprep.mubr.bf16.mxu0 0
        %6791 = vmatmul.mubr.bf16.gmra.mxu0 %v6756
        %v6792 = vpop.f32.mrf.mxu0
        %v6793 = vadd.f32 0.0, %v6792
        %v6794 = vpop.f32.mrf.mxu0
        %v6795 = vpop.f32.mrf.mxu0
        %v6796 = vpop.f32.mrf.mxu0
        %6797 = vdwg.mxu0
        %v6798 = vadd.f32 %v6669, %v6793
        %v6799 = vld [vmem:[%s2 + $0x28] sm:$0x1]
        %v6800 = vlaneseq
        %v6801 = vshrl.u32 %v6800, 7
        %v6802 = vsub.s32 0, %v6801
        %v6803 = vrot.slane %v6799, %v6802
        %v6804 = vadd.f32 %v6798, %v6803
        %v6805 = vadd.f32 %v5692, %v6804
        %v6806 = vsel %vm398, %v6805, 0.0
        %6807 = vadd.xlane.f32.xlu0 %v6806
        %v6808 = vpop.xlane.xlu0 %6807
        %v6809 = vmul.f32 %v6808, %v402
        %v6810 = vsub.f32 %v6805, %v6809
        %v6811 = vmul.f32 %v6810, %v6810
        %v6812 = vsel %vm398, %v6811, 0.0
        %6813 = vadd.xlane.f32.xlu0 %v6812
        %v6814 = vpop.xlane.xlu0 %6813
        %v6815 = vmul.f32 %v6814, %v402
        %v6816 = vadd.f32 %v6815, 1e-05
        %v6817 = vrsqrt.pop %v6816
        %v6818 = vmul.f32 %v6810, %v6817
        %v6819 = vld [vmem:[%s2 + $0x2d] sm:$0x1]
        %v6820 = vlaneseq
        %v6821 = vshrl.u32 %v6820, 7
        %v6822 = vsub.s32 0, %v6821
        %v6823 = vrot.slane %v6819, %v6822
        %v6824 = vmul.f32 %v6818, %v6823
        %v6825 = vld [vmem:[%s2 + $0x2e] sm:$0x1]
        %v6826 = vlaneseq
        %v6827 = vshrl.u32 %v6826, 7
        %v6828 = vsub.s32 0, %v6827
        %v6829 = vrot.slane %v6825, %v6828
        %v6830 = vadd.f32 %v6824, %v6829
        %v6831 = vpack.c.bf16 %v6830, %v6830
        %v6832 = vld [vmem:[%s0 + $0x340] sm:$0xf]
        %v6833 = vld [vmem:[%s0 + $0x344] sm:$0xf]
        %v6834 = vld [vmem:[%s0 + $0x348] sm:$0xf]
        %v6835 = vld [vmem:[%s0 + $0x34c] sm:$0xf]
        %v6836 = vld [vmem:[%s0 + $0x350] sm:$0xf]
        %v6837 = vld [vmem:[%s0 + $0x354] sm:$0xf]
        %v6838 = vld [vmem:[%s0 + $0x358] sm:$0xf]
        %v6839 = vld [vmem:[%s0 + $0x35c] sm:$0xf]
        %v6840 = vld [vmem:[%s2 + $0x29] sm:$0x1]
        %v6841 = vlaneseq
        %v6842 = vshrl.u32 %v6841, 7
        %v6843 = vsub.s32 0, %v6842
        %v6844 = vrot.slane %v6840, %v6843
        %v6853 = vunpack.c.l.b16 %v6832
        %v6854 = vunpack.c.l.b16 %v6833
        %v6855 = vunpack.c.l.b16 %v6834
        %v6856 = vunpack.c.l.b16 %v6835
        %v6857 = vunpack.c.l.b16 %v6836
        %v6858 = vunpack.c.l.b16 %v6837
        %v6859 = vunpack.c.l.b16 %v6838
        %v6860 = vunpack.c.l.b16 %v6839
        %v6861 = vpack.c.b16 %v6854, %v6853
        %v6862 = vpack.c.b16 %v6856, %v6855
        %v6863 = vpack.c.b16 %v6858, %v6857
        %v6864 = vpack.c.b16 %v6860, %v6859
        %v6870 = vsel %vm398, %v6831, 0
        %6872 = vmatprep.subr.bf16.mxu0 0
        %6873 = vmatpush1.bf16.msra.mxu0 0
        %6874 = vmatprep.subr.bf16.mxu0 0
        %6875 = vmatpush1.bf16.msra.mxu0 0
        %6876 = vmatprep.subr.bf16.mxu0 0
        %6877 = vmatpush1.bf16.msra.mxu0 0
        %6878 = vmatprep.subr.bf16.mxu0 0
        %6879 = vmatpush1.bf16.msra.mxu0 0
        %6880 = vmatprep.subr.bf16.mxu0 0
        %6881 = vmatpush1.bf16.msra.mxu0 %v6864
        %6882 = vmatprep.subr.bf16.mxu0 0
        %6883 = vmatpush1.bf16.msra.mxu0 %v6863
        %6884 = vmatprep.subr.bf16.mxu0 0
        %6885 = vmatpush1.bf16.msra.mxu0 %v6862
        %6886 = vmatprep.subr.bf16.mxu0 0
        %6887 = vmatpush1.bf16.msra.mxu0 %v6861
        %6888 = vmatprep.subr.bf16.mxu0 0
        %6889 = vmatpush2.bf16.msra.mxu0 0
        %6890 = vmatprep.subr.bf16.mxu0 0
        %6891 = vmatpush2.bf16.msra.mxu0 0
        %6892 = vmatprep.subr.bf16.mxu0 0
        %6893 = vmatpush2.bf16.msra.mxu0 0
        %6894 = vmatprep.subr.bf16.mxu0 0
        %6895 = vmatpush2.bf16.msra.mxu0 0
        %6896 = vmatprep.subr.bf16.mxu0 0
        %6897 = vmatpush2.bf16.msra.mxu0 0
        %6898 = vmatprep.subr.bf16.mxu0 0
        %6899 = vmatpush2.bf16.msra.mxu0 0
        %6900 = vmatprep.subr.bf16.mxu0 0
        %6901 = vmatpush2.bf16.msra.mxu0 0
        %6902 = vmatprep.subr.bf16.mxu0 0
        %6903 = vmatpush2.bf16.msra.mxu0 0
        %6904 = vmatprep.mubr.bf16.mxu0 0
        %6905 = vmatmul.mubr.bf16.gmra.mxu0 %v6870
        %v6906 = vpop.f32.mrf.mxu0
        %v6907 = vadd.f32 %v6844, %v6906
        %v6908 = vpop.f32.mrf.mxu0
        %v6909 = vpop.f32.mrf.mxu0
        %v6910 = vpop.f32.mrf.mxu0
        %6911 = vdwg.mxu0
        %v6912 = vmul.f32 %v6907, 0.25
        %v6913 = vld [vmem:[%s0 + $0x360] sm:$0xf]
        %v6914 = vld [vmem:[%s0 + $0x364] sm:$0xf]
        %v6915 = vld [vmem:[%s0 + $0x368] sm:$0xf]
        %v6916 = vld [vmem:[%s0 + $0x36c] sm:$0xf]
        %v6917 = vld [vmem:[%s0 + $0x370] sm:$0xf]
        %v6918 = vld [vmem:[%s0 + $0x374] sm:$0xf]
        %v6919 = vld [vmem:[%s0 + $0x378] sm:$0xf]
        %v6920 = vld [vmem:[%s0 + $0x37c] sm:$0xf]
        %v6921 = vld [vmem:[%s2 + $0x2a] sm:$0x1]
        %v6922 = vlaneseq
        %v6923 = vshrl.u32 %v6922, 7
        %v6924 = vsub.s32 0, %v6923
        %v6925 = vrot.slane %v6921, %v6924
        %v6934 = vunpack.c.l.b16 %v6913
        %v6935 = vunpack.c.l.b16 %v6914
        %v6936 = vunpack.c.l.b16 %v6915
        %v6937 = vunpack.c.l.b16 %v6916
        %v6938 = vunpack.c.l.b16 %v6917
        %v6939 = vunpack.c.l.b16 %v6918
        %v6940 = vunpack.c.l.b16 %v6919
        %v6941 = vunpack.c.l.b16 %v6920
        %v6942 = vpack.c.b16 %v6935, %v6934
        %v6943 = vpack.c.b16 %v6937, %v6936
        %v6944 = vpack.c.b16 %v6939, %v6938
        %v6945 = vpack.c.b16 %v6941, %v6940
        %6950 = vmatprep.subr.bf16.mxu0 0
        %6951 = vmatpush1.bf16.msra.mxu0 0
        %6952 = vmatprep.subr.bf16.mxu0 0
        %6953 = vmatpush1.bf16.msra.mxu0 0
        %6954 = vmatprep.subr.bf16.mxu0 0
        %6955 = vmatpush1.bf16.msra.mxu0 0
        %6956 = vmatprep.subr.bf16.mxu0 0
        %6957 = vmatpush1.bf16.msra.mxu0 0
        %6958 = vmatprep.subr.bf16.mxu0 0
        %6959 = vmatpush1.bf16.msra.mxu0 %v6945
        %6960 = vmatprep.subr.bf16.mxu0 0
        %6961 = vmatpush1.bf16.msra.mxu0 %v6944
        %6962 = vmatprep.subr.bf16.mxu0 0
        %6963 = vmatpush1.bf16.msra.mxu0 %v6943
        %6964 = vmatprep.subr.bf16.mxu0 0
        %6965 = vmatpush1.bf16.msra.mxu0 %v6942
        %6966 = vmatprep.subr.bf16.mxu0 0
        %6967 = vmatpush2.bf16.msra.mxu0 0
        %6968 = vmatprep.subr.bf16.mxu0 0
        %6969 = vmatpush2.bf16.msra.mxu0 0
        %6970 = vmatprep.subr.bf16.mxu0 0
        %6971 = vmatpush2.bf16.msra.mxu0 0
        %6972 = vmatprep.subr.bf16.mxu0 0
        %6973 = vmatpush2.bf16.msra.mxu0 0
        %6974 = vmatprep.subr.bf16.mxu0 0
        %6975 = vmatpush2.bf16.msra.mxu0 0
        %6976 = vmatprep.subr.bf16.mxu0 0
        %6977 = vmatpush2.bf16.msra.mxu0 0
        %6978 = vmatprep.subr.bf16.mxu0 0
        %6979 = vmatpush2.bf16.msra.mxu0 0
        %6980 = vmatprep.subr.bf16.mxu0 0
        %6981 = vmatpush2.bf16.msra.mxu0 0
        %6982 = vmatprep.mubr.bf16.mxu0 0
        %6983 = vmatmul.mubr.bf16.gmra.mxu0 %v4446
        %v6984 = vpop.f32.mrf.mxu0
        %v6985 = vadd.f32 %v6925, %v6984
        %v6986 = vpop.f32.mrf.mxu0
        %v6987 = vpop.f32.mrf.mxu0
        %v6988 = vpop.f32.mrf.mxu0
        %6989 = vdwg.mxu0
        %v6990 = vld [vmem:[%s0 + $0x380] sm:$0xf]
        %v6991 = vld [vmem:[%s0 + $0x384] sm:$0xf]
        %v6992 = vld [vmem:[%s0 + $0x388] sm:$0xf]
        %v6993 = vld [vmem:[%s0 + $0x38c] sm:$0xf]
        %v6994 = vld [vmem:[%s0 + $0x390] sm:$0xf]
        %v6995 = vld [vmem:[%s0 + $0x394] sm:$0xf]
        %v6996 = vld [vmem:[%s0 + $0x398] sm:$0xf]
        %v6997 = vld [vmem:[%s0 + $0x39c] sm:$0xf]
        %v6998 = vld [vmem:[%s2 + $0x2b] sm:$0x1]
        %v6999 = vlaneseq
        %v7000 = vshrl.u32 %v6999, 7
        %v7001 = vsub.s32 0, %v7000
        %v7002 = vrot.slane %v6998, %v7001
        %v7011 = vunpack.c.l.b16 %v6990
        %v7012 = vunpack.c.l.b16 %v6991
        %v7013 = vunpack.c.l.b16 %v6992
        %v7014 = vunpack.c.l.b16 %v6993
        %v7015 = vunpack.c.l.b16 %v6994
        %v7016 = vunpack.c.l.b16 %v6995
        %v7017 = vunpack.c.l.b16 %v6996
        %v7018 = vunpack.c.l.b16 %v6997
        %v7019 = vpack.c.b16 %v7012, %v7011
        %v7020 = vpack.c.b16 %v7014, %v7013
        %v7021 = vpack.c.b16 %v7016, %v7015
        %v7022 = vpack.c.b16 %v7018, %v7017
        %7027 = vmatprep.subr.bf16.mxu0 0
        %7028 = vmatpush1.bf16.msra.mxu0 0
        %7029 = vmatprep.subr.bf16.mxu0 0
        %7030 = vmatpush1.bf16.msra.mxu0 0
        %7031 = vmatprep.subr.bf16.mxu0 0
        %7032 = vmatpush1.bf16.msra.mxu0 0
        %7033 = vmatprep.subr.bf16.mxu0 0
        %7034 = vmatpush1.bf16.msra.mxu0 0
        %7035 = vmatprep.subr.bf16.mxu0 0
        %7036 = vmatpush1.bf16.msra.mxu0 %v7022
        %7037 = vmatprep.subr.bf16.mxu0 0
        %7038 = vmatpush1.bf16.msra.mxu0 %v7021
        %7039 = vmatprep.subr.bf16.mxu0 0
        %7040 = vmatpush1.bf16.msra.mxu0 %v7020
        %7041 = vmatprep.subr.bf16.mxu0 0
        %7042 = vmatpush1.bf16.msra.mxu0 %v7019
        %7043 = vmatprep.subr.bf16.mxu0 0
        %7044 = vmatpush2.bf16.msra.mxu0 0
        %7045 = vmatprep.subr.bf16.mxu0 0
        %7046 = vmatpush2.bf16.msra.mxu0 0
        %7047 = vmatprep.subr.bf16.mxu0 0
        %7048 = vmatpush2.bf16.msra.mxu0 0
        %7049 = vmatprep.subr.bf16.mxu0 0
        %7050 = vmatpush2.bf16.msra.mxu0 0
        %7051 = vmatprep.subr.bf16.mxu0 0
        %7052 = vmatpush2.bf16.msra.mxu0 0
        %7053 = vmatprep.subr.bf16.mxu0 0
        %7054 = vmatpush2.bf16.msra.mxu0 0
        %7055 = vmatprep.subr.bf16.mxu0 0
        %7056 = vmatpush2.bf16.msra.mxu0 0
        %7057 = vmatprep.subr.bf16.mxu0 0
        %7058 = vmatpush2.bf16.msra.mxu0 0
        %7059 = vmatprep.mubr.bf16.mxu0 0
        %7060 = vmatmul.mubr.bf16.gmra.mxu0 %v4446
        %v7061 = vpop.f32.mrf.mxu0
        %v7062 = vadd.f32 %v7002, %v7061
        %v7063 = vpop.f32.mrf.mxu0
        %v7064 = vpop.f32.mrf.mxu0
        %v7065 = vpop.f32.mrf.mxu0
        %7066 = vdwg.mxu0
        %v7068 = vsel %vm661, %v6912, 0
        %v7071 = vsel %vm661, %v6985, 0
        %7073 = vmatprep.subr.mxu0 0.0
        %7074 = vmatpush1.xpose.msra.mxu0 0.0
        %7075 = vmatprep.subr.mxu0 0.0
        %7076 = vmatpush1.xpose.msra.mxu0 0.0
        %7077 = vmatprep.subr.mxu0 0.0
        %7078 = vmatpush1.xpose.msra.mxu0 0.0
        %7079 = vmatprep.subr.mxu0 0.0
        %7080 = vmatpush1.xpose.msra.mxu0 0.0
        %7081 = vmatprep.subr.mxu0 0.0
        %7082 = vmatpush1.xpose.msra.mxu0 0.0
        %7083 = vmatprep.subr.mxu0 0.0
        %7084 = vmatpush1.xpose.msra.mxu0 0.0
        %7085 = vmatprep.subr.mxu0 0.0
        %7086 = vmatpush1.xpose.msra.mxu0 0.0
        %7087 = vmatprep.subr.mxu0 0.0
        %7088 = vmatpush1.xpose.msra.mxu0 0.0
        %7089 = vmatprep.subr.mxu0 0.0
        %7090 = vmatpush1.xpose.msra.mxu0 0.0
        %7091 = vmatprep.subr.mxu0 0.0
        %7092 = vmatpush1.xpose.msra.mxu0 0.0
        %7093 = vmatprep.subr.mxu0 0.0
        %7094 = vmatpush1.xpose.msra.mxu0 0.0
        %7095 = vmatprep.subr.mxu0 0.0
        %7096 = vmatpush1.xpose.msra.mxu0 0.0
        %7097 = vmatprep.subr.mxu0 0.0
        %7098 = vmatpush1.xpose.msra.mxu0 0.0
        %7099 = vmatprep.subr.mxu0 0.0
        %7100 = vmatpush1.xpose.msra.mxu0 0.0
        %7101 = vmatprep.subr.mxu0 0.0
        %7102 = vmatpush1.xpose.msra.mxu0 0.0
        %7103 = vmatprep.subr.mxu0 0.0
        %7104 = vmatpush1.xpose.msra.mxu0 %v7071
        %7105 = vmatprep.subr.mxu0 0.0
        %7106 = vmatpush2.xpose.msra.mxu0 0.0
        %7107 = vmatprep.subr.mxu0 0.0
        %7108 = vmatpush2.xpose.msra.mxu0 0.0
        %7109 = vmatprep.subr.mxu0 0.0
        %7110 = vmatpush2.xpose.msra.mxu0 0.0
        %7111 = vmatprep.subr.mxu0 0.0
        %7112 = vmatpush2.xpose.msra.mxu0 0.0
        %7113 = vmatprep.subr.mxu0 0.0
        %7114 = vmatpush2.xpose.msra.mxu0 0.0
        %7115 = vmatprep.subr.mxu0 0.0
        %7116 = vmatpush2.xpose.msra.mxu0 0.0
        %7117 = vmatprep.subr.mxu0 0.0
        %7118 = vmatpush2.xpose.msra.mxu0 0.0
        %7119 = vmatprep.subr.mxu0 0.0
        %7120 = vmatpush2.xpose.msra.mxu0 0.0
        %7121 = vmatprep.subr.mxu0 0.0
        %7122 = vmatpush2.xpose.msra.mxu0 0.0
        %7123 = vmatprep.subr.mxu0 0.0
        %7124 = vmatpush2.xpose.msra.mxu0 0.0
        %7125 = vmatprep.subr.mxu0 0.0
        %7126 = vmatpush2.xpose.msra.mxu0 0.0
        %7127 = vmatprep.subr.mxu0 0.0
        %7128 = vmatpush2.xpose.msra.mxu0 0.0
        %7129 = vmatprep.subr.mxu0 0.0
        %7130 = vmatpush2.xpose.msra.mxu0 0.0
        %7131 = vmatprep.subr.mxu0 0.0
        %7132 = vmatpush2.xpose.msra.mxu0 0.0
        %7133 = vmatprep.subr.mxu0 0.0
        %7134 = vmatpush2.xpose.msra.mxu0 0.0
        %7135 = vmatprep.subr.mxu0 0.0
        %7136 = vmatpush2.xpose.msra.mxu0 0.0
        %7137 = vmatprep.mubr.f32.mxu0 0.0
        %7138 = vmatmul.mubr.f32.gmra.mxu0 %v7068
        %v7139 = vpop.f32.mrf.mxu0
        %v7140 = vadd.f32 0.0, %v7139
        %v7141 = vpop.f32.mrf.mxu0
        %7142 = vdwg.mxu0
        %7143 = vrot.lane.b32.xlu0 %v6912, 112
        %v7144 = vpop.permute.xlu0 %7143
        %7145 = vrot.lane.b32.xlu0 %v6985, 112
        %v7146 = vpop.permute.xlu0 %7145
        %v7147 = vsel %vm661, %v7144, 0
        %v7149 = vsel %vm661, %v7146, 0
        %7151 = vmatprep.subr.mxu0 0.0
        %7152 = vmatpush1.xpose.msra.mxu0 0.0
        %7153 = vmatprep.subr.mxu0 0.0
        %7154 = vmatpush1.xpose.msra.mxu0 0.0
        %7155 = vmatprep.subr.mxu0 0.0
        %7156 = vmatpush1.xpose.msra.mxu0 0.0
        %7157 = vmatprep.subr.mxu0 0.0
        %7158 = vmatpush1.xpose.msra.mxu0 0.0
        %7159 = vmatprep.subr.mxu0 0.0
        %7160 = vmatpush1.xpose.msra.mxu0 0.0
        %7161 = vmatprep.subr.mxu0 0.0
        %7162 = vmatpush1.xpose.msra.mxu0 0.0
        %7163 = vmatprep.subr.mxu0 0.0
        %7164 = vmatpush1.xpose.msra.mxu0 0.0
        %7165 = vmatprep.subr.mxu0 0.0
        %7166 = vmatpush1.xpose.msra.mxu0 0.0
        %7167 = vmatprep.subr.mxu0 0.0
        %7168 = vmatpush1.xpose.msra.mxu0 0.0
        %7169 = vmatprep.subr.mxu0 0.0
        %7170 = vmatpush1.xpose.msra.mxu0 0.0
        %7171 = vmatprep.subr.mxu0 0.0
        %7172 = vmatpush1.xpose.msra.mxu0 0.0
        %7173 = vmatprep.subr.mxu0 0.0
        %7174 = vmatpush1.xpose.msra.mxu0 0.0
        %7175 = vmatprep.subr.mxu0 0.0
        %7176 = vmatpush1.xpose.msra.mxu0 0.0
        %7177 = vmatprep.subr.mxu0 0.0
        %7178 = vmatpush1.xpose.msra.mxu0 0.0
        %7179 = vmatprep.subr.mxu0 0.0
        %7180 = vmatpush1.xpose.msra.mxu0 0.0
        %7181 = vmatprep.subr.mxu0 0.0
        %7182 = vmatpush1.xpose.msra.mxu0 %v7149
        %7183 = vmatprep.subr.mxu0 0.0
        %7184 = vmatpush2.xpose.msra.mxu0 0.0
        %7185 = vmatprep.subr.mxu0 0.0
        %7186 = vmatpush2.xpose.msra.mxu0 0.0
        %7187 = vmatprep.subr.mxu0 0.0
        %7188 = vmatpush2.xpose.msra.mxu0 0.0
        %7189 = vmatprep.subr.mxu0 0.0
        %7190 = vmatpush2.xpose.msra.mxu0 0.0
        %7191 = vmatprep.subr.mxu0 0.0
        %7192 = vmatpush2.xpose.msra.mxu0 0.0
        %7193 = vmatprep.subr.mxu0 0.0
        %7194 = vmatpush2.xpose.msra.mxu0 0.0
        %7195 = vmatprep.subr.mxu0 0.0
        %7196 = vmatpush2.xpose.msra.mxu0 0.0
        %7197 = vmatprep.subr.mxu0 0.0
        %7198 = vmatpush2.xpose.msra.mxu0 0.0
        %7199 = vmatprep.subr.mxu0 0.0
        %7200 = vmatpush2.xpose.msra.mxu0 0.0
        %7201 = vmatprep.subr.mxu0 0.0
        %7202 = vmatpush2.xpose.msra.mxu0 0.0
        %7203 = vmatprep.subr.mxu0 0.0
        %7204 = vmatpush2.xpose.msra.mxu0 0.0
        %7205 = vmatprep.subr.mxu0 0.0
        %7206 = vmatpush2.xpose.msra.mxu0 0.0
        %7207 = vmatprep.subr.mxu0 0.0
        %7208 = vmatpush2.xpose.msra.mxu0 0.0
        %7209 = vmatprep.subr.mxu0 0.0
        %7210 = vmatpush2.xpose.msra.mxu0 0.0
        %7211 = vmatprep.subr.mxu0 0.0
        %7212 = vmatpush2.xpose.msra.mxu0 0.0
        %7213 = vmatprep.subr.mxu0 0.0
        %7214 = vmatpush2.xpose.msra.mxu0 0.0
        %7215 = vmatprep.mubr.f32.mxu0 0.0
        %7216 = vmatmul.mubr.f32.gmra.mxu0 %v7147
        %v7217 = vpop.f32.mrf.mxu0
        %v7218 = vadd.f32 0.0, %v7217
        %v7219 = vpop.f32.mrf.mxu0
        %7220 = vdwg.mxu0
        %7221 = vrot.lane.b32.xlu0 %v6912, 96
        %v7222 = vpop.permute.xlu0 %7221
        %7223 = vrot.lane.b32.xlu0 %v6985, 96
        %v7224 = vpop.permute.xlu0 %7223
        %v7225 = vsel %vm661, %v7222, 0
        %v7227 = vsel %vm661, %v7224, 0
        %7229 = vmatprep.subr.mxu0 0.0
        %7230 = vmatpush1.xpose.msra.mxu0 0.0
        %7231 = vmatprep.subr.mxu0 0.0
        %7232 = vmatpush1.xpose.msra.mxu0 0.0
        %7233 = vmatprep.subr.mxu0 0.0
        %7234 = vmatpush1.xpose.msra.mxu0 0.0
        %7235 = vmatprep.subr.mxu0 0.0
        %7236 = vmatpush1.xpose.msra.mxu0 0.0
        %7237 = vmatprep.subr.mxu0 0.0
        %7238 = vmatpush1.xpose.msra.mxu0 0.0
        %7239 = vmatprep.subr.mxu0 0.0
        %7240 = vmatpush1.xpose.msra.mxu0 0.0
        %7241 = vmatprep.subr.mxu0 0.0
        %7242 = vmatpush1.xpose.msra.mxu0 0.0
        %7243 = vmatprep.subr.mxu0 0.0
        %7244 = vmatpush1.xpose.msra.mxu0 0.0
        %7245 = vmatprep.subr.mxu0 0.0
        %7246 = vmatpush1.xpose.msra.mxu0 0.0
        %7247 = vmatprep.subr.mxu0 0.0
        %7248 = vmatpush1.xpose.msra.mxu0 0.0
        %7249 = vmatprep.subr.mxu0 0.0
        %7250 = vmatpush1.xpose.msra.mxu0 0.0
        %7251 = vmatprep.subr.mxu0 0.0
        %7252 = vmatpush1.xpose.msra.mxu0 0.0
        %7253 = vmatprep.subr.mxu0 0.0
        %7254 = vmatpush1.xpose.msra.mxu0 0.0
        %7255 = vmatprep.subr.mxu0 0.0
        %7256 = vmatpush1.xpose.msra.mxu0 0.0
        %7257 = vmatprep.subr.mxu0 0.0
        %7258 = vmatpush1.xpose.msra.mxu0 0.0
        %7259 = vmatprep.subr.mxu0 0.0
        %7260 = vmatpush1.xpose.msra.mxu0 %v7227
        %7261 = vmatprep.subr.mxu0 0.0
        %7262 = vmatpush2.xpose.msra.mxu0 0.0
        %7263 = vmatprep.subr.mxu0 0.0
        %7264 = vmatpush2.xpose.msra.mxu0 0.0
        %7265 = vmatprep.subr.mxu0 0.0
        %7266 = vmatpush2.xpose.msra.mxu0 0.0
        %7267 = vmatprep.subr.mxu0 0.0
        %7268 = vmatpush2.xpose.msra.mxu0 0.0
        %7269 = vmatprep.subr.mxu0 0.0
        %7270 = vmatpush2.xpose.msra.mxu0 0.0
        %7271 = vmatprep.subr.mxu0 0.0
        %7272 = vmatpush2.xpose.msra.mxu0 0.0
        %7273 = vmatprep.subr.mxu0 0.0
        %7274 = vmatpush2.xpose.msra.mxu0 0.0
        %7275 = vmatprep.subr.mxu0 0.0
        %7276 = vmatpush2.xpose.msra.mxu0 0.0
        %7277 = vmatprep.subr.mxu0 0.0
        %7278 = vmatpush2.xpose.msra.mxu0 0.0
        %7279 = vmatprep.subr.mxu0 0.0
        %7280 = vmatpush2.xpose.msra.mxu0 0.0
        %7281 = vmatprep.subr.mxu0 0.0
        %7282 = vmatpush2.xpose.msra.mxu0 0.0
        %7283 = vmatprep.subr.mxu0 0.0
        %7284 = vmatpush2.xpose.msra.mxu0 0.0
        %7285 = vmatprep.subr.mxu0 0.0
        %7286 = vmatpush2.xpose.msra.mxu0 0.0
        %7287 = vmatprep.subr.mxu0 0.0
        %7288 = vmatpush2.xpose.msra.mxu0 0.0
        %7289 = vmatprep.subr.mxu0 0.0
        %7290 = vmatpush2.xpose.msra.mxu0 0.0
        %7291 = vmatprep.subr.mxu0 0.0
        %7292 = vmatpush2.xpose.msra.mxu0 0.0
        %7293 = vmatprep.mubr.f32.mxu0 0.0
        %7294 = vmatmul.mubr.f32.gmra.mxu0 %v7225
        %v7295 = vpop.f32.mrf.mxu0
        %v7296 = vadd.f32 0.0, %v7295
        %v7297 = vpop.f32.mrf.mxu0
        %7298 = vdwg.mxu0
        %7299 = vrot.lane.b32.xlu0 %v6912, 80
        %v7300 = vpop.permute.xlu0 %7299
        %7301 = vrot.lane.b32.xlu0 %v6985, 80
        %v7302 = vpop.permute.xlu0 %7301
        %v7303 = vsel %vm661, %v7300, 0
        %v7305 = vsel %vm661, %v7302, 0
        %7307 = vmatprep.subr.mxu0 0.0
        %7308 = vmatpush1.xpose.msra.mxu0 0.0
        %7309 = vmatprep.subr.mxu0 0.0
        %7310 = vmatpush1.xpose.msra.mxu0 0.0
        %7311 = vmatprep.subr.mxu0 0.0
        %7312 = vmatpush1.xpose.msra.mxu0 0.0
        %7313 = vmatprep.subr.mxu0 0.0
        %7314 = vmatpush1.xpose.msra.mxu0 0.0
        %7315 = vmatprep.subr.mxu0 0.0
        %7316 = vmatpush1.xpose.msra.mxu0 0.0
        %7317 = vmatprep.subr.mxu0 0.0
        %7318 = vmatpush1.xpose.msra.mxu0 0.0
        %7319 = vmatprep.subr.mxu0 0.0
        %7320 = vmatpush1.xpose.msra.mxu0 0.0
        %7321 = vmatprep.subr.mxu0 0.0
        %7322 = vmatpush1.xpose.msra.mxu0 0.0
        %7323 = vmatprep.subr.mxu0 0.0
        %7324 = vmatpush1.xpose.msra.mxu0 0.0
        %7325 = vmatprep.subr.mxu0 0.0
        %7326 = vmatpush1.xpose.msra.mxu0 0.0
        %7327 = vmatprep.subr.mxu0 0.0
        %7328 = vmatpush1.xpose.msra.mxu0 0.0
        %7329 = vmatprep.subr.mxu0 0.0
        %7330 = vmatpush1.xpose.msra.mxu0 0.0
        %7331 = vmatprep.subr.mxu0 0.0
        %7332 = vmatpush1.xpose.msra.mxu0 0.0
        %7333 = vmatprep.subr.mxu0 0.0
        %7334 = vmatpush1.xpose.msra.mxu0 0.0
        %7335 = vmatprep.subr.mxu0 0.0
        %7336 = vmatpush1.xpose.msra.mxu0 0.0
        %7337 = vmatprep.subr.mxu0 0.0
        %7338 = vmatpush1.xpose.msra.mxu0 %v7305
        %7339 = vmatprep.subr.mxu0 0.0
        %7340 = vmatpush2.xpose.msra.mxu0 0.0
        %7341 = vmatprep.subr.mxu0 0.0
        %7342 = vmatpush2.xpose.msra.mxu0 0.0
        %7343 = vmatprep.subr.mxu0 0.0
        %7344 = vmatpush2.xpose.msra.mxu0 0.0
        %7345 = vmatprep.subr.mxu0 0.0
        %7346 = vmatpush2.xpose.msra.mxu0 0.0
        %7347 = vmatprep.subr.mxu0 0.0
        %7348 = vmatpush2.xpose.msra.mxu0 0.0
        %7349 = vmatprep.subr.mxu0 0.0
        %7350 = vmatpush2.xpose.msra.mxu0 0.0
        %7351 = vmatprep.subr.mxu0 0.0
        %7352 = vmatpush2.xpose.msra.mxu0 0.0
        %7353 = vmatprep.subr.mxu0 0.0
        %7354 = vmatpush2.xpose.msra.mxu0 0.0
        %7355 = vmatprep.subr.mxu0 0.0
        %7356 = vmatpush2.xpose.msra.mxu0 0.0
        %7357 = vmatprep.subr.mxu0 0.0
        %7358 = vmatpush2.xpose.msra.mxu0 0.0
        %7359 = vmatprep.subr.mxu0 0.0
        %7360 = vmatpush2.xpose.msra.mxu0 0.0
        %7361 = vmatprep.subr.mxu0 0.0
        %7362 = vmatpush2.xpose.msra.mxu0 0.0
        %7363 = vmatprep.subr.mxu0 0.0
        %7364 = vmatpush2.xpose.msra.mxu0 0.0
        %7365 = vmatprep.subr.mxu0 0.0
        %7366 = vmatpush2.xpose.msra.mxu0 0.0
        %7367 = vmatprep.subr.mxu0 0.0
        %7368 = vmatpush2.xpose.msra.mxu0 0.0
        %7369 = vmatprep.subr.mxu0 0.0
        %7370 = vmatpush2.xpose.msra.mxu0 0.0
        %7371 = vmatprep.mubr.f32.mxu0 0.0
        %7372 = vmatmul.mubr.f32.gmra.mxu0 %v7303
        %v7373 = vpop.f32.mrf.mxu0
        %v7374 = vadd.f32 0.0, %v7373
        %v7375 = vpop.f32.mrf.mxu0
        %7376 = vdwg.mxu0
        %v7377 = vadd.f32 %v7140, %v976
        %v7378 = vadd.f32 %v7218, %v976
        %v7379 = vadd.f32 %v7296, %v976
        %v7380 = vadd.f32 %v7374, %v976
        %v7381 = vsel %vm982, %v7377, -inf
        %7382 = vmax.xlane.f32.xlu0 %v7381
        %v7383 = vpop.xlane.xlu0 %7382
        %v7384 = vsel %vm982, %v7378, -inf
        %7385 = vmax.xlane.f32.xlu0 %v7384
        %v7386 = vpop.xlane.xlu0 %7385
        %v7387 = vsel %vm982, %v7379, -inf
        %7388 = vmax.xlane.f32.xlu0 %v7387
        %v7389 = vpop.xlane.xlu0 %7388
        %v7390 = vsel %vm982, %v7380, -inf
        %7391 = vmax.xlane.f32.xlu0 %v7390
        %v7392 = vpop.xlane.xlu0 %7391
        %v7393 = vsub.f32 %v7377, %v7383
        %v7394 = vsub.f32 %v7378, %v7386
        %v7395 = vsub.f32 %v7379, %v7389
        %v7396 = vsub.f32 %v7380, %v7392
        %v7397 = vmul.f32 %v7393, 1.442695
        %v7398 = vpow.pop %v7397
        %v7399 = vmul.f32 %v7394, 1.442695
        %v7400 = vpow.pop %v7399
        %v7401 = vmul.f32 %v7395, 1.442695
        %v7402 = vpow.pop %v7401
        %v7403 = vmul.f32 %v7396, 1.442695
        %v7404 = vpow.pop %v7403
        %v7405 = vsel %vm982, %v7398, 0.0
        %7406 = vadd.xlane.f32.xlu0 %v7405
        %v7407 = vpop.xlane.xlu0 %7406
        %v7408 = vsel %vm982, %v7400, 0.0
        %7409 = vadd.xlane.f32.xlu0 %v7408
        %v7410 = vpop.xlane.xlu0 %7409
        %v7411 = vsel %vm982, %v7402, 0.0
        %7412 = vadd.xlane.f32.xlu0 %v7411
        %v7413 = vpop.xlane.xlu0 %7412
        %v7414 = vsel %vm982, %v7404, 0.0
        %7415 = vadd.xlane.f32.xlu0 %v7414
        %v7416 = vpop.xlane.xlu0 %7415
        %v7417 = vrcp.pop %v7407
        %v7418 = vrcp.pop %v7410
        %v7419 = vrcp.pop %v7413
        %v7420 = vrcp.pop %v7416
        %v7421 = vmul.f32 %v7398, %v7417
        %v7422 = vmul.f32 %v7400, %v7418
        %v7423 = vmul.f32 %v7402, %v7419
        %v7424 = vmul.f32 %v7404, %v7420
        %v7426 = vsel %vm982, %v7421, 0
        %7428 = vmatprep.subr.mxu0 0.0
        %7429 = vmatpush1.msra.mxu0 0.0
        %7430 = vmatprep.subr.mxu0 0.0
        %7431 = vmatpush1.msra.mxu0 0.0
        %7432 = vmatprep.subr.mxu0 0.0
        %7433 = vmatpush1.msra.mxu0 0.0
        %7434 = vmatprep.subr.mxu0 0.0
        %7435 = vmatpush1.msra.mxu0 0.0
        %7436 = vmatprep.subr.mxu0 0.0
        %7437 = vmatpush1.msra.mxu0 0.0
        %7438 = vmatprep.subr.mxu0 0.0
        %7439 = vmatpush1.msra.mxu0 0.0
        %7440 = vmatprep.subr.mxu0 0.0
        %7441 = vmatpush1.msra.mxu0 0.0
        %7442 = vmatprep.subr.mxu0 0.0
        %7443 = vmatpush1.msra.mxu0 0.0
        %7444 = vmatprep.subr.mxu0 0.0
        %7445 = vmatpush1.msra.mxu0 0.0
        %7446 = vmatprep.subr.mxu0 0.0
        %7447 = vmatpush1.msra.mxu0 0.0
        %7448 = vmatprep.subr.mxu0 0.0
        %7449 = vmatpush1.msra.mxu0 0.0
        %7450 = vmatprep.subr.mxu0 0.0
        %7451 = vmatpush1.msra.mxu0 0.0
        %7452 = vmatprep.subr.mxu0 0.0
        %7453 = vmatpush1.msra.mxu0 0.0
        %7454 = vmatprep.subr.mxu0 0.0
        %7455 = vmatpush1.msra.mxu0 0.0
        %7456 = vmatprep.subr.mxu0 0.0
        %7457 = vmatpush1.msra.mxu0 0.0
        %7458 = vmatprep.subr.mxu0 0.0
        %7459 = vmatpush1.msra.mxu0 %v7062
        %7460 = vmatprep.subr.mxu0 0.0
        %7461 = vmatpush2.msra.mxu0 0.0
        %7462 = vmatprep.subr.mxu0 0.0
        %7463 = vmatpush2.msra.mxu0 0.0
        %7464 = vmatprep.subr.mxu0 0.0
        %7465 = vmatpush2.msra.mxu0 0.0
        %7466 = vmatprep.subr.mxu0 0.0
        %7467 = vmatpush2.msra.mxu0 0.0
        %7468 = vmatprep.subr.mxu0 0.0
        %7469 = vmatpush2.msra.mxu0 0.0
        %7470 = vmatprep.subr.mxu0 0.0
        %7471 = vmatpush2.msra.mxu0 0.0
        %7472 = vmatprep.subr.mxu0 0.0
        %7473 = vmatpush2.msra.mxu0 0.0
        %7474 = vmatprep.subr.mxu0 0.0
        %7475 = vmatpush2.msra.mxu0 0.0
        %7476 = vmatprep.subr.mxu0 0.0
        %7477 = vmatpush2.msra.mxu0 0.0
        %7478 = vmatprep.subr.mxu0 0.0
        %7479 = vmatpush2.msra.mxu0 0.0
        %7480 = vmatprep.subr.mxu0 0.0
        %7481 = vmatpush2.msra.mxu0 0.0
        %7482 = vmatprep.subr.mxu0 0.0
        %7483 = vmatpush2.msra.mxu0 0.0
        %7484 = vmatprep.subr.mxu0 0.0
        %7485 = vmatpush2.msra.mxu0 0.0
        %7486 = vmatprep.subr.mxu0 0.0
        %7487 = vmatpush2.msra.mxu0 0.0
        %7488 = vmatprep.subr.mxu0 0.0
        %7489 = vmatpush2.msra.mxu0 0.0
        %7490 = vmatprep.subr.mxu0 0.0
        %7491 = vmatpush2.msra.mxu0 0.0
        %7492 = vmatprep.mubr.f32.mxu0 0.0
        %7493 = vmatmul.mubr.f32.gmra.mxu0 %v7426
        %v7494 = vpop.f32.mrf.mxu0
        %v7495 = vadd.f32 0.0, %v7494
        %v7496 = vpop.f32.mrf.mxu0
        %7497 = vdwg.mxu0
        %v7498 = vld [vmem:[%s0 + $0x3a0] sm:$0xf]
        %v7499 = vld [vmem:[%s0 + $0x3a4] sm:$0xf]
        %v7500 = vpack.c.bf16 %v7495, %v7495
        %7502 = vrot.lane.b32.xlu0 %v7062, 112
        %v7503 = vpop.permute.xlu0 %7502
        %v7506 = vsel %vm982, %v7422, 0
        %7508 = vmatprep.subr.mxu0 0.0
        %7509 = vmatpush1.msra.mxu0 0.0
        %7510 = vmatprep.subr.mxu0 0.0
        %7511 = vmatpush1.msra.mxu0 0.0
        %7512 = vmatprep.subr.mxu0 0.0
        %7513 = vmatpush1.msra.mxu0 0.0
        %7514 = vmatprep.subr.mxu0 0.0
        %7515 = vmatpush1.msra.mxu0 0.0
        %7516 = vmatprep.subr.mxu0 0.0
        %7517 = vmatpush1.msra.mxu0 0.0
        %7518 = vmatprep.subr.mxu0 0.0
        %7519 = vmatpush1.msra.mxu0 0.0
        %7520 = vmatprep.subr.mxu0 0.0
        %7521 = vmatpush1.msra.mxu0 0.0
        %7522 = vmatprep.subr.mxu0 0.0
        %7523 = vmatpush1.msra.mxu0 0.0
        %7524 = vmatprep.subr.mxu0 0.0
        %7525 = vmatpush1.msra.mxu0 0.0
        %7526 = vmatprep.subr.mxu0 0.0
        %7527 = vmatpush1.msra.mxu0 0.0
        %7528 = vmatprep.subr.mxu0 0.0
        %7529 = vmatpush1.msra.mxu0 0.0
        %7530 = vmatprep.subr.mxu0 0.0
        %7531 = vmatpush1.msra.mxu0 0.0
        %7532 = vmatprep.subr.mxu0 0.0
        %7533 = vmatpush1.msra.mxu0 0.0
        %7534 = vmatprep.subr.mxu0 0.0
        %7535 = vmatpush1.msra.mxu0 0.0
        %7536 = vmatprep.subr.mxu0 0.0
        %7537 = vmatpush1.msra.mxu0 0.0
        %7538 = vmatprep.subr.mxu0 0.0
        %7539 = vmatpush1.msra.mxu0 %v7503
        %7540 = vmatprep.subr.mxu0 0.0
        %7541 = vmatpush2.msra.mxu0 0.0
        %7542 = vmatprep.subr.mxu0 0.0
        %7543 = vmatpush2.msra.mxu0 0.0
        %7544 = vmatprep.subr.mxu0 0.0
        %7545 = vmatpush2.msra.mxu0 0.0
        %7546 = vmatprep.subr.mxu0 0.0
        %7547 = vmatpush2.msra.mxu0 0.0
        %7548 = vmatprep.subr.mxu0 0.0
        %7549 = vmatpush2.msra.mxu0 0.0
        %7550 = vmatprep.subr.mxu0 0.0
        %7551 = vmatpush2.msra.mxu0 0.0
        %7552 = vmatprep.subr.mxu0 0.0
        %7553 = vmatpush2.msra.mxu0 0.0
        %7554 = vmatprep.subr.mxu0 0.0
        %7555 = vmatpush2.msra.mxu0 0.0
        %7556 = vmatprep.subr.mxu0 0.0
        %7557 = vmatpush2.msra.mxu0 0.0
        %7558 = vmatprep.subr.mxu0 0.0
        %7559 = vmatpush2.msra.mxu0 0.0
        %7560 = vmatprep.subr.mxu0 0.0
        %7561 = vmatpush2.msra.mxu0 0.0
        %7562 = vmatprep.subr.mxu0 0.0
        %7563 = vmatpush2.msra.mxu0 0.0
        %7564 = vmatprep.subr.mxu0 0.0
        %7565 = vmatpush2.msra.mxu0 0.0
        %7566 = vmatprep.subr.mxu0 0.0
        %7567 = vmatpush2.msra.mxu0 0.0
        %7568 = vmatprep.subr.mxu0 0.0
        %7569 = vmatpush2.msra.mxu0 0.0
        %7570 = vmatprep.subr.mxu0 0.0
        %7571 = vmatpush2.msra.mxu0 0.0
        %7572 = vmatprep.mubr.f32.mxu0 0.0
        %7573 = vmatmul.mubr.f32.gmra.mxu0 %v7506
        %v7574 = vpop.f32.mrf.mxu0
        %v7575 = vadd.f32 0.0, %v7574
        %v7576 = vpop.f32.mrf.mxu0
        %7577 = vdwg.mxu0
        %v7578 = vld [vmem:[%s0 + $0x3a8] sm:$0xf]
        %v7579 = vld [vmem:[%s0 + $0x3ac] sm:$0xf]
        %v7580 = vpack.c.bf16 %v7575, %v7575
        %v7583 = vunpack.c.l.b16 %v7578
        %v7584 = vunpack.c.l.b16 %v7579
        %v7585 = vpack.c.b16 %v7584, %v7583
        %v7588 = vsel %vm661, %v7580, 0
        %7590 = vmatprep.subr.bf16.mxu0 0
        %7591 = vmatpush1.bf16.msra.mxu0 0
        %7592 = vmatprep.subr.bf16.mxu0 0
        %7593 = vmatpush1.bf16.msra.mxu0 0
        %7594 = vmatprep.subr.bf16.mxu0 0
        %7595 = vmatpush1.bf16.msra.mxu0 0
        %7596 = vmatprep.subr.bf16.mxu0 0
        %7597 = vmatpush1.bf16.msra.mxu0 0
        %7598 = vmatprep.subr.bf16.mxu0 0
        %7599 = vmatpush1.bf16.msra.mxu0 0
        %7600 = vmatprep.subr.bf16.mxu0 0
        %7601 = vmatpush1.bf16.msra.mxu0 0
        %7602 = vmatprep.subr.bf16.mxu0 0
        %7603 = vmatpush1.bf16.msra.mxu0 0
        %7604 = vmatprep.subr.bf16.mxu0 0
        %7605 = vmatpush1.bf16.msra.mxu0 %v7585
        %7606 = vmatprep.subr.bf16.mxu0 0
        %7607 = vmatpush2.bf16.msra.mxu0 0
        %7608 = vmatprep.subr.bf16.mxu0 0
        %7609 = vmatpush2.bf16.msra.mxu0 0
        %7610 = vmatprep.subr.bf16.mxu0 0
        %7611 = vmatpush2.bf16.msra.mxu0 0
        %7612 = vmatprep.subr.bf16.mxu0 0
        %7613 = vmatpush2.bf16.msra.mxu0 0
        %7614 = vmatprep.subr.bf16.mxu0 0
        %7615 = vmatpush2.bf16.msra.mxu0 0
        %7616 = vmatprep.subr.bf16.mxu0 0
        %7617 = vmatpush2.bf16.msra.mxu0 0
        %7618 = vmatprep.subr.bf16.mxu0 0
        %7619 = vmatpush2.bf16.msra.mxu0 0
        %7620 = vmatprep.subr.bf16.mxu0 0
        %7621 = vmatpush2.bf16.msra.mxu0 0
        %7622 = vmatprep.mubr.bf16.mxu0 0
        %7623 = vmatmul.mubr.bf16.gmra.mxu0 %v7588
        %v7624 = vpop.f32.mrf.mxu0
        %v7625 = vadd.f32 0.0, %v7624
        %v7626 = vpop.f32.mrf.mxu0
        %v7627 = vpop.f32.mrf.mxu0
        %v7628 = vpop.f32.mrf.mxu0
        %7629 = vdwg.mxu0
        %v7632 = vunpack.c.l.b16 %v7498
        %v7633 = vunpack.c.l.b16 %v7499
        %v7634 = vpack.c.b16 %v7633, %v7632
        %v7637 = vsel %vm661, %v7500, 0
        %7639 = vmatprep.subr.bf16.mxu0 0
        %7640 = vmatpush1.bf16.msra.mxu0 0
        %7641 = vmatprep.subr.bf16.mxu0 0
        %7642 = vmatpush1.bf16.msra.mxu0 0
        %7643 = vmatprep.subr.bf16.mxu0 0
        %7644 = vmatpush1.bf16.msra.mxu0 0
        %7645 = vmatprep.subr.bf16.mxu0 0
        %7646 = vmatpush1.bf16.msra.mxu0 0
        %7647 = vmatprep.subr.bf16.mxu0 0
        %7648 = vmatpush1.bf16.msra.mxu0 0
        %7649 = vmatprep.subr.bf16.mxu0 0
        %7650 = vmatpush1.bf16.msra.mxu0 0
        %7651 = vmatprep.subr.bf16.mxu0 0
        %7652 = vmatpush1.bf16.msra.mxu0 0
        %7653 = vmatprep.subr.bf16.mxu0 0
        %7654 = vmatpush1.bf16.msra.mxu0 %v7634
        %7655 = vmatprep.subr.bf16.mxu0 0
        %7656 = vmatpush2.bf16.msra.mxu0 0
        %7657 = vmatprep.subr.bf16.mxu0 0
        %7658 = vmatpush2.bf16.msra.mxu0 0
        %7659 = vmatprep.subr.bf16.mxu0 0
        %7660 = vmatpush2.bf16.msra.mxu0 0
        %7661 = vmatprep.subr.bf16.mxu0 0
        %7662 = vmatpush2.bf16.msra.mxu0 0
        %7663 = vmatprep.subr.bf16.mxu0 0
        %7664 = vmatpush2.bf16.msra.mxu0 0
        %7665 = vmatprep.subr.bf16.mxu0 0
        %7666 = vmatpush2.bf16.msra.mxu0 0
        %7667 = vmatprep.subr.bf16.mxu0 0
        %7668 = vmatpush2.bf16.msra.mxu0 0
        %7669 = vmatprep.subr.bf16.mxu0 0
        %7670 = vmatpush2.bf16.msra.mxu0 0
        %7671 = vmatprep.mubr.bf16.mxu0 0
        %7672 = vmatmul.mubr.bf16.gmra.mxu0 %v7637
        %v7673 = vpop.f32.mrf.mxu0
        %v7674 = vadd.f32 %v7625, %v7673
        %v7675 = vpop.f32.mrf.mxu0
        %v7676 = vpop.f32.mrf.mxu0
        %v7677 = vpop.f32.mrf.mxu0
        %7678 = vdwg.mxu0
        %7679 = vrot.lane.b32.xlu0 %v7062, 96
        %v7680 = vpop.permute.xlu0 %7679
        %v7683 = vsel %vm982, %v7423, 0
        %7685 = vmatprep.subr.mxu0 0.0
        %7686 = vmatpush1.msra.mxu0 0.0
        %7687 = vmatprep.subr.mxu0 0.0
        %7688 = vmatpush1.msra.mxu0 0.0
        %7689 = vmatprep.subr.mxu0 0.0
        %7690 = vmatpush1.msra.mxu0 0.0
        %7691 = vmatprep.subr.mxu0 0.0
        %7692 = vmatpush1.msra.mxu0 0.0
        %7693 = vmatprep.subr.mxu0 0.0
        %7694 = vmatpush1.msra.mxu0 0.0
        %7695 = vmatprep.subr.mxu0 0.0
        %7696 = vmatpush1.msra.mxu0 0.0
        %7697 = vmatprep.subr.mxu0 0.0
        %7698 = vmatpush1.msra.mxu0 0.0
        %7699 = vmatprep.subr.mxu0 0.0
        %7700 = vmatpush1.msra.mxu0 0.0
        %7701 = vmatprep.subr.mxu0 0.0
        %7702 = vmatpush1.msra.mxu0 0.0
        %7703 = vmatprep.subr.mxu0 0.0
        %7704 = vmatpush1.msra.mxu0 0.0
        %7705 = vmatprep.subr.mxu0 0.0
        %7706 = vmatpush1.msra.mxu0 0.0
        %7707 = vmatprep.subr.mxu0 0.0
        %7708 = vmatpush1.msra.mxu0 0.0
        %7709 = vmatprep.subr.mxu0 0.0
        %7710 = vmatpush1.msra.mxu0 0.0
        %7711 = vmatprep.subr.mxu0 0.0
        %7712 = vmatpush1.msra.mxu0 0.0
        %7713 = vmatprep.subr.mxu0 0.0
        %7714 = vmatpush1.msra.mxu0 0.0
        %7715 = vmatprep.subr.mxu0 0.0
        %7716 = vmatpush1.msra.mxu0 %v7680
        %7717 = vmatprep.subr.mxu0 0.0
        %7718 = vmatpush2.msra.mxu0 0.0
        %7719 = vmatprep.subr.mxu0 0.0
        %7720 = vmatpush2.msra.mxu0 0.0
        %7721 = vmatprep.subr.mxu0 0.0
        %7722 = vmatpush2.msra.mxu0 0.0
        %7723 = vmatprep.subr.mxu0 0.0
        %7724 = vmatpush2.msra.mxu0 0.0
        %7725 = vmatprep.subr.mxu0 0.0
        %7726 = vmatpush2.msra.mxu0 0.0
        %7727 = vmatprep.subr.mxu0 0.0
        %7728 = vmatpush2.msra.mxu0 0.0
        %7729 = vmatprep.subr.mxu0 0.0
        %7730 = vmatpush2.msra.mxu0 0.0
        %7731 = vmatprep.subr.mxu0 0.0
        %7732 = vmatpush2.msra.mxu0 0.0
        %7733 = vmatprep.subr.mxu0 0.0
        %7734 = vmatpush2.msra.mxu0 0.0
        %7735 = vmatprep.subr.mxu0 0.0
        %7736 = vmatpush2.msra.mxu0 0.0
        %7737 = vmatprep.subr.mxu0 0.0
        %7738 = vmatpush2.msra.mxu0 0.0
        %7739 = vmatprep.subr.mxu0 0.0
        %7740 = vmatpush2.msra.mxu0 0.0
        %7741 = vmatprep.subr.mxu0 0.0
        %7742 = vmatpush2.msra.mxu0 0.0
        %7743 = vmatprep.subr.mxu0 0.0
        %7744 = vmatpush2.msra.mxu0 0.0
        %7745 = vmatprep.subr.mxu0 0.0
        %7746 = vmatpush2.msra.mxu0 0.0
        %7747 = vmatprep.subr.mxu0 0.0
        %7748 = vmatpush2.msra.mxu0 0.0
        %7749 = vmatprep.mubr.f32.mxu0 0.0
        %7750 = vmatmul.mubr.f32.gmra.mxu0 %v7683
        %v7751 = vpop.f32.mrf.mxu0
        %v7752 = vadd.f32 0.0, %v7751
        %v7753 = vpop.f32.mrf.mxu0
        %7754 = vdwg.mxu0
        %v7755 = vld [vmem:[%s0 + $0x3b0] sm:$0xf]
        %v7756 = vld [vmem:[%s0 + $0x3b4] sm:$0xf]
        %v7757 = vpack.c.bf16 %v7752, %v7752
        %v7760 = vunpack.c.l.b16 %v7755
        %v7761 = vunpack.c.l.b16 %v7756
        %v7762 = vpack.c.b16 %v7761, %v7760
        %v7765 = vsel %vm661, %v7757, 0
        %7767 = vmatprep.subr.bf16.mxu0 0
        %7768 = vmatpush1.bf16.msra.mxu0 0
        %7769 = vmatprep.subr.bf16.mxu0 0
        %7770 = vmatpush1.bf16.msra.mxu0 0
        %7771 = vmatprep.subr.bf16.mxu0 0
        %7772 = vmatpush1.bf16.msra.mxu0 0
        %7773 = vmatprep.subr.bf16.mxu0 0
        %7774 = vmatpush1.bf16.msra.mxu0 0
        %7775 = vmatprep.subr.bf16.mxu0 0
        %7776 = vmatpush1.bf16.msra.mxu0 0
        %7777 = vmatprep.subr.bf16.mxu0 0
        %7778 = vmatpush1.bf16.msra.mxu0 0
        %7779 = vmatprep.subr.bf16.mxu0 0
        %7780 = vmatpush1.bf16.msra.mxu0 0
        %7781 = vmatprep.subr.bf16.mxu0 0
        %7782 = vmatpush1.bf16.msra.mxu0 %v7762
        %7783 = vmatprep.subr.bf16.mxu0 0
        %7784 = vmatpush2.bf16.msra.mxu0 0
        %7785 = vmatprep.subr.bf16.mxu0 0
        %7786 = vmatpush2.bf16.msra.mxu0 0
        %7787 = vmatprep.subr.bf16.mxu0 0
        %7788 = vmatpush2.bf16.msra.mxu0 0
        %7789 = vmatprep.subr.bf16.mxu0 0
        %7790 = vmatpush2.bf16.msra.mxu0 0
        %7791 = vmatprep.subr.bf16.mxu0 0
        %7792 = vmatpush2.bf16.msra.mxu0 0
        %7793 = vmatprep.subr.bf16.mxu0 0
        %7794 = vmatpush2.bf16.msra.mxu0 0
        %7795 = vmatprep.subr.bf16.mxu0 0
        %7796 = vmatpush2.bf16.msra.mxu0 0
        %7797 = vmatprep.subr.bf16.mxu0 0
        %7798 = vmatpush2.bf16.msra.mxu0 0
        %7799 = vmatprep.mubr.bf16.mxu0 0
        %7800 = vmatmul.mubr.bf16.gmra.mxu0 %v7765
        %v7801 = vpop.f32.mrf.mxu0
        %v7802 = vadd.f32 0.0, %v7801
        %v7803 = vpop.f32.mrf.mxu0
        %v7804 = vpop.f32.mrf.mxu0
        %v7805 = vpop.f32.mrf.mxu0
        %7806 = vdwg.mxu0
        %v7807 = vadd.f32 %v7674, %v7802
        %7808 = vrot.lane.b32.xlu0 %v7062, 80
        %v7809 = vpop.permute.xlu0 %7808
        %v7812 = vsel %vm982, %v7424, 0
        %7814 = vmatprep.subr.mxu0 0.0
        %7815 = vmatpush1.msra.mxu0 0.0
        %7816 = vmatprep.subr.mxu0 0.0
        %7817 = vmatpush1.msra.mxu0 0.0
        %7818 = vmatprep.subr.mxu0 0.0
        %7819 = vmatpush1.msra.mxu0 0.0
        %7820 = vmatprep.subr.mxu0 0.0
        %7821 = vmatpush1.msra.mxu0 0.0
        %7822 = vmatprep.subr.mxu0 0.0
        %7823 = vmatpush1.msra.mxu0 0.0
        %7824 = vmatprep.subr.mxu0 0.0
        %7825 = vmatpush1.msra.mxu0 0.0
        %7826 = vmatprep.subr.mxu0 0.0
        %7827 = vmatpush1.msra.mxu0 0.0
        %7828 = vmatprep.subr.mxu0 0.0
        %7829 = vmatpush1.msra.mxu0 0.0
        %7830 = vmatprep.subr.mxu0 0.0
        %7831 = vmatpush1.msra.mxu0 0.0
        %7832 = vmatprep.subr.mxu0 0.0
        %7833 = vmatpush1.msra.mxu0 0.0
        %7834 = vmatprep.subr.mxu0 0.0
        %7835 = vmatpush1.msra.mxu0 0.0
        %7836 = vmatprep.subr.mxu0 0.0
        %7837 = vmatpush1.msra.mxu0 0.0
        %7838 = vmatprep.subr.mxu0 0.0
        %7839 = vmatpush1.msra.mxu0 0.0
        %7840 = vmatprep.subr.mxu0 0.0
        %7841 = vmatpush1.msra.mxu0 0.0
        %7842 = vmatprep.subr.mxu0 0.0
        %7843 = vmatpush1.msra.mxu0 0.0
        %7844 = vmatprep.subr.mxu0 0.0
        %7845 = vmatpush1.msra.mxu0 %v7809
        %7846 = vmatprep.subr.mxu0 0.0
        %7847 = vmatpush2.msra.mxu0 0.0
        %7848 = vmatprep.subr.mxu0 0.0
        %7849 = vmatpush2.msra.mxu0 0.0
        %7850 = vmatprep.subr.mxu0 0.0
        %7851 = vmatpush2.msra.mxu0 0.0
        %7852 = vmatprep.subr.mxu0 0.0
        %7853 = vmatpush2.msra.mxu0 0.0
        %7854 = vmatprep.subr.mxu0 0.0
        %7855 = vmatpush2.msra.mxu0 0.0
        %7856 = vmatprep.subr.mxu0 0.0
        %7857 = vmatpush2.msra.mxu0 0.0
        %7858 = vmatprep.subr.mxu0 0.0
        %7859 = vmatpush2.msra.mxu0 0.0
        %7860 = vmatprep.subr.mxu0 0.0
        %7861 = vmatpush2.msra.mxu0 0.0
        %7862 = vmatprep.subr.mxu0 0.0
        %7863 = vmatpush2.msra.mxu0 0.0
        %7864 = vmatprep.subr.mxu0 0.0
        %7865 = vmatpush2.msra.mxu0 0.0
        %7866 = vmatprep.subr.mxu0 0.0
        %7867 = vmatpush2.msra.mxu0 0.0
        %7868 = vmatprep.subr.mxu0 0.0
        %7869 = vmatpush2.msra.mxu0 0.0
        %7870 = vmatprep.subr.mxu0 0.0
        %7871 = vmatpush2.msra.mxu0 0.0
        %7872 = vmatprep.subr.mxu0 0.0
        %7873 = vmatpush2.msra.mxu0 0.0
        %7874 = vmatprep.subr.mxu0 0.0
        %7875 = vmatpush2.msra.mxu0 0.0
        %7876 = vmatprep.subr.mxu0 0.0
        %7877 = vmatpush2.msra.mxu0 0.0
        %7878 = vmatprep.mubr.f32.mxu0 0.0
        %7879 = vmatmul.mubr.f32.gmra.mxu0 %v7812
        %v7880 = vpop.f32.mrf.mxu0
        %v7881 = vadd.f32 0.0, %v7880
        %v7882 = vpop.f32.mrf.mxu0
        %7883 = vdwg.mxu0
        %v7884 = vld [vmem:[%s0 + $0x3b8] sm:$0xf]
        %v7885 = vld [vmem:[%s0 + $0x3bc] sm:$0xf]
        %v7886 = vpack.c.bf16 %v7881, %v7881
        %v7889 = vunpack.c.l.b16 %v7884
        %v7890 = vunpack.c.l.b16 %v7885
        %v7891 = vpack.c.b16 %v7890, %v7889
        %v7894 = vsel %vm661, %v7886, 0
        %7896 = vmatprep.subr.bf16.mxu0 0
        %7897 = vmatpush1.bf16.msra.mxu0 0
        %7898 = vmatprep.subr.bf16.mxu0 0
        %7899 = vmatpush1.bf16.msra.mxu0 0
        %7900 = vmatprep.subr.bf16.mxu0 0
        %7901 = vmatpush1.bf16.msra.mxu0 0
        %7902 = vmatprep.subr.bf16.mxu0 0
        %7903 = vmatpush1.bf16.msra.mxu0 0
        %7904 = vmatprep.subr.bf16.mxu0 0
        %7905 = vmatpush1.bf16.msra.mxu0 0
        %7906 = vmatprep.subr.bf16.mxu0 0
        %7907 = vmatpush1.bf16.msra.mxu0 0
        %7908 = vmatprep.subr.bf16.mxu0 0
        %7909 = vmatpush1.bf16.msra.mxu0 0
        %7910 = vmatprep.subr.bf16.mxu0 0
        %7911 = vmatpush1.bf16.msra.mxu0 %v7891
        %7912 = vmatprep.subr.bf16.mxu0 0
        %7913 = vmatpush2.bf16.msra.mxu0 0
        %7914 = vmatprep.subr.bf16.mxu0 0
        %7915 = vmatpush2.bf16.msra.mxu0 0
        %7916 = vmatprep.subr.bf16.mxu0 0
        %7917 = vmatpush2.bf16.msra.mxu0 0
        %7918 = vmatprep.subr.bf16.mxu0 0
        %7919 = vmatpush2.bf16.msra.mxu0 0
        %7920 = vmatprep.subr.bf16.mxu0 0
        %7921 = vmatpush2.bf16.msra.mxu0 0
        %7922 = vmatprep.subr.bf16.mxu0 0
        %7923 = vmatpush2.bf16.msra.mxu0 0
        %7924 = vmatprep.subr.bf16.mxu0 0
        %7925 = vmatpush2.bf16.msra.mxu0 0
        %7926 = vmatprep.subr.bf16.mxu0 0
        %7927 = vmatpush2.bf16.msra.mxu0 0
        %7928 = vmatprep.mubr.bf16.mxu0 0
        %7929 = vmatmul.mubr.bf16.gmra.mxu0 %v7894
        %v7930 = vpop.f32.mrf.mxu0
        %v7931 = vadd.f32 0.0, %v7930
        %v7932 = vpop.f32.mrf.mxu0
        %v7933 = vpop.f32.mrf.mxu0
        %v7934 = vpop.f32.mrf.mxu0
        %7935 = vdwg.mxu0
        %v7936 = vadd.f32 %v7807, %v7931
        %v7937 = vld [vmem:[%s2 + $0x2c] sm:$0x1]
        %v7938 = vlaneseq
        %v7939 = vshrl.u32 %v7938, 7
        %v7940 = vsub.s32 0, %v7939
        %v7941 = vrot.slane %v7937, %v7940
        %v7942 = vadd.f32 %v7936, %v7941
        %v7943 = vadd.f32 %v6830, %v7942
        %v7944 = vsel %vm398, %v7943, 0.0
        %7945 = vadd.xlane.f32.xlu0 %v7944
        %v7946 = vpop.xlane.xlu0 %7945
        %v7947 = vmul.f32 %v7946, %v402
        %v7948 = vsub.f32 %v7943, %v7947
        %v7949 = vmul.f32 %v7948, %v7948
        %v7950 = vsel %vm398, %v7949, 0.0
        %7951 = vadd.xlane.f32.xlu0 %v7950
        %v7952 = vpop.xlane.xlu0 %7951
        %v7953 = vmul.f32 %v7952, %v402
        %v7954 = vadd.f32 %v7953, 1e-05
        %v7955 = vrsqrt.pop %v7954
        %v7956 = vmul.f32 %v7948, %v7955
        %v7957 = vld [vmem:[%s2 + $0x2f] sm:$0x1]
        %v7958 = vlaneseq
        %v7959 = vshrl.u32 %v7958, 7
        %v7960 = vsub.s32 0, %v7959
        %v7961 = vrot.slane %v7957, %v7960
        %v7962 = vmul.f32 %v7956, %v7961
        %v7963 = vld [vmem:[%s2 + $0x30] sm:$0x1]
        %v7964 = vlaneseq
        %v7965 = vshrl.u32 %v7964, 7
        %v7966 = vsub.s32 0, %v7965
        %v7967 = vrot.slane %v7963, %v7966
        %v7968 = vadd.f32 %v7962, %v7967
        %v7969 = vpack.c.bf16 %v7968, %v7968
        %v7970 = vld [vmem:[%s1 + $0x80] sm:$0xf]
        %v7971 = vld [vmem:[%s1 + $0x84] sm:$0xf]
        %v7972 = vld [vmem:[%s1 + $0x88] sm:$0xf]
        %v7973 = vld [vmem:[%s1 + $0x8c] sm:$0xf]
        %v7974 = vld [vmem:[%s1 + $0x90] sm:$0xf]
        %v7975 = vld [vmem:[%s1 + $0x94] sm:$0xf]
        %v7976 = vld [vmem:[%s1 + $0x98] sm:$0xf]
        %v7977 = vld [vmem:[%s1 + $0x9c] sm:$0xf]
        %v7978 = vld [vmem:[%s3 + $0x4] sm:$0x1]
        %v7979 = vlaneseq
        %v7980 = vshrl.u32 %v7979, 7
        %v7981 = vsub.s32 0, %v7980
        %v7982 = vrot.slane %v7978, %v7981
        %v7991 = vunpack.c.l.b16 %v7970
        %v7992 = vunpack.c.l.b16 %v7971
        %v7993 = vunpack.c.l.b16 %v7972
        %v7994 = vunpack.c.l.b16 %v7973
        %v7995 = vunpack.c.l.b16 %v7974
        %v7996 = vunpack.c.l.b16 %v7975
        %v7997 = vunpack.c.l.b16 %v7976
        %v7998 = vunpack.c.l.b16 %v7977
        %v7999 = vpack.c.b16 %v7992, %v7991
        %v8000 = vpack.c.b16 %v7994, %v7993
        %v8001 = vpack.c.b16 %v7996, %v7995
        %v8002 = vpack.c.b16 %v7998, %v7997
        %v8008 = vsel %vm398, %v7969, 0
        %8010 = vmatprep.subr.bf16.mxu0 0
        %8011 = vmatpush1.bf16.msra.mxu0 0
        %8012 = vmatprep.subr.bf16.mxu0 0
        %8013 = vmatpush1.bf16.msra.mxu0 0
        %8014 = vmatprep.subr.bf16.mxu0 0
        %8015 = vmatpush1.bf16.msra.mxu0 0
        %8016 = vmatprep.subr.bf16.mxu0 0
        %8017 = vmatpush1.bf16.msra.mxu0 0
        %8018 = vmatprep.subr.bf16.mxu0 0
        %8019 = vmatpush1.bf16.msra.mxu0 %v8002
        %8020 = vmatprep.subr.bf16.mxu0 0
        %8021 = vmatpush1.bf16.msra.mxu0 %v8001
        %8022 = vmatprep.subr.bf16.mxu0 0
        %8023 = vmatpush1.bf16.msra.mxu0 %v8000
        %8024 = vmatprep.subr.bf16.mxu0 0
        %8025 = vmatpush1.bf16.msra.mxu0 %v7999
        %8026 = vmatprep.subr.bf16.mxu0 0
        %8027 = vmatpush2.bf16.msra.mxu0 0
        %8028 = vmatprep.subr.bf16.mxu0 0
        %8029 = vmatpush2.bf16.msra.mxu0 0
        %8030 = vmatprep.subr.bf16.mxu0 0
        %8031 = vmatpush2.bf16.msra.mxu0 0
        %8032 = vmatprep.subr.bf16.mxu0 0
        %8033 = vmatpush2.bf16.msra.mxu0 0
        %8034 = vmatprep.subr.bf16.mxu0 0
        %8035 = vmatpush2.bf16.msra.mxu0 0
        %8036 = vmatprep.subr.bf16.mxu0 0
        %8037 = vmatpush2.bf16.msra.mxu0 0
        %8038 = vmatprep.subr.bf16.mxu0 0
        %8039 = vmatpush2.bf16.msra.mxu0 0
        %8040 = vmatprep.subr.bf16.mxu0 0
        %8041 = vmatpush2.bf16.msra.mxu0 0
        %8042 = vmatprep.mubr.bf16.mxu0 0
        %8043 = vmatmul.mubr.bf16.gmra.mxu0 %v8008
        %v8044 = vpop.f32.mrf.mxu0
        %v8045 = vadd.f32 %v7982, %v8044
        %v8046 = vpop.f32.mrf.mxu0
        %v8047 = vpop.f32.mrf.mxu0
        %v8048 = vpop.f32.mrf.mxu0
        %8049 = vdwg.mxu0
        %v8050 = vmul.f32 %v8045, 0.5
        %v8051 = vmul.f32 %v8045, 0.044715
        %v8052 = vmul.f32 %v8051, %v8045
        %v8053 = vmul.f32 %v8052, %v8045
        %v8054 = vadd.f32 %v8045, %v8053
        %v8055 = vmul.f32 %v8054, 0.7978846
        %v8056 = vtanh.pop %v8055
        %v8057 = vadd.f32 %v8056, 1.0
        %v8058 = vmul.f32 %v8050, %v8057
        %v8059 = vpack.c.bf16 %v8058, %v8058
        %v8060 = vld [vmem:[%s0 + $0x3c0] sm:$0xf]
        %v8061 = vld [vmem:[%s0 + $0x3c4] sm:$0xf]
        %v8062 = vld [vmem:[%s0 + $0x3c8] sm:$0xf]
        %v8063 = vld [vmem:[%s0 + $0x3cc] sm:$0xf]
        %v8064 = vld [vmem:[%s0 + $0x3d0] sm:$0xf]
        %v8065 = vld [vmem:[%s0 + $0x3d4] sm:$0xf]
        %v8066 = vld [vmem:[%s0 + $0x3d8] sm:$0xf]
        %v8067 = vld [vmem:[%s0 + $0x3dc] sm:$0xf]
        %v8068 = vld [vmem:[%s0 + $0x3e0] sm:$0xf]
        %v8069 = vld [vmem:[%s0 + $0x3e4] sm:$0xf]
        %v8070 = vld [vmem:[%s0 + $0x3e8] sm:$0xf]
        %v8071 = vld [vmem:[%s0 + $0x3ec] sm:$0xf]
        %v8072 = vld [vmem:[%s0 + $0x3f0] sm:$0xf]
        %v8073 = vld [vmem:[%s0 + $0x3f4] sm:$0xf]
        %v8074 = vld [vmem:[%s0 + $0x3f8] sm:$0xf]
        %v8075 = vld [vmem:[%s0 + $0x3fc] sm:$0xf]
        %v8076 = vld [vmem:[%s2 + $0x31] sm:$0x1]
        %v8077 = vlaneseq
        %v8078 = vshrl.u32 %v8077, 7
        %v8079 = vsub.s32 0, %v8078
        %v8080 = vrot.slane %v8076, %v8079
        %v8097 = vunpack.c.l.b16 %v8060
        %v8098 = vunpack.c.l.b16 %v8061
        %v8099 = vunpack.c.l.b16 %v8062
        %v8100 = vunpack.c.l.b16 %v8063
        %v8101 = vunpack.c.l.b16 %v8064
        %v8102 = vunpack.c.l.b16 %v8065
        %v8103 = vunpack.c.l.b16 %v8066
        %v8104 = vunpack.c.l.b16 %v8067
        %v8105 = vunpack.c.l.b16 %v8068
        %v8106 = vunpack.c.l.b16 %v8069
        %v8107 = vunpack.c.l.b16 %v8070
        %v8108 = vunpack.c.l.b16 %v8071
        %v8109 = vunpack.c.l.b16 %v8072
        %v8110 = vunpack.c.l.b16 %v8073
        %v8111 = vunpack.c.l.b16 %v8074
        %v8112 = vunpack.c.l.b16 %v8075
        %v8113 = vpack.c.b16 %v8098, %v8097
        %v8114 = vpack.c.b16 %v8100, %v8099
        %v8115 = vpack.c.b16 %v8102, %v8101
        %v8116 = vpack.c.b16 %v8104, %v8103
        %v8117 = vpack.c.b16 %v8106, %v8105
        %v8118 = vpack.c.b16 %v8108, %v8107
        %v8119 = vpack.c.b16 %v8110, %v8109
        %v8120 = vpack.c.b16 %v8112, %v8111
        %8129 = vmatprep.subr.bf16.mxu0 0
        %8130 = vmatpush1.bf16.msra.mxu0 %v8120
        %8131 = vmatprep.subr.bf16.mxu0 0
        %8132 = vmatpush1.bf16.msra.mxu0 %v8119
        %8133 = vmatprep.subr.bf16.mxu0 0
        %8134 = vmatpush1.bf16.msra.mxu0 %v8118
        %8135 = vmatprep.subr.bf16.mxu0 0
        %8136 = vmatpush1.bf16.msra.mxu0 %v8117
        %8137 = vmatprep.subr.bf16.mxu0 0
        %8138 = vmatpush1.bf16.msra.mxu0 %v8116
        %8139 = vmatprep.subr.bf16.mxu0 0
        %8140 = vmatpush1.bf16.msra.mxu0 %v8115
        %8141 = vmatprep.subr.bf16.mxu0 0
        %8142 = vmatpush1.bf16.msra.mxu0 %v8114
        %8143 = vmatprep.subr.bf16.mxu0 0
        %8144 = vmatpush1.bf16.msra.mxu0 %v8113
        %8145 = vmatprep.subr.bf16.mxu0 0
        %8146 = vmatpush2.bf16.msra.mxu0 0
        %8147 = vmatprep.subr.bf16.mxu0 0
        %8148 = vmatpush2.bf16.msra.mxu0 0
        %8149 = vmatprep.subr.bf16.mxu0 0
        %8150 = vmatpush2.bf16.msra.mxu0 0
        %8151 = vmatprep.subr.bf16.mxu0 0
        %8152 = vmatpush2.bf16.msra.mxu0 0
        %8153 = vmatprep.subr.bf16.mxu0 0
        %8154 = vmatpush2.bf16.msra.mxu0 0
        %8155 = vmatprep.subr.bf16.mxu0 0
        %8156 = vmatpush2.bf16.msra.mxu0 0
        %8157 = vmatprep.subr.bf16.mxu0 0
        %8158 = vmatpush2.bf16.msra.mxu0 0
        %8159 = vmatprep.subr.bf16.mxu0 0
        %8160 = vmatpush2.bf16.msra.mxu0 0
        %8161 = vmatprep.mubr.bf16.mxu0 0
        %8162 = vmatmul.mubr.bf16.gmra.mxu0 %v8059
        %v8163 = vpop.f32.mrf.mxu0
        %v8164 = vadd.f32 %v8080, %v8163
        %v8165 = vpop.f32.mrf.mxu0
        %v8166 = vpop.f32.mrf.mxu0
        %v8167 = vpop.f32.mrf.mxu0
        %8168 = vdwg.mxu0
        %v8169 = vadd.f32 %v7968, %v8164
        %v8170 = vsel %vm398, %v8169, 0.0
        %8171 = vadd.xlane.f32.xlu0 %v8170
        %v8172 = vpop.xlane.xlu0 %8171
        %v8173 = vmul.f32 %v8172, %v402
        %v8174 = vsub.f32 %v8169, %v8173
        %v8175 = vmul.f32 %v8174, %v8174
        %v8176 = vsel %vm398, %v8175, 0.0
        %8177 = vadd.xlane.f32.xlu0 %v8176
        %v8178 = vpop.xlane.xlu0 %8177
        %v8179 = vmul.f32 %v8178, %v402
        %v8180 = vadd.f32 %v8179, 1e-05
        %v8181 = vrsqrt.pop %v8180
        %v8182 = vmul.f32 %v8174, %v8181
        %v8183 = vld [vmem:[%s2 + $0x32] sm:$0x1]
        %v8184 = vlaneseq
        %v8185 = vshrl.u32 %v8184, 7
        %v8186 = vsub.s32 0, %v8185
        %v8187 = vrot.slane %v8183, %v8186
        %v8188 = vmul.f32 %v8182, %v8187
        %v8189 = vld [vmem:[%s2 + $0x33] sm:$0x1]
        %v8190 = vlaneseq
        %v8191 = vshrl.u32 %v8190, 7
        %v8192 = vsub.s32 0, %v8191
        %v8193 = vrot.slane %v8189, %v8192
        %v8194 = vadd.f32 %v8188, %v8193
        %v8195 = vpack.c.bf16 %v8194, %v8194
        %v8196 = vld [vmem:[%s1] sm:$0xf]
        %v8197 = vld [vmem:[%s1 + $0x4] sm:$0xf]
        %v8198 = vld [vmem:[%s1 + $0x8] sm:$0xf]
        %v8199 = vld [vmem:[%s1 + $0xc] sm:$0xf]
        %v8200 = vld [vmem:[%s1 + $0x10] sm:$0xf]
        %v8201 = vld [vmem:[%s1 + $0x14] sm:$0xf]
        %v8202 = vld [vmem:[%s1 + $0x18] sm:$0xf]
        %v8203 = vld [vmem:[%s1 + $0x1c] sm:$0xf]
        %v8204 = vld [vmem:[%s3] sm:$0x1]
        %v8205 = vlaneseq
        %v8206 = vshrl.u32 %v8205, 7
        %v8207 = vsub.s32 0, %v8206
        %v8208 = vrot.slane %v8204, %v8207
        %v8217 = vunpack.c.l.b16 %v8196
        %v8218 = vunpack.c.l.b16 %v8197
        %v8219 = vunpack.c.l.b16 %v8198
        %v8220 = vunpack.c.l.b16 %v8199
        %v8221 = vunpack.c.l.b16 %v8200
        %v8222 = vunpack.c.l.b16 %v8201
        %v8223 = vunpack.c.l.b16 %v8202
        %v8224 = vunpack.c.l.b16 %v8203
        %v8225 = vpack.c.b16 %v8218, %v8217
        %v8226 = vpack.c.b16 %v8220, %v8219
        %v8227 = vpack.c.b16 %v8222, %v8221
        %v8228 = vpack.c.b16 %v8224, %v8223
        %v8234 = vsel %vm398, %v8195, 0
        %8236 = vmatprep.subr.bf16.mxu0 0
        %8237 = vmatpush1.bf16.msra.mxu0 0
        %8238 = vmatprep.subr.bf16.mxu0 0
        %8239 = vmatpush1.bf16.msra.mxu0 0
        %8240 = vmatprep.subr.bf16.mxu0 0
        %8241 = vmatpush1.bf16.msra.mxu0 0
        %8242 = vmatprep.subr.bf16.mxu0 0
        %8243 = vmatpush1.bf16.msra.mxu0 0
        %8244 = vmatprep.subr.bf16.mxu0 0
        %8245 = vmatpush1.bf16.msra.mxu0 %v8228
        %8246 = vmatprep.subr.bf16.mxu0 0
        %8247 = vmatpush1.bf16.msra.mxu0 %v8227
        %8248 = vmatprep.subr.bf16.mxu0 0
        %8249 = vmatpush1.bf16.msra.mxu0 %v8226
        %8250 = vmatprep.subr.bf16.mxu0 0
        %8251 = vmatpush1.bf16.msra.mxu0 %v8225
        %8252 = vmatprep.subr.bf16.mxu0 0
        %8253 = vmatpush2.bf16.msra.mxu0 0
        %8254 = vmatprep.subr.bf16.mxu0 0
        %8255 = vmatpush2.bf16.msra.mxu0 0
        %8256 = vmatprep.subr.bf16.mxu0 0
        %8257 = vmatpush2.bf16.msra.mxu0 0
        %8258 = vmatprep.subr.bf16.mxu0 0
        %8259 = vmatpush2.bf16.msra.mxu0 0
        %8260 = vmatprep.subr.bf16.mxu0 0
        %8261 = vmatpush2.bf16.msra.mxu0 0
        %8262 = vmatprep.subr.bf16.mxu0 0
        %8263 = vmatpush2.bf16.msra.mxu0 0
        %8264 = vmatprep.subr.bf16.mxu0 0
        %8265 = vmatpush2.bf16.msra.mxu0 0
        %8266 = vmatprep.subr.bf16.mxu0 0
        %8267 = vmatpush2.bf16.msra.mxu0 0
        %8268 = vmatprep.mubr.bf16.mxu0 0
        %8269 = vmatmul.mubr.bf16.gmra.mxu0 %v8234
        %v8270 = vpop.f32.mrf.mxu0
        %v8271 = vadd.f32 %v8208, %v8270
        %v8272 = vpop.f32.mrf.mxu0
        %v8273 = vpop.f32.mrf.mxu0
        %v8274 = vpop.f32.mrf.mxu0
        %8275 = vdwg.mxu0
        %8276 = vst [vmem:[%s361] sm:$0xff] %v8271
        %v8277 = vld [vmem:[%s382] sm:$0xff]
        %8278 = vmax.xlane.f32.xlu0 %v8271
        %v8279 = vpop.xlane.xlu0 %8278
        %v8280 = vsub.f32 %v8271, %v8279
        %v8281 = vmul.f32 %v8280, 1.442695
        %v8282 = vpow.pop %v8281
        %8283 = vadd.xlane.f32.xlu0 %v8282
        %v8284 = vpop.xlane.xlu0 %8283
        %v8285 = vlog2.pop %v8284
        %v8286 = vmul.f32 %v8285, 0.6931472
        %v8287 = vadd.f32 %v8286, %v8279
        %8288 = vset.pattern.permute.xlu0 0
        %8289 = vperm.xlu0 %8288, %v8277
        %v8290 = vpop.permute.xlu0 %8289
        %vm8291 = vcmp.eq.s32.totalorder %v394, %v8290
        %v8292 = vsel %vm8291, %v8271, 0.0
        %8293 = vadd.xlane.f32.xlu0 %v8292
        %v8294 = vpop.xlane.xlu0 %8293
        %vm8295 = vcmp.ge.s32.totalorder %v8277, 0
        %vm8296 = vcmp.lt.s32.totalorder %v8277, 128
        %vm8297 = vmand %vm8295, %vm8296
        %v8298 = vsel %vm8297, 1, 0
        %v8299 = vcvt.s32.f32 %v8298
        %v8300 = vsub.f32 %v8287, %v8294
        %v8301 = vmul.f32 %v8300, %v8299
        %vm8302 = vcmask 7168
        %v8303 = vsel %vm8302, %v8301, 0.0
        %8304 = vadd.xlane.f32.xlu0 %v8303
        %v8305 = vpop.xlane.xlu0 %8304
        %v8306 = vrot.slane %v8305, 4
        %v8307 = vadd.f32 %v8305, %v8306
        %v8308 = vrot.slane %v8307, 2
        %v8309 = vadd.f32 %v8307, %v8308
        %v8310 = vrot.slane %v8309, 1
        %v8311 = vadd.f32 %v8309, %v8310
        %s8312 = vtos %v8311
        %v8313 = vsel %vm8302, %v8299, 0.0
        %8314 = vadd.xlane.f32.xlu0 %v8313
        %v8315 = vpop.xlane.xlu0 %8314
        %v8316 = vrot.slane %v8315, 4
        %v8317 = vadd.f32 %v8315, %v8316
        %v8318 = vrot.slane %v8317, 2
        %v8319 = vadd.f32 %v8317, %v8318
        %v8320 = vrot.slane %v8319, 1
        %v8321 = vadd.f32 %v8319, %v8320
        %s8322 = vtos %v8321
        %vm8323 = vcmp.eq.s32.totalorder %v392, 0
        %vm8324 = vcmp.eq.s32.totalorder %v392, 1
        %v8325 = vstv %s8322
        %v8326 = vsel %vm8324, %v8325, 0.0
        %v8327 = vstv %s8312
        %v8328 = vsel %vm8323, %v8327, %v8326
        %8329 = vst [vmem:[%s386] sm:$0xff] %v8328
        %s8330 = sand.u32 %s220, 1
        %s8331 = scalar_lea.sflag [#allocation3], %s8330
        %s8332 = sand.u32 %s220, 1
        %s8333 = smul.addr %s8332, 8
        %s8334 = scalar_lea.vmem [#allocation2], %s8333
        %p8335 = scmp.lt.s32.totalorder %s24, 1
        %s8336 = scalar_select %p8335, %s24, 1
        %s8337 = smul.addr %s8336, 8
        %s8338 = scalar_lea.vmem %s9, %s8337
        // Predicated region
        $region53: #{bart_forward.1} parent=51 // pred_check
          %p8339 = pneg %p230
        $region54: #{bart_forward.1} parent=51 // pred_check_branch
          %8341 = sbr.rel (%p8339) target = $region56
        $region55: #{bart_forward.1} parent=51 // pred_region
          %s8343 = ssub.s32 128, 128
          %8344 = vsyncadd %s8331, %s8343
          %s8345 = smul.addr %s24, 128
          %s8346 = scalar_lea.hbm %s8, %s8345
          %s8348 = sshll.u32 %s8334, 4
          %s8349 = int_to_ptr.vmem [resolvable:$true] %s8348
          %8351 = dma.vmem_to_hbm [thread:$0]  %s8349, 128, %s8346, %s8331
        $region56: #{bart_forward.1} parent=51 // pred_fallthru
          _
        // Predicated region
        $region57: #{bart_forward.1} parent=51 // pred_check
          %p8352 = pneg %p256
        $region58: #{bart_forward.1} parent=51 // pred_check_branch
          %8354 = sbr.rel (%p8352) target = $region60
        $region59: #{bart_forward.1} parent=51 // pred_region
          _
        $region60: #{bart_forward.1} parent=51 // pred_fallthru
          _
      $region52: #{bart_forward.1} parent=5 // pred_fallthru
        _
      %p8355 = scmp.le.s32.totalorder 2, %s19
      // Predicated region
      $region61: #{bart_forward.1} parent=5 // pred_check
        %p8356 = pneg %p8355
      $region62: #{bart_forward.1} parent=5 // pred_check_branch
        %8358 = sbr.rel (%p8356) target = $region64
      $region63: #{bart_forward.1} parent=5 // pred_region
        %s8359 = ssub.s32 %s19, 2
        // Predicated region
        $region65: #{bart_forward.1} parent=63 // pred_check
          %p8360 = pneg %p236
        $region66: #{bart_forward.1} parent=63 // pred_check_branch
          %8362 = sbr.rel (%p8360) target = $region68
        $region67: #{bart_forward.1} parent=63 // pred_region
          %s8363 = sand.u32 %s221, 1
          %s8364 = scalar_lea.sflag [#allocation3], %s8363
          %s8365 = sand.u32 %s221, 1
          %s8366 = smul.addr %s8365, 8
          %s8367 = scalar_lea.vmem [#allocation2], %s8366
          %8368 = dma.done %s8364, 128
        $region68: #{bart_forward.1} parent=63 // pred_fallthru
          _
        // Predicated region
        $region69: #{bart_forward.1} parent=63 // pred_check
          %p8369 = pneg %p262
        $region70: #{bart_forward.1} parent=63 // pred_check_branch
          %8371 = sbr.rel (%p8369) target = $region72
        $region71: #{bart_forward.1} parent=63 // pred_region
          %p8372 = scmp.lt.s32.totalorder %s25, 1
          %s8373 = scalar_select %p8372, %s25, 1
          %s8374 = smul.addr %s8373, 8
          %s8375 = scalar_lea.vmem %s9, %s8374
        $region72: #{bart_forward.1} parent=63 // pred_fallthru
          _
      $region64: #{bart_forward.1} parent=5 // pred_fallthru
        _
    $region6: #{bart_forward.1} parent=1 // loop_footer
      %s23 = sadd.s32 1, %s19
    $region7: #{bart_forward.1} parent=1 // loop_footer_branch
      %18 = sbr.rel target = $region3
    $region8: #{bart_forward.1} parent=1 // loop_exit
      _
    %8376 = vsyncpa [#allocation3], 1
    %s8377 = scalar_lea.sflag [#allocation3], 1
    %8378 = vsyncpa %s8377, 1

</llo_original>
